<compile_context>
chip_gen: v7x
topology: tpu7x:2x2x1
jax: 0.10.0
libtpu: 0.0.40
codegen_flags: <defaults>
</compile_context>

<pallas_src>
import functools
import math

import jax
import jax.numpy as jnp
from jax.experimental import pallas as pl
from jax.experimental.pallas import tpu as pltpu

LANE = 128  # channel padding target == TPU lane width


def _pick_bt(n, hw_in):
    """Images per grid step: aim for M = bt*hw ~= 4096 rows, keep grid length >= 2."""
    bt = max(1, 4096 // max(hw_in, 1))
    if n >= 2:
        bt = min(bt, n // 2)          # leave >= 2 grid steps (v7x megacore)
    return math.gcd(n, max(bt, 1))


def _cparams(block_bytes, temp_bytes):
    """Parallel grid + explicit scoped-VMEM limit sized from the per-step footprint."""
    need = 2 * block_bytes + 2 * temp_bytes + (8 << 20)
    need = min(max(need, 32 << 20), 56 << 20)   # >= v5e 16 MiB default, < v7x 64 MiB phys
    return pltpu.CompilerParams(dimension_semantics=("parallel",),
                                vmem_limit_bytes=int(need))


# --------------------------------------------------------------------------
# Front kernel: [BN+ReLU] -> 3x3 conv (pad=1, stride 1|2) with the optional 1x1
# shortcut conv fused into the centre tap, + per-step [sum, sum_sq] of the conv
# output (for the next BN).  bt images per grid step; 9 accumulating K=128 matmuls.
# --------------------------------------------------------------------------

def _front_kernel(*refs, stride, apply_bn, has_sc, H, W, bt):
    if has_sc:
        x_ref, bsc_ref, bsh_ref, w_ref, y_ref, st_ref, sc_ref = refs
    else:
        x_ref, bsc_ref, bsh_ref, w_ref, y_ref, st_ref = refs
        sc_ref = None
    ho, wo = H // stride, W // stride
    m = bt * ho * wo

    x = x_ref[...]                       # stride1: (bt,H,W,128)   stride2: (bt,4,ho,wo,128)
    h = jnp.maximum(x * bsc_ref[...] + bsh_ref[...], 0.0) if apply_bn else x
    hb = h.astype(jnp.bfloat16)          # bf16 right after BN+ReLU (halves copy traffic)

    if stride == 1:
        zr = jnp.zeros((bt, 1, W, LANE), jnp.bfloat16)
        hp = jnp.concatenate([zr, hb, zr], axis=1)            # (bt, H+2, W, 128)
        zc = jnp.zeros((bt, H + 2, 1, LANE), jnp.bfloat16)
        hp = jnp.concatenate([zc, hp, zc], axis=2)            # (bt, H+2, W+2, 128)

        def tap(dy, dx):
            return hp[:, dy:dy + H, dx:dx + W, :].reshape(m, LANE)
    else:
        # hb holds the 4 parity planes x[:, a::2, b::2]; every tap of a stride-2
        # 3x3/pad-1 conv is a (possibly top/left zero-shifted) parity plane.
        zr = jnp.zeros((bt, 1, wo, LANE), jnp.bfloat16)
        zc = jnp.zeros((bt, ho, 1, LANE), jnp.bfloat16)

        def tap(dy, dx):
            p = (0 if dy == 1 else 1) * 2 + (0 if dx == 1 else 1)
            t = hb[:, p]                                      # (bt, ho, wo, 128)
            if dy == 0:
                t = jnp.concatenate([zr, t[:, :ho - 1]], axis=1)
            if dx == 0:
                t = jnp.concatenate([zc, t[:, :, :wo - 1]], axis=2)
            return t.reshape(m, LANE)

    # 9 accumulating MXU matmuls with K = 128 (no lane-misaligned 9*Cin slab concat).
    acc = None
    t_idx = 0
    for dy in range(3):
        for dx in range(3):
            part = jnp.dot(tap(dy, dx), w_ref[t_idx],
                           preferred_element_type=jnp.float32)   # (m, 128|256)
            acc = part if acc is None else acc + part
            t_idx += 1

    y = acc[:, :LANE]
    y_ref[...] = y.reshape(bt, ho, wo, LANE)                  # lane-dense store
    s1 = jnp.sum(y, axis=0, keepdims=True)
    s2 = jnp.sum(y * y, axis=0, keepdims=True)
    st_ref[0] = jnp.concatenate([s1, s2], axis=0)             # (2, 128) BN partial sums
    if has_sc:
        # fused 1x1 shortcut conv: its weights live in the centre tap's columns 128:256
        sc_ref[...] = acc[:, LANE:].reshape(bt, ho, wo, LANE)


def conv_front(x, scale, shift, w9, *, stride=1, apply_bn=True, has_sc=False):
    """x: (N,H,W,128) f32; w9: (9,128,Co) bf16 (Co = 128, or 256 with fused shortcut)."""
    n, h, w, _ = x.shape
    co = w9.shape[-1]
    ho, wo = h // stride, w // stride
    bt = _pick_bt(n, h * w)
    steps = n // bt

    if stride == 1:
        xin = x
        x_spec = pl.BlockSpec((bt, h, w, LANE), lambda i: (i, 0, 0, 0))
    else:
        # exact parity-plane rearrangement (one cheap lane-dense XLA pass)
        xin = jnp.stack([x[:, a::2, b::2, :] for a in (0, 1) for b in (0, 1)], axis=1)
        x_spec = pl.BlockSpec((bt, 4, ho, wo, LANE), lambda i: (i, 0, 0, 0, 0))

    vec = pl.BlockSpec((1, LANE), lambda i: (0, 0))
    in_specs = [x_spec, vec, vec, pl.BlockSpec((9, LANE, co), lambda i: (0, 0, 0))]
    out_shapes = [jax.ShapeDtypeStruct((n, ho, wo, LANE), jnp.float32),
                  jax.ShapeDtypeStruct((steps, 2, LANE), jnp.float32)]
    out_specs = [pl.BlockSpec((bt, ho, wo, LANE), lambda i: (i, 0, 0, 0)),
                 pl.BlockSpec((1, 2, LANE), lambda i: (i, 0, 0))]
    if has_sc:
        out_shapes.append(jax.ShapeDtypeStruct((n, ho, wo, LANE), jnp.float32))
        out_specs.append(pl.BlockSpec((bt, ho, wo, LANE), lambda i: (i, 0, 0, 0)))

    block_bytes = (bt * h * w * LANE * 4
                   + (2 if has_sc else 1) * bt * ho * wo * LANE * 4
                   + 9 * LANE * co * 2)
    temp_bytes = bt * (h + 2) * (w + 2) * LANE * 2 + bt * ho * wo * co * 4

    kern = functools.partial(_front_kernel, stride=stride, apply_bn=apply_bn,
                             has_sc=has_sc, H=h, W=w, bt=bt)
    return pl.pallas_call(
        kern, grid=(steps,), in_specs=in_specs,
        out_specs=tuple(out_specs), out_shape=tuple(out_shapes),
        compiler_params=_cparams(block_bytes, temp_bytes),
    )(xin, scale, shift, w9)


# --------------------------------------------------------------------------
# Back kernel: BN2+ReLU -> conv3x3(stride1) -> SE (GAP, fc1+relu, fc2+sigmoid)
#              -> channel scale -> + shortcut, plus output stats.  bt images per step.
# --------------------------------------------------------------------------

def _back_kernel(y1_ref, sc_ref, bsc_ref, bsh_ref, w_ref,
                 f1w_ref, f1b_ref, f2w_ref, f2b_ref, out_ref, st_ref,
                 *, H, W, bt):
    m = bt * H * W
    y1 = y1_ref[...]                                          # (bt, H, W, 128) f32
    h = jnp.maximum(y1 * bsc_ref[...] + bsh_ref[...], 0.0)    # BN2 + ReLU
    hb = h.astype(jnp.bfloat16)

    zr = jnp.zeros((bt, 1, W, LANE), jnp.bfloat16)
    hp = jnp.concatenate([zr, hb, zr], axis=1)
    zc = jnp.zeros((bt, H + 2, 1, LANE), jnp.bfloat16)
    hp = jnp.concatenate([zc, hp, zc], axis=2)                # (bt, H+2, W+2, 128)

    acc = None
    t_idx = 0
    for dy in range(3):
        for dx in range(3):
            tap = hp[:, dy:dy + H, dx:dx + W, :].reshape(m, LANE)
            part = jnp.dot(tap, w_ref[t_idx], preferred_element_type=jnp.float32)
            acc = part if acc is None else acc + part
            t_idx += 1
    y2 = acc.reshape(bt, H * W, LANE)                         # conv2 output

    # Squeeze-and-excitation, fully in VMEM (f32 math); M = bt rows amortize MXU fill.
    s = jnp.mean(y2, axis=1)                                  # (bt, 128) global pool
    z = jnp.maximum(jnp.dot(s, f1w_ref[...], preferred_element_type=jnp.float32)
                    + f1b_ref[...], 0.0)
    g = jax.nn.sigmoid(jnp.dot(z, f2w_ref[...], preferred_element_type=jnp.float32)
                       + f2b_ref[...])                        # (bt, 128)

    out = y2 * g[:, None, :] + sc_ref[...].reshape(bt, H * W, LANE)
    out_ref[...] = out.reshape(bt, H, W, LANE)                # lane-dense store
    o2 = out.reshape(m, LANE)
    s1 = jnp.sum(o2, axis=0, keepdims=True)
    s2 = jnp.sum(o2 * o2, axis=0, keepdims=True)
    st_ref[0] = jnp.concatenate([s1, s2], axis=0)


def block_back(y1, shortcut, scale, shift, w9, f1w, f1b, f2w, f2b):
    n, h, w, _ = y1.shape
    bt = _pick_bt(n, h * w)
    steps = n // bt
    act = pl.BlockSpec((bt, h, w, LANE), lambda i: (i, 0, 0, 0))
    vec = pl.BlockSpec((1, LANE), lambda i: (0, 0))
    mat = pl.BlockSpec((LANE, LANE), lambda i: (0, 0))
    in_specs = [act, act, vec, vec,
                pl.BlockSpec((9, LANE, LANE), lambda i: (0, 0, 0)),
                mat, vec, mat, vec]
    out_shapes = (jax.ShapeDtypeStruct((n, h, w, LANE), jnp.float32),
                  jax.ShapeDtypeStruct((steps, 2, LANE), jnp.float32))
    out_specs = (act, pl.BlockSpec((1, 2, LANE), lambda i: (i, 0, 0)))
    block_bytes = 3 * bt * h * w * LANE * 4 + 9 * LANE * LANE * 2 + 4 * LANE * LANE * 4
    temp_bytes = bt * (h + 2) * (w + 2) * LANE * 2 + 2 * bt * h * w * LANE * 4
    kern = functools.partial(_back_kernel, H=h, W=w, bt=bt)
    return pl.pallas_call(
        kern, grid=(steps,), in_specs=in_specs, out_specs=out_specs,
        out_shape=out_shapes,
        compiler_params=_cparams(block_bytes, temp_bytes),
    )(y1, shortcut, scale, shift, w9, f1w, f1b, f2w, f2b)


# --------------------------------------------------------------------------
# Tail kernel: final BN+ReLU -> global average pool -> linear classifier.
# Gridded over batch tiles so both v7x TensorCores participate.
# --------------------------------------------------------------------------

def _tail_kernel(x_ref, bsc_ref, bsh_ref, w_ref, b_ref, o_ref, *, bt):
    x = x_ref[...]                                            # (bt, H, W, 128)
    y = jnp.maximum(x * bsc_ref[...] + bsh_ref[...], 0.0)
    hw = y.shape[1] * y.shape[2]
    p = jnp.mean(y.reshape(bt, hw, LANE), axis=1)             # global average pool
    o_ref[0] = jnp.dot(p, w_ref[...], preferred_element_type=jnp.float32) + b_ref[...]


def tail_call(x, scale, shift, lin_wt, lin_b2):
    n, h, w, _ = x.shape
    ncls = lin_wt.shape[1]
    bt = _pick_bt(n, h * w)
    steps = n // bt
    out = pl.pallas_call(
        functools.partial(_tail_kernel, bt=bt),
        grid=(steps,),
        in_specs=[pl.BlockSpec((bt, h, w, LANE), lambda i: (i, 0, 0, 0)),
                  pl.BlockSpec((1, LANE), lambda i: (0, 0)),
                  pl.BlockSpec((1, LANE), lambda i: (0, 0)),
                  pl.BlockSpec((LANE, ncls), lambda i: (0, 0)),
                  pl.BlockSpec((1, ncls), lambda i: (0, 0))],
        out_specs=pl.BlockSpec((1, bt, ncls), lambda i: (i, 0, 0)),
        out_shape=jax.ShapeDtypeStruct((steps, bt, ncls), jnp.float32),
        compiler_params=pltpu.CompilerParams(dimension_semantics=("parallel",),
                                             vmem_limit_bytes=32 << 20),
    )(x, scale, shift, lin_wt, lin_b2)
    return out.reshape(n, ncls)


# --------------------------------------------------------------------------
# BatchNorm finalize (few-element XLA math on per-step kernel stats).
# --------------------------------------------------------------------------

def bn_scale_shift(stats, gamma, beta, count, eps=1e-5):
    s = jnp.sum(stats, axis=0)                                # (2, 128)
    mean = s[0] / count
    var = jnp.maximum(s[1] / count - mean * mean, 0.0)        # biased batch variance
    scale = gamma * jax.lax.rsqrt(var + eps)
    shift = beta - mean * scale
    return scale.reshape(1, -1), shift.reshape(1, -1)


# --------------------------------------------------------------------------
# Full network forward.
# --------------------------------------------------------------------------

def seresnet_forward(x_nchw, params):
    x = jnp.transpose(x_nchw, (0, 2, 3, 1)).astype(jnp.float32)   # NCHW -> NHWC
    n, h, w, c = x.shape
    x = jnp.pad(x, ((0, 0), (0, 0), (0, 0), (0, LANE - c)))       # lane-dense channels
    dummy = jnp.zeros((1, LANE), jnp.float32)
    # Head conv (no BN/ReLU prologue); stats of its output feed block 0's bn1.
    y, stats = conv_front(x, dummy, dummy, params["conv1_w9"], stride=1, apply_bn=False)

    for blk in params["blocks"]:
        nb, hb_, wb, _ = y.shape
        sc1, sh1 = bn_scale_shift(stats, blk["bn1_g"], blk["bn1_b"], nb * hb_ * wb)
        if blk["has_sc"]:
            y1, st1, shortcut = conv_front(y, sc1, sh1, blk["conv1_w9"],
                                           stride=blk["stride"], apply_bn=True,
                                           has_sc=True)
        else:
            y1, st1 = conv_front(y, sc1, sh1, blk["conv1_w9"],
                                 stride=blk["stride"], apply_bn=True, has_sc=False)
            shortcut = y                                          # identity shortcut
        n2, h2, w2, _ = y1.shape
        sc2, sh2 = bn_scale_shift(st1, blk["bn2_g"], blk["bn2_b"], n2 * h2 * w2)
        y, stats = block_back(y1, shortcut, sc2, sh2, blk["conv2_w9"],
                              blk["fc1_wp"], blk["fc1_bp"], blk["fc2_wp"], blk["fc2_b2"])

    nf, hf, wf, _ = y.shape
    scf, shf = bn_scale_shift(stats, params["bn_g"], params["bn_b"], nf * hf * wf)
    # TODO(synk): F.avg_pool2d(out, 8) equals a global mean only when the final map is
    #             8x8 (true for 32x32 CIFAR-sized inputs, as used here).
    return tail_call(y, scf, shf, params["lin_wt"], params["lin_b2"])


# --------------------------------------------------------------------------
# Deterministic init (matches the PyTorch reference init) + kernel-layout prep.
# --------------------------------------------------------------------------

def _normal(key, shape, std):
    return jax.random.normal(key, shape, dtype=jnp.float32) * std


def init_block(nk, in_planes, planes, stride):
    p = {"stride": stride}
    p["bn1_g"] = jnp.ones((in_planes,), jnp.float32)
    p["bn1_b"] = jnp.zeros((in_planes,), jnp.float32)
    p["conv1_w"] = _normal(nk(), (planes, in_planes, 3, 3), math.sqrt(2.0 / (9 * planes)))
    p["bn2_g"] = jnp.ones((planes,), jnp.float32)
    p["bn2_b"] = jnp.zeros((planes,), jnp.float32)
    p["conv2_w"] = _normal(nk(), (planes, planes, 3, 3), math.sqrt(2.0 / (9 * planes)))
    hid = max(planes // 16, 1)
    p["fc1_w"] = _normal(nk(), (hid, planes, 1, 1), math.sqrt(2.0 / hid))
    p["fc1_b"] = jnp.zeros((hid,), jnp.float32)
    p["fc2_w"] = _normal(nk(), (planes, hid, 1, 1), math.sqrt(2.0 / planes))
    p["fc2_b"] = jnp.zeros((planes,), jnp.float32)
    if stride != 1 or in_planes != planes:
        p["sc_w"] = _normal(nk(), (planes, in_planes, 1, 1), math.sqrt(2.0 / planes))
    return p


def init_params(key, filters=(16, 32, 64), num_blocks=(1, 1, 1), num_classes=10):
    counter = [0]

    def nk():
        counter[0] += 1
        return jax.random.fold_in(key, counter[0])

    params = {"conv1_w": _normal(nk(), (16, 3, 3, 3), math.sqrt(2.0 / (9 * 16)))}
    in_planes = 16
    blocks = []
    for planes, nb, stride0 in zip(filters, num_blocks, (1, 2, 2)):
        for s in [stride0] + [1] * (nb - 1):
            blocks.append(init_block(nk, in_planes, planes, s))
            in_planes = planes  # expansion = 1
    params["blocks"] = blocks
    c = filters[2]
    params["bn_g"] = jnp.ones((c,), jnp.float32)
    params["bn_b"] = jnp.zeros((c,), jnp.float32)
    params["lin_w"] = _normal(nk(), (num_classes, c), math.sqrt(2.0 / c))
    params["lin_b"] = jnp.zeros((num_classes,), jnp.float32)
    return params


def _padvec(v, n=LANE):
    return jnp.pad(v, (0, n - v.shape[0]))


def _pad2(a, r=LANE, c=LANE):
    return jnp.pad(a, ((0, r - a.shape[0]), (0, c - a.shape[1])))


def _conv_taps(w, sc_w=None):
    """(Cout,Cin,3,3) -> (9, 128, Co) bf16, tap-major (dy,dx); optional fused 1x1
    shortcut weights embedded in the centre tap's output columns [128:256]."""
    cout, cin = w.shape[0], w.shape[1]
    taps = jnp.transpose(w, (2, 3, 1, 0)).reshape(9, cin, cout)
    taps = jnp.pad(taps, ((0, 0), (0, LANE - cin), (0, LANE - cout)))
    if sc_w is not None:
        so, si = sc_w.shape[0], sc_w.shape[1]
        sc2 = jnp.pad(sc_w.reshape(so, si).T, ((0, LANE - si), (0, LANE - so)))
        sc_taps = jnp.zeros((9, LANE, LANE), jnp.float32).at[4].set(sc2)
        taps = jnp.concatenate([taps, sc_taps], axis=-1)        # (9, 128, 256)
    return taps.astype(jnp.bfloat16)


def prepare_params(params):
    ncls = params["lin_w"].shape[0]
    p = {"conv1_w9": _conv_taps(params["conv1_w"]),
         "bn_g": _padvec(params["bn_g"]), "bn_b": _padvec(params["bn_b"]),
         "lin_wt": _pad2(params["lin_w"].T, LANE, ncls),
         "lin_b2": params["lin_b"].reshape(1, -1)}
    blocks = []
    for b in params["blocks"]:
        planes = b["conv1_w"].shape[0]
        hid = b["fc1_w"].shape[0]
        has_sc = "sc_w" in b
        nb = {"stride": b["stride"], "has_sc": has_sc,
              "bn1_g": _padvec(b["bn1_g"]), "bn1_b": _padvec(b["bn1_b"]),
              "bn2_g": _padvec(b["bn2_g"]), "bn2_b": _padvec(b["bn2_b"]),
              "conv1_w9": _conv_taps(b["conv1_w"], sc_w=b.get("sc_w")),
              "conv2_w9": _conv_taps(b["conv2_w"]),
              "fc1_wp": _pad2(b["fc1_w"].reshape(hid, planes).T),
              "fc1_bp": _padvec(b["fc1_b"]).reshape(1, LANE),
              "fc2_wp": _pad2(b["fc2_w"].reshape(planes, hid).T),
              "fc2_b2": _padvec(b["fc2_b"]).reshape(1, LANE)}
        blocks.append(nb)
    p["blocks"] = blocks
    return p


if __name__ == "__main__":
    key = jax.random.PRNGKey(0)
    kx, kp = jax.random.split(key)
    x = jax.random.normal(kx, (2, 3, 32, 32), dtype=jnp.float32)   # NCHW, CIFAR-sized
    raw = init_params(kp, filters=(16, 32, 64), num_blocks=(1, 1, 1), num_classes=10)
    params = prepare_params(raw)
    logits = seresnet_forward(x, params)
    logits = jax.block_until_ready(logits)
    assert logits.shape == (2, 10) and logits.dtype == jnp.float32
    assert bool(jnp.all(jnp.isfinite(logits)))
    print("KERNEL_OK")
</pallas_src>

<mosaic_0001>
module attributes {stable_mosaic.version = 11 : i64} {
  func.func @_front_kernel(%arg0: i32, %arg1: memref<1x32x32x128xf32, #tpu.memory_space<vmem>>, %arg2: memref<1x128xf32, #tpu.memory_space<vmem>>, %arg3: memref<1x128xf32, #tpu.memory_space<vmem>>, %arg4: memref<9x128x128xbf16, #tpu.memory_space<vmem>>, %arg5: memref<1x32x32x128xf32, #tpu.memory_space<vmem>>, %arg6: memref<1x2x128xf32, #tpu.memory_space<vmem>>) attributes {dimension_semantics = [#tpu.dimension_semantics<parallel>], iteration_bounds = array<i64: 2>, scalar_prefetch = 0 : i64, scratch_operands = 0 : i64, tpu.core_type = #tpu.core_type<tc>, window_params = [{transform_indices = @transform_0, window_bounds = array<i64: 1, 32, 32, 128>}, {pipeline_mode = #tpu.pipeline_mode<synchronous>, transform_indices = @transform_1, window_bounds = array<i64: 1, 128>}, {pipeline_mode = #tpu.pipeline_mode<synchronous>, transform_indices = @transform_2, window_bounds = array<i64: 1, 128>}, {pipeline_mode = #tpu.pipeline_mode<synchronous>, transform_indices = @transform_3, window_bounds = array<i64: 9, 128, 128>}, {transform_indices = @transform_4, window_bounds = array<i64: 1, 32, 32, 128>}, {transform_indices = @transform_5, window_bounds = array<i64: 1, 2, 128>}]} {
    %c0 = arith.constant 0 : index
    %c0_0 = arith.constant 0 : index
    %c0_1 = arith.constant 0 : index
    %c0_2 = arith.constant 0 : index
    %0 = vector.load %arg1[%c0, %c0_0, %c0_1, %c0_2] : memref<1x32x32x128xf32, #tpu.memory_space<vmem>>, vector<1x32x32x128xf32>
    %1 = arith.truncf %0 : vector<1x32x32x128xf32> to vector<1x32x32x128xbf16>
    %cst = arith.constant 0.000000e+00 : bf16
    %2 = vector.broadcast %cst : bf16 to vector<1x1x32x128xbf16>
    %3 = tpu.concatenate %2, %1, %2 in 1 : vector<1x1x32x128xbf16>, vector<1x32x32x128xbf16>, vector<1x1x32x128xbf16> -> vector<1x34x32x128xbf16>
    %cst_3 = arith.constant 0.000000e+00 : bf16
    %4 = vector.broadcast %cst_3 : bf16 to vector<1x34x1x128xbf16>
    %5 = tpu.concatenate %4, %3, %4 in 2 : vector<1x34x1x128xbf16>, vector<1x34x32x128xbf16>, vector<1x34x1x128xbf16> -> vector<1x34x34x128xbf16>
    %6 = vector.extract_strided_slice %5 {offsets = [0, 0, 0, 0], sizes = [1, 32, 32, 128], strides = [1, 1, 1, 1]} : vector<1x34x34x128xbf16> to vector<1x32x32x128xbf16>
    %7 = vector.shape_cast %6 : vector<1x32x32x128xbf16> to vector<1024x128xbf16>
    %c0_4 = arith.constant 0 : index
    %c0_5 = arith.constant 0 : index
    %c0_6 = arith.constant 0 : index
    %8 = vector.load %arg4[%c0_4, %c0_5, %c0_6] : memref<9x128x128xbf16, #tpu.memory_space<vmem>>, vector<1x128x128xbf16>
    %9 = vector.shape_cast %8 : vector<1x128x128xbf16> to vector<128x128xbf16>
    %cst_7 = arith.constant dense<0.000000e+00> : vector<1024x128xf32>
    %10 = tpu.matmul %7, %9, %cst_7 {dimension_numbers = #tpu.dot_dimension_numbers<[1], [0], [0], [1], [0, 0, 1, 1], [], []>} : vector<1024x128xbf16>, vector<128x128xbf16>, vector<1024x128xf32> -> vector<1024x128xf32>
    %11 = vector.extract_strided_slice %5 {offsets = [0, 0, 1, 0], sizes = [1, 32, 32, 128], strides = [1, 1, 1, 1]} : vector<1x34x34x128xbf16> to vector<1x32x32x128xbf16>
    %12 = vector.shape_cast %11 : vector<1x32x32x128xbf16> to vector<1024x128xbf16>
    %c1 = arith.constant 1 : index
    %c0_8 = arith.constant 0 : index
    %c0_9 = arith.constant 0 : index
    %13 = vector.load %arg4[%c1, %c0_8, %c0_9] : memref<9x128x128xbf16, #tpu.memory_space<vmem>>, vector<1x128x128xbf16>
    %14 = vector.shape_cast %13 : vector<1x128x128xbf16> to vector<128x128xbf16>
    %cst_10 = arith.constant dense<0.000000e+00> : vector<1024x128xf32>
    %15 = tpu.matmul %12, %14, %cst_10 {dimension_numbers = #tpu.dot_dimension_numbers<[1], [0], [0], [1], [0, 0, 1, 1], [], []>} : vector<1024x128xbf16>, vector<128x128xbf16>, vector<1024x128xf32> -> vector<1024x128xf32>
    %16 = arith.addf %10, %15 : vector<1024x128xf32>
    %17 = vector.extract_strided_slice %5 {offsets = [0, 0, 2, 0], sizes = [1, 32, 32, 128], strides = [1, 1, 1, 1]} : vector<1x34x34x128xbf16> to vector<1x32x32x128xbf16>
    %18 = vector.shape_cast %17 : vector<1x32x32x128xbf16> to vector<1024x128xbf16>
    %c2 = arith.constant 2 : index
    %c0_11 = arith.constant 0 : index
    %c0_12 = arith.constant 0 : index
    %19 = vector.load %arg4[%c2, %c0_11, %c0_12] : memref<9x128x128xbf16, #tpu.memory_space<vmem>>, vector<1x128x128xbf16>
    %20 = vector.shape_cast %19 : vector<1x128x128xbf16> to vector<128x128xbf16>
    %cst_13 = arith.constant dense<0.000000e+00> : vector<1024x128xf32>
    %21 = tpu.matmul %18, %20, %cst_13 {dimension_numbers = #tpu.dot_dimension_numbers<[1], [0], [0], [1], [0, 0, 1, 1], [], []>} : vector<1024x128xbf16>, vector<128x128xbf16>, vector<1024x128xf32> -> vector<1024x128xf32>
    %22 = arith.addf %16, %21 : vector<1024x128xf32>
    %23 = vector.extract_strided_slice %5 {offsets = [0, 1, 0, 0], sizes = [1, 32, 32, 128], strides = [1, 1, 1, 1]} : vector<1x34x34x128xbf16> to vector<1x32x32x128xbf16>
    %24 = vector.shape_cast %23 : vector<1x32x32x128xbf16> to vector<1024x128xbf16>
    %c3 = arith.constant 3 : index
    %c0_14 = arith.constant 0 : index
    %c0_15 = arith.constant 0 : index
    %25 = vector.load %arg4[%c3, %c0_14, %c0_15] : memref<9x128x128xbf16, #tpu.memory_space<vmem>>, vector<1x128x128xbf16>
    %26 = vector.shape_cast %25 : vector<1x128x128xbf16> to vector<128x128xbf16>
    %cst_16 = arith.constant dense<0.000000e+00> : vector<1024x128xf32>
    %27 = tpu.matmul %24, %26, %cst_16 {dimension_numbers = #tpu.dot_dimension_numbers<[1], [0], [0], [1], [0, 0, 1, 1], [], []>} : vector<1024x128xbf16>, vector<128x128xbf16>, vector<1024x128xf32> -> vector<1024x128xf32>
    %28 = arith.addf %22, %27 : vector<1024x128xf32>
    %29 = vector.extract_strided_slice %5 {offsets = [0, 1, 1, 0], sizes = [1, 32, 32, 128], strides = [1, 1, 1, 1]} : vector<1x34x34x128xbf16> to vector<1x32x32x128xbf16>
    %30 = vector.shape_cast %29 : vector<1x32x32x128xbf16> to vector<1024x128xbf16>
    %c4 = arith.constant 4 : index
    %c0_17 = arith.constant 0 : index
    %c0_18 = arith.constant 0 : index
    %31 = vector.load %arg4[%c4, %c0_17, %c0_18] : memref<9x128x128xbf16, #tpu.memory_space<vmem>>, vector<1x128x128xbf16>
    %32 = vector.shape_cast %31 : vector<1x128x128xbf16> to vector<128x128xbf16>
    %cst_19 = arith.constant dense<0.000000e+00> : vector<1024x128xf32>
    %33 = tpu.matmul %30, %32, %cst_19 {dimension_numbers = #tpu.dot_dimension_numbers<[1], [0], [0], [1], [0, 0, 1, 1], [], []>} : vector<1024x128xbf16>, vector<128x128xbf16>, vector<1024x128xf32> -> vector<1024x128xf32>
    %34 = arith.addf %28, %33 : vector<1024x128xf32>
    %35 = vector.extract_strided_slice %5 {offsets = [0, 1, 2, 0], sizes = [1, 32, 32, 128], strides = [1, 1, 1, 1]} : vector<1x34x34x128xbf16> to vector<1x32x32x128xbf16>
    %36 = vector.shape_cast %35 : vector<1x32x32x128xbf16> to vector<1024x128xbf16>
    %c5 = arith.constant 5 : index
    %c0_20 = arith.constant 0 : index
    %c0_21 = arith.constant 0 : index
    %37 = vector.load %arg4[%c5, %c0_20, %c0_21] : memref<9x128x128xbf16, #tpu.memory_space<vmem>>, vector<1x128x128xbf16>
    %38 = vector.shape_cast %37 : vector<1x128x128xbf16> to vector<128x128xbf16>
    %cst_22 = arith.constant dense<0.000000e+00> : vector<1024x128xf32>
    %39 = tpu.matmul %36, %38, %cst_22 {dimension_numbers = #tpu.dot_dimension_numbers<[1], [0], [0], [1], [0, 0, 1, 1], [], []>} : vector<1024x128xbf16>, vector<128x128xbf16>, vector<1024x128xf32> -> vector<1024x128xf32>
    %40 = arith.addf %34, %39 : vector<1024x128xf32>
    %41 = vector.extract_strided_slice %5 {offsets = [0, 2, 0, 0], sizes = [1, 32, 32, 128], strides = [1, 1, 1, 1]} : vector<1x34x34x128xbf16> to vector<1x32x32x128xbf16>
    %42 = vector.shape_cast %41 : vector<1x32x32x128xbf16> to vector<1024x128xbf16>
    %c6 = arith.constant 6 : index
    %c0_23 = arith.constant 0 : index
    %c0_24 = arith.constant 0 : index
    %43 = vector.load %arg4[%c6, %c0_23, %c0_24] : memref<9x128x128xbf16, #tpu.memory_space<vmem>>, vector<1x128x128xbf16>
    %44 = vector.shape_cast %43 : vector<1x128x128xbf16> to vector<128x128xbf16>
    %cst_25 = arith.constant dense<0.000000e+00> : vector<1024x128xf32>
    %45 = tpu.matmul %42, %44, %cst_25 {dimension_numbers = #tpu.dot_dimension_numbers<[1], [0], [0], [1], [0, 0, 1, 1], [], []>} : vector<1024x128xbf16>, vector<128x128xbf16>, vector<1024x128xf32> -> vector<1024x128xf32>
    %46 = arith.addf %40, %45 : vector<1024x128xf32>
    %47 = vector.extract_strided_slice %5 {offsets = [0, 2, 1, 0], sizes = [1, 32, 32, 128], strides = [1, 1, 1, 1]} : vector<1x34x34x128xbf16> to vector<1x32x32x128xbf16>
    %48 = vector.shape_cast %47 : vector<1x32x32x128xbf16> to vector<1024x128xbf16>
    %c7 = arith.constant 7 : index
    %c0_26 = arith.constant 0 : index
    %c0_27 = arith.constant 0 : index
    %49 = vector.load %arg4[%c7, %c0_26, %c0_27] : memref<9x128x128xbf16, #tpu.memory_space<vmem>>, vector<1x128x128xbf16>
    %50 = vector.shape_cast %49 : vector<1x128x128xbf16> to vector<128x128xbf16>
    %cst_28 = arith.constant dense<0.000000e+00> : vector<1024x128xf32>
    %51 = tpu.matmul %48, %50, %cst_28 {dimension_numbers = #tpu.dot_dimension_numbers<[1], [0], [0], [1], [0, 0, 1, 1], [], []>} : vector<1024x128xbf16>, vector<128x128xbf16>, vector<1024x128xf32> -> vector<1024x128xf32>
    %52 = arith.addf %46, %51 : vector<1024x128xf32>
    %53 = vector.extract_strided_slice %5 {offsets = [0, 2, 2, 0], sizes = [1, 32, 32, 128], strides = [1, 1, 1, 1]} : vector<1x34x34x128xbf16> to vector<1x32x32x128xbf16>
    %54 = vector.shape_cast %53 : vector<1x32x32x128xbf16> to vector<1024x128xbf16>
    %c8 = arith.constant 8 : index
    %c0_29 = arith.constant 0 : index
    %c0_30 = arith.constant 0 : index
    %55 = vector.load %arg4[%c8, %c0_29, %c0_30] : memref<9x128x128xbf16, #tpu.memory_space<vmem>>, vector<1x128x128xbf16>
    %56 = vector.shape_cast %55 : vector<1x128x128xbf16> to vector<128x128xbf16>
    %cst_31 = arith.constant dense<0.000000e+00> : vector<1024x128xf32>
    %57 = tpu.matmul %54, %56, %cst_31 {dimension_numbers = #tpu.dot_dimension_numbers<[1], [0], [0], [1], [0, 0, 1, 1], [], []>} : vector<1024x128xbf16>, vector<128x128xbf16>, vector<1024x128xf32> -> vector<1024x128xf32>
    %58 = arith.addf %52, %57 : vector<1024x128xf32>
    %59 = vector.shape_cast %58 : vector<1024x128xf32> to vector<1x32x32x128xf32>
    %c0_32 = arith.constant 0 : index
    %c0_33 = arith.constant 0 : index
    %c0_34 = arith.constant 0 : index
    %c0_35 = arith.constant 0 : index
    %60 = vector.load %arg5[%c0_32, %c0_33, %c0_34, %c0_35] : memref<1x32x32x128xf32, #tpu.memory_space<vmem>>, vector<1x32x32x128xf32>
    tpu.vector_store %arg5[%c0_32, %c0_33, %c0_34, %c0_35], %59 {strides = array<i32>} : memref<1x32x32x128xf32, #tpu.memory_space<vmem>>, vector<1x32x32x128xf32>,
    %cst_36 = arith.constant dense<0.000000e+00> : vector<128xf32>
    %61 = vector.multi_reduction <add>, %58, %cst_36 [0] : vector<1024x128xf32> to vector<128xf32>
    %62 = vector.shape_cast %61 : vector<128xf32> to vector<1x128xf32>
    %63 = arith.mulf %58, %58 : vector<1024x128xf32>
    %cst_37 = arith.constant dense<0.000000e+00> : vector<128xf32>
    %64 = vector.multi_reduction <add>, %63, %cst_37 [0] : vector<1024x128xf32> to vector<128xf32>
    %65 = vector.shape_cast %64 : vector<128xf32> to vector<1x128xf32>
    %66 = tpu.concatenate %62, %65 in 0 : vector<1x128xf32>, vector<1x128xf32> -> vector<2x128xf32>
    %c0_38 = arith.constant 0 : index
    %c0_39 = arith.constant 0 : index
    %c0_40 = arith.constant 0 : index
    %67 = vector.load %arg6[%c0_38, %c0_39, %c0_40] : memref<1x2x128xf32, #tpu.memory_space<vmem>>, vector<1x2x128xf32>
    %68 = vector.shape_cast %67 : vector<1x2x128xf32> to vector<2x128xf32>
    %69 = vector.shape_cast %66 : vector<2x128xf32> to vector<1x2x128xf32>
    tpu.vector_store %arg6[%c0_38, %c0_39, %c0_40], %69 {strides = array<i32>} : memref<1x2x128xf32, #tpu.memory_space<vmem>>, vector<1x2x128xf32>,
    return
  }
  func.func @transform_0(%arg0: i32) -> (i32, i32, i32, i32) {
    %c0_i32 = arith.constant 0 : i32
    %c0_i32_0 = arith.constant 0 : i32
    %c0_i32_1 = arith.constant 0 : i32
    %c0_i32_2 = arith.constant 0 : i32
    return %arg0, %c0_i32, %c0_i32_0, %c0_i32_1 : i32, i32, i32, i32
  }
  func.func @transform_1(%arg0: i32) -> (i32, i32) {
    %c0_i32 = arith.constant 0 : i32
    %c0_i32_0 = arith.constant 0 : i32
    %c0_i32_1 = arith.constant 0 : i32
    return %c0_i32, %c0_i32_0 : i32, i32
  }
  func.func @transform_2(%arg0: i32) -> (i32, i32) {
    %c0_i32 = arith.constant 0 : i32
    %c0_i32_0 = arith.constant 0 : i32
    %c0_i32_1 = arith.constant 0 : i32
    return %c0_i32, %c0_i32_0 : i32, i32
  }
  func.func @transform_3(%arg0: i32) -> (i32, i32, i32) {
    %c0_i32 = arith.constant 0 : i32
    %c0_i32_0 = arith.constant 0 : i32
    %c0_i32_1 = arith.constant 0 : i32
    %c0_i32_2 = arith.constant 0 : i32
    return %c0_i32, %c0_i32_0, %c0_i32_1 : i32, i32, i32
  }
  func.func @transform_4(%arg0: i32) -> (i32, i32, i32, i32) {
    %c0_i32 = arith.constant 0 : i32
    %c0_i32_0 = arith.constant 0 : i32
    %c0_i32_1 = arith.constant 0 : i32
    %c0_i32_2 = arith.constant 0 : i32
    return %arg0, %c0_i32, %c0_i32_0, %c0_i32_1 : i32, i32, i32, i32
  }
  func.func @transform_5(%arg0: i32) -> (i32, i32, i32) {
    %c0_i32 = arith.constant 0 : i32
    %c0_i32_0 = arith.constant 0 : i32
    %c0_i32_1 = arith.constant 0 : i32
    return %arg0, %c0_i32, %c0_i32_0 : i32, i32, i32
  }
}

</mosaic_0001>

<llo_original>
// kernel: tpu_custom_call.1
$region0: #{tpu_custom_call.1}
  #allocation0 [shape = 'u32[]', space=smem, size = 0x4, offset = 0x4, fixed_abs, tag = 'smem constant byte address 0x4 - core index']
  #allocation1 [shape = 'u32[144,128]{1,0:T(1,128)}', space=vmem, size = 0x12000, scoped, tag = 'internal scratch']
  %s0 = inlined_call_operand.hbm [shape: f32[2,32,32,128], index: 0, kind: input, shape index: {}]
  %s1 = inlined_call_operand.vmem [shape: f32[1,128], index: 1, kind: input, shape index: {}]
  %s2 = inlined_call_operand.vmem [shape: f32[1,128], index: 2, kind: input, shape index: {}]
  %s3 = inlined_call_operand.hbm [shape: bf16[9,128,128], index: 3, kind: input, shape index: {}]
  %s4 = inlined_call_operand.hbm [shape: f32[2,32,32,128], index: 4, kind: output, shape index: {0}]
  %s5 = inlined_call_operand.hbm [shape: f32[2,2,128], index: 5, kind: output, shape index: {1}]
  %6 = xla_tuple %s4, %s5
  %s7 = sld [smem:[#allocation0]]
  $region65: #{tpu_custom_call.1} parent=0
    _
  %s9 = ssub.s32 1, %s7
  %s10 = scalar_select 0, %s9, %s7
  $region1: #{tpu_custom_call.1} parent=0
    #allocation2 [shape = 'u8[1048576]{0}', space=vmem, size = 0x100000, scoped, tag = 'input window, operand 0']
    #allocation3 [shape = 's32[2]{0}', space=sflag, size = 0x8, scoped, tag = 'scoped memory for tpu_custom_call.1']
    #allocation4 [shape = 's32[2]{0}', space=sflag, size = 0x8, scoped, tag = 'scoped memory for tpu_custom_call.1']
    #allocation5 [shape = 'u8[294912]{0}', space=vmem, size = 0x48000, scoped, tag = 'input window, operand 3, single buffered']
    #allocation6 [shape = 's32[1]{0}', space=sflag, size = 0x4, scoped, tag = 'scoped memory for tpu_custom_call.1']
    #allocation7 [shape = 'u8[1048576]{0}', space=vmem, size = 0x100000, scoped, tag = 'output window, operand 0']
    #allocation8 [shape = 'u8[2048]{0}', space=vmem, size = 0x800, scoped, tag = 'output window, operand 1']
    #allocation9 [shape = 's32[2]{0}', space=sflag, size = 0x8, scoped, tag = 'scoped memory for tpu_custom_call.1']
    %11 = vsyncpa [#allocation3], 0
    %s12 = scalar_lea.sflag [#allocation3], 1
    %13 = vsyncpa %s12, 0
    %14 = vsyncpa [#allocation6], 0
    %15 = vsyncpa [#allocation4], 0
    %s16 = scalar_lea.sflag [#allocation4], 1
    %17 = vsyncpa %s16, 0
    %18 = vsyncpa [#allocation9], 0
    %s19 = scalar_lea.sflag [#allocation9], 1
    %20 = vsyncpa %s19, 0
    loop: start=0, step=1, limit=4
    $region2: #{tpu_custom_call.1} parent=1 // loop_pre_header
      _
    $region3: #{tpu_custom_call.1} parent=1 // loop_header
      %s22 = sphi 0, %s26
      %p23 = scmp.ge.s32.totalorder %s22, 4
      %s32 = sphi 0, %s34
      %s35 = sphi 0, %s32
      %s36 = sphi 0, %s35
      %s52 = sphi 0, %s36
      %s56 = sphi 0, %s56
      %s58 = sphi 0, %s56
      %s59 = sphi 0, %s58
      %s73 = sphi 0, %s59
      %s77 = sphi 0, %s77
      %s79 = sphi 0, %s77
      %s80 = sphi 0, %s79
      %s94 = sphi 0, %s80
      %s98 = sphi 0, %s98
      %s100 = sphi 0, %s98
      %s101 = sphi 0, %s100
      %s115 = sphi 0, %s101
      %s121 = sphi 0, %s123
      %s124 = sphi 0, %s121
      %s125 = sphi 0, %s124
      %s141 = sphi 0, %s125
      %s147 = sphi 0, %s149
      %s150 = sphi 0, %s147
      %s151 = sphi 0, %s150
      %s167 = sphi 0, %s151
    $region4: #{tpu_custom_call.1} parent=1 // loop_header_branch
      %25 = sbr.rel (%p23) target = $region8
    $region5: #{tpu_custom_call.1} parent=1 // loop_body
      %s27 = ssub.s32 %s22, 1
      %s28 = ssub.s32 %s22, 2
      %s29 = sadd.s32 %s22, 1
      %s30 = ssub.s32 %s22, %s29
      %p31 = scmp.eq.s32.totalorder %s30, 0
      %s33 = sadd.s32 %s32, 1
      %s34 = scalar_select %p31, %s32, %s33
      %p37 = pneg %p31
      %p38 = scmp.eq.s32.totalorder %s22, 1
      %p39 = por %p37, %p38
      %p40 = scmp.ne.s32.totalorder %s32, %s35
      %p41 = scmp.eq.s32.totalorder %s22, 0
      %p42 = por %p40, %p41
      %p43 = scmp.ne.s32.totalorder %s32, %s35
      %p44 = scmp.eq.s32.totalorder %s27, 1
      %p45 = por %p43, %p44
      %p46 = scmp.ne.s32.totalorder %s35, %s36
      %p47 = scmp.eq.s32.totalorder %s27, 0
      %p48 = por %p46, %p47
      %p49 = scmp.ne.s32.totalorder %s35, %s36
      %p50 = scmp.eq.s32.totalorder %s28, 1
      %p51 = por %p49, %p50
      %p53 = scmp.ne.s32.totalorder %s36, %s52
      %p54 = scmp.eq.s32.totalorder %s28, 0
      %p55 = por %p53, %p54
      %s57 = sadd.s32 %s56, 1
      %p60 = scmp.eq.s32.totalorder %s22, 1
      %p61 = scmp.ne.s32.totalorder %s56, %s58
      %p62 = scmp.eq.s32.totalorder %s22, 0
      %p63 = por %p61, %p62
      %p64 = scmp.ne.s32.totalorder %s56, %s58
      %p65 = scmp.eq.s32.totalorder %s27, 1
      %p66 = por %p64, %p65
      %p67 = scmp.ne.s32.totalorder %s58, %s59
      %p68 = scmp.eq.s32.totalorder %s27, 0
      %p69 = por %p67, %p68
      %p70 = scmp.ne.s32.totalorder %s58, %s59
      %p71 = scmp.eq.s32.totalorder %s28, 1
      %p72 = por %p70, %p71
      %p74 = scmp.ne.s32.totalorder %s59, %s73
      %p75 = scmp.eq.s32.totalorder %s28, 0
      %p76 = por %p74, %p75
      %s78 = sadd.s32 %s77, 1
      %p81 = scmp.eq.s32.totalorder %s22, 1
      %p82 = scmp.ne.s32.totalorder %s77, %s79
      %p83 = scmp.eq.s32.totalorder %s22, 0
      %p84 = por %p82, %p83
      %p85 = scmp.ne.s32.totalorder %s77, %s79
      %p86 = scmp.eq.s32.totalorder %s27, 1
      %p87 = por %p85, %p86
      %p88 = scmp.ne.s32.totalorder %s79, %s80
      %p89 = scmp.eq.s32.totalorder %s27, 0
      %p90 = por %p88, %p89
      %p91 = scmp.ne.s32.totalorder %s79, %s80
      %p92 = scmp.eq.s32.totalorder %s28, 1
      %p93 = por %p91, %p92
      %p95 = scmp.ne.s32.totalorder %s80, %s94
      %p96 = scmp.eq.s32.totalorder %s28, 0
      %p97 = por %p95, %p96
      %s99 = sadd.s32 %s98, 1
      %p102 = scmp.eq.s32.totalorder %s22, 1
      %p103 = scmp.ne.s32.totalorder %s98, %s100
      %p104 = scmp.eq.s32.totalorder %s22, 0
      %p105 = por %p103, %p104
      %p106 = scmp.ne.s32.totalorder %s98, %s100
      %p107 = scmp.eq.s32.totalorder %s27, 1
      %p108 = por %p106, %p107
      %p109 = scmp.ne.s32.totalorder %s100, %s101
      %p110 = scmp.eq.s32.totalorder %s27, 0
      %p111 = por %p109, %p110
      %p112 = scmp.ne.s32.totalorder %s100, %s101
      %p113 = scmp.eq.s32.totalorder %s28, 1
      %p114 = por %p112, %p113
      %p116 = scmp.ne.s32.totalorder %s101, %s115
      %p117 = scmp.eq.s32.totalorder %s28, 0
      %p118 = por %p116, %p117
      %s119 = ssub.s32 %s22, %s29
      %p120 = scmp.eq.s32.totalorder %s119, 0
      %s122 = sadd.s32 %s121, 1
      %s123 = scalar_select %p120, %s121, %s122
      %p126 = pneg %p120
      %p127 = scmp.eq.s32.totalorder %s22, 1
      %p128 = por %p126, %p127
      %p129 = scmp.ne.s32.totalorder %s121, %s124
      %p130 = scmp.eq.s32.totalorder %s22, 0
      %p131 = por %p129, %p130
      %p132 = scmp.ne.s32.totalorder %s121, %s124
      %p133 = scmp.eq.s32.totalorder %s27, 1
      %p134 = por %p132, %p133
      %p135 = scmp.ne.s32.totalorder %s124, %s125
      %p136 = scmp.eq.s32.totalorder %s27, 0
      %p137 = por %p135, %p136
      %p138 = scmp.ne.s32.totalorder %s124, %s125
      %p139 = scmp.eq.s32.totalorder %s28, 1
      %p140 = por %p138, %p139
      %p142 = scmp.ne.s32.totalorder %s125, %s141
      %p143 = scmp.eq.s32.totalorder %s28, 0
      %p144 = por %p142, %p143
      %s145 = ssub.s32 %s22, %s29
      %p146 = scmp.eq.s32.totalorder %s145, 0
      %s148 = sadd.s32 %s147, 1
      %s149 = scalar_select %p146, %s147, %s148
      %p152 = pneg %p146
      %p153 = scmp.eq.s32.totalorder %s22, 1
      %p154 = por %p152, %p153
      %p155 = scmp.ne.s32.totalorder %s147, %s150
      %p156 = scmp.eq.s32.totalorder %s22, 0
      %p157 = por %p155, %p156
      %p158 = scmp.ne.s32.totalorder %s147, %s150
      %p159 = scmp.eq.s32.totalorder %s27, 1
      %p160 = por %p158, %p159
      %p161 = scmp.ne.s32.totalorder %s150, %s151
      %p162 = scmp.eq.s32.totalorder %s27, 0
      %p163 = por %p161, %p162
      %p164 = scmp.ne.s32.totalorder %s150, %s151
      %p165 = scmp.eq.s32.totalorder %s28, 1
      %p166 = por %p164, %p165
      %p168 = scmp.ne.s32.totalorder %s151, %s167
      %p169 = scmp.eq.s32.totalorder %s28, 0
      %p170 = por %p168, %p169
      %p171 = scmp.le.s32.totalorder 1, %s22
      %p172 = scmp.lt.s32.totalorder %s22, 3
      %p173 = pnand %p171, %p172
      %p174 = pneg %p173
      // Predicated region
      $region9: #{tpu_custom_call.1} parent=5 // pred_check
        _
      $region10: #{tpu_custom_call.1} parent=5 // pred_check_branch
        %176 = sbr.rel (%p173) target = $region12
      $region11: #{tpu_custom_call.1} parent=5 // pred_region
        %s177 = ssub.s32 %s22, 1
        // Predicated region
        $region13: #{tpu_custom_call.1} parent=11 // pred_check
          %p178 = pneg %p69
        $region14: #{tpu_custom_call.1} parent=11 // pred_check_branch
          %180 = sbr.rel (%p178) target = $region16
        $region15: #{tpu_custom_call.1} parent=11 // pred_region
          _
        $region16: #{tpu_custom_call.1} parent=11 // pred_fallthru
          _
        // Predicated region
        $region17: #{tpu_custom_call.1} parent=11 // pred_check
          %p181 = pneg %p90
        $region18: #{tpu_custom_call.1} parent=11 // pred_check_branch
          %183 = sbr.rel (%p181) target = $region20
        $region19: #{tpu_custom_call.1} parent=11 // pred_region
          _
        $region20: #{tpu_custom_call.1} parent=11 // pred_fallthru
          _
        // Predicated region
        $region21: #{tpu_custom_call.1} parent=11 // pred_check
          %p184 = pneg %p111
        $region22: #{tpu_custom_call.1} parent=11 // pred_check_branch
          %186 = sbr.rel (%p184) target = $region24
        $region23: #{tpu_custom_call.1} parent=11 // pred_region
          %s188 = ssub.s32 9216, 9216
          %189 = vsyncadd [#allocation6], %s188
          %s190 = sshll.u32 [#allocation5], 4
          %s191 = int_to_ptr.vmem [resolvable:$true] %s190
          %196 = dma.hbm_to_vmem [thread:$0]  %s3, 9216, %s191, [#allocation6], 64, 64, 4
        $region24: #{tpu_custom_call.1} parent=11 // pred_fallthru
          _
      $region12: #{tpu_custom_call.1} parent=5 // pred_fallthru
        _
      %p197 = scmp.lt.s32.totalorder %s22, 2
      // Predicated region
      $region25: #{tpu_custom_call.1} parent=5 // pred_check
        %p198 = pneg %p197
      $region26: #{tpu_custom_call.1} parent=5 // pred_check_branch
        %200 = sbr.rel (%p198) target = $region28
      $region27: #{tpu_custom_call.1} parent=5 // pred_region
        // Predicated region
        $region29: #{tpu_custom_call.1} parent=27 // pred_check
          %p201 = pneg %p42
        $region30: #{tpu_custom_call.1} parent=27 // pred_check_branch
          %203 = sbr.rel (%p201) target = $region32
        $region31: #{tpu_custom_call.1} parent=27 // pred_region
          %s204 = sand.u32 %s32, 1
          %s205 = scalar_lea.sflag [#allocation3], %s204
          %s206 = sand.u32 %s32, 1
          %s207 = smul.addr %s206, 1024
          %s208 = scalar_lea.vmem [#allocation2], %s207
          %s210 = ssub.s32 16384, 16384
          %211 = vsyncadd %s205, %s210
          %s212 = smul.addr %s22, 128
          %s213 = smul.addr %s212, 128
          %s214 = scalar_lea.hbm %s0, %s213
          %s215 = sshll.u32 %s208, 4
          %s216 = int_to_ptr.vmem [resolvable:$true] %s215
          %221 = dma.hbm_to_vmem [thread:$0]  %s214, 16384, %s216, %s205, 128, 128, 8
        $region32: #{tpu_custom_call.1} parent=27 // pred_fallthru
          _
      $region28: #{tpu_custom_call.1} parent=5 // pred_fallthru
        _
      %p222 = scmp.le.s32.totalorder 1, %s22
      %p223 = scmp.lt.s32.totalorder %s22, 3
      %p224 = pnand %p222, %p223
      %p225 = pneg %p224
      // Predicated region
      $region33: #{tpu_custom_call.1} parent=5 // pred_check
        _
      $region34: #{tpu_custom_call.1} parent=5 // pred_check_branch
        %227 = sbr.rel (%p224) target = $region36
      $region35: #{tpu_custom_call.1} parent=5 // pred_region
        %s228 = ssub.s32 %s22, 1
        %s229 = sand.u32 %s35, 1
        %s230 = scalar_lea.sflag [#allocation3], %s229
        %s231 = sand.u32 %s35, 1
        %s232 = smul.addr %s231, 1024
        %s233 = scalar_lea.vmem [#allocation2], %s232
        // Predicated region
        $region37: #{tpu_custom_call.1} parent=35 // pred_check
          %p234 = pneg %p48
        $region38: #{tpu_custom_call.1} parent=35 // pred_check_branch
          %236 = sbr.rel (%p234) target = $region40
        $region39: #{tpu_custom_call.1} parent=35 // pred_region
          %237 = dma.done %s230, 16384
        $region40: #{tpu_custom_call.1} parent=35 // pred_fallthru
          _
        // Predicated region
        $region41: #{tpu_custom_call.1} parent=35 // pred_check
          %p238 = pneg %p111
        $region42: #{tpu_custom_call.1} parent=35 // pred_check_branch
          %240 = sbr.rel (%p238) target = $region44
        $region43: #{tpu_custom_call.1} parent=35 // pred_region
          %241 = dma.done [#allocation6], 9216
        $region44: #{tpu_custom_call.1} parent=35 // pred_fallthru
          _
        %s242 = sand.u32 %s35, 1
        %s243 = scalar_lea.sflag [#allocation3], %s242
        %s244 = sand.u32 %s35, 1
        %s245 = smul.addr %s244, 1024
        %s246 = scalar_lea.vmem [#allocation2], %s245
        %p247 = pneg %p48
        %p248 = pneg %p45
        %p249 = pneg %p69
        %p250 = pneg %p66
        %p251 = pneg %p90
        %p252 = pneg %p87
        %p253 = pneg %p111
        %p254 = pneg %p108
        %p255 = pneg %p137
        %p256 = pneg %p134
        %s257 = sand.u32 %s124, 1
        %s258 = scalar_lea.sflag [#allocation4], %s257
        %s259 = sand.u32 %s124, 1
        %s260 = smul.addr %s259, 1024
        %s261 = scalar_lea.vmem [#allocation7], %s260
        %p262 = pneg %p163
        %p263 = pneg %p160
        %s264 = sand.u32 %s150, 1
        %s265 = scalar_lea.sflag [#allocation9], %s264
        %s266 = sand.u32 %s150, 1
        %s267 = smul.addr %s266, 2
        %s268 = scalar_lea.vmem [#allocation8], %s267
        %v270 = vld [vmem:[%s233] sm:$0xff]
        %v271 = vld [vmem:[%s233 + $0x8] sm:$0xff]
        %v272 = vld [vmem:[%s233 + $0x10] sm:$0xff]
        %v273 = vld [vmem:[%s233 + $0x18] sm:$0xff]
        %v274 = vld [vmem:[%s233 + $0x20] sm:$0xff]
        %v275 = vld [vmem:[%s233 + $0x28] sm:$0xff]
        %v276 = vld [vmem:[%s233 + $0x30] sm:$0xff]
        %v277 = vld [vmem:[%s233 + $0x38] sm:$0xff]
        %v278 = vld [vmem:[%s233 + $0x40] sm:$0xff]
        %v279 = vld [vmem:[%s233 + $0x48] sm:$0xff]
        %v280 = vld [vmem:[%s233 + $0x50] sm:$0xff]
        %v281 = vld [vmem:[%s233 + $0x58] sm:$0xff]
        %v282 = vld [vmem:[%s233 + $0x60] sm:$0xff]
        %v283 = vld [vmem:[%s233 + $0x68] sm:$0xff]
        %v284 = vld [vmem:[%s233 + $0x70] sm:$0xff]
        %v285 = vld [vmem:[%s233 + $0x78] sm:$0xff]
        %v286 = vld [vmem:[%s233 + $0x80] sm:$0xff]
        %v287 = vld [vmem:[%s233 + $0x88] sm:$0xff]
        %v288 = vld [vmem:[%s233 + $0x90] sm:$0xff]
        %v289 = vld [vmem:[%s233 + $0x98] sm:$0xff]
        %v290 = vld [vmem:[%s233 + $0xa0] sm:$0xff]
        %v291 = vld [vmem:[%s233 + $0xa8] sm:$0xff]
        %v292 = vld [vmem:[%s233 + $0xb0] sm:$0xff]
        %v293 = vld [vmem:[%s233 + $0xb8] sm:$0xff]
        %v294 = vld [vmem:[%s233 + $0xc0] sm:$0xff]
        %v295 = vld [vmem:[%s233 + $0xc8] sm:$0xff]
        %v296 = vld [vmem:[%s233 + $0xd0] sm:$0xff]
        %v297 = vld [vmem:[%s233 + $0xd8] sm:$0xff]
        %v298 = vld [vmem:[%s233 + $0xe0] sm:$0xff]
        %v299 = vld [vmem:[%s233 + $0xe8] sm:$0xff]
        %v300 = vld [vmem:[%s233 + $0xf0] sm:$0xff]
        %v301 = vld [vmem:[%s233 + $0xf8] sm:$0xff]
        %v302 = vld [vmem:[%s233 + $0x100] sm:$0xff]
        %v303 = vld [vmem:[%s233 + $0x108] sm:$0xff]
        %v304 = vld [vmem:[%s233 + $0x110] sm:$0xff]
        %v305 = vld [vmem:[%s233 + $0x118] sm:$0xff]
        %v306 = vld [vmem:[%s233 + $0x120] sm:$0xff]
        %v307 = vld [vmem:[%s233 + $0x128] sm:$0xff]
        %v308 = vld [vmem:[%s233 + $0x130] sm:$0xff]
        %v309 = vld [vmem:[%s233 + $0x138] sm:$0xff]
        %v310 = vld [vmem:[%s233 + $0x140] sm:$0xff]
        %v311 = vld [vmem:[%s233 + $0x148] sm:$0xff]
        %v312 = vld [vmem:[%s233 + $0x150] sm:$0xff]
        %v313 = vld [vmem:[%s233 + $0x158] sm:$0xff]
        %v314 = vld [vmem:[%s233 + $0x160] sm:$0xff]
        %v315 = vld [vmem:[%s233 + $0x168] sm:$0xff]
        %v316 = vld [vmem:[%s233 + $0x170] sm:$0xff]
        %v317 = vld [vmem:[%s233 + $0x178] sm:$0xff]
        %v318 = vld [vmem:[%s233 + $0x180] sm:$0xff]
        %v319 = vld [vmem:[%s233 + $0x188] sm:$0xff]
        %v320 = vld [vmem:[%s233 + $0x190] sm:$0xff]
        %v321 = vld [vmem:[%s233 + $0x198] sm:$0xff]
        %v322 = vld [vmem:[%s233 + $0x1a0] sm:$0xff]
        %v323 = vld [vmem:[%s233 + $0x1a8] sm:$0xff]
        %v324 = vld [vmem:[%s233 + $0x1b0] sm:$0xff]
        %v325 = vld [vmem:[%s233 + $0x1b8] sm:$0xff]
        %v326 = vld [vmem:[%s233 + $0x1c0] sm:$0xff]
        %v327 = vld [vmem:[%s233 + $0x1c8] sm:$0xff]
        %v328 = vld [vmem:[%s233 + $0x1d0] sm:$0xff]
        %v329 = vld [vmem:[%s233 + $0x1d8] sm:$0xff]
        %v330 = vld [vmem:[%s233 + $0x1e0] sm:$0xff]
        %v331 = vld [vmem:[%s233 + $0x1e8] sm:$0xff]
        %v332 = vld [vmem:[%s233 + $0x1f0] sm:$0xff]
        %v333 = vld [vmem:[%s233 + $0x1f8] sm:$0xff]
        %v334 = vld [vmem:[%s233 + $0x200] sm:$0xff]
        %v335 = vld [vmem:[%s233 + $0x208] sm:$0xff]
        %v336 = vld [vmem:[%s233 + $0x210] sm:$0xff]
        %v337 = vld [vmem:[%s233 + $0x218] sm:$0xff]
        %v338 = vld [vmem:[%s233 + $0x220] sm:$0xff]
        %v339 = vld [vmem:[%s233 + $0x228] sm:$0xff]
        %v340 = vld [vmem:[%s233 + $0x230] sm:$0xff]
        %v341 = vld [vmem:[%s233 + $0x238] sm:$0xff]
        %v342 = vld [vmem:[%s233 + $0x240] sm:$0xff]
        %v343 = vld [vmem:[%s233 + $0x248] sm:$0xff]
        %v344 = vld [vmem:[%s233 + $0x250] sm:$0xff]
        %v345 = vld [vmem:[%s233 + $0x258] sm:$0xff]
        %v346 = vld [vmem:[%s233 + $0x260] sm:$0xff]
        %v347 = vld [vmem:[%s233 + $0x268] sm:$0xff]
        %v348 = vld [vmem:[%s233 + $0x270] sm:$0xff]
        %v349 = vld [vmem:[%s233 + $0x278] sm:$0xff]
        %v350 = vld [vmem:[%s233 + $0x280] sm:$0xff]
        %v351 = vld [vmem:[%s233 + $0x288] sm:$0xff]
        %v352 = vld [vmem:[%s233 + $0x290] sm:$0xff]
        %v353 = vld [vmem:[%s233 + $0x298] sm:$0xff]
        %v354 = vld [vmem:[%s233 + $0x2a0] sm:$0xff]
        %v355 = vld [vmem:[%s233 + $0x2a8] sm:$0xff]
        %v356 = vld [vmem:[%s233 + $0x2b0] sm:$0xff]
        %v357 = vld [vmem:[%s233 + $0x2b8] sm:$0xff]
        %v358 = vld [vmem:[%s233 + $0x2c0] sm:$0xff]
        %v359 = vld [vmem:[%s233 + $0x2c8] sm:$0xff]
        %v360 = vld [vmem:[%s233 + $0x2d0] sm:$0xff]
        %v361 = vld [vmem:[%s233 + $0x2d8] sm:$0xff]
        %v362 = vld [vmem:[%s233 + $0x2e0] sm:$0xff]
        %v363 = vld [vmem:[%s233 + $0x2e8] sm:$0xff]
        %v364 = vld [vmem:[%s233 + $0x2f0] sm:$0xff]
        %v365 = vld [vmem:[%s233 + $0x2f8] sm:$0xff]
        %v366 = vld [vmem:[%s233 + $0x300] sm:$0xff]
        %v367 = vld [vmem:[%s233 + $0x308] sm:$0xff]
        %v368 = vld [vmem:[%s233 + $0x310] sm:$0xff]
        %v369 = vld [vmem:[%s233 + $0x318] sm:$0xff]
        %v370 = vld [vmem:[%s233 + $0x320] sm:$0xff]
        %v371 = vld [vmem:[%s233 + $0x328] sm:$0xff]
        %v372 = vld [vmem:[%s233 + $0x330] sm:$0xff]
        %v373 = vld [vmem:[%s233 + $0x338] sm:$0xff]
        %v374 = vld [vmem:[%s233 + $0x340] sm:$0xff]
        %v375 = vld [vmem:[%s233 + $0x348] sm:$0xff]
        %v376 = vld [vmem:[%s233 + $0x350] sm:$0xff]
        %v377 = vld [vmem:[%s233 + $0x358] sm:$0xff]
        %v378 = vld [vmem:[%s233 + $0x360] sm:$0xff]
        %v379 = vld [vmem:[%s233 + $0x368] sm:$0xff]
        %v380 = vld [vmem:[%s233 + $0x370] sm:$0xff]
        %v381 = vld [vmem:[%s233 + $0x378] sm:$0xff]
        %v382 = vld [vmem:[%s233 + $0x380] sm:$0xff]
        %v383 = vld [vmem:[%s233 + $0x388] sm:$0xff]
        %v384 = vld [vmem:[%s233 + $0x390] sm:$0xff]
        %v385 = vld [vmem:[%s233 + $0x398] sm:$0xff]
        %v386 = vld [vmem:[%s233 + $0x3a0] sm:$0xff]
        %v387 = vld [vmem:[%s233 + $0x3a8] sm:$0xff]
        %v388 = vld [vmem:[%s233 + $0x3b0] sm:$0xff]
        %v389 = vld [vmem:[%s233 + $0x3b8] sm:$0xff]
        %v390 = vld [vmem:[%s233 + $0x3c0] sm:$0xff]
        %v391 = vld [vmem:[%s233 + $0x3c8] sm:$0xff]
        %v392 = vld [vmem:[%s233 + $0x3d0] sm:$0xff]
        %v393 = vld [vmem:[%s233 + $0x3d8] sm:$0xff]
        %v394 = vld [vmem:[%s233 + $0x3e0] sm:$0xff]
        %v395 = vld [vmem:[%s233 + $0x3e8] sm:$0xff]
        %v396 = vld [vmem:[%s233 + $0x3f0] sm:$0xff]
        %v397 = vld [vmem:[%s233 + $0x3f8] sm:$0xff]
        %v398 = vpack.c.bf16 %v271, %v270
        %v399 = vpack.c.bf16 %v273, %v272
        %v400 = vpack.c.bf16 %v275, %v274
        %v401 = vpack.c.bf16 %v277, %v276
        %v402 = vpack.c.bf16 %v279, %v278
        %v403 = vpack.c.bf16 %v281, %v280
        %v404 = vpack.c.bf16 %v283, %v282
        %v405 = vpack.c.bf16 %v285, %v284
        %v406 = vpack.c.bf16 %v287, %v286
        %v407 = vpack.c.bf16 %v289, %v288
        %v408 = vpack.c.bf16 %v291, %v290
        %v409 = vpack.c.bf16 %v293, %v292
        %v410 = vpack.c.bf16 %v295, %v294
        %v411 = vpack.c.bf16 %v297, %v296
        %v412 = vpack.c.bf16 %v299, %v298
        %v413 = vpack.c.bf16 %v301, %v300
        %v414 = vpack.c.bf16 %v303, %v302
        %v415 = vpack.c.bf16 %v305, %v304
        %v416 = vpack.c.bf16 %v307, %v306
        %v417 = vpack.c.bf16 %v309, %v308
        %v418 = vpack.c.bf16 %v311, %v310
        %v419 = vpack.c.bf16 %v313, %v312
        %v420 = vpack.c.bf16 %v315, %v314
        %v421 = vpack.c.bf16 %v317, %v316
        %v422 = vpack.c.bf16 %v319, %v318
        %v423 = vpack.c.bf16 %v321, %v320
        %v424 = vpack.c.bf16 %v323, %v322
        %v425 = vpack.c.bf16 %v325, %v324
        %v426 = vpack.c.bf16 %v327, %v326
        %v427 = vpack.c.bf16 %v329, %v328
        %v428 = vpack.c.bf16 %v331, %v330
        %v429 = vpack.c.bf16 %v333, %v332
        %v430 = vpack.c.bf16 %v335, %v334
        %v431 = vpack.c.bf16 %v337, %v336
        %v432 = vpack.c.bf16 %v339, %v338
        %v433 = vpack.c.bf16 %v341, %v340
        %v434 = vpack.c.bf16 %v343, %v342
        %v435 = vpack.c.bf16 %v345, %v344
        %v436 = vpack.c.bf16 %v347, %v346
        %v437 = vpack.c.bf16 %v349, %v348
        %v438 = vpack.c.bf16 %v351, %v350
        %v439 = vpack.c.bf16 %v353, %v352
        %v440 = vpack.c.bf16 %v355, %v354
        %v441 = vpack.c.bf16 %v357, %v356
        %v442 = vpack.c.bf16 %v359, %v358
        %v443 = vpack.c.bf16 %v361, %v360
        %v444 = vpack.c.bf16 %v363, %v362
        %v445 = vpack.c.bf16 %v365, %v364
        %v446 = vpack.c.bf16 %v367, %v366
        %v447 = vpack.c.bf16 %v369, %v368
        %v448 = vpack.c.bf16 %v371, %v370
        %v449 = vpack.c.bf16 %v373, %v372
        %v450 = vpack.c.bf16 %v375, %v374
        %v451 = vpack.c.bf16 %v377, %v376
        %v452 = vpack.c.bf16 %v379, %v378
        %v453 = vpack.c.bf16 %v381, %v380
        %v454 = vpack.c.bf16 %v383, %v382
        %v455 = vpack.c.bf16 %v385, %v384
        %v456 = vpack.c.bf16 %v387, %v386
        %v457 = vpack.c.bf16 %v389, %v388
        %v458 = vpack.c.bf16 %v391, %v390
        %v459 = vpack.c.bf16 %v393, %v392
        %v460 = vpack.c.bf16 %v395, %v394
        %v461 = vpack.c.bf16 %v397, %v396
        %vm462 = vsmask.f32 256
        %v464 = vshrl.u32 0, 16
        %v466 = vrot.slane %v464, 7
        %v467 = vshll.u32 0, 16
        %v469 = vor.u32 %v466, %v467
        %v470 = vsel %vm462, %v466, %v469
        %v472 = vshrl.u32 %v398, 16
        %v474 = vrot.slane %v472, 7
        %v475 = vshll.u32 %v398, 16
        %v477 = vor.u32 %v474, %v475
        %v479 = vshrl.u32 %v399, 16
        %v481 = vrot.slane %v479, 7
        %v482 = vshll.u32 %v399, 16
        %v484 = vor.u32 %v481, %v482
        %v485 = vsel %vm462, %v474, %v484
        %v487 = vshrl.u32 %v400, 16
        %v489 = vrot.slane %v487, 7
        %v490 = vshll.u32 %v400, 16
        %v492 = vor.u32 %v489, %v490
        %v494 = vshrl.u32 %v401, 16
        %v496 = vrot.slane %v494, 7
        %v497 = vshll.u32 %v401, 16
        %v499 = vor.u32 %v496, %v497
        %v500 = vsel %vm462, %v489, %v499
        %v502 = vshrl.u32 %v402, 16
        %v504 = vrot.slane %v502, 7
        %v505 = vshll.u32 %v402, 16
        %v507 = vor.u32 %v504, %v505
        %v509 = vshrl.u32 %v403, 16
        %v511 = vrot.slane %v509, 7
        %v512 = vshll.u32 %v403, 16
        %v514 = vor.u32 %v511, %v512
        %v515 = vsel %vm462, %v504, %v514
        %v517 = vshrl.u32 %v404, 16
        %v519 = vrot.slane %v517, 7
        %v520 = vshll.u32 %v404, 16
        %v522 = vor.u32 %v519, %v520
        %v524 = vshrl.u32 %v405, 16
        %v526 = vrot.slane %v524, 7
        %v527 = vshll.u32 %v405, 16
        %v529 = vor.u32 %v526, %v527
        %v530 = vsel %vm462, %v519, %v529
        %v532 = vshrl.u32 %v406, 16
        %v534 = vrot.slane %v532, 7
        %v535 = vshll.u32 %v406, 16
        %v537 = vor.u32 %v534, %v535
        %v539 = vshrl.u32 %v407, 16
        %v541 = vrot.slane %v539, 7
        %v542 = vshll.u32 %v407, 16
        %v544 = vor.u32 %v541, %v542
        %v545 = vsel %vm462, %v534, %v544
        %v547 = vshrl.u32 %v408, 16
        %v549 = vrot.slane %v547, 7
        %v550 = vshll.u32 %v408, 16
        %v552 = vor.u32 %v549, %v550
        %v554 = vshrl.u32 %v409, 16
        %v556 = vrot.slane %v554, 7
        %v557 = vshll.u32 %v409, 16
        %v559 = vor.u32 %v556, %v557
        %v560 = vsel %vm462, %v549, %v559
        %v562 = vshrl.u32 %v410, 16
        %v564 = vrot.slane %v562, 7
        %v565 = vshll.u32 %v410, 16
        %v567 = vor.u32 %v564, %v565
        %v569 = vshrl.u32 %v411, 16
        %v571 = vrot.slane %v569, 7
        %v572 = vshll.u32 %v411, 16
        %v574 = vor.u32 %v571, %v572
        %v575 = vsel %vm462, %v564, %v574
        %v577 = vshrl.u32 %v412, 16
        %v579 = vrot.slane %v577, 7
        %v580 = vshll.u32 %v412, 16
        %v582 = vor.u32 %v579, %v580
        %v584 = vshrl.u32 %v413, 16
        %v586 = vrot.slane %v584, 7
        %v587 = vshll.u32 %v413, 16
        %v589 = vor.u32 %v586, %v587
        %v590 = vsel %vm462, %v579, %v589
        %v592 = vshrl.u32 %v414, 16
        %v594 = vrot.slane %v592, 7
        %v595 = vshll.u32 %v414, 16
        %v597 = vor.u32 %v594, %v595
        %v599 = vshrl.u32 %v415, 16
        %v601 = vrot.slane %v599, 7
        %v602 = vshll.u32 %v415, 16
        %v604 = vor.u32 %v601, %v602
        %v605 = vsel %vm462, %v594, %v604
        %v607 = vshrl.u32 %v416, 16
        %v609 = vrot.slane %v607, 7
        %v610 = vshll.u32 %v416, 16
        %v612 = vor.u32 %v609, %v610
        %v614 = vshrl.u32 %v417, 16
        %v616 = vrot.slane %v614, 7
        %v617 = vshll.u32 %v417, 16
        %v619 = vor.u32 %v616, %v617
        %v620 = vsel %vm462, %v609, %v619
        %v622 = vshrl.u32 %v418, 16
        %v624 = vrot.slane %v622, 7
        %v625 = vshll.u32 %v418, 16
        %v627 = vor.u32 %v624, %v625
        %v629 = vshrl.u32 %v419, 16
        %v631 = vrot.slane %v629, 7
        %v632 = vshll.u32 %v419, 16
        %v634 = vor.u32 %v631, %v632
        %v635 = vsel %vm462, %v624, %v634
        %v637 = vshrl.u32 %v420, 16
        %v639 = vrot.slane %v637, 7
        %v640 = vshll.u32 %v420, 16
        %v642 = vor.u32 %v639, %v640
        %v644 = vshrl.u32 %v421, 16
        %v646 = vrot.slane %v644, 7
        %v647 = vshll.u32 %v421, 16
        %v649 = vor.u32 %v646, %v647
        %v650 = vsel %vm462, %v639, %v649
        %v652 = vshrl.u32 %v422, 16
        %v654 = vrot.slane %v652, 7
        %v655 = vshll.u32 %v422, 16
        %v657 = vor.u32 %v654, %v655
        %v659 = vshrl.u32 %v423, 16
        %v661 = vrot.slane %v659, 7
        %v662 = vshll.u32 %v423, 16
        %v664 = vor.u32 %v661, %v662
        %v665 = vsel %vm462, %v654, %v664
        %v667 = vshrl.u32 %v424, 16
        %v669 = vrot.slane %v667, 7
        %v670 = vshll.u32 %v424, 16
        %v672 = vor.u32 %v669, %v670
        %v674 = vshrl.u32 %v425, 16
        %v676 = vrot.slane %v674, 7
        %v677 = vshll.u32 %v425, 16
        %v679 = vor.u32 %v676, %v677
        %v680 = vsel %vm462, %v669, %v679
        %v682 = vshrl.u32 %v426, 16
        %v684 = vrot.slane %v682, 7
        %v685 = vshll.u32 %v426, 16
        %v687 = vor.u32 %v684, %v685
        %v689 = vshrl.u32 %v427, 16
        %v691 = vrot.slane %v689, 7
        %v692 = vshll.u32 %v427, 16
        %v694 = vor.u32 %v691, %v692
        %v695 = vsel %vm462, %v684, %v694
        %v697 = vshrl.u32 %v428, 16
        %v699 = vrot.slane %v697, 7
        %v700 = vshll.u32 %v428, 16
        %v702 = vor.u32 %v699, %v700
        %v704 = vshrl.u32 %v429, 16
        %v706 = vrot.slane %v704, 7
        %v707 = vshll.u32 %v429, 16
        %v709 = vor.u32 %v706, %v707
        %v710 = vsel %vm462, %v699, %v709
        %v712 = vshrl.u32 %v430, 16
        %v714 = vrot.slane %v712, 7
        %v715 = vshll.u32 %v430, 16
        %v717 = vor.u32 %v714, %v715
        %v719 = vshrl.u32 %v431, 16
        %v721 = vrot.slane %v719, 7
        %v722 = vshll.u32 %v431, 16
        %v724 = vor.u32 %v721, %v722
        %v725 = vsel %vm462, %v714, %v724
        %v727 = vshrl.u32 %v432, 16
        %v729 = vrot.slane %v727, 7
        %v730 = vshll.u32 %v432, 16
        %v732 = vor.u32 %v729, %v730
        %v734 = vshrl.u32 %v433, 16
        %v736 = vrot.slane %v734, 7
        %v737 = vshll.u32 %v433, 16
        %v739 = vor.u32 %v736, %v737
        %v740 = vsel %vm462, %v729, %v739
        %v742 = vshrl.u32 %v434, 16
        %v744 = vrot.slane %v742, 7
        %v745 = vshll.u32 %v434, 16
        %v747 = vor.u32 %v744, %v745
        %v749 = vshrl.u32 %v435, 16
        %v751 = vrot.slane %v749, 7
        %v752 = vshll.u32 %v435, 16
        %v754 = vor.u32 %v751, %v752
        %v755 = vsel %vm462, %v744, %v754
        %v757 = vshrl.u32 %v436, 16
        %v759 = vrot.slane %v757, 7
        %v760 = vshll.u32 %v436, 16
        %v762 = vor.u32 %v759, %v760
        %v764 = vshrl.u32 %v437, 16
        %v766 = vrot.slane %v764, 7
        %v767 = vshll.u32 %v437, 16
        %v769 = vor.u32 %v766, %v767
        %v770 = vsel %vm462, %v759, %v769
        %v772 = vshrl.u32 %v438, 16
        %v774 = vrot.slane %v772, 7
        %v775 = vshll.u32 %v438, 16
        %v777 = vor.u32 %v774, %v775
        %v779 = vshrl.u32 %v439, 16
        %v781 = vrot.slane %v779, 7
        %v782 = vshll.u32 %v439, 16
        %v784 = vor.u32 %v781, %v782
        %v785 = vsel %vm462, %v774, %v784
        %v787 = vshrl.u32 %v440, 16
        %v789 = vrot.slane %v787, 7
        %v790 = vshll.u32 %v440, 16
        %v792 = vor.u32 %v789, %v790
        %v794 = vshrl.u32 %v441, 16
        %v796 = vrot.slane %v794, 7
        %v797 = vshll.u32 %v441, 16
        %v799 = vor.u32 %v796, %v797
        %v800 = vsel %vm462, %v789, %v799
        %v802 = vshrl.u32 %v442, 16
        %v804 = vrot.slane %v802, 7
        %v805 = vshll.u32 %v442, 16
        %v807 = vor.u32 %v804, %v805
        %v809 = vshrl.u32 %v443, 16
        %v811 = vrot.slane %v809, 7
        %v812 = vshll.u32 %v443, 16
        %v814 = vor.u32 %v811, %v812
        %v815 = vsel %vm462, %v804, %v814
        %v817 = vshrl.u32 %v444, 16
        %v819 = vrot.slane %v817, 7
        %v820 = vshll.u32 %v444, 16
        %v822 = vor.u32 %v819, %v820
        %v824 = vshrl.u32 %v445, 16
        %v826 = vrot.slane %v824, 7
        %v827 = vshll.u32 %v445, 16
        %v829 = vor.u32 %v826, %v827
        %v830 = vsel %vm462, %v819, %v829
        %v832 = vshrl.u32 %v446, 16
        %v834 = vrot.slane %v832, 7
        %v835 = vshll.u32 %v446, 16
        %v837 = vor.u32 %v834, %v835
        %v839 = vshrl.u32 %v447, 16
        %v841 = vrot.slane %v839, 7
        %v842 = vshll.u32 %v447, 16
        %v844 = vor.u32 %v841, %v842
        %v845 = vsel %vm462, %v834, %v844
        %v847 = vshrl.u32 %v448, 16
        %v849 = vrot.slane %v847, 7
        %v850 = vshll.u32 %v448, 16
        %v852 = vor.u32 %v849, %v850
        %v854 = vshrl.u32 %v449, 16
        %v856 = vrot.slane %v854, 7
        %v857 = vshll.u32 %v449, 16
        %v859 = vor.u32 %v856, %v857
        %v860 = vsel %vm462, %v849, %v859
        %v862 = vshrl.u32 %v450, 16
        %v864 = vrot.slane %v862, 7
        %v865 = vshll.u32 %v450, 16
        %v867 = vor.u32 %v864, %v865
        %v869 = vshrl.u32 %v451, 16
        %v871 = vrot.slane %v869, 7
        %v872 = vshll.u32 %v451, 16
        %v874 = vor.u32 %v871, %v872
        %v875 = vsel %vm462, %v864, %v874
        %v877 = vshrl.u32 %v452, 16
        %v879 = vrot.slane %v877, 7
        %v880 = vshll.u32 %v452, 16
        %v882 = vor.u32 %v879, %v880
        %v884 = vshrl.u32 %v453, 16
        %v886 = vrot.slane %v884, 7
        %v887 = vshll.u32 %v453, 16
        %v889 = vor.u32 %v886, %v887
        %v890 = vsel %vm462, %v879, %v889
        %v892 = vshrl.u32 %v454, 16
        %v894 = vrot.slane %v892, 7
        %v895 = vshll.u32 %v454, 16
        %v897 = vor.u32 %v894, %v895
        %v899 = vshrl.u32 %v455, 16
        %v901 = vrot.slane %v899, 7
        %v902 = vshll.u32 %v455, 16
        %v904 = vor.u32 %v901, %v902
        %v905 = vsel %vm462, %v894, %v904
        %v907 = vshrl.u32 %v456, 16
        %v909 = vrot.slane %v907, 7
        %v910 = vshll.u32 %v456, 16
        %v912 = vor.u32 %v909, %v910
        %v914 = vshrl.u32 %v457, 16
        %v916 = vrot.slane %v914, 7
        %v917 = vshll.u32 %v457, 16
        %v919 = vor.u32 %v916, %v917
        %v920 = vsel %vm462, %v909, %v919
        %v922 = vshrl.u32 %v458, 16
        %v924 = vrot.slane %v922, 7
        %v925 = vshll.u32 %v458, 16
        %v927 = vor.u32 %v924, %v925
        %v929 = vshrl.u32 %v459, 16
        %v931 = vrot.slane %v929, 7
        %v932 = vshll.u32 %v459, 16
        %v934 = vor.u32 %v931, %v932
        %v935 = vsel %vm462, %v924, %v934
        %v937 = vshrl.u32 %v460, 16
        %v939 = vrot.slane %v937, 7
        %v940 = vshll.u32 %v460, 16
        %v942 = vor.u32 %v939, %v940
        %v944 = vshrl.u32 %v461, 16
        %v946 = vrot.slane %v944, 7
        %v947 = vshll.u32 %v461, 16
        %v949 = vor.u32 %v946, %v947
        %v950 = vsel %vm462, %v939, %v949
        %vm1050 = vcmask 1040384
        %vm1051 = vmand %vm1050, %vm462
        %v1052 = vsel %vm1051, 0, %v469
        %v1053 = vsel %vm1051, 0, %v477
        %v1054 = vsel %vm1051, 0, %v492
        %v1055 = vsel %vm1051, 0, %v507
        %v1056 = vsel %vm1051, 0, %v522
        %v1057 = vsel %vm1051, 0, %v537
        %v1058 = vsel %vm1051, 0, %v552
        %v1059 = vsel %vm1051, 0, %v567
        %v1060 = vsel %vm1051, 0, %v582
        %v1061 = vsel %vm1051, 0, %v597
        %v1062 = vsel %vm1051, 0, %v612
        %v1063 = vsel %vm1051, 0, %v627
        %v1064 = vsel %vm1051, 0, %v642
        %v1065 = vsel %vm1051, 0, %v657
        %v1066 = vsel %vm1051, 0, %v672
        %v1067 = vsel %vm1051, 0, %v687
        %v1068 = vsel %vm1051, 0, %v702
        %v1069 = vsel %vm1051, 0, %v717
        %v1070 = vsel %vm1051, 0, %v732
        %v1071 = vsel %vm1051, 0, %v747
        %v1072 = vsel %vm1051, 0, %v762
        %v1073 = vsel %vm1051, 0, %v777
        %v1074 = vsel %vm1051, 0, %v792
        %v1075 = vsel %vm1051, 0, %v807
        %v1076 = vsel %vm1051, 0, %v822
        %v1077 = vsel %vm1051, 0, %v837
        %v1078 = vsel %vm1051, 0, %v852
        %v1079 = vsel %vm1051, 0, %v867
        %v1080 = vsel %vm1051, 0, %v882
        %v1081 = vsel %vm1051, 0, %v897
        %v1082 = vsel %vm1051, 0, %v912
        %v1083 = vsel %vm1051, 0, %v927
        %v1084 = vsel %vm1051, 0, %v942
        %v1085 = vsel %vm1051, %v466, 0
        %v1086 = vsel %vm1051, %v481, 0
        %v1087 = vsel %vm1051, %v496, 0
        %v1088 = vsel %vm1051, %v511, 0
        %v1089 = vsel %vm1051, %v526, 0
        %v1090 = vsel %vm1051, %v541, 0
        %v1091 = vsel %vm1051, %v556, 0
        %v1092 = vsel %vm1051, %v571, 0
        %v1093 = vsel %vm1051, %v586, 0
        %v1094 = vsel %vm1051, %v601, 0
        %v1095 = vsel %vm1051, %v616, 0
        %v1096 = vsel %vm1051, %v631, 0
        %v1097 = vsel %vm1051, %v646, 0
        %v1098 = vsel %vm1051, %v661, 0
        %v1099 = vsel %vm1051, %v676, 0
        %v1100 = vsel %vm1051, %v691, 0
        %v1101 = vsel %vm1051, %v706, 0
        %v1102 = vsel %vm1051, %v721, 0
        %v1103 = vsel %vm1051, %v736, 0
        %v1104 = vsel %vm1051, %v751, 0
        %v1105 = vsel %vm1051, %v766, 0
        %v1106 = vsel %vm1051, %v781, 0
        %v1107 = vsel %vm1051, %v796, 0
        %v1108 = vsel %vm1051, %v811, 0
        %v1109 = vsel %vm1051, %v826, 0
        %v1110 = vsel %vm1051, %v841, 0
        %v1111 = vsel %vm1051, %v856, 0
        %v1112 = vsel %vm1051, %v871, 0
        %v1113 = vsel %vm1051, %v886, 0
        %v1114 = vsel %vm1051, %v901, 0
        %v1115 = vsel %vm1051, %v916, 0
        %v1116 = vsel %vm1051, %v931, 0
        %v1117 = vsel %vm1051, %v946, 0
        %v1118 = vld [vmem:[#allocation5] sm:$0xf]
        %v1119 = vld [vmem:[#allocation5 + $0x4] sm:$0xf]
        %v1120 = vld [vmem:[#allocation5 + $0x8] sm:$0xf]
        %v1121 = vld [vmem:[#allocation5 + $0xc] sm:$0xf]
        %v1122 = vld [vmem:[#allocation5 + $0x10] sm:$0xf]
        %v1123 = vld [vmem:[#allocation5 + $0x14] sm:$0xf]
        %v1124 = vld [vmem:[#allocation5 + $0x18] sm:$0xf]
        %v1125 = vld [vmem:[#allocation5 + $0x1c] sm:$0xf]
        %v1126 = vld [vmem:[#allocation5 + $0x20] sm:$0xf]
        %v1127 = vld [vmem:[#allocation5 + $0x24] sm:$0xf]
        %v1128 = vld [vmem:[#allocation5 + $0x28] sm:$0xf]
        %v1129 = vld [vmem:[#allocation5 + $0x2c] sm:$0xf]
        %v1130 = vld [vmem:[#allocation5 + $0x30] sm:$0xf]
        %v1131 = vld [vmem:[#allocation5 + $0x34] sm:$0xf]
        %v1132 = vld [vmem:[#allocation5 + $0x38] sm:$0xf]
        %v1133 = vld [vmem:[#allocation5 + $0x3c] sm:$0xf]
        %vm1134 = vsmask.f32 7424
        %v1136 = vshrl.u32 %v1052, 16
        %v1138 = vshll.u32 %v1052, 16
        %v1140 = vrot.slane %v1138, 1
        %v1141 = vor.u32 %v1136, %v1140
        %v1143 = vshll.u32 %v470, 16
        %v1145 = vrot.slane %v1143, 1
        %v1146 = vsel %vm1134, %v1141, %v1145
        %v1147 = vshrl.u32 %v470, 16
        %v1149 = vor.u32 %v1147, %v1145
        %v1151 = vshll.u32 %v1085, 16
        %v1153 = vrot.slane %v1151, 1
        %v1154 = vsel %vm1134, %v1149, %v1153
        %v1156 = vshrl.u32 %v1053, 16
        %v1158 = vshll.u32 %v1053, 16
        %v1160 = vrot.slane %v1158, 1
        %v1161 = vor.u32 %v1156, %v1160
        %v1163 = vshll.u32 %v485, 16
        %v1165 = vrot.slane %v1163, 1
        %v1166 = vsel %vm1134, %v1161, %v1165
        %v1167 = vshrl.u32 %v485, 16
        %v1169 = vor.u32 %v1167, %v1165
        %v1171 = vshll.u32 %v1086, 16
        %v1173 = vrot.slane %v1171, 1
        %v1174 = vsel %vm1134, %v1169, %v1173
        %v1176 = vshrl.u32 %v1054, 16
        %v1178 = vshll.u32 %v1054, 16
        %v1180 = vrot.slane %v1178, 1
        %v1181 = vor.u32 %v1176, %v1180
        %v1183 = vshll.u32 %v500, 16
        %v1185 = vrot.slane %v1183, 1
        %v1186 = vsel %vm1134, %v1181, %v1185
        %v1187 = vshrl.u32 %v500, 16
        %v1189 = vor.u32 %v1187, %v1185
        %v1191 = vshll.u32 %v1087, 16
        %v1193 = vrot.slane %v1191, 1
        %v1194 = vsel %vm1134, %v1189, %v1193
        %v1196 = vshrl.u32 %v1055, 16
        %v1198 = vshll.u32 %v1055, 16
        %v1200 = vrot.slane %v1198, 1
        %v1201 = vor.u32 %v1196, %v1200
        %v1203 = vshll.u32 %v515, 16
        %v1205 = vrot.slane %v1203, 1
        %v1206 = vsel %vm1134, %v1201, %v1205
        %v1207 = vshrl.u32 %v515, 16
        %v1209 = vor.u32 %v1207, %v1205
        %v1211 = vshll.u32 %v1088, 16
        %v1213 = vrot.slane %v1211, 1
        %v1214 = vsel %vm1134, %v1209, %v1213
        %v1216 = vshrl.u32 %v1056, 16
        %v1218 = vshll.u32 %v1056, 16
        %v1220 = vrot.slane %v1218, 1
        %v1221 = vor.u32 %v1216, %v1220
        %v1223 = vshll.u32 %v530, 16
        %v1225 = vrot.slane %v1223, 1
        %v1226 = vsel %vm1134, %v1221, %v1225
        %v1227 = vshrl.u32 %v530, 16
        %v1229 = vor.u32 %v1227, %v1225
        %v1231 = vshll.u32 %v1089, 16
        %v1233 = vrot.slane %v1231, 1
        %v1234 = vsel %vm1134, %v1229, %v1233
        %v1236 = vshrl.u32 %v1057, 16
        %v1238 = vshll.u32 %v1057, 16
        %v1240 = vrot.slane %v1238, 1
        %v1241 = vor.u32 %v1236, %v1240
        %v1243 = vshll.u32 %v545, 16
        %v1245 = vrot.slane %v1243, 1
        %v1246 = vsel %vm1134, %v1241, %v1245
        %v1247 = vshrl.u32 %v545, 16
        %v1249 = vor.u32 %v1247, %v1245
        %v1251 = vshll.u32 %v1090, 16
        %v1253 = vrot.slane %v1251, 1
        %v1254 = vsel %vm1134, %v1249, %v1253
        %v1256 = vshrl.u32 %v1058, 16
        %v1258 = vshll.u32 %v1058, 16
        %v1260 = vrot.slane %v1258, 1
        %v1261 = vor.u32 %v1256, %v1260
        %v1263 = vshll.u32 %v560, 16
        %v1265 = vrot.slane %v1263, 1
        %v1266 = vsel %vm1134, %v1261, %v1265
        %v1267 = vshrl.u32 %v560, 16
        %v1269 = vor.u32 %v1267, %v1265
        %v1271 = vshll.u32 %v1091, 16
        %v1273 = vrot.slane %v1271, 1
        %v1274 = vsel %vm1134, %v1269, %v1273
        %v1276 = vshrl.u32 %v1059, 16
        %v1278 = vshll.u32 %v1059, 16
        %v1280 = vrot.slane %v1278, 1
        %v1281 = vor.u32 %v1276, %v1280
        %v1283 = vshll.u32 %v575, 16
        %v1285 = vrot.slane %v1283, 1
        %v1286 = vsel %vm1134, %v1281, %v1285
        %v1287 = vshrl.u32 %v575, 16
        %v1289 = vor.u32 %v1287, %v1285
        %v1291 = vshll.u32 %v1092, 16
        %v1293 = vrot.slane %v1291, 1
        %v1294 = vsel %vm1134, %v1289, %v1293
        %v1296 = vshrl.u32 %v1060, 16
        %v1298 = vshll.u32 %v1060, 16
        %v1300 = vrot.slane %v1298, 1
        %v1301 = vor.u32 %v1296, %v1300
        %v1303 = vshll.u32 %v590, 16
        %v1305 = vrot.slane %v1303, 1
        %v1306 = vsel %vm1134, %v1301, %v1305
        %v1307 = vshrl.u32 %v590, 16
        %v1309 = vor.u32 %v1307, %v1305
        %v1311 = vshll.u32 %v1093, 16
        %v1313 = vrot.slane %v1311, 1
        %v1314 = vsel %vm1134, %v1309, %v1313
        %v1316 = vshrl.u32 %v1061, 16
        %v1318 = vshll.u32 %v1061, 16
        %v1320 = vrot.slane %v1318, 1
        %v1321 = vor.u32 %v1316, %v1320
        %v1323 = vshll.u32 %v605, 16
        %v1325 = vrot.slane %v1323, 1
        %v1326 = vsel %vm1134, %v1321, %v1325
        %v1327 = vshrl.u32 %v605, 16
        %v1329 = vor.u32 %v1327, %v1325
        %v1331 = vshll.u32 %v1094, 16
        %v1333 = vrot.slane %v1331, 1
        %v1334 = vsel %vm1134, %v1329, %v1333
        %v1336 = vshrl.u32 %v1062, 16
        %v1338 = vshll.u32 %v1062, 16
        %v1340 = vrot.slane %v1338, 1
        %v1341 = vor.u32 %v1336, %v1340
        %v1343 = vshll.u32 %v620, 16
        %v1345 = vrot.slane %v1343, 1
        %v1346 = vsel %vm1134, %v1341, %v1345
        %v1347 = vshrl.u32 %v620, 16
        %v1349 = vor.u32 %v1347, %v1345
        %v1351 = vshll.u32 %v1095, 16
        %v1353 = vrot.slane %v1351, 1
        %v1354 = vsel %vm1134, %v1349, %v1353
        %v1356 = vshrl.u32 %v1063, 16
        %v1358 = vshll.u32 %v1063, 16
        %v1360 = vrot.slane %v1358, 1
        %v1361 = vor.u32 %v1356, %v1360
        %v1363 = vshll.u32 %v635, 16
        %v1365 = vrot.slane %v1363, 1
        %v1366 = vsel %vm1134, %v1361, %v1365
        %v1367 = vshrl.u32 %v635, 16
        %v1369 = vor.u32 %v1367, %v1365
        %v1371 = vshll.u32 %v1096, 16
        %v1373 = vrot.slane %v1371, 1
        %v1374 = vsel %vm1134, %v1369, %v1373
        %v1376 = vshrl.u32 %v1064, 16
        %v1378 = vshll.u32 %v1064, 16
        %v1380 = vrot.slane %v1378, 1
        %v1381 = vor.u32 %v1376, %v1380
        %v1383 = vshll.u32 %v650, 16
        %v1385 = vrot.slane %v1383, 1
        %v1386 = vsel %vm1134, %v1381, %v1385
        %v1387 = vshrl.u32 %v650, 16
        %v1389 = vor.u32 %v1387, %v1385
        %v1391 = vshll.u32 %v1097, 16
        %v1393 = vrot.slane %v1391, 1
        %v1394 = vsel %vm1134, %v1389, %v1393
        %v1396 = vshrl.u32 %v1065, 16
        %v1398 = vshll.u32 %v1065, 16
        %v1400 = vrot.slane %v1398, 1
        %v1401 = vor.u32 %v1396, %v1400
        %v1403 = vshll.u32 %v665, 16
        %v1405 = vrot.slane %v1403, 1
        %v1406 = vsel %vm1134, %v1401, %v1405
        %v1407 = vshrl.u32 %v665, 16
        %v1409 = vor.u32 %v1407, %v1405
        %v1411 = vshll.u32 %v1098, 16
        %v1413 = vrot.slane %v1411, 1
        %v1414 = vsel %vm1134, %v1409, %v1413
        %v1416 = vshrl.u32 %v1066, 16
        %v1418 = vshll.u32 %v1066, 16
        %v1420 = vrot.slane %v1418, 1
        %v1421 = vor.u32 %v1416, %v1420
        %v1423 = vshll.u32 %v680, 16
        %v1425 = vrot.slane %v1423, 1
        %v1426 = vsel %vm1134, %v1421, %v1425
        %v1427 = vshrl.u32 %v680, 16
        %v1429 = vor.u32 %v1427, %v1425
        %v1431 = vshll.u32 %v1099, 16
        %v1433 = vrot.slane %v1431, 1
        %v1434 = vsel %vm1134, %v1429, %v1433
        %v1436 = vshrl.u32 %v1067, 16
        %v1438 = vshll.u32 %v1067, 16
        %v1440 = vrot.slane %v1438, 1
        %v1441 = vor.u32 %v1436, %v1440
        %v1443 = vshll.u32 %v695, 16
        %v1445 = vrot.slane %v1443, 1
        %v1446 = vsel %vm1134, %v1441, %v1445
        %v1447 = vshrl.u32 %v695, 16
        %v1449 = vor.u32 %v1447, %v1445
        %v1451 = vshll.u32 %v1100, 16
        %v1453 = vrot.slane %v1451, 1
        %v1454 = vsel %vm1134, %v1449, %v1453
        %v1456 = vshrl.u32 %v1068, 16
        %v1458 = vshll.u32 %v1068, 16
        %v1460 = vrot.slane %v1458, 1
        %v1461 = vor.u32 %v1456, %v1460
        %v1463 = vshll.u32 %v710, 16
        %v1465 = vrot.slane %v1463, 1
        %v1466 = vsel %vm1134, %v1461, %v1465
        %v1467 = vshrl.u32 %v710, 16
        %v1469 = vor.u32 %v1467, %v1465
        %v1471 = vshll.u32 %v1101, 16
        %v1473 = vrot.slane %v1471, 1
        %v1474 = vsel %vm1134, %v1469, %v1473
        %v1476 = vshrl.u32 %v1069, 16
        %v1478 = vshll.u32 %v1069, 16
        %v1480 = vrot.slane %v1478, 1
        %v1481 = vor.u32 %v1476, %v1480
        %v1483 = vshll.u32 %v725, 16
        %v1485 = vrot.slane %v1483, 1
        %v1486 = vsel %vm1134, %v1481, %v1485
        %v1487 = vshrl.u32 %v725, 16
        %v1489 = vor.u32 %v1487, %v1485
        %v1491 = vshll.u32 %v1102, 16
        %v1493 = vrot.slane %v1491, 1
        %v1494 = vsel %vm1134, %v1489, %v1493
        %v1496 = vshrl.u32 %v1070, 16
        %v1498 = vshll.u32 %v1070, 16
        %v1500 = vrot.slane %v1498, 1
        %v1501 = vor.u32 %v1496, %v1500
        %v1503 = vshll.u32 %v740, 16
        %v1505 = vrot.slane %v1503, 1
        %v1506 = vsel %vm1134, %v1501, %v1505
        %v1507 = vshrl.u32 %v740, 16
        %v1509 = vor.u32 %v1507, %v1505
        %v1511 = vshll.u32 %v1103, 16
        %v1513 = vrot.slane %v1511, 1
        %v1514 = vsel %vm1134, %v1509, %v1513
        %v1516 = vshrl.u32 %v1071, 16
        %v1518 = vshll.u32 %v1071, 16
        %v1520 = vrot.slane %v1518, 1
        %v1521 = vor.u32 %v1516, %v1520
        %v1523 = vshll.u32 %v755, 16
        %v1525 = vrot.slane %v1523, 1
        %v1526 = vsel %vm1134, %v1521, %v1525
        %v1527 = vshrl.u32 %v755, 16
        %v1529 = vor.u32 %v1527, %v1525
        %v1531 = vshll.u32 %v1104, 16
        %v1533 = vrot.slane %v1531, 1
        %v1534 = vsel %vm1134, %v1529, %v1533
        %v1536 = vshrl.u32 %v1072, 16
        %v1538 = vshll.u32 %v1072, 16
        %v1540 = vrot.slane %v1538, 1
        %v1541 = vor.u32 %v1536, %v1540
        %v1543 = vshll.u32 %v770, 16
        %v1545 = vrot.slane %v1543, 1
        %v1546 = vsel %vm1134, %v1541, %v1545
        %v1547 = vshrl.u32 %v770, 16
        %v1549 = vor.u32 %v1547, %v1545
        %v1551 = vshll.u32 %v1105, 16
        %v1553 = vrot.slane %v1551, 1
        %v1554 = vsel %vm1134, %v1549, %v1553
        %v1556 = vshrl.u32 %v1073, 16
        %v1558 = vshll.u32 %v1073, 16
        %v1560 = vrot.slane %v1558, 1
        %v1561 = vor.u32 %v1556, %v1560
        %v1563 = vshll.u32 %v785, 16
        %v1565 = vrot.slane %v1563, 1
        %v1566 = vsel %vm1134, %v1561, %v1565
        %v1567 = vshrl.u32 %v785, 16
        %v1569 = vor.u32 %v1567, %v1565
        %v1571 = vshll.u32 %v1106, 16
        %v1573 = vrot.slane %v1571, 1
        %v1574 = vsel %vm1134, %v1569, %v1573
        %v1576 = vshrl.u32 %v1074, 16
        %v1578 = vshll.u32 %v1074, 16
        %v1580 = vrot.slane %v1578, 1
        %v1581 = vor.u32 %v1576, %v1580
        %v1583 = vshll.u32 %v800, 16
        %v1585 = vrot.slane %v1583, 1
        %v1586 = vsel %vm1134, %v1581, %v1585
        %v1587 = vshrl.u32 %v800, 16
        %v1589 = vor.u32 %v1587, %v1585
        %v1591 = vshll.u32 %v1107, 16
        %v1593 = vrot.slane %v1591, 1
        %v1594 = vsel %vm1134, %v1589, %v1593
        %v1596 = vshrl.u32 %v1075, 16
        %v1598 = vshll.u32 %v1075, 16
        %v1600 = vrot.slane %v1598, 1
        %v1601 = vor.u32 %v1596, %v1600
        %v1603 = vshll.u32 %v815, 16
        %v1605 = vrot.slane %v1603, 1
        %v1606 = vsel %vm1134, %v1601, %v1605
        %v1607 = vshrl.u32 %v815, 16
        %v1609 = vor.u32 %v1607, %v1605
        %v1611 = vshll.u32 %v1108, 16
        %v1613 = vrot.slane %v1611, 1
        %v1614 = vsel %vm1134, %v1609, %v1613
        %v1616 = vshrl.u32 %v1076, 16
        %v1618 = vshll.u32 %v1076, 16
        %v1620 = vrot.slane %v1618, 1
        %v1621 = vor.u32 %v1616, %v1620
        %v1623 = vshll.u32 %v830, 16
        %v1625 = vrot.slane %v1623, 1
        %v1626 = vsel %vm1134, %v1621, %v1625
        %v1627 = vshrl.u32 %v830, 16
        %v1629 = vor.u32 %v1627, %v1625
        %v1631 = vshll.u32 %v1109, 16
        %v1633 = vrot.slane %v1631, 1
        %v1634 = vsel %vm1134, %v1629, %v1633
        %v1636 = vshrl.u32 %v1077, 16
        %v1638 = vshll.u32 %v1077, 16
        %v1640 = vrot.slane %v1638, 1
        %v1641 = vor.u32 %v1636, %v1640
        %v1643 = vshll.u32 %v845, 16
        %v1645 = vrot.slane %v1643, 1
        %v1646 = vsel %vm1134, %v1641, %v1645
        %v1647 = vshrl.u32 %v845, 16
        %v1649 = vor.u32 %v1647, %v1645
        %v1651 = vshll.u32 %v1110, 16
        %v1653 = vrot.slane %v1651, 1
        %v1654 = vsel %vm1134, %v1649, %v1653
        %v1656 = vshrl.u32 %v1078, 16
        %v1658 = vshll.u32 %v1078, 16
        %v1660 = vrot.slane %v1658, 1
        %v1661 = vor.u32 %v1656, %v1660
        %v1663 = vshll.u32 %v860, 16
        %v1665 = vrot.slane %v1663, 1
        %v1666 = vsel %vm1134, %v1661, %v1665
        %v1667 = vshrl.u32 %v860, 16
        %v1669 = vor.u32 %v1667, %v1665
        %v1671 = vshll.u32 %v1111, 16
        %v1673 = vrot.slane %v1671, 1
        %v1674 = vsel %vm1134, %v1669, %v1673
        %v1676 = vshrl.u32 %v1079, 16
        %v1678 = vshll.u32 %v1079, 16
        %v1680 = vrot.slane %v1678, 1
        %v1681 = vor.u32 %v1676, %v1680
        %v1683 = vshll.u32 %v875, 16
        %v1685 = vrot.slane %v1683, 1
        %v1686 = vsel %vm1134, %v1681, %v1685
        %v1687 = vshrl.u32 %v875, 16
        %v1689 = vor.u32 %v1687, %v1685
        %v1691 = vshll.u32 %v1112, 16
        %v1693 = vrot.slane %v1691, 1
        %v1694 = vsel %vm1134, %v1689, %v1693
        %v1696 = vshrl.u32 %v1080, 16
        %v1698 = vshll.u32 %v1080, 16
        %v1700 = vrot.slane %v1698, 1
        %v1701 = vor.u32 %v1696, %v1700
        %v1703 = vshll.u32 %v890, 16
        %v1705 = vrot.slane %v1703, 1
        %v1706 = vsel %vm1134, %v1701, %v1705
        %v1707 = vshrl.u32 %v890, 16
        %v1709 = vor.u32 %v1707, %v1705
        %v1711 = vshll.u32 %v1113, 16
        %v1713 = vrot.slane %v1711, 1
        %v1714 = vsel %vm1134, %v1709, %v1713
        %v1716 = vshrl.u32 %v1081, 16
        %v1718 = vshll.u32 %v1081, 16
        %v1720 = vrot.slane %v1718, 1
        %v1721 = vor.u32 %v1716, %v1720
        %v1723 = vshll.u32 %v905, 16
        %v1725 = vrot.slane %v1723, 1
        %v1726 = vsel %vm1134, %v1721, %v1725
        %v1727 = vshrl.u32 %v905, 16
        %v1729 = vor.u32 %v1727, %v1725
        %v1731 = vshll.u32 %v1114, 16
        %v1733 = vrot.slane %v1731, 1
        %v1734 = vsel %vm1134, %v1729, %v1733
        %v1736 = vshrl.u32 %v1082, 16
        %v1738 = vshll.u32 %v1082, 16
        %v1740 = vrot.slane %v1738, 1
        %v1741 = vor.u32 %v1736, %v1740
        %v1743 = vshll.u32 %v920, 16
        %v1745 = vrot.slane %v1743, 1
        %v1746 = vsel %vm1134, %v1741, %v1745
        %v1747 = vshrl.u32 %v920, 16
        %v1749 = vor.u32 %v1747, %v1745
        %v1751 = vshll.u32 %v1115, 16
        %v1753 = vrot.slane %v1751, 1
        %v1754 = vsel %vm1134, %v1749, %v1753
        %v1756 = vshrl.u32 %v1083, 16
        %v1758 = vshll.u32 %v1083, 16
        %v1760 = vrot.slane %v1758, 1
        %v1761 = vor.u32 %v1756, %v1760
        %v1763 = vshll.u32 %v935, 16
        %v1765 = vrot.slane %v1763, 1
        %v1766 = vsel %vm1134, %v1761, %v1765
        %v1767 = vshrl.u32 %v935, 16
        %v1769 = vor.u32 %v1767, %v1765
        %v1771 = vshll.u32 %v1116, 16
        %v1773 = vrot.slane %v1771, 1
        %v1774 = vsel %vm1134, %v1769, %v1773
        %s1839 = scalar_lea.vmem [#allocation5], 64
        %v1840 = vld [vmem:[%s1839] sm:$0xf]
        %v1841 = vld [vmem:[%s1839 + $0x4] sm:$0xf]
        %v1842 = vld [vmem:[%s1839 + $0x8] sm:$0xf]
        %v1843 = vld [vmem:[%s1839 + $0xc] sm:$0xf]
        %v1844 = vld [vmem:[%s1839 + $0x10] sm:$0xf]
        %v1845 = vld [vmem:[%s1839 + $0x14] sm:$0xf]
        %v1846 = vld [vmem:[%s1839 + $0x18] sm:$0xf]
        %v1847 = vld [vmem:[%s1839 + $0x1c] sm:$0xf]
        %v1848 = vld [vmem:[%s1839 + $0x20] sm:$0xf]
        %v1849 = vld [vmem:[%s1839 + $0x24] sm:$0xf]
        %v1850 = vld [vmem:[%s1839 + $0x28] sm:$0xf]
        %v1851 = vld [vmem:[%s1839 + $0x2c] sm:$0xf]
        %v1852 = vld [vmem:[%s1839 + $0x30] sm:$0xf]
        %v1853 = vld [vmem:[%s1839 + $0x34] sm:$0xf]
        %v1854 = vld [vmem:[%s1839 + $0x38] sm:$0xf]
        %v1855 = vld [vmem:[%s1839 + $0x3c] sm:$0xf]
        %v1872 = vunpack.c.l.b16 %v1840
        %v1873 = vunpack.c.l.b16 %v1841
        %v1874 = vunpack.c.l.b16 %v1842
        %v1875 = vunpack.c.l.b16 %v1843
        %v1876 = vunpack.c.l.b16 %v1844
        %v1877 = vunpack.c.l.b16 %v1845
        %v1878 = vunpack.c.l.b16 %v1846
        %v1879 = vunpack.c.l.b16 %v1847
        %v1880 = vunpack.c.l.b16 %v1848
        %v1881 = vunpack.c.l.b16 %v1849
        %v1882 = vunpack.c.l.b16 %v1850
        %v1883 = vunpack.c.l.b16 %v1851
        %v1884 = vunpack.c.l.b16 %v1852
        %v1885 = vunpack.c.l.b16 %v1853
        %v1886 = vunpack.c.l.b16 %v1854
        %v1887 = vunpack.c.l.b16 %v1855
        %v1888 = vpack.c.b16 %v1873, %v1872
        %v1889 = vpack.c.b16 %v1875, %v1874
        %v1890 = vpack.c.b16 %v1877, %v1876
        %v1891 = vpack.c.b16 %v1879, %v1878
        %v1892 = vpack.c.b16 %v1881, %v1880
        %v1893 = vpack.c.b16 %v1883, %v1882
        %v1894 = vpack.c.b16 %v1885, %v1884
        %v1895 = vpack.c.b16 %v1887, %v1886
        %1904 = vmatprep.subr.bf16.mxu0 0
        %1905 = vmatpush1.bf16.msra.mxu0 %v1888
        %1906 = vmatprep.subr.bf16.mxu0 0
        %1907 = vmatpush1.bf16.msra.mxu0 %v1889
        %1908 = vmatprep.subr.bf16.mxu0 0
        %1909 = vmatpush1.bf16.msra.mxu0 %v1890
        %1910 = vmatprep.subr.bf16.mxu0 0
        %1911 = vmatpush1.bf16.msra.mxu0 %v1891
        %1912 = vmatprep.subr.bf16.mxu0 0
        %1913 = vmatpush1.bf16.msra.mxu0 %v1892
        %1914 = vmatprep.subr.bf16.mxu0 0
        %1915 = vmatpush1.bf16.msra.mxu0 %v1893
        %1916 = vmatprep.subr.bf16.mxu0 0
        %1917 = vmatpush1.bf16.msra.mxu0 %v1894
        %1918 = vmatprep.subr.bf16.mxu0 0
        %1919 = vmatpush1.bf16.msra.mxu0 %v1895
        %1920 = vmatprep.subr.bf16.mxu0 0
        %1921 = vmatpush1.bf16.msra.mxu0 0
        %1922 = vmatprep.subr.bf16.mxu0 0
        %1923 = vmatpush1.bf16.msra.mxu0 0
        %1924 = vmatprep.subr.bf16.mxu0 0
        %1925 = vmatpush1.bf16.msra.mxu0 0
        %1926 = vmatprep.subr.bf16.mxu0 0
        %1927 = vmatpush1.bf16.msra.mxu0 0
        %1928 = vmatprep.subr.bf16.mxu0 0
        %1929 = vmatpush1.bf16.msra.mxu0 0
        %1930 = vmatprep.subr.bf16.mxu0 0
        %1931 = vmatpush1.bf16.msra.mxu0 0
        %1932 = vmatprep.subr.bf16.mxu0 0
        %1933 = vmatpush1.bf16.msra.mxu0 0
        %1934 = vmatprep.subr.bf16.mxu0 0
        %1935 = vmatpush1.bf16.msra.mxu0 0
        %1936 = vmatprep.mubr.bf16.mxu0 0
        %1937 = vmatmul.mubr.bf16.gmra.mrb[0].mxu0 %v1146
        %v1938 = vpop.f32.mrb[0].mxu0
        %v1939 = vadd.f32 0.0, %v1938
        %v1940 = vpop.f32.mrb[0].mxu0
        %v1941 = vpop.f32.mrb[0].mxu0
        %v1942 = vadd.f32 0.0, %v1941
        %v1943 = vpop.f32.mrb[0].mxu0
        %1944 = vmatprep.mubr.bf16.mxu0 0
        %1945 = vmatmul.mubr.bf16.gmra.mrb[0].mxu0 %v1154
        %v1946 = vpop.f32.mrb[0].mxu0
        %v1947 = vadd.f32 0.0, %v1946
        %v1948 = vpop.f32.mrb[0].mxu0
        %v1949 = vpop.f32.mrb[0].mxu0
        %v1950 = vadd.f32 0.0, %v1949
        %v1951 = vpop.f32.mrb[0].mxu0
        %1952 = vmatprep.mubr.bf16.mxu0 0
        %1953 = vmatmul.mubr.bf16.gmra.mrb[0].mxu0 %v1166
        %v1954 = vpop.f32.mrb[0].mxu0
        %v1955 = vadd.f32 0.0, %v1954
        %v1956 = vpop.f32.mrb[0].mxu0
        %v1957 = vpop.f32.mrb[0].mxu0
        %v1958 = vadd.f32 0.0, %v1957
        %v1959 = vpop.f32.mrb[0].mxu0
        %1960 = vmatprep.mubr.bf16.mxu0 0
        %1961 = vmatmul.mubr.bf16.gmra.mrb[0].mxu0 %v1174
        %v1962 = vpop.f32.mrb[0].mxu0
        %v1963 = vadd.f32 0.0, %v1962
        %v1964 = vpop.f32.mrb[0].mxu0
        %v1965 = vpop.f32.mrb[0].mxu0
        %v1966 = vadd.f32 0.0, %v1965
        %v1967 = vpop.f32.mrb[0].mxu0
        %1968 = vmatprep.mubr.bf16.mxu0 0
        %1969 = vmatmul.mubr.bf16.gmra.mrb[0].mxu0 %v1186
        %v1970 = vpop.f32.mrb[0].mxu0
        %v1971 = vadd.f32 0.0, %v1970
        %v1972 = vpop.f32.mrb[0].mxu0
        %v1973 = vpop.f32.mrb[0].mxu0
        %v1974 = vadd.f32 0.0, %v1973
        %v1975 = vpop.f32.mrb[0].mxu0
        %1976 = vmatprep.mubr.bf16.mxu0 0
        %1977 = vmatmul.mubr.bf16.gmra.mrb[0].mxu0 %v1194
        %v1978 = vpop.f32.mrb[0].mxu0
        %v1979 = vadd.f32 0.0, %v1978
        %v1980 = vpop.f32.mrb[0].mxu0
        %v1981 = vpop.f32.mrb[0].mxu0
        %v1982 = vadd.f32 0.0, %v1981
        %v1983 = vpop.f32.mrb[0].mxu0
        %1984 = vmatprep.mubr.bf16.mxu0 0
        %1985 = vmatmul.mubr.bf16.gmra.mrb[0].mxu0 %v1206
        %v1986 = vpop.f32.mrb[0].mxu0
        %v1987 = vadd.f32 0.0, %v1986
        %v1988 = vpop.f32.mrb[0].mxu0
        %v1989 = vpop.f32.mrb[0].mxu0
        %v1990 = vadd.f32 0.0, %v1989
        %v1991 = vpop.f32.mrb[0].mxu0
        %1992 = vmatprep.mubr.bf16.mxu0 0
        %1993 = vmatmul.mubr.bf16.gmra.mrb[0].mxu0 %v1214
        %v1994 = vpop.f32.mrb[0].mxu0
        %v1995 = vadd.f32 0.0, %v1994
        %v1996 = vpop.f32.mrb[0].mxu0
        %v1997 = vpop.f32.mrb[0].mxu0
        %v1998 = vadd.f32 0.0, %v1997
        %v1999 = vpop.f32.mrb[0].mxu0
        %2000 = vmatprep.mubr.bf16.mxu0 0
        %2001 = vmatmul.mubr.bf16.gmra.mrb[0].mxu0 %v1226
        %v2002 = vpop.f32.mrb[0].mxu0
        %v2003 = vadd.f32 0.0, %v2002
        %v2004 = vpop.f32.mrb[0].mxu0
        %v2005 = vpop.f32.mrb[0].mxu0
        %v2006 = vadd.f32 0.0, %v2005
        %v2007 = vpop.f32.mrb[0].mxu0
        %2008 = vmatprep.mubr.bf16.mxu0 0
        %2009 = vmatmul.mubr.bf16.gmra.mrb[0].mxu0 %v1234
        %v2010 = vpop.f32.mrb[0].mxu0
        %v2011 = vadd.f32 0.0, %v2010
        %v2012 = vpop.f32.mrb[0].mxu0
        %v2013 = vpop.f32.mrb[0].mxu0
        %v2014 = vadd.f32 0.0, %v2013
        %v2015 = vpop.f32.mrb[0].mxu0
        %2016 = vmatprep.mubr.bf16.mxu0 0
        %2017 = vmatmul.mubr.bf16.gmra.mrb[0].mxu0 %v1246
        %v2018 = vpop.f32.mrb[0].mxu0
        %v2019 = vadd.f32 0.0, %v2018
        %v2020 = vpop.f32.mrb[0].mxu0
        %v2021 = vpop.f32.mrb[0].mxu0
        %v2022 = vadd.f32 0.0, %v2021
        %v2023 = vpop.f32.mrb[0].mxu0
        %2024 = vmatprep.mubr.bf16.mxu0 0
        %2025 = vmatmul.mubr.bf16.gmra.mrb[0].mxu0 %v1254
        %v2026 = vpop.f32.mrb[0].mxu0
        %v2027 = vadd.f32 0.0, %v2026
        %v2028 = vpop.f32.mrb[0].mxu0
        %v2029 = vpop.f32.mrb[0].mxu0
        %v2030 = vadd.f32 0.0, %v2029
        %v2031 = vpop.f32.mrb[0].mxu0
        %2032 = vmatprep.mubr.bf16.mxu0 0
        %2033 = vmatmul.mubr.bf16.gmra.mrb[0].mxu0 %v1266
        %v2034 = vpop.f32.mrb[0].mxu0
        %v2035 = vadd.f32 0.0, %v2034
        %v2036 = vpop.f32.mrb[0].mxu0
        %v2037 = vpop.f32.mrb[0].mxu0
        %v2038 = vadd.f32 0.0, %v2037
        %v2039 = vpop.f32.mrb[0].mxu0
        %2040 = vmatprep.mubr.bf16.mxu0 0
        %2041 = vmatmul.mubr.bf16.gmra.mrb[0].mxu0 %v1274
        %v2042 = vpop.f32.mrb[0].mxu0
        %v2043 = vadd.f32 0.0, %v2042
        %v2044 = vpop.f32.mrb[0].mxu0
        %v2045 = vpop.f32.mrb[0].mxu0
        %v2046 = vadd.f32 0.0, %v2045
        %v2047 = vpop.f32.mrb[0].mxu0
        %2048 = vmatprep.mubr.bf16.mxu0 0
        %2049 = vmatmul.mubr.bf16.gmra.mrb[0].mxu0 %v1286
        %v2050 = vpop.f32.mrb[0].mxu0
        %v2051 = vadd.f32 0.0, %v2050
        %v2052 = vpop.f32.mrb[0].mxu0
        %v2053 = vpop.f32.mrb[0].mxu0
        %v2054 = vadd.f32 0.0, %v2053
        %v2055 = vpop.f32.mrb[0].mxu0
        %2056 = vmatprep.mubr.bf16.mxu0 0
        %2057 = vmatmul.mubr.bf16.gmra.mrb[0].mxu0 %v1294
        %v2058 = vpop.f32.mrb[0].mxu0
        %v2059 = vadd.f32 0.0, %v2058
        %v2060 = vpop.f32.mrb[0].mxu0
        %v2061 = vpop.f32.mrb[0].mxu0
        %v2062 = vadd.f32 0.0, %v2061
        %v2063 = vpop.f32.mrb[0].mxu0
        %2064 = vmatprep.mubr.bf16.mxu0 0
        %2065 = vmatmul.mubr.bf16.gmra.mrb[0].mxu0 %v1306
        %v2066 = vpop.f32.mrb[0].mxu0
        %v2067 = vadd.f32 0.0, %v2066
        %v2068 = vpop.f32.mrb[0].mxu0
        %v2069 = vpop.f32.mrb[0].mxu0
        %v2070 = vadd.f32 0.0, %v2069
        %v2071 = vpop.f32.mrb[0].mxu0
        %2072 = vmatprep.mubr.bf16.mxu0 0
        %2073 = vmatmul.mubr.bf16.gmra.mrb[0].mxu0 %v1314
        %v2074 = vpop.f32.mrb[0].mxu0
        %v2075 = vadd.f32 0.0, %v2074
        %v2076 = vpop.f32.mrb[0].mxu0
        %v2077 = vpop.f32.mrb[0].mxu0
        %v2078 = vadd.f32 0.0, %v2077
        %v2079 = vpop.f32.mrb[0].mxu0
        %2080 = vmatprep.mubr.bf16.mxu0 0
        %2081 = vmatmul.mubr.bf16.gmra.mrb[0].mxu0 %v1326
        %v2082 = vpop.f32.mrb[0].mxu0
        %v2083 = vadd.f32 0.0, %v2082
        %v2084 = vpop.f32.mrb[0].mxu0
        %v2085 = vpop.f32.mrb[0].mxu0
        %v2086 = vadd.f32 0.0, %v2085
        %v2087 = vpop.f32.mrb[0].mxu0
        %2088 = vmatprep.mubr.bf16.mxu0 0
        %2089 = vmatmul.mubr.bf16.gmra.mrb[0].mxu0 %v1334
        %v2090 = vpop.f32.mrb[0].mxu0
        %v2091 = vadd.f32 0.0, %v2090
        %v2092 = vpop.f32.mrb[0].mxu0
        %v2093 = vpop.f32.mrb[0].mxu0
        %v2094 = vadd.f32 0.0, %v2093
        %v2095 = vpop.f32.mrb[0].mxu0
        %2096 = vmatprep.mubr.bf16.mxu0 0
        %2097 = vmatmul.mubr.bf16.gmra.mrb[0].mxu0 %v1346
        %v2098 = vpop.f32.mrb[0].mxu0
        %v2099 = vadd.f32 0.0, %v2098
        %v2100 = vpop.f32.mrb[0].mxu0
        %v2101 = vpop.f32.mrb[0].mxu0
        %v2102 = vadd.f32 0.0, %v2101
        %v2103 = vpop.f32.mrb[0].mxu0
        %2104 = vmatprep.mubr.bf16.mxu0 0
        %2105 = vmatmul.mubr.bf16.gmra.mrb[0].mxu0 %v1354
        %v2106 = vpop.f32.mrb[0].mxu0
        %v2107 = vadd.f32 0.0, %v2106
        %v2108 = vpop.f32.mrb[0].mxu0
        %v2109 = vpop.f32.mrb[0].mxu0
        %v2110 = vadd.f32 0.0, %v2109
        %v2111 = vpop.f32.mrb[0].mxu0
        %2112 = vmatprep.mubr.bf16.mxu0 0
        %2113 = vmatmul.mubr.bf16.gmra.mrb[0].mxu0 %v1366
        %v2114 = vpop.f32.mrb[0].mxu0
        %v2115 = vadd.f32 0.0, %v2114
        %v2116 = vpop.f32.mrb[0].mxu0
        %v2117 = vpop.f32.mrb[0].mxu0
        %v2118 = vadd.f32 0.0, %v2117
        %v2119 = vpop.f32.mrb[0].mxu0
        %2120 = vmatprep.mubr.bf16.mxu0 0
        %2121 = vmatmul.mubr.bf16.gmra.mrb[0].mxu0 %v1374
        %v2122 = vpop.f32.mrb[0].mxu0
        %v2123 = vadd.f32 0.0, %v2122
        %v2124 = vpop.f32.mrb[0].mxu0
        %v2125 = vpop.f32.mrb[0].mxu0
        %v2126 = vadd.f32 0.0, %v2125
        %v2127 = vpop.f32.mrb[0].mxu0
        %2128 = vmatprep.mubr.bf16.mxu0 0
        %2129 = vmatmul.mubr.bf16.gmra.mrb[0].mxu0 %v1386
        %v2130 = vpop.f32.mrb[0].mxu0
        %v2131 = vadd.f32 0.0, %v2130
        %v2132 = vpop.f32.mrb[0].mxu0
        %v2133 = vpop.f32.mrb[0].mxu0
        %v2134 = vadd.f32 0.0, %v2133
        %v2135 = vpop.f32.mrb[0].mxu0
        %2136 = vmatprep.mubr.bf16.mxu0 0
        %2137 = vmatmul.mubr.bf16.gmra.mrb[0].mxu0 %v1394
        %v2138 = vpop.f32.mrb[0].mxu0
        %v2139 = vadd.f32 0.0, %v2138
        %v2140 = vpop.f32.mrb[0].mxu0
        %v2141 = vpop.f32.mrb[0].mxu0
        %v2142 = vadd.f32 0.0, %v2141
        %v2143 = vpop.f32.mrb[0].mxu0
        %2144 = vmatprep.mubr.bf16.mxu0 0
        %2145 = vmatmul.mubr.bf16.gmra.mrb[0].mxu0 %v1406
        %v2146 = vpop.f32.mrb[0].mxu0
        %v2147 = vadd.f32 0.0, %v2146
        %v2148 = vpop.f32.mrb[0].mxu0
        %v2149 = vpop.f32.mrb[0].mxu0
        %v2150 = vadd.f32 0.0, %v2149
        %v2151 = vpop.f32.mrb[0].mxu0
        %2152 = vmatprep.mubr.bf16.mxu0 0
        %2153 = vmatmul.mubr.bf16.gmra.mrb[0].mxu0 %v1414
        %v2154 = vpop.f32.mrb[0].mxu0
        %v2155 = vadd.f32 0.0, %v2154
        %v2156 = vpop.f32.mrb[0].mxu0
        %v2157 = vpop.f32.mrb[0].mxu0
        %v2158 = vadd.f32 0.0, %v2157
        %v2159 = vpop.f32.mrb[0].mxu0
        %2160 = vmatprep.mubr.bf16.mxu0 0
        %2161 = vmatmul.mubr.bf16.gmra.mrb[0].mxu0 %v1426
        %v2162 = vpop.f32.mrb[0].mxu0
        %v2163 = vadd.f32 0.0, %v2162
        %v2164 = vpop.f32.mrb[0].mxu0
        %v2165 = vpop.f32.mrb[0].mxu0
        %v2166 = vadd.f32 0.0, %v2165
        %v2167 = vpop.f32.mrb[0].mxu0
        %2168 = vmatprep.mubr.bf16.mxu0 0
        %2169 = vmatmul.mubr.bf16.gmra.mrb[0].mxu0 %v1434
        %v2170 = vpop.f32.mrb[0].mxu0
        %v2171 = vadd.f32 0.0, %v2170
        %v2172 = vpop.f32.mrb[0].mxu0
        %v2173 = vpop.f32.mrb[0].mxu0
        %v2174 = vadd.f32 0.0, %v2173
        %v2175 = vpop.f32.mrb[0].mxu0
        %2176 = vmatprep.mubr.bf16.mxu0 0
        %2177 = vmatmul.mubr.bf16.gmra.mrb[0].mxu0 %v1446
        %v2178 = vpop.f32.mrb[0].mxu0
        %v2179 = vadd.f32 0.0, %v2178
        %v2180 = vpop.f32.mrb[0].mxu0
        %v2181 = vpop.f32.mrb[0].mxu0
        %v2182 = vadd.f32 0.0, %v2181
        %v2183 = vpop.f32.mrb[0].mxu0
        %2184 = vmatprep.mubr.bf16.mxu0 0
        %2185 = vmatmul.mubr.bf16.gmra.mrb[0].mxu0 %v1454
        %v2186 = vpop.f32.mrb[0].mxu0
        %v2187 = vadd.f32 0.0, %v2186
        %v2188 = vpop.f32.mrb[0].mxu0
        %v2189 = vpop.f32.mrb[0].mxu0
        %v2190 = vadd.f32 0.0, %v2189
        %v2191 = vpop.f32.mrb[0].mxu0
        %2192 = vmatprep.mubr.bf16.mxu0 0
        %2193 = vmatmul.mubr.bf16.gmra.mrb[0].mxu0 %v1466
        %v2194 = vpop.f32.mrb[0].mxu0
        %v2195 = vadd.f32 0.0, %v2194
        %v2196 = vpop.f32.mrb[0].mxu0
        %v2197 = vpop.f32.mrb[0].mxu0
        %v2198 = vadd.f32 0.0, %v2197
        %v2199 = vpop.f32.mrb[0].mxu0
        %2200 = vmatprep.mubr.bf16.mxu0 0
        %2201 = vmatmul.mubr.bf16.gmra.mrb[0].mxu0 %v1474
        %v2202 = vpop.f32.mrb[0].mxu0
        %v2203 = vadd.f32 0.0, %v2202
        %v2204 = vpop.f32.mrb[0].mxu0
        %v2205 = vpop.f32.mrb[0].mxu0
        %v2206 = vadd.f32 0.0, %v2205
        %v2207 = vpop.f32.mrb[0].mxu0
        %2208 = vmatprep.mubr.bf16.mxu0 0
        %2209 = vmatmul.mubr.bf16.gmra.mrb[0].mxu0 %v1486
        %v2210 = vpop.f32.mrb[0].mxu0
        %v2211 = vadd.f32 0.0, %v2210
        %v2212 = vpop.f32.mrb[0].mxu0
        %v2213 = vpop.f32.mrb[0].mxu0
        %v2214 = vadd.f32 0.0, %v2213
        %v2215 = vpop.f32.mrb[0].mxu0
        %2216 = vmatprep.mubr.bf16.mxu0 0
        %2217 = vmatmul.mubr.bf16.gmra.mrb[0].mxu0 %v1494
        %v2218 = vpop.f32.mrb[0].mxu0
        %v2219 = vadd.f32 0.0, %v2218
        %v2220 = vpop.f32.mrb[0].mxu0
        %v2221 = vpop.f32.mrb[0].mxu0
        %v2222 = vadd.f32 0.0, %v2221
        %v2223 = vpop.f32.mrb[0].mxu0
        %2224 = vmatprep.mubr.bf16.mxu0 0
        %2225 = vmatmul.mubr.bf16.gmra.mrb[0].mxu0 %v1506
        %v2226 = vpop.f32.mrb[0].mxu0
        %v2227 = vadd.f32 0.0, %v2226
        %v2228 = vpop.f32.mrb[0].mxu0
        %v2229 = vpop.f32.mrb[0].mxu0
        %v2230 = vadd.f32 0.0, %v2229
        %v2231 = vpop.f32.mrb[0].mxu0
        %2232 = vmatprep.mubr.bf16.mxu0 0
        %2233 = vmatmul.mubr.bf16.gmra.mrb[0].mxu0 %v1514
        %v2234 = vpop.f32.mrb[0].mxu0
        %v2235 = vadd.f32 0.0, %v2234
        %v2236 = vpop.f32.mrb[0].mxu0
        %v2237 = vpop.f32.mrb[0].mxu0
        %v2238 = vadd.f32 0.0, %v2237
        %v2239 = vpop.f32.mrb[0].mxu0
        %2240 = vmatprep.mubr.bf16.mxu0 0
        %2241 = vmatmul.mubr.bf16.gmra.mrb[0].mxu0 %v1526
        %v2242 = vpop.f32.mrb[0].mxu0
        %v2243 = vadd.f32 0.0, %v2242
        %v2244 = vpop.f32.mrb[0].mxu0
        %v2245 = vpop.f32.mrb[0].mxu0
        %v2246 = vadd.f32 0.0, %v2245
        %v2247 = vpop.f32.mrb[0].mxu0
        %2248 = vmatprep.mubr.bf16.mxu0 0
        %2249 = vmatmul.mubr.bf16.gmra.mrb[0].mxu0 %v1534
        %v2250 = vpop.f32.mrb[0].mxu0
        %v2251 = vadd.f32 0.0, %v2250
        %v2252 = vpop.f32.mrb[0].mxu0
        %v2253 = vpop.f32.mrb[0].mxu0
        %v2254 = vadd.f32 0.0, %v2253
        %v2255 = vpop.f32.mrb[0].mxu0
        %2256 = vmatprep.mubr.bf16.mxu0 0
        %2257 = vmatmul.mubr.bf16.gmra.mrb[0].mxu0 %v1546
        %v2258 = vpop.f32.mrb[0].mxu0
        %v2259 = vadd.f32 0.0, %v2258
        %v2260 = vpop.f32.mrb[0].mxu0
        %v2261 = vpop.f32.mrb[0].mxu0
        %v2262 = vadd.f32 0.0, %v2261
        %v2263 = vpop.f32.mrb[0].mxu0
        %2264 = vmatprep.mubr.bf16.mxu0 0
        %2265 = vmatmul.mubr.bf16.gmra.mrb[0].mxu0 %v1554
        %v2266 = vpop.f32.mrb[0].mxu0
        %v2267 = vadd.f32 0.0, %v2266
        %v2268 = vpop.f32.mrb[0].mxu0
        %v2269 = vpop.f32.mrb[0].mxu0
        %v2270 = vadd.f32 0.0, %v2269
        %v2271 = vpop.f32.mrb[0].mxu0
        %2272 = vmatprep.mubr.bf16.mxu0 0
        %2273 = vmatmul.mubr.bf16.gmra.mrb[0].mxu0 %v1566
        %v2274 = vpop.f32.mrb[0].mxu0
        %v2275 = vadd.f32 0.0, %v2274
        %v2276 = vpop.f32.mrb[0].mxu0
        %v2277 = vpop.f32.mrb[0].mxu0
        %v2278 = vadd.f32 0.0, %v2277
        %v2279 = vpop.f32.mrb[0].mxu0
        %2280 = vmatprep.mubr.bf16.mxu0 0
        %2281 = vmatmul.mubr.bf16.gmra.mrb[0].mxu0 %v1574
        %v2282 = vpop.f32.mrb[0].mxu0
        %v2283 = vadd.f32 0.0, %v2282
        %v2284 = vpop.f32.mrb[0].mxu0
        %v2285 = vpop.f32.mrb[0].mxu0
        %v2286 = vadd.f32 0.0, %v2285
        %v2287 = vpop.f32.mrb[0].mxu0
        %2288 = vmatprep.mubr.bf16.mxu0 0
        %2289 = vmatmul.mubr.bf16.gmra.mrb[0].mxu0 %v1586
        %v2290 = vpop.f32.mrb[0].mxu0
        %v2291 = vadd.f32 0.0, %v2290
        %v2292 = vpop.f32.mrb[0].mxu0
        %v2293 = vpop.f32.mrb[0].mxu0
        %v2294 = vadd.f32 0.0, %v2293
        %v2295 = vpop.f32.mrb[0].mxu0
        %2296 = vmatprep.mubr.bf16.mxu0 0
        %2297 = vmatmul.mubr.bf16.gmra.mrb[0].mxu0 %v1594
        %v2298 = vpop.f32.mrb[0].mxu0
        %v2299 = vadd.f32 0.0, %v2298
        %v2300 = vpop.f32.mrb[0].mxu0
        %v2301 = vpop.f32.mrb[0].mxu0
        %v2302 = vadd.f32 0.0, %v2301
        %v2303 = vpop.f32.mrb[0].mxu0
        %2304 = vmatprep.mubr.bf16.mxu0 0
        %2305 = vmatmul.mubr.bf16.gmra.mrb[0].mxu0 %v1606
        %v2306 = vpop.f32.mrb[0].mxu0
        %v2307 = vadd.f32 0.0, %v2306
        %v2308 = vpop.f32.mrb[0].mxu0
        %v2309 = vpop.f32.mrb[0].mxu0
        %v2310 = vadd.f32 0.0, %v2309
        %v2311 = vpop.f32.mrb[0].mxu0
        %2312 = vmatprep.mubr.bf16.mxu0 0
        %2313 = vmatmul.mubr.bf16.gmra.mrb[0].mxu0 %v1614
        %v2314 = vpop.f32.mrb[0].mxu0
        %v2315 = vadd.f32 0.0, %v2314
        %v2316 = vpop.f32.mrb[0].mxu0
        %v2317 = vpop.f32.mrb[0].mxu0
        %v2318 = vadd.f32 0.0, %v2317
        %v2319 = vpop.f32.mrb[0].mxu0
        %2320 = vmatprep.mubr.bf16.mxu0 0
        %2321 = vmatmul.mubr.bf16.gmra.mrb[0].mxu0 %v1626
        %v2322 = vpop.f32.mrb[0].mxu0
        %v2323 = vadd.f32 0.0, %v2322
        %v2324 = vpop.f32.mrb[0].mxu0
        %v2325 = vpop.f32.mrb[0].mxu0
        %v2326 = vadd.f32 0.0, %v2325
        %v2327 = vpop.f32.mrb[0].mxu0
        %2328 = vmatprep.mubr.bf16.mxu0 0
        %2329 = vmatmul.mubr.bf16.gmra.mrb[0].mxu0 %v1634
        %v2330 = vpop.f32.mrb[0].mxu0
        %v2331 = vadd.f32 0.0, %v2330
        %v2332 = vpop.f32.mrb[0].mxu0
        %v2333 = vpop.f32.mrb[0].mxu0
        %v2334 = vadd.f32 0.0, %v2333
        %v2335 = vpop.f32.mrb[0].mxu0
        %2336 = vmatprep.mubr.bf16.mxu0 0
        %2337 = vmatmul.mubr.bf16.gmra.mrb[0].mxu0 %v1646
        %v2338 = vpop.f32.mrb[0].mxu0
        %v2339 = vadd.f32 0.0, %v2338
        %v2340 = vpop.f32.mrb[0].mxu0
        %v2341 = vpop.f32.mrb[0].mxu0
        %v2342 = vadd.f32 0.0, %v2341
        %v2343 = vpop.f32.mrb[0].mxu0
        %2344 = vmatprep.mubr.bf16.mxu0 0
        %2345 = vmatmul.mubr.bf16.gmra.mrb[0].mxu0 %v1654
        %v2346 = vpop.f32.mrb[0].mxu0
        %v2347 = vadd.f32 0.0, %v2346
        %v2348 = vpop.f32.mrb[0].mxu0
        %v2349 = vpop.f32.mrb[0].mxu0
        %v2350 = vadd.f32 0.0, %v2349
        %v2351 = vpop.f32.mrb[0].mxu0
        %2352 = vmatprep.mubr.bf16.mxu0 0
        %2353 = vmatmul.mubr.bf16.gmra.mrb[0].mxu0 %v1666
        %v2354 = vpop.f32.mrb[0].mxu0
        %v2355 = vadd.f32 0.0, %v2354
        %v2356 = vpop.f32.mrb[0].mxu0
        %v2357 = vpop.f32.mrb[0].mxu0
        %v2358 = vadd.f32 0.0, %v2357
        %v2359 = vpop.f32.mrb[0].mxu0
        %2360 = vmatprep.mubr.bf16.mxu0 0
        %2361 = vmatmul.mubr.bf16.gmra.mrb[0].mxu0 %v1674
        %v2362 = vpop.f32.mrb[0].mxu0
        %v2363 = vadd.f32 0.0, %v2362
        %v2364 = vpop.f32.mrb[0].mxu0
        %v2365 = vpop.f32.mrb[0].mxu0
        %v2366 = vadd.f32 0.0, %v2365
        %v2367 = vpop.f32.mrb[0].mxu0
        %2368 = vmatprep.mubr.bf16.mxu0 0
        %2369 = vmatmul.mubr.bf16.gmra.mrb[0].mxu0 %v1686
        %v2370 = vpop.f32.mrb[0].mxu0
        %v2371 = vadd.f32 0.0, %v2370
        %v2372 = vpop.f32.mrb[0].mxu0
        %v2373 = vpop.f32.mrb[0].mxu0
        %v2374 = vadd.f32 0.0, %v2373
        %v2375 = vpop.f32.mrb[0].mxu0
        %2376 = vmatprep.mubr.bf16.mxu0 0
        %2377 = vmatmul.mubr.bf16.gmra.mrb[0].mxu0 %v1694
        %v2378 = vpop.f32.mrb[0].mxu0
        %v2379 = vadd.f32 0.0, %v2378
        %v2380 = vpop.f32.mrb[0].mxu0
        %v2381 = vpop.f32.mrb[0].mxu0
        %v2382 = vadd.f32 0.0, %v2381
        %v2383 = vpop.f32.mrb[0].mxu0
        %2384 = vmatprep.mubr.bf16.mxu0 0
        %2385 = vmatmul.mubr.bf16.gmra.mrb[0].mxu0 %v1706
        %v2386 = vpop.f32.mrb[0].mxu0
        %v2387 = vadd.f32 0.0, %v2386
        %v2388 = vpop.f32.mrb[0].mxu0
        %v2389 = vpop.f32.mrb[0].mxu0
        %v2390 = vadd.f32 0.0, %v2389
        %v2391 = vpop.f32.mrb[0].mxu0
        %2392 = vmatprep.mubr.bf16.mxu0 0
        %2393 = vmatmul.mubr.bf16.gmra.mrb[0].mxu0 %v1714
        %v2394 = vpop.f32.mrb[0].mxu0
        %v2395 = vadd.f32 0.0, %v2394
        %v2396 = vpop.f32.mrb[0].mxu0
        %v2397 = vpop.f32.mrb[0].mxu0
        %v2398 = vadd.f32 0.0, %v2397
        %v2399 = vpop.f32.mrb[0].mxu0
        %2400 = vmatprep.mubr.bf16.mxu0 0
        %2401 = vmatmul.mubr.bf16.gmra.mrb[0].mxu0 %v1726
        %v2402 = vpop.f32.mrb[0].mxu0
        %v2403 = vadd.f32 0.0, %v2402
        %v2404 = vpop.f32.mrb[0].mxu0
        %v2405 = vpop.f32.mrb[0].mxu0
        %v2406 = vadd.f32 0.0, %v2405
        %v2407 = vpop.f32.mrb[0].mxu0
        %2408 = vmatprep.mubr.bf16.mxu0 0
        %2409 = vmatmul.mubr.bf16.gmra.mrb[0].mxu0 %v1734
        %v2410 = vpop.f32.mrb[0].mxu0
        %v2411 = vadd.f32 0.0, %v2410
        %v2412 = vpop.f32.mrb[0].mxu0
        %v2413 = vpop.f32.mrb[0].mxu0
        %v2414 = vadd.f32 0.0, %v2413
        %v2415 = vpop.f32.mrb[0].mxu0
        %2416 = vmatprep.mubr.bf16.mxu0 0
        %2417 = vmatmul.mubr.bf16.gmra.mrb[0].mxu0 %v1746
        %v2418 = vpop.f32.mrb[0].mxu0
        %v2419 = vadd.f32 0.0, %v2418
        %v2420 = vpop.f32.mrb[0].mxu0
        %v2421 = vpop.f32.mrb[0].mxu0
        %v2422 = vadd.f32 0.0, %v2421
        %v2423 = vpop.f32.mrb[0].mxu0
        %2424 = vmatprep.mubr.bf16.mxu0 0
        %2425 = vmatmul.mubr.bf16.gmra.mrb[0].mxu0 %v1754
        %v2426 = vpop.f32.mrb[0].mxu0
        %v2427 = vadd.f32 0.0, %v2426
        %v2428 = vpop.f32.mrb[0].mxu0
        %v2429 = vpop.f32.mrb[0].mxu0
        %v2430 = vadd.f32 0.0, %v2429
        %v2431 = vpop.f32.mrb[0].mxu0
        %2432 = vmatprep.mubr.bf16.mxu0 0
        %2433 = vmatmul.mubr.bf16.gmra.mrb[0].mxu0 %v1766
        %v2434 = vpop.f32.mrb[0].mxu0
        %v2435 = vadd.f32 0.0, %v2434
        %v2436 = vpop.f32.mrb[0].mxu0
        %v2437 = vpop.f32.mrb[0].mxu0
        %v2438 = vadd.f32 0.0, %v2437
        %v2439 = vpop.f32.mrb[0].mxu0
        %2440 = vmatprep.mubr.bf16.mxu0 0
        %2441 = vmatmul.mubr.bf16.gmra.mrb[0].mxu0 %v1774
        %v2442 = vpop.f32.mrb[0].mxu0
        %v2443 = vadd.f32 0.0, %v2442
        %v2444 = vpop.f32.mrb[0].mxu0
        %v2445 = vpop.f32.mrb[0].mxu0
        %v2446 = vadd.f32 0.0, %v2445
        %v2447 = vpop.f32.mrb[0].mxu0
        %2448 = vdwg.mxu0
        %v2465 = vunpack.c.l.b16 %v1118
        %v2466 = vunpack.c.l.b16 %v1119
        %v2467 = vunpack.c.l.b16 %v1120
        %v2468 = vunpack.c.l.b16 %v1121
        %v2469 = vunpack.c.l.b16 %v1122
        %v2470 = vunpack.c.l.b16 %v1123
        %v2471 = vunpack.c.l.b16 %v1124
        %v2472 = vunpack.c.l.b16 %v1125
        %v2473 = vunpack.c.l.b16 %v1126
        %v2474 = vunpack.c.l.b16 %v1127
        %v2475 = vunpack.c.l.b16 %v1128
        %v2476 = vunpack.c.l.b16 %v1129
        %v2477 = vunpack.c.l.b16 %v1130
        %v2478 = vunpack.c.l.b16 %v1131
        %v2479 = vunpack.c.l.b16 %v1132
        %v2480 = vunpack.c.l.b16 %v1133
        %v2481 = vpack.c.b16 %v2466, %v2465
        %v2482 = vpack.c.b16 %v2468, %v2467
        %v2483 = vpack.c.b16 %v2470, %v2469
        %v2484 = vpack.c.b16 %v2472, %v2471
        %v2485 = vpack.c.b16 %v2474, %v2473
        %v2486 = vpack.c.b16 %v2476, %v2475
        %v2487 = vpack.c.b16 %v2478, %v2477
        %v2488 = vpack.c.b16 %v2480, %v2479
        %2497 = vmatprep.subr.bf16.mxu0 0
        %2498 = vmatpush1.bf16.msra.mxu0 %v2481
        %2499 = vmatprep.subr.bf16.mxu0 0
        %2500 = vmatpush1.bf16.msra.mxu0 %v2482
        %2501 = vmatprep.subr.bf16.mxu0 0
        %2502 = vmatpush1.bf16.msra.mxu0 %v2483
        %2503 = vmatprep.subr.bf16.mxu0 0
        %2504 = vmatpush1.bf16.msra.mxu0 %v2484
        %2505 = vmatprep.subr.bf16.mxu0 0
        %2506 = vmatpush1.bf16.msra.mxu0 %v2485
        %2507 = vmatprep.subr.bf16.mxu0 0
        %2508 = vmatpush1.bf16.msra.mxu0 %v2486
        %2509 = vmatprep.subr.bf16.mxu0 0
        %2510 = vmatpush1.bf16.msra.mxu0 %v2487
        %2511 = vmatprep.subr.bf16.mxu0 0
        %2512 = vmatpush1.bf16.msra.mxu0 %v2488
        %2513 = vmatprep.subr.bf16.mxu0 0
        %2514 = vmatpush1.bf16.msra.mxu0 0
        %2515 = vmatprep.subr.bf16.mxu0 0
        %2516 = vmatpush1.bf16.msra.mxu0 0
        %2517 = vmatprep.subr.bf16.mxu0 0
        %2518 = vmatpush1.bf16.msra.mxu0 0
        %2519 = vmatprep.subr.bf16.mxu0 0
        %2520 = vmatpush1.bf16.msra.mxu0 0
        %2521 = vmatprep.subr.bf16.mxu0 0
        %2522 = vmatpush1.bf16.msra.mxu0 0
        %2523 = vmatprep.subr.bf16.mxu0 0
        %2524 = vmatpush1.bf16.msra.mxu0 0
        %2525 = vmatprep.subr.bf16.mxu0 0
        %2526 = vmatpush1.bf16.msra.mxu0 0
        %2527 = vmatprep.subr.bf16.mxu0 0
        %2528 = vmatpush1.bf16.msra.mxu0 0
        %2529 = vmatprep.mubr.bf16.mxu0 0
        %2530 = vmatmul.mubr.bf16.gmra.mrb[0].mxu0 %v1052
        %v2531 = vpop.f32.mrb[0].mxu0
        %v2532 = vadd.f32 %v1939, %v2531
        %v2533 = vpop.f32.mrb[0].mxu0
        %v2534 = vpop.f32.mrb[0].mxu0
        %v2535 = vadd.f32 %v1942, %v2534
        %v2536 = vpop.f32.mrb[0].mxu0
        %2537 = vmatprep.mubr.bf16.mxu0 0
        %2538 = vmatmul.mubr.bf16.gmra.mrb[0].mxu0 %v470
        %v2539 = vpop.f32.mrb[0].mxu0
        %v2540 = vadd.f32 %v1947, %v2539
        %v2541 = vpop.f32.mrb[0].mxu0
        %v2542 = vpop.f32.mrb[0].mxu0
        %v2543 = vadd.f32 %v1950, %v2542
        %v2544 = vpop.f32.mrb[0].mxu0
        %2545 = vmatprep.mubr.bf16.mxu0 0
        %2546 = vmatmul.mubr.bf16.gmra.mrb[0].mxu0 %v1053
        %v2547 = vpop.f32.mrb[0].mxu0
        %v2548 = vadd.f32 %v1955, %v2547
        %v2549 = vpop.f32.mrb[0].mxu0
        %v2550 = vpop.f32.mrb[0].mxu0
        %v2551 = vadd.f32 %v1958, %v2550
        %v2552 = vpop.f32.mrb[0].mxu0
        %2553 = vmatprep.mubr.bf16.mxu0 0
        %2554 = vmatmul.mubr.bf16.gmra.mrb[0].mxu0 %v485
        %v2555 = vpop.f32.mrb[0].mxu0
        %v2556 = vadd.f32 %v1963, %v2555
        %v2557 = vpop.f32.mrb[0].mxu0
        %v2558 = vpop.f32.mrb[0].mxu0
        %v2559 = vadd.f32 %v1966, %v2558
        %v2560 = vpop.f32.mrb[0].mxu0
        %2561 = vmatprep.mubr.bf16.mxu0 0
        %2562 = vmatmul.mubr.bf16.gmra.mrb[0].mxu0 %v1054
        %v2563 = vpop.f32.mrb[0].mxu0
        %v2564 = vadd.f32 %v1971, %v2563
        %v2565 = vpop.f32.mrb[0].mxu0
        %v2566 = vpop.f32.mrb[0].mxu0
        %v2567 = vadd.f32 %v1974, %v2566
        %v2568 = vpop.f32.mrb[0].mxu0
        %2569 = vmatprep.mubr.bf16.mxu0 0
        %2570 = vmatmul.mubr.bf16.gmra.mrb[0].mxu0 %v500
        %v2571 = vpop.f32.mrb[0].mxu0
        %v2572 = vadd.f32 %v1979, %v2571
        %v2573 = vpop.f32.mrb[0].mxu0
        %v2574 = vpop.f32.mrb[0].mxu0
        %v2575 = vadd.f32 %v1982, %v2574
        %v2576 = vpop.f32.mrb[0].mxu0
        %2577 = vmatprep.mubr.bf16.mxu0 0
        %2578 = vmatmul.mubr.bf16.gmra.mrb[0].mxu0 %v1055
        %v2579 = vpop.f32.mrb[0].mxu0
        %v2580 = vadd.f32 %v1987, %v2579
        %v2581 = vpop.f32.mrb[0].mxu0
        %v2582 = vpop.f32.mrb[0].mxu0
        %v2583 = vadd.f32 %v1990, %v2582
        %v2584 = vpop.f32.mrb[0].mxu0
        %2585 = vmatprep.mubr.bf16.mxu0 0
        %2586 = vmatmul.mubr.bf16.gmra.mrb[0].mxu0 %v515
        %v2587 = vpop.f32.mrb[0].mxu0
        %v2588 = vadd.f32 %v1995, %v2587
        %v2589 = vpop.f32.mrb[0].mxu0
        %v2590 = vpop.f32.mrb[0].mxu0
        %v2591 = vadd.f32 %v1998, %v2590
        %v2592 = vpop.f32.mrb[0].mxu0
        %2593 = vmatprep.mubr.bf16.mxu0 0
        %2594 = vmatmul.mubr.bf16.gmra.mrb[0].mxu0 %v1056
        %v2595 = vpop.f32.mrb[0].mxu0
        %v2596 = vadd.f32 %v2003, %v2595
        %v2597 = vpop.f32.mrb[0].mxu0
        %v2598 = vpop.f32.mrb[0].mxu0
        %v2599 = vadd.f32 %v2006, %v2598
        %v2600 = vpop.f32.mrb[0].mxu0
        %2601 = vmatprep.mubr.bf16.mxu0 0
        %2602 = vmatmul.mubr.bf16.gmra.mrb[0].mxu0 %v530
        %v2603 = vpop.f32.mrb[0].mxu0
        %v2604 = vadd.f32 %v2011, %v2603
        %v2605 = vpop.f32.mrb[0].mxu0
        %v2606 = vpop.f32.mrb[0].mxu0
        %v2607 = vadd.f32 %v2014, %v2606
        %v2608 = vpop.f32.mrb[0].mxu0
        %2609 = vmatprep.mubr.bf16.mxu0 0
        %2610 = vmatmul.mubr.bf16.gmra.mrb[0].mxu0 %v1057
        %v2611 = vpop.f32.mrb[0].mxu0
        %v2612 = vadd.f32 %v2019, %v2611
        %v2613 = vpop.f32.mrb[0].mxu0
        %v2614 = vpop.f32.mrb[0].mxu0
        %v2615 = vadd.f32 %v2022, %v2614
        %v2616 = vpop.f32.mrb[0].mxu0
        %2617 = vmatprep.mubr.bf16.mxu0 0
        %2618 = vmatmul.mubr.bf16.gmra.mrb[0].mxu0 %v545
        %v2619 = vpop.f32.mrb[0].mxu0
        %v2620 = vadd.f32 %v2027, %v2619
        %v2621 = vpop.f32.mrb[0].mxu0
        %v2622 = vpop.f32.mrb[0].mxu0
        %v2623 = vadd.f32 %v2030, %v2622
        %v2624 = vpop.f32.mrb[0].mxu0
        %2625 = vmatprep.mubr.bf16.mxu0 0
        %2626 = vmatmul.mubr.bf16.gmra.mrb[0].mxu0 %v1058
        %v2627 = vpop.f32.mrb[0].mxu0
        %v2628 = vadd.f32 %v2035, %v2627
        %v2629 = vpop.f32.mrb[0].mxu0
        %v2630 = vpop.f32.mrb[0].mxu0
        %v2631 = vadd.f32 %v2038, %v2630
        %v2632 = vpop.f32.mrb[0].mxu0
        %2633 = vmatprep.mubr.bf16.mxu0 0
        %2634 = vmatmul.mubr.bf16.gmra.mrb[0].mxu0 %v560
        %v2635 = vpop.f32.mrb[0].mxu0
        %v2636 = vadd.f32 %v2043, %v2635
        %v2637 = vpop.f32.mrb[0].mxu0
        %v2638 = vpop.f32.mrb[0].mxu0
        %v2639 = vadd.f32 %v2046, %v2638
        %v2640 = vpop.f32.mrb[0].mxu0
        %2641 = vmatprep.mubr.bf16.mxu0 0
        %2642 = vmatmul.mubr.bf16.gmra.mrb[0].mxu0 %v1059
        %v2643 = vpop.f32.mrb[0].mxu0
        %v2644 = vadd.f32 %v2051, %v2643
        %v2645 = vpop.f32.mrb[0].mxu0
        %v2646 = vpop.f32.mrb[0].mxu0
        %v2647 = vadd.f32 %v2054, %v2646
        %v2648 = vpop.f32.mrb[0].mxu0
        %2649 = vmatprep.mubr.bf16.mxu0 0
        %2650 = vmatmul.mubr.bf16.gmra.mrb[0].mxu0 %v575
        %v2651 = vpop.f32.mrb[0].mxu0
        %v2652 = vadd.f32 %v2059, %v2651
        %v2653 = vpop.f32.mrb[0].mxu0
        %v2654 = vpop.f32.mrb[0].mxu0
        %v2655 = vadd.f32 %v2062, %v2654
        %v2656 = vpop.f32.mrb[0].mxu0
        %2657 = vmatprep.mubr.bf16.mxu0 0
        %2658 = vmatmul.mubr.bf16.gmra.mrb[0].mxu0 %v1060
        %v2659 = vpop.f32.mrb[0].mxu0
        %v2660 = vadd.f32 %v2067, %v2659
        %v2661 = vpop.f32.mrb[0].mxu0
        %v2662 = vpop.f32.mrb[0].mxu0
        %v2663 = vadd.f32 %v2070, %v2662
        %v2664 = vpop.f32.mrb[0].mxu0
        %2665 = vmatprep.mubr.bf16.mxu0 0
        %2666 = vmatmul.mubr.bf16.gmra.mrb[0].mxu0 %v590
        %v2667 = vpop.f32.mrb[0].mxu0
        %v2668 = vadd.f32 %v2075, %v2667
        %v2669 = vpop.f32.mrb[0].mxu0
        %v2670 = vpop.f32.mrb[0].mxu0
        %v2671 = vadd.f32 %v2078, %v2670
        %v2672 = vpop.f32.mrb[0].mxu0
        %2673 = vmatprep.mubr.bf16.mxu0 0
        %2674 = vmatmul.mubr.bf16.gmra.mrb[0].mxu0 %v1061
        %v2675 = vpop.f32.mrb[0].mxu0
        %v2676 = vadd.f32 %v2083, %v2675
        %v2677 = vpop.f32.mrb[0].mxu0
        %v2678 = vpop.f32.mrb[0].mxu0
        %v2679 = vadd.f32 %v2086, %v2678
        %v2680 = vpop.f32.mrb[0].mxu0
        %2681 = vmatprep.mubr.bf16.mxu0 0
        %2682 = vmatmul.mubr.bf16.gmra.mrb[0].mxu0 %v605
        %v2683 = vpop.f32.mrb[0].mxu0
        %v2684 = vadd.f32 %v2091, %v2683
        %v2685 = vpop.f32.mrb[0].mxu0
        %v2686 = vpop.f32.mrb[0].mxu0
        %v2687 = vadd.f32 %v2094, %v2686
        %v2688 = vpop.f32.mrb[0].mxu0
        %2689 = vmatprep.mubr.bf16.mxu0 0
        %2690 = vmatmul.mubr.bf16.gmra.mrb[0].mxu0 %v1062
        %v2691 = vpop.f32.mrb[0].mxu0
        %v2692 = vadd.f32 %v2099, %v2691
        %v2693 = vpop.f32.mrb[0].mxu0
        %v2694 = vpop.f32.mrb[0].mxu0
        %v2695 = vadd.f32 %v2102, %v2694
        %v2696 = vpop.f32.mrb[0].mxu0
        %2697 = vmatprep.mubr.bf16.mxu0 0
        %2698 = vmatmul.mubr.bf16.gmra.mrb[0].mxu0 %v620
        %v2699 = vpop.f32.mrb[0].mxu0
        %v2700 = vadd.f32 %v2107, %v2699
        %v2701 = vpop.f32.mrb[0].mxu0
        %v2702 = vpop.f32.mrb[0].mxu0
        %v2703 = vadd.f32 %v2110, %v2702
        %v2704 = vpop.f32.mrb[0].mxu0
        %2705 = vmatprep.mubr.bf16.mxu0 0
        %2706 = vmatmul.mubr.bf16.gmra.mrb[0].mxu0 %v1063
        %v2707 = vpop.f32.mrb[0].mxu0
        %v2708 = vadd.f32 %v2115, %v2707
        %v2709 = vpop.f32.mrb[0].mxu0
        %v2710 = vpop.f32.mrb[0].mxu0
        %v2711 = vadd.f32 %v2118, %v2710
        %v2712 = vpop.f32.mrb[0].mxu0
        %2713 = vmatprep.mubr.bf16.mxu0 0
        %2714 = vmatmul.mubr.bf16.gmra.mrb[0].mxu0 %v635
        %v2715 = vpop.f32.mrb[0].mxu0
        %v2716 = vadd.f32 %v2123, %v2715
        %v2717 = vpop.f32.mrb[0].mxu0
        %v2718 = vpop.f32.mrb[0].mxu0
        %v2719 = vadd.f32 %v2126, %v2718
        %v2720 = vpop.f32.mrb[0].mxu0
        %2721 = vmatprep.mubr.bf16.mxu0 0
        %2722 = vmatmul.mubr.bf16.gmra.mrb[0].mxu0 %v1064
        %v2723 = vpop.f32.mrb[0].mxu0
        %v2724 = vadd.f32 %v2131, %v2723
        %v2725 = vpop.f32.mrb[0].mxu0
        %v2726 = vpop.f32.mrb[0].mxu0
        %v2727 = vadd.f32 %v2134, %v2726
        %v2728 = vpop.f32.mrb[0].mxu0
        %2729 = vmatprep.mubr.bf16.mxu0 0
        %2730 = vmatmul.mubr.bf16.gmra.mrb[0].mxu0 %v650
        %v2731 = vpop.f32.mrb[0].mxu0
        %v2732 = vadd.f32 %v2139, %v2731
        %v2733 = vpop.f32.mrb[0].mxu0
        %v2734 = vpop.f32.mrb[0].mxu0
        %v2735 = vadd.f32 %v2142, %v2734
        %v2736 = vpop.f32.mrb[0].mxu0
        %2737 = vmatprep.mubr.bf16.mxu0 0
        %2738 = vmatmul.mubr.bf16.gmra.mrb[0].mxu0 %v1065
        %v2739 = vpop.f32.mrb[0].mxu0
        %v2740 = vadd.f32 %v2147, %v2739
        %v2741 = vpop.f32.mrb[0].mxu0
        %v2742 = vpop.f32.mrb[0].mxu0
        %v2743 = vadd.f32 %v2150, %v2742
        %v2744 = vpop.f32.mrb[0].mxu0
        %2745 = vmatprep.mubr.bf16.mxu0 0
        %2746 = vmatmul.mubr.bf16.gmra.mrb[0].mxu0 %v665
        %v2747 = vpop.f32.mrb[0].mxu0
        %v2748 = vadd.f32 %v2155, %v2747
        %v2749 = vpop.f32.mrb[0].mxu0
        %v2750 = vpop.f32.mrb[0].mxu0
        %v2751 = vadd.f32 %v2158, %v2750
        %v2752 = vpop.f32.mrb[0].mxu0
        %2753 = vmatprep.mubr.bf16.mxu0 0
        %2754 = vmatmul.mubr.bf16.gmra.mrb[0].mxu0 %v1066
        %v2755 = vpop.f32.mrb[0].mxu0
        %v2756 = vadd.f32 %v2163, %v2755
        %v2757 = vpop.f32.mrb[0].mxu0
        %v2758 = vpop.f32.mrb[0].mxu0
        %v2759 = vadd.f32 %v2166, %v2758
        %v2760 = vpop.f32.mrb[0].mxu0
        %2761 = vmatprep.mubr.bf16.mxu0 0
        %2762 = vmatmul.mubr.bf16.gmra.mrb[0].mxu0 %v680
        %v2763 = vpop.f32.mrb[0].mxu0
        %v2764 = vadd.f32 %v2171, %v2763
        %v2765 = vpop.f32.mrb[0].mxu0
        %v2766 = vpop.f32.mrb[0].mxu0
        %v2767 = vadd.f32 %v2174, %v2766
        %v2768 = vpop.f32.mrb[0].mxu0
        %2769 = vmatprep.mubr.bf16.mxu0 0
        %2770 = vmatmul.mubr.bf16.gmra.mrb[0].mxu0 %v1067
        %v2771 = vpop.f32.mrb[0].mxu0
        %v2772 = vadd.f32 %v2179, %v2771
        %v2773 = vpop.f32.mrb[0].mxu0
        %v2774 = vpop.f32.mrb[0].mxu0
        %v2775 = vadd.f32 %v2182, %v2774
        %v2776 = vpop.f32.mrb[0].mxu0
        %2777 = vmatprep.mubr.bf16.mxu0 0
        %2778 = vmatmul.mubr.bf16.gmra.mrb[0].mxu0 %v695
        %v2779 = vpop.f32.mrb[0].mxu0
        %v2780 = vadd.f32 %v2187, %v2779
        %v2781 = vpop.f32.mrb[0].mxu0
        %v2782 = vpop.f32.mrb[0].mxu0
        %v2783 = vadd.f32 %v2190, %v2782
        %v2784 = vpop.f32.mrb[0].mxu0
        %2785 = vmatprep.mubr.bf16.mxu0 0
        %2786 = vmatmul.mubr.bf16.gmra.mrb[0].mxu0 %v1068
        %v2787 = vpop.f32.mrb[0].mxu0
        %v2788 = vadd.f32 %v2195, %v2787
        %v2789 = vpop.f32.mrb[0].mxu0
        %v2790 = vpop.f32.mrb[0].mxu0
        %v2791 = vadd.f32 %v2198, %v2790
        %v2792 = vpop.f32.mrb[0].mxu0
        %2793 = vmatprep.mubr.bf16.mxu0 0
        %2794 = vmatmul.mubr.bf16.gmra.mrb[0].mxu0 %v710
        %v2795 = vpop.f32.mrb[0].mxu0
        %v2796 = vadd.f32 %v2203, %v2795
        %v2797 = vpop.f32.mrb[0].mxu0
        %v2798 = vpop.f32.mrb[0].mxu0
        %v2799 = vadd.f32 %v2206, %v2798
        %v2800 = vpop.f32.mrb[0].mxu0
        %2801 = vmatprep.mubr.bf16.mxu0 0
        %2802 = vmatmul.mubr.bf16.gmra.mrb[0].mxu0 %v1069
        %v2803 = vpop.f32.mrb[0].mxu0
        %v2804 = vadd.f32 %v2211, %v2803
        %v2805 = vpop.f32.mrb[0].mxu0
        %v2806 = vpop.f32.mrb[0].mxu0
        %v2807 = vadd.f32 %v2214, %v2806
        %v2808 = vpop.f32.mrb[0].mxu0
        %2809 = vmatprep.mubr.bf16.mxu0 0
        %2810 = vmatmul.mubr.bf16.gmra.mrb[0].mxu0 %v725
        %v2811 = vpop.f32.mrb[0].mxu0
        %v2812 = vadd.f32 %v2219, %v2811
        %v2813 = vpop.f32.mrb[0].mxu0
        %v2814 = vpop.f32.mrb[0].mxu0
        %v2815 = vadd.f32 %v2222, %v2814
        %v2816 = vpop.f32.mrb[0].mxu0
        %2817 = vmatprep.mubr.bf16.mxu0 0
        %2818 = vmatmul.mubr.bf16.gmra.mrb[0].mxu0 %v1070
        %v2819 = vpop.f32.mrb[0].mxu0
        %v2820 = vadd.f32 %v2227, %v2819
        %v2821 = vpop.f32.mrb[0].mxu0
        %v2822 = vpop.f32.mrb[0].mxu0
        %v2823 = vadd.f32 %v2230, %v2822
        %v2824 = vpop.f32.mrb[0].mxu0
        %2825 = vmatprep.mubr.bf16.mxu0 0
        %2826 = vmatmul.mubr.bf16.gmra.mrb[0].mxu0 %v740
        %v2827 = vpop.f32.mrb[0].mxu0
        %v2828 = vadd.f32 %v2235, %v2827
        %v2829 = vpop.f32.mrb[0].mxu0
        %v2830 = vpop.f32.mrb[0].mxu0
        %v2831 = vadd.f32 %v2238, %v2830
        %v2832 = vpop.f32.mrb[0].mxu0
        %2833 = vmatprep.mubr.bf16.mxu0 0
        %2834 = vmatmul.mubr.bf16.gmra.mrb[0].mxu0 %v1071
        %v2835 = vpop.f32.mrb[0].mxu0
        %v2836 = vadd.f32 %v2243, %v2835
        %v2837 = vpop.f32.mrb[0].mxu0
        %v2838 = vpop.f32.mrb[0].mxu0
        %v2839 = vadd.f32 %v2246, %v2838
        %v2840 = vpop.f32.mrb[0].mxu0
        %2841 = vmatprep.mubr.bf16.mxu0 0
        %2842 = vmatmul.mubr.bf16.gmra.mrb[0].mxu0 %v755
        %v2843 = vpop.f32.mrb[0].mxu0
        %v2844 = vadd.f32 %v2251, %v2843
        %v2845 = vpop.f32.mrb[0].mxu0
        %v2846 = vpop.f32.mrb[0].mxu0
        %v2847 = vadd.f32 %v2254, %v2846
        %v2848 = vpop.f32.mrb[0].mxu0
        %2849 = vmatprep.mubr.bf16.mxu0 0
        %2850 = vmatmul.mubr.bf16.gmra.mrb[0].mxu0 %v1072
        %v2851 = vpop.f32.mrb[0].mxu0
        %v2852 = vadd.f32 %v2259, %v2851
        %v2853 = vpop.f32.mrb[0].mxu0
        %v2854 = vpop.f32.mrb[0].mxu0
        %v2855 = vadd.f32 %v2262, %v2854
        %v2856 = vpop.f32.mrb[0].mxu0
        %2857 = vmatprep.mubr.bf16.mxu0 0
        %2858 = vmatmul.mubr.bf16.gmra.mrb[0].mxu0 %v770
        %v2859 = vpop.f32.mrb[0].mxu0
        %v2860 = vadd.f32 %v2267, %v2859
        %v2861 = vpop.f32.mrb[0].mxu0
        %v2862 = vpop.f32.mrb[0].mxu0
        %v2863 = vadd.f32 %v2270, %v2862
        %v2864 = vpop.f32.mrb[0].mxu0
        %2865 = vmatprep.mubr.bf16.mxu0 0
        %2866 = vmatmul.mubr.bf16.gmra.mrb[0].mxu0 %v1073
        %v2867 = vpop.f32.mrb[0].mxu0
        %v2868 = vadd.f32 %v2275, %v2867
        %v2869 = vpop.f32.mrb[0].mxu0
        %v2870 = vpop.f32.mrb[0].mxu0
        %v2871 = vadd.f32 %v2278, %v2870
        %v2872 = vpop.f32.mrb[0].mxu0
        %2873 = vmatprep.mubr.bf16.mxu0 0
        %2874 = vmatmul.mubr.bf16.gmra.mrb[0].mxu0 %v785
        %v2875 = vpop.f32.mrb[0].mxu0
        %v2876 = vadd.f32 %v2283, %v2875
        %v2877 = vpop.f32.mrb[0].mxu0
        %v2878 = vpop.f32.mrb[0].mxu0
        %v2879 = vadd.f32 %v2286, %v2878
        %v2880 = vpop.f32.mrb[0].mxu0
        %2881 = vmatprep.mubr.bf16.mxu0 0
        %2882 = vmatmul.mubr.bf16.gmra.mrb[0].mxu0 %v1074
        %v2883 = vpop.f32.mrb[0].mxu0
        %v2884 = vadd.f32 %v2291, %v2883
        %v2885 = vpop.f32.mrb[0].mxu0
        %v2886 = vpop.f32.mrb[0].mxu0
        %v2887 = vadd.f32 %v2294, %v2886
        %v2888 = vpop.f32.mrb[0].mxu0
        %2889 = vmatprep.mubr.bf16.mxu0 0
        %2890 = vmatmul.mubr.bf16.gmra.mrb[0].mxu0 %v800
        %v2891 = vpop.f32.mrb[0].mxu0
        %v2892 = vadd.f32 %v2299, %v2891
        %v2893 = vpop.f32.mrb[0].mxu0
        %v2894 = vpop.f32.mrb[0].mxu0
        %v2895 = vadd.f32 %v2302, %v2894
        %v2896 = vpop.f32.mrb[0].mxu0
        %2897 = vmatprep.mubr.bf16.mxu0 0
        %2898 = vmatmul.mubr.bf16.gmra.mrb[0].mxu0 %v1075
        %v2899 = vpop.f32.mrb[0].mxu0
        %v2900 = vadd.f32 %v2307, %v2899
        %v2901 = vpop.f32.mrb[0].mxu0
        %v2902 = vpop.f32.mrb[0].mxu0
        %v2903 = vadd.f32 %v2310, %v2902
        %v2904 = vpop.f32.mrb[0].mxu0
        %2905 = vmatprep.mubr.bf16.mxu0 0
        %2906 = vmatmul.mubr.bf16.gmra.mrb[0].mxu0 %v815
        %v2907 = vpop.f32.mrb[0].mxu0
        %v2908 = vadd.f32 %v2315, %v2907
        %v2909 = vpop.f32.mrb[0].mxu0
        %v2910 = vpop.f32.mrb[0].mxu0
        %v2911 = vadd.f32 %v2318, %v2910
        %v2912 = vpop.f32.mrb[0].mxu0
        %2913 = vmatprep.mubr.bf16.mxu0 0
        %2914 = vmatmul.mubr.bf16.gmra.mrb[0].mxu0 %v1076
        %v2915 = vpop.f32.mrb[0].mxu0
        %v2916 = vadd.f32 %v2323, %v2915
        %v2917 = vpop.f32.mrb[0].mxu0
        %v2918 = vpop.f32.mrb[0].mxu0
        %v2919 = vadd.f32 %v2326, %v2918
        %v2920 = vpop.f32.mrb[0].mxu0
        %2921 = vmatprep.mubr.bf16.mxu0 0
        %2922 = vmatmul.mubr.bf16.gmra.mrb[0].mxu0 %v830
        %v2923 = vpop.f32.mrb[0].mxu0
        %v2924 = vadd.f32 %v2331, %v2923
        %v2925 = vpop.f32.mrb[0].mxu0
        %v2926 = vpop.f32.mrb[0].mxu0
        %v2927 = vadd.f32 %v2334, %v2926
        %v2928 = vpop.f32.mrb[0].mxu0
        %2929 = vmatprep.mubr.bf16.mxu0 0
        %2930 = vmatmul.mubr.bf16.gmra.mrb[0].mxu0 %v1077
        %v2931 = vpop.f32.mrb[0].mxu0
        %v2932 = vadd.f32 %v2339, %v2931
        %v2933 = vpop.f32.mrb[0].mxu0
        %v2934 = vpop.f32.mrb[0].mxu0
        %v2935 = vadd.f32 %v2342, %v2934
        %v2936 = vpop.f32.mrb[0].mxu0
        %2937 = vmatprep.mubr.bf16.mxu0 0
        %2938 = vmatmul.mubr.bf16.gmra.mrb[0].mxu0 %v845
        %v2939 = vpop.f32.mrb[0].mxu0
        %v2940 = vadd.f32 %v2347, %v2939
        %v2941 = vpop.f32.mrb[0].mxu0
        %v2942 = vpop.f32.mrb[0].mxu0
        %v2943 = vadd.f32 %v2350, %v2942
        %v2944 = vpop.f32.mrb[0].mxu0
        %2945 = vmatprep.mubr.bf16.mxu0 0
        %2946 = vmatmul.mubr.bf16.gmra.mrb[0].mxu0 %v1078
        %v2947 = vpop.f32.mrb[0].mxu0
        %v2948 = vadd.f32 %v2355, %v2947
        %v2949 = vpop.f32.mrb[0].mxu0
        %v2950 = vpop.f32.mrb[0].mxu0
        %v2951 = vadd.f32 %v2358, %v2950
        %v2952 = vpop.f32.mrb[0].mxu0
        %2953 = vmatprep.mubr.bf16.mxu0 0
        %2954 = vmatmul.mubr.bf16.gmra.mrb[0].mxu0 %v860
        %v2955 = vpop.f32.mrb[0].mxu0
        %v2956 = vadd.f32 %v2363, %v2955
        %v2957 = vpop.f32.mrb[0].mxu0
        %v2958 = vpop.f32.mrb[0].mxu0
        %v2959 = vadd.f32 %v2366, %v2958
        %v2960 = vpop.f32.mrb[0].mxu0
        %2961 = vmatprep.mubr.bf16.mxu0 0
        %2962 = vmatmul.mubr.bf16.gmra.mrb[0].mxu0 %v1079
        %v2963 = vpop.f32.mrb[0].mxu0
        %v2964 = vadd.f32 %v2371, %v2963
        %v2965 = vpop.f32.mrb[0].mxu0
        %v2966 = vpop.f32.mrb[0].mxu0
        %v2967 = vadd.f32 %v2374, %v2966
        %v2968 = vpop.f32.mrb[0].mxu0
        %2969 = vmatprep.mubr.bf16.mxu0 0
        %2970 = vmatmul.mubr.bf16.gmra.mrb[0].mxu0 %v875
        %v2971 = vpop.f32.mrb[0].mxu0
        %v2972 = vadd.f32 %v2379, %v2971
        %v2973 = vpop.f32.mrb[0].mxu0
        %v2974 = vpop.f32.mrb[0].mxu0
        %v2975 = vadd.f32 %v2382, %v2974
        %v2976 = vpop.f32.mrb[0].mxu0
        %2977 = vmatprep.mubr.bf16.mxu0 0
        %2978 = vmatmul.mubr.bf16.gmra.mrb[0].mxu0 %v1080
        %v2979 = vpop.f32.mrb[0].mxu0
        %v2980 = vadd.f32 %v2387, %v2979
        %v2981 = vpop.f32.mrb[0].mxu0
        %v2982 = vpop.f32.mrb[0].mxu0
        %v2983 = vadd.f32 %v2390, %v2982
        %v2984 = vpop.f32.mrb[0].mxu0
        %2985 = vmatprep.mubr.bf16.mxu0 0
        %2986 = vmatmul.mubr.bf16.gmra.mrb[0].mxu0 %v890
        %v2987 = vpop.f32.mrb[0].mxu0
        %v2988 = vadd.f32 %v2395, %v2987
        %v2989 = vpop.f32.mrb[0].mxu0
        %v2990 = vpop.f32.mrb[0].mxu0
        %v2991 = vadd.f32 %v2398, %v2990
        %v2992 = vpop.f32.mrb[0].mxu0
        %2993 = vmatprep.mubr.bf16.mxu0 0
        %2994 = vmatmul.mubr.bf16.gmra.mrb[0].mxu0 %v1081
        %v2995 = vpop.f32.mrb[0].mxu0
        %v2996 = vadd.f32 %v2403, %v2995
        %v2997 = vpop.f32.mrb[0].mxu0
        %v2998 = vpop.f32.mrb[0].mxu0
        %v2999 = vadd.f32 %v2406, %v2998
        %v3000 = vpop.f32.mrb[0].mxu0
        %3001 = vmatprep.mubr.bf16.mxu0 0
        %3002 = vmatmul.mubr.bf16.gmra.mrb[0].mxu0 %v905
        %v3003 = vpop.f32.mrb[0].mxu0
        %v3004 = vadd.f32 %v2411, %v3003
        %v3005 = vpop.f32.mrb[0].mxu0
        %v3006 = vpop.f32.mrb[0].mxu0
        %v3007 = vadd.f32 %v2414, %v3006
        %v3008 = vpop.f32.mrb[0].mxu0
        %3009 = vmatprep.mubr.bf16.mxu0 0
        %3010 = vmatmul.mubr.bf16.gmra.mrb[0].mxu0 %v1082
        %v3011 = vpop.f32.mrb[0].mxu0
        %v3012 = vadd.f32 %v2419, %v3011
        %v3013 = vpop.f32.mrb[0].mxu0
        %v3014 = vpop.f32.mrb[0].mxu0
        %v3015 = vadd.f32 %v2422, %v3014
        %v3016 = vpop.f32.mrb[0].mxu0
        %3017 = vmatprep.mubr.bf16.mxu0 0
        %3018 = vmatmul.mubr.bf16.gmra.mrb[0].mxu0 %v920
        %v3019 = vpop.f32.mrb[0].mxu0
        %v3020 = vadd.f32 %v2427, %v3019
        %v3021 = vpop.f32.mrb[0].mxu0
        %v3022 = vpop.f32.mrb[0].mxu0
        %v3023 = vadd.f32 %v2430, %v3022
        %v3024 = vpop.f32.mrb[0].mxu0
        %3025 = vmatprep.mubr.bf16.mxu0 0
        %3026 = vmatmul.mubr.bf16.gmra.mrb[0].mxu0 %v1083
        %v3027 = vpop.f32.mrb[0].mxu0
        %v3028 = vadd.f32 %v2435, %v3027
        %v3029 = vpop.f32.mrb[0].mxu0
        %v3030 = vpop.f32.mrb[0].mxu0
        %v3031 = vadd.f32 %v2438, %v3030
        %v3032 = vpop.f32.mrb[0].mxu0
        %3033 = vmatprep.mubr.bf16.mxu0 0
        %3034 = vmatmul.mubr.bf16.gmra.mrb[0].mxu0 %v935
        %v3035 = vpop.f32.mrb[0].mxu0
        %v3036 = vadd.f32 %v2443, %v3035
        %v3037 = vpop.f32.mrb[0].mxu0
        %v3038 = vpop.f32.mrb[0].mxu0
        %v3039 = vadd.f32 %v2446, %v3038
        %v3040 = vpop.f32.mrb[0].mxu0
        %3041 = vdwg.mxu0
        %vm3106 = vcmask 1046528
        %v3107 = vrot.slane %v1052, 1
        %v3108 = vrot.slane %v470, 1
        %v3109 = vsel %vm3106, %v3107, %v3108
        %v3110 = vrot.slane %v1085, 1
        %v3111 = vsel %vm3106, %v3108, %v3110
        %v3112 = vrot.slane %v1053, 1
        %v3113 = vrot.slane %v485, 1
        %v3114 = vsel %vm3106, %v3112, %v3113
        %v3115 = vrot.slane %v1086, 1
        %v3116 = vsel %vm3106, %v3113, %v3115
        %v3117 = vrot.slane %v1054, 1
        %v3118 = vrot.slane %v500, 1
        %v3119 = vsel %vm3106, %v3117, %v3118
        %v3120 = vrot.slane %v1087, 1
        %v3121 = vsel %vm3106, %v3118, %v3120
        %v3122 = vrot.slane %v1055, 1
        %v3123 = vrot.slane %v515, 1
        %v3124 = vsel %vm3106, %v3122, %v3123
        %v3125 = vrot.slane %v1088, 1
        %v3126 = vsel %vm3106, %v3123, %v3125
        %v3127 = vrot.slane %v1056, 1
        %v3128 = vrot.slane %v530, 1
        %v3129 = vsel %vm3106, %v3127, %v3128
        %v3130 = vrot.slane %v1089, 1
        %v3131 = vsel %vm3106, %v3128, %v3130
        %v3132 = vrot.slane %v1057, 1
        %v3133 = vrot.slane %v545, 1
        %v3134 = vsel %vm3106, %v3132, %v3133
        %v3135 = vrot.slane %v1090, 1
        %v3136 = vsel %vm3106, %v3133, %v3135
        %v3137 = vrot.slane %v1058, 1
        %v3138 = vrot.slane %v560, 1
        %v3139 = vsel %vm3106, %v3137, %v3138
        %v3140 = vrot.slane %v1091, 1
        %v3141 = vsel %vm3106, %v3138, %v3140
        %v3142 = vrot.slane %v1059, 1
        %v3143 = vrot.slane %v575, 1
        %v3144 = vsel %vm3106, %v3142, %v3143
        %v3145 = vrot.slane %v1092, 1
        %v3146 = vsel %vm3106, %v3143, %v3145
        %v3147 = vrot.slane %v1060, 1
        %v3148 = vrot.slane %v590, 1
        %v3149 = vsel %vm3106, %v3147, %v3148
        %v3150 = vrot.slane %v1093, 1
        %v3151 = vsel %vm3106, %v3148, %v3150
        %v3152 = vrot.slane %v1061, 1
        %v3153 = vrot.slane %v605, 1
        %v3154 = vsel %vm3106, %v3152, %v3153
        %v3155 = vrot.slane %v1094, 1
        %v3156 = vsel %vm3106, %v3153, %v3155
        %v3157 = vrot.slane %v1062, 1
        %v3158 = vrot.slane %v620, 1
        %v3159 = vsel %vm3106, %v3157, %v3158
        %v3160 = vrot.slane %v1095, 1
        %v3161 = vsel %vm3106, %v3158, %v3160
        %v3162 = vrot.slane %v1063, 1
        %v3163 = vrot.slane %v635, 1
        %v3164 = vsel %vm3106, %v3162, %v3163
        %v3165 = vrot.slane %v1096, 1
        %v3166 = vsel %vm3106, %v3163, %v3165
        %v3167 = vrot.slane %v1064, 1
        %v3168 = vrot.slane %v650, 1
        %v3169 = vsel %vm3106, %v3167, %v3168
        %v3170 = vrot.slane %v1097, 1
        %v3171 = vsel %vm3106, %v3168, %v3170
        %v3172 = vrot.slane %v1065, 1
        %v3173 = vrot.slane %v665, 1
        %v3174 = vsel %vm3106, %v3172, %v3173
        %v3175 = vrot.slane %v1098, 1
        %v3176 = vsel %vm3106, %v3173, %v3175
        %v3177 = vrot.slane %v1066, 1
        %v3178 = vrot.slane %v680, 1
        %v3179 = vsel %vm3106, %v3177, %v3178
        %v3180 = vrot.slane %v1099, 1
        %v3181 = vsel %vm3106, %v3178, %v3180
        %v3182 = vrot.slane %v1067, 1
        %v3183 = vrot.slane %v695, 1
        %v3184 = vsel %vm3106, %v3182, %v3183
        %v3185 = vrot.slane %v1100, 1
        %v3186 = vsel %vm3106, %v3183, %v3185
        %v3187 = vrot.slane %v1068, 1
        %v3188 = vrot.slane %v710, 1
        %v3189 = vsel %vm3106, %v3187, %v3188
        %v3190 = vrot.slane %v1101, 1
        %v3191 = vsel %vm3106, %v3188, %v3190
        %v3192 = vrot.slane %v1069, 1
        %v3193 = vrot.slane %v725, 1
        %v3194 = vsel %vm3106, %v3192, %v3193
        %v3195 = vrot.slane %v1102, 1
        %v3196 = vsel %vm3106, %v3193, %v3195
        %v3197 = vrot.slane %v1070, 1
        %v3198 = vrot.slane %v740, 1
        %v3199 = vsel %vm3106, %v3197, %v3198
        %v3200 = vrot.slane %v1103, 1
        %v3201 = vsel %vm3106, %v3198, %v3200
        %v3202 = vrot.slane %v1071, 1
        %v3203 = vrot.slane %v755, 1
        %v3204 = vsel %vm3106, %v3202, %v3203
        %v3205 = vrot.slane %v1104, 1
        %v3206 = vsel %vm3106, %v3203, %v3205
        %v3207 = vrot.slane %v1072, 1
        %v3208 = vrot.slane %v770, 1
        %v3209 = vsel %vm3106, %v3207, %v3208
        %v3210 = vrot.slane %v1105, 1
        %v3211 = vsel %vm3106, %v3208, %v3210
        %v3212 = vrot.slane %v1073, 1
        %v3213 = vrot.slane %v785, 1
        %v3214 = vsel %vm3106, %v3212, %v3213
        %v3215 = vrot.slane %v1106, 1
        %v3216 = vsel %vm3106, %v3213, %v3215
        %v3217 = vrot.slane %v1074, 1
        %v3218 = vrot.slane %v800, 1
        %v3219 = vsel %vm3106, %v3217, %v3218
        %v3220 = vrot.slane %v1107, 1
        %v3221 = vsel %vm3106, %v3218, %v3220
        %v3222 = vrot.slane %v1075, 1
        %v3223 = vrot.slane %v815, 1
        %v3224 = vsel %vm3106, %v3222, %v3223
        %v3225 = vrot.slane %v1108, 1
        %v3226 = vsel %vm3106, %v3223, %v3225
        %v3227 = vrot.slane %v1076, 1
        %v3228 = vrot.slane %v830, 1
        %v3229 = vsel %vm3106, %v3227, %v3228
        %v3230 = vrot.slane %v1109, 1
        %v3231 = vsel %vm3106, %v3228, %v3230
        %v3232 = vrot.slane %v1077, 1
        %v3233 = vrot.slane %v845, 1
        %v3234 = vsel %vm3106, %v3232, %v3233
        %v3235 = vrot.slane %v1110, 1
        %v3236 = vsel %vm3106, %v3233, %v3235
        %v3237 = vrot.slane %v1078, 1
        %v3238 = vrot.slane %v860, 1
        %v3239 = vsel %vm3106, %v3237, %v3238
        %v3240 = vrot.slane %v1111, 1
        %v3241 = vsel %vm3106, %v3238, %v3240
        %v3242 = vrot.slane %v1079, 1
        %v3243 = vrot.slane %v875, 1
        %v3244 = vsel %vm3106, %v3242, %v3243
        %v3245 = vrot.slane %v1112, 1
        %v3246 = vsel %vm3106, %v3243, %v3245
        %v3247 = vrot.slane %v1080, 1
        %v3248 = vrot.slane %v890, 1
        %v3249 = vsel %vm3106, %v3247, %v3248
        %v3250 = vrot.slane %v1113, 1
        %v3251 = vsel %vm3106, %v3248, %v3250
        %v3252 = vrot.slane %v1081, 1
        %v3253 = vrot.slane %v905, 1
        %v3254 = vsel %vm3106, %v3252, %v3253
        %v3255 = vrot.slane %v1114, 1
        %v3256 = vsel %vm3106, %v3253, %v3255
        %v3257 = vrot.slane %v1082, 1
        %v3258 = vrot.slane %v920, 1
        %v3259 = vsel %vm3106, %v3257, %v3258
        %v3260 = vrot.slane %v1115, 1
        %v3261 = vsel %vm3106, %v3258, %v3260
        %v3262 = vrot.slane %v1083, 1
        %v3263 = vrot.slane %v935, 1
        %v3264 = vsel %vm3106, %v3262, %v3263
        %v3265 = vrot.slane %v1116, 1
        %v3266 = vsel %vm3106, %v3263, %v3265
        %s3331 = scalar_lea.vmem [#allocation5], 128
        %v3332 = vld [vmem:[%s3331] sm:$0xf]
        %v3333 = vld [vmem:[%s3331 + $0x4] sm:$0xf]
        %v3334 = vld [vmem:[%s3331 + $0x8] sm:$0xf]
        %v3335 = vld [vmem:[%s3331 + $0xc] sm:$0xf]
        %v3336 = vld [vmem:[%s3331 + $0x10] sm:$0xf]
        %v3337 = vld [vmem:[%s3331 + $0x14] sm:$0xf]
        %v3338 = vld [vmem:[%s3331 + $0x18] sm:$0xf]
        %v3339 = vld [vmem:[%s3331 + $0x1c] sm:$0xf]
        %v3340 = vld [vmem:[%s3331 + $0x20] sm:$0xf]
        %v3341 = vld [vmem:[%s3331 + $0x24] sm:$0xf]
        %v3342 = vld [vmem:[%s3331 + $0x28] sm:$0xf]
        %v3343 = vld [vmem:[%s3331 + $0x2c] sm:$0xf]
        %v3344 = vld [vmem:[%s3331 + $0x30] sm:$0xf]
        %v3345 = vld [vmem:[%s3331 + $0x34] sm:$0xf]
        %v3346 = vld [vmem:[%s3331 + $0x38] sm:$0xf]
        %v3347 = vld [vmem:[%s3331 + $0x3c] sm:$0xf]
        %v3364 = vunpack.c.l.b16 %v3332
        %v3365 = vunpack.c.l.b16 %v3333
        %v3366 = vunpack.c.l.b16 %v3334
        %v3367 = vunpack.c.l.b16 %v3335
        %v3368 = vunpack.c.l.b16 %v3336
        %v3369 = vunpack.c.l.b16 %v3337
        %v3370 = vunpack.c.l.b16 %v3338
        %v3371 = vunpack.c.l.b16 %v3339
        %v3372 = vunpack.c.l.b16 %v3340
        %v3373 = vunpack.c.l.b16 %v3341
        %v3374 = vunpack.c.l.b16 %v3342
        %v3375 = vunpack.c.l.b16 %v3343
        %v3376 = vunpack.c.l.b16 %v3344
        %v3377 = vunpack.c.l.b16 %v3345
        %v3378 = vunpack.c.l.b16 %v3346
        %v3379 = vunpack.c.l.b16 %v3347
        %v3380 = vpack.c.b16 %v3365, %v3364
        %v3381 = vpack.c.b16 %v3367, %v3366
        %v3382 = vpack.c.b16 %v3369, %v3368
        %v3383 = vpack.c.b16 %v3371, %v3370
        %v3384 = vpack.c.b16 %v3373, %v3372
        %v3385 = vpack.c.b16 %v3375, %v3374
        %v3386 = vpack.c.b16 %v3377, %v3376
        %v3387 = vpack.c.b16 %v3379, %v3378
        %3396 = vmatprep.subr.bf16.mxu0 0
        %3397 = vmatpush1.bf16.msra.mxu0 %v3380
        %3398 = vmatprep.subr.bf16.mxu0 0
        %3399 = vmatpush1.bf16.msra.mxu0 %v3381
        %3400 = vmatprep.subr.bf16.mxu0 0
        %3401 = vmatpush1.bf16.msra.mxu0 %v3382
        %3402 = vmatprep.subr.bf16.mxu0 0
        %3403 = vmatpush1.bf16.msra.mxu0 %v3383
        %3404 = vmatprep.subr.bf16.mxu0 0
        %3405 = vmatpush1.bf16.msra.mxu0 %v3384
        %3406 = vmatprep.subr.bf16.mxu0 0
        %3407 = vmatpush1.bf16.msra.mxu0 %v3385
        %3408 = vmatprep.subr.bf16.mxu0 0
        %3409 = vmatpush1.bf16.msra.mxu0 %v3386
        %3410 = vmatprep.subr.bf16.mxu0 0
        %3411 = vmatpush1.bf16.msra.mxu0 %v3387
        %3412 = vmatprep.subr.bf16.mxu0 0
        %3413 = vmatpush1.bf16.msra.mxu0 0
        %3414 = vmatprep.subr.bf16.mxu0 0
        %3415 = vmatpush1.bf16.msra.mxu0 0
        %3416 = vmatprep.subr.bf16.mxu0 0
        %3417 = vmatpush1.bf16.msra.mxu0 0
        %3418 = vmatprep.subr.bf16.mxu0 0
        %3419 = vmatpush1.bf16.msra.mxu0 0
        %3420 = vmatprep.subr.bf16.mxu0 0
        %3421 = vmatpush1.bf16.msra.mxu0 0
        %3422 = vmatprep.subr.bf16.mxu0 0
        %3423 = vmatpush1.bf16.msra.mxu0 0
        %3424 = vmatprep.subr.bf16.mxu0 0
        %3425 = vmatpush1.bf16.msra.mxu0 0
        %3426 = vmatprep.subr.bf16.mxu0 0
        %3427 = vmatpush1.bf16.msra.mxu0 0
        %3428 = vmatprep.mubr.bf16.mxu0 0
        %3429 = vmatmul.mubr.bf16.gmra.mrb[0].mxu0 %v3109
        %v3430 = vpop.f32.mrb[0].mxu0
        %v3431 = vadd.f32 0.0, %v3430
        %v3432 = vpop.f32.mrb[0].mxu0
        %v3433 = vpop.f32.mrb[0].mxu0
        %v3434 = vadd.f32 0.0, %v3433
        %v3435 = vpop.f32.mrb[0].mxu0
        %3436 = vmatprep.mubr.bf16.mxu0 0
        %3437 = vmatmul.mubr.bf16.gmra.mrb[0].mxu0 %v3111
        %v3438 = vpop.f32.mrb[0].mxu0
        %v3439 = vadd.f32 0.0, %v3438
        %v3440 = vpop.f32.mrb[0].mxu0
        %v3441 = vpop.f32.mrb[0].mxu0
        %v3442 = vadd.f32 0.0, %v3441
        %v3443 = vpop.f32.mrb[0].mxu0
        %3444 = vmatprep.mubr.bf16.mxu0 0
        %3445 = vmatmul.mubr.bf16.gmra.mrb[0].mxu0 %v3114
        %v3446 = vpop.f32.mrb[0].mxu0
        %v3447 = vadd.f32 0.0, %v3446
        %v3448 = vpop.f32.mrb[0].mxu0
        %v3449 = vpop.f32.mrb[0].mxu0
        %v3450 = vadd.f32 0.0, %v3449
        %v3451 = vpop.f32.mrb[0].mxu0
        %3452 = vmatprep.mubr.bf16.mxu0 0
        %3453 = vmatmul.mubr.bf16.gmra.mrb[0].mxu0 %v3116
        %v3454 = vpop.f32.mrb[0].mxu0
        %v3455 = vadd.f32 0.0, %v3454
        %v3456 = vpop.f32.mrb[0].mxu0
        %v3457 = vpop.f32.mrb[0].mxu0
        %v3458 = vadd.f32 0.0, %v3457
        %v3459 = vpop.f32.mrb[0].mxu0
        %3460 = vmatprep.mubr.bf16.mxu0 0
        %3461 = vmatmul.mubr.bf16.gmra.mrb[0].mxu0 %v3119
        %v3462 = vpop.f32.mrb[0].mxu0
        %v3463 = vadd.f32 0.0, %v3462
        %v3464 = vpop.f32.mrb[0].mxu0
        %v3465 = vpop.f32.mrb[0].mxu0
        %v3466 = vadd.f32 0.0, %v3465
        %v3467 = vpop.f32.mrb[0].mxu0
        %3468 = vmatprep.mubr.bf16.mxu0 0
        %3469 = vmatmul.mubr.bf16.gmra.mrb[0].mxu0 %v3121
        %v3470 = vpop.f32.mrb[0].mxu0
        %v3471 = vadd.f32 0.0, %v3470
        %v3472 = vpop.f32.mrb[0].mxu0
        %v3473 = vpop.f32.mrb[0].mxu0
        %v3474 = vadd.f32 0.0, %v3473
        %v3475 = vpop.f32.mrb[0].mxu0
        %3476 = vmatprep.mubr.bf16.mxu0 0
        %3477 = vmatmul.mubr.bf16.gmra.mrb[0].mxu0 %v3124
        %v3478 = vpop.f32.mrb[0].mxu0
        %v3479 = vadd.f32 0.0, %v3478
        %v3480 = vpop.f32.mrb[0].mxu0
        %v3481 = vpop.f32.mrb[0].mxu0
        %v3482 = vadd.f32 0.0, %v3481
        %v3483 = vpop.f32.mrb[0].mxu0
        %3484 = vmatprep.mubr.bf16.mxu0 0
        %3485 = vmatmul.mubr.bf16.gmra.mrb[0].mxu0 %v3126
        %v3486 = vpop.f32.mrb[0].mxu0
        %v3487 = vadd.f32 0.0, %v3486
        %v3488 = vpop.f32.mrb[0].mxu0
        %v3489 = vpop.f32.mrb[0].mxu0
        %v3490 = vadd.f32 0.0, %v3489
        %v3491 = vpop.f32.mrb[0].mxu0
        %3492 = vmatprep.mubr.bf16.mxu0 0
        %3493 = vmatmul.mubr.bf16.gmra.mrb[0].mxu0 %v3129
        %v3494 = vpop.f32.mrb[0].mxu0
        %v3495 = vadd.f32 0.0, %v3494
        %v3496 = vpop.f32.mrb[0].mxu0
        %v3497 = vpop.f32.mrb[0].mxu0
        %v3498 = vadd.f32 0.0, %v3497
        %v3499 = vpop.f32.mrb[0].mxu0
        %3500 = vmatprep.mubr.bf16.mxu0 0
        %3501 = vmatmul.mubr.bf16.gmra.mrb[0].mxu0 %v3131
        %v3502 = vpop.f32.mrb[0].mxu0
        %v3503 = vadd.f32 0.0, %v3502
        %v3504 = vpop.f32.mrb[0].mxu0
        %v3505 = vpop.f32.mrb[0].mxu0
        %v3506 = vadd.f32 0.0, %v3505
        %v3507 = vpop.f32.mrb[0].mxu0
        %3508 = vmatprep.mubr.bf16.mxu0 0
        %3509 = vmatmul.mubr.bf16.gmra.mrb[0].mxu0 %v3134
        %v3510 = vpop.f32.mrb[0].mxu0
        %v3511 = vadd.f32 0.0, %v3510
        %v3512 = vpop.f32.mrb[0].mxu0
        %v3513 = vpop.f32.mrb[0].mxu0
        %v3514 = vadd.f32 0.0, %v3513
        %v3515 = vpop.f32.mrb[0].mxu0
        %3516 = vmatprep.mubr.bf16.mxu0 0
        %3517 = vmatmul.mubr.bf16.gmra.mrb[0].mxu0 %v3136
        %v3518 = vpop.f32.mrb[0].mxu0
        %v3519 = vadd.f32 0.0, %v3518
        %v3520 = vpop.f32.mrb[0].mxu0
        %v3521 = vpop.f32.mrb[0].mxu0
        %v3522 = vadd.f32 0.0, %v3521
        %v3523 = vpop.f32.mrb[0].mxu0
        %3524 = vmatprep.mubr.bf16.mxu0 0
        %3525 = vmatmul.mubr.bf16.gmra.mrb[0].mxu0 %v3139
        %v3526 = vpop.f32.mrb[0].mxu0
        %v3527 = vadd.f32 0.0, %v3526
        %v3528 = vpop.f32.mrb[0].mxu0
        %v3529 = vpop.f32.mrb[0].mxu0
        %v3530 = vadd.f32 0.0, %v3529
        %v3531 = vpop.f32.mrb[0].mxu0
        %3532 = vmatprep.mubr.bf16.mxu0 0
        %3533 = vmatmul.mubr.bf16.gmra.mrb[0].mxu0 %v3141
        %v3534 = vpop.f32.mrb[0].mxu0
        %v3535 = vadd.f32 0.0, %v3534
        %v3536 = vpop.f32.mrb[0].mxu0
        %v3537 = vpop.f32.mrb[0].mxu0
        %v3538 = vadd.f32 0.0, %v3537
        %v3539 = vpop.f32.mrb[0].mxu0
        %3540 = vmatprep.mubr.bf16.mxu0 0
        %3541 = vmatmul.mubr.bf16.gmra.mrb[0].mxu0 %v3144
        %v3542 = vpop.f32.mrb[0].mxu0
        %v3543 = vadd.f32 0.0, %v3542
        %v3544 = vpop.f32.mrb[0].mxu0
        %v3545 = vpop.f32.mrb[0].mxu0
        %v3546 = vadd.f32 0.0, %v3545
        %v3547 = vpop.f32.mrb[0].mxu0
        %3548 = vmatprep.mubr.bf16.mxu0 0
        %3549 = vmatmul.mubr.bf16.gmra.mrb[0].mxu0 %v3146
        %v3550 = vpop.f32.mrb[0].mxu0
        %v3551 = vadd.f32 0.0, %v3550
        %v3552 = vpop.f32.mrb[0].mxu0
        %v3553 = vpop.f32.mrb[0].mxu0
        %v3554 = vadd.f32 0.0, %v3553
        %v3555 = vpop.f32.mrb[0].mxu0
        %3556 = vmatprep.mubr.bf16.mxu0 0
        %3557 = vmatmul.mubr.bf16.gmra.mrb[0].mxu0 %v3149
        %v3558 = vpop.f32.mrb[0].mxu0
        %v3559 = vadd.f32 0.0, %v3558
        %v3560 = vpop.f32.mrb[0].mxu0
        %v3561 = vpop.f32.mrb[0].mxu0
        %v3562 = vadd.f32 0.0, %v3561
        %v3563 = vpop.f32.mrb[0].mxu0
        %3564 = vmatprep.mubr.bf16.mxu0 0
        %3565 = vmatmul.mubr.bf16.gmra.mrb[0].mxu0 %v3151
        %v3566 = vpop.f32.mrb[0].mxu0
        %v3567 = vadd.f32 0.0, %v3566
        %v3568 = vpop.f32.mrb[0].mxu0
        %v3569 = vpop.f32.mrb[0].mxu0
        %v3570 = vadd.f32 0.0, %v3569
        %v3571 = vpop.f32.mrb[0].mxu0
        %3572 = vmatprep.mubr.bf16.mxu0 0
        %3573 = vmatmul.mubr.bf16.gmra.mrb[0].mxu0 %v3154
        %v3574 = vpop.f32.mrb[0].mxu0
        %v3575 = vadd.f32 0.0, %v3574
        %v3576 = vpop.f32.mrb[0].mxu0
        %v3577 = vpop.f32.mrb[0].mxu0
        %v3578 = vadd.f32 0.0, %v3577
        %v3579 = vpop.f32.mrb[0].mxu0
        %3580 = vmatprep.mubr.bf16.mxu0 0
        %3581 = vmatmul.mubr.bf16.gmra.mrb[0].mxu0 %v3156
        %v3582 = vpop.f32.mrb[0].mxu0
        %v3583 = vadd.f32 0.0, %v3582
        %v3584 = vpop.f32.mrb[0].mxu0
        %v3585 = vpop.f32.mrb[0].mxu0
        %v3586 = vadd.f32 0.0, %v3585
        %v3587 = vpop.f32.mrb[0].mxu0
        %3588 = vmatprep.mubr.bf16.mxu0 0
        %3589 = vmatmul.mubr.bf16.gmra.mrb[0].mxu0 %v3159
        %v3590 = vpop.f32.mrb[0].mxu0
        %v3591 = vadd.f32 0.0, %v3590
        %v3592 = vpop.f32.mrb[0].mxu0
        %v3593 = vpop.f32.mrb[0].mxu0
        %v3594 = vadd.f32 0.0, %v3593
        %v3595 = vpop.f32.mrb[0].mxu0
        %3596 = vmatprep.mubr.bf16.mxu0 0
        %3597 = vmatmul.mubr.bf16.gmra.mrb[0].mxu0 %v3161
        %v3598 = vpop.f32.mrb[0].mxu0
        %v3599 = vadd.f32 0.0, %v3598
        %v3600 = vpop.f32.mrb[0].mxu0
        %v3601 = vpop.f32.mrb[0].mxu0
        %v3602 = vadd.f32 0.0, %v3601
        %v3603 = vpop.f32.mrb[0].mxu0
        %3604 = vmatprep.mubr.bf16.mxu0 0
        %3605 = vmatmul.mubr.bf16.gmra.mrb[0].mxu0 %v3164
        %v3606 = vpop.f32.mrb[0].mxu0
        %v3607 = vadd.f32 0.0, %v3606
        %v3608 = vpop.f32.mrb[0].mxu0
        %v3609 = vpop.f32.mrb[0].mxu0
        %v3610 = vadd.f32 0.0, %v3609
        %v3611 = vpop.f32.mrb[0].mxu0
        %3612 = vmatprep.mubr.bf16.mxu0 0
        %3613 = vmatmul.mubr.bf16.gmra.mrb[0].mxu0 %v3166
        %v3614 = vpop.f32.mrb[0].mxu0
        %v3615 = vadd.f32 0.0, %v3614
        %v3616 = vpop.f32.mrb[0].mxu0
        %v3617 = vpop.f32.mrb[0].mxu0
        %v3618 = vadd.f32 0.0, %v3617
        %v3619 = vpop.f32.mrb[0].mxu0
        %3620 = vmatprep.mubr.bf16.mxu0 0
        %3621 = vmatmul.mubr.bf16.gmra.mrb[0].mxu0 %v3169
        %v3622 = vpop.f32.mrb[0].mxu0
        %v3623 = vadd.f32 0.0, %v3622
        %v3624 = vpop.f32.mrb[0].mxu0
        %v3625 = vpop.f32.mrb[0].mxu0
        %v3626 = vadd.f32 0.0, %v3625
        %v3627 = vpop.f32.mrb[0].mxu0
        %3628 = vmatprep.mubr.bf16.mxu0 0
        %3629 = vmatmul.mubr.bf16.gmra.mrb[0].mxu0 %v3171
        %v3630 = vpop.f32.mrb[0].mxu0
        %v3631 = vadd.f32 0.0, %v3630
        %v3632 = vpop.f32.mrb[0].mxu0
        %v3633 = vpop.f32.mrb[0].mxu0
        %v3634 = vadd.f32 0.0, %v3633
        %v3635 = vpop.f32.mrb[0].mxu0
        %3636 = vmatprep.mubr.bf16.mxu0 0
        %3637 = vmatmul.mubr.bf16.gmra.mrb[0].mxu0 %v3174
        %v3638 = vpop.f32.mrb[0].mxu0
        %v3639 = vadd.f32 0.0, %v3638
        %v3640 = vpop.f32.mrb[0].mxu0
        %v3641 = vpop.f32.mrb[0].mxu0
        %v3642 = vadd.f32 0.0, %v3641
        %v3643 = vpop.f32.mrb[0].mxu0
        %3644 = vmatprep.mubr.bf16.mxu0 0
        %3645 = vmatmul.mubr.bf16.gmra.mrb[0].mxu0 %v3176
        %v3646 = vpop.f32.mrb[0].mxu0
        %v3647 = vadd.f32 0.0, %v3646
        %v3648 = vpop.f32.mrb[0].mxu0
        %v3649 = vpop.f32.mrb[0].mxu0
        %v3650 = vadd.f32 0.0, %v3649
        %v3651 = vpop.f32.mrb[0].mxu0
        %3652 = vmatprep.mubr.bf16.mxu0 0
        %3653 = vmatmul.mubr.bf16.gmra.mrb[0].mxu0 %v3179
        %v3654 = vpop.f32.mrb[0].mxu0
        %v3655 = vadd.f32 0.0, %v3654
        %v3656 = vpop.f32.mrb[0].mxu0
        %v3657 = vpop.f32.mrb[0].mxu0
        %v3658 = vadd.f32 0.0, %v3657
        %v3659 = vpop.f32.mrb[0].mxu0
        %3660 = vmatprep.mubr.bf16.mxu0 0
        %3661 = vmatmul.mubr.bf16.gmra.mrb[0].mxu0 %v3181
        %v3662 = vpop.f32.mrb[0].mxu0
        %v3663 = vadd.f32 0.0, %v3662
        %v3664 = vpop.f32.mrb[0].mxu0
        %v3665 = vpop.f32.mrb[0].mxu0
        %v3666 = vadd.f32 0.0, %v3665
        %v3667 = vpop.f32.mrb[0].mxu0
        %3668 = vmatprep.mubr.bf16.mxu0 0
        %3669 = vmatmul.mubr.bf16.gmra.mrb[0].mxu0 %v3184
        %v3670 = vpop.f32.mrb[0].mxu0
        %v3671 = vadd.f32 0.0, %v3670
        %v3672 = vpop.f32.mrb[0].mxu0
        %v3673 = vpop.f32.mrb[0].mxu0
        %v3674 = vadd.f32 0.0, %v3673
        %v3675 = vpop.f32.mrb[0].mxu0
        %3676 = vmatprep.mubr.bf16.mxu0 0
        %3677 = vmatmul.mubr.bf16.gmra.mrb[0].mxu0 %v3186
        %v3678 = vpop.f32.mrb[0].mxu0
        %v3679 = vadd.f32 0.0, %v3678
        %v3680 = vpop.f32.mrb[0].mxu0
        %v3681 = vpop.f32.mrb[0].mxu0
        %v3682 = vadd.f32 0.0, %v3681
        %v3683 = vpop.f32.mrb[0].mxu0
        %3684 = vmatprep.mubr.bf16.mxu0 0
        %3685 = vmatmul.mubr.bf16.gmra.mrb[0].mxu0 %v3189
        %v3686 = vpop.f32.mrb[0].mxu0
        %v3687 = vadd.f32 0.0, %v3686
        %v3688 = vpop.f32.mrb[0].mxu0
        %v3689 = vpop.f32.mrb[0].mxu0
        %v3690 = vadd.f32 0.0, %v3689
        %v3691 = vpop.f32.mrb[0].mxu0
        %3692 = vmatprep.mubr.bf16.mxu0 0
        %3693 = vmatmul.mubr.bf16.gmra.mrb[0].mxu0 %v3191
        %v3694 = vpop.f32.mrb[0].mxu0
        %v3695 = vadd.f32 0.0, %v3694
        %v3696 = vpop.f32.mrb[0].mxu0
        %v3697 = vpop.f32.mrb[0].mxu0
        %v3698 = vadd.f32 0.0, %v3697
        %v3699 = vpop.f32.mrb[0].mxu0
        %3700 = vmatprep.mubr.bf16.mxu0 0
        %3701 = vmatmul.mubr.bf16.gmra.mrb[0].mxu0 %v3194
        %v3702 = vpop.f32.mrb[0].mxu0
        %v3703 = vadd.f32 0.0, %v3702
        %v3704 = vpop.f32.mrb[0].mxu0
        %v3705 = vpop.f32.mrb[0].mxu0
        %v3706 = vadd.f32 0.0, %v3705
        %v3707 = vpop.f32.mrb[0].mxu0
        %3708 = vmatprep.mubr.bf16.mxu0 0
        %3709 = vmatmul.mubr.bf16.gmra.mrb[0].mxu0 %v3196
        %v3710 = vpop.f32.mrb[0].mxu0
        %v3711 = vadd.f32 0.0, %v3710
        %v3712 = vpop.f32.mrb[0].mxu0
        %v3713 = vpop.f32.mrb[0].mxu0
        %v3714 = vadd.f32 0.0, %v3713
        %v3715 = vpop.f32.mrb[0].mxu0
        %3716 = vmatprep.mubr.bf16.mxu0 0
        %3717 = vmatmul.mubr.bf16.gmra.mrb[0].mxu0 %v3199
        %v3718 = vpop.f32.mrb[0].mxu0
        %v3719 = vadd.f32 0.0, %v3718
        %v3720 = vpop.f32.mrb[0].mxu0
        %v3721 = vpop.f32.mrb[0].mxu0
        %v3722 = vadd.f32 0.0, %v3721
        %v3723 = vpop.f32.mrb[0].mxu0
        %3724 = vmatprep.mubr.bf16.mxu0 0
        %3725 = vmatmul.mubr.bf16.gmra.mrb[0].mxu0 %v3201
        %v3726 = vpop.f32.mrb[0].mxu0
        %v3727 = vadd.f32 0.0, %v3726
        %v3728 = vpop.f32.mrb[0].mxu0
        %v3729 = vpop.f32.mrb[0].mxu0
        %v3730 = vadd.f32 0.0, %v3729
        %v3731 = vpop.f32.mrb[0].mxu0
        %3732 = vmatprep.mubr.bf16.mxu0 0
        %3733 = vmatmul.mubr.bf16.gmra.mrb[0].mxu0 %v3204
        %v3734 = vpop.f32.mrb[0].mxu0
        %v3735 = vadd.f32 0.0, %v3734
        %v3736 = vpop.f32.mrb[0].mxu0
        %v3737 = vpop.f32.mrb[0].mxu0
        %v3738 = vadd.f32 0.0, %v3737
        %v3739 = vpop.f32.mrb[0].mxu0
        %3740 = vmatprep.mubr.bf16.mxu0 0
        %3741 = vmatmul.mubr.bf16.gmra.mrb[0].mxu0 %v3206
        %v3742 = vpop.f32.mrb[0].mxu0
        %v3743 = vadd.f32 0.0, %v3742
        %v3744 = vpop.f32.mrb[0].mxu0
        %v3745 = vpop.f32.mrb[0].mxu0
        %v3746 = vadd.f32 0.0, %v3745
        %v3747 = vpop.f32.mrb[0].mxu0
        %3748 = vmatprep.mubr.bf16.mxu0 0
        %3749 = vmatmul.mubr.bf16.gmra.mrb[0].mxu0 %v3209
        %v3750 = vpop.f32.mrb[0].mxu0
        %v3751 = vadd.f32 0.0, %v3750
        %v3752 = vpop.f32.mrb[0].mxu0
        %v3753 = vpop.f32.mrb[0].mxu0
        %v3754 = vadd.f32 0.0, %v3753
        %v3755 = vpop.f32.mrb[0].mxu0
        %3756 = vmatprep.mubr.bf16.mxu0 0
        %3757 = vmatmul.mubr.bf16.gmra.mrb[0].mxu0 %v3211
        %v3758 = vpop.f32.mrb[0].mxu0
        %v3759 = vadd.f32 0.0, %v3758
        %v3760 = vpop.f32.mrb[0].mxu0
        %v3761 = vpop.f32.mrb[0].mxu0
        %v3762 = vadd.f32 0.0, %v3761
        %v3763 = vpop.f32.mrb[0].mxu0
        %3764 = vmatprep.mubr.bf16.mxu0 0
        %3765 = vmatmul.mubr.bf16.gmra.mrb[0].mxu0 %v3214
        %v3766 = vpop.f32.mrb[0].mxu0
        %v3767 = vadd.f32 0.0, %v3766
        %v3768 = vpop.f32.mrb[0].mxu0
        %v3769 = vpop.f32.mrb[0].mxu0
        %v3770 = vadd.f32 0.0, %v3769
        %v3771 = vpop.f32.mrb[0].mxu0
        %3772 = vmatprep.mubr.bf16.mxu0 0
        %3773 = vmatmul.mubr.bf16.gmra.mrb[0].mxu0 %v3216
        %v3774 = vpop.f32.mrb[0].mxu0
        %v3775 = vadd.f32 0.0, %v3774
        %v3776 = vpop.f32.mrb[0].mxu0
        %v3777 = vpop.f32.mrb[0].mxu0
        %v3778 = vadd.f32 0.0, %v3777
        %v3779 = vpop.f32.mrb[0].mxu0
        %3780 = vmatprep.mubr.bf16.mxu0 0
        %3781 = vmatmul.mubr.bf16.gmra.mrb[0].mxu0 %v3219
        %v3782 = vpop.f32.mrb[0].mxu0
        %v3783 = vadd.f32 0.0, %v3782
        %v3784 = vpop.f32.mrb[0].mxu0
        %v3785 = vpop.f32.mrb[0].mxu0
        %v3786 = vadd.f32 0.0, %v3785
        %v3787 = vpop.f32.mrb[0].mxu0
        %3788 = vmatprep.mubr.bf16.mxu0 0
        %3789 = vmatmul.mubr.bf16.gmra.mrb[0].mxu0 %v3221
        %v3790 = vpop.f32.mrb[0].mxu0
        %v3791 = vadd.f32 0.0, %v3790
        %v3792 = vpop.f32.mrb[0].mxu0
        %v3793 = vpop.f32.mrb[0].mxu0
        %v3794 = vadd.f32 0.0, %v3793
        %v3795 = vpop.f32.mrb[0].mxu0
        %3796 = vmatprep.mubr.bf16.mxu0 0
        %3797 = vmatmul.mubr.bf16.gmra.mrb[0].mxu0 %v3224
        %v3798 = vpop.f32.mrb[0].mxu0
        %v3799 = vadd.f32 0.0, %v3798
        %v3800 = vpop.f32.mrb[0].mxu0
        %v3801 = vpop.f32.mrb[0].mxu0
        %v3802 = vadd.f32 0.0, %v3801
        %v3803 = vpop.f32.mrb[0].mxu0
        %3804 = vmatprep.mubr.bf16.mxu0 0
        %3805 = vmatmul.mubr.bf16.gmra.mrb[0].mxu0 %v3226
        %v3806 = vpop.f32.mrb[0].mxu0
        %v3807 = vadd.f32 0.0, %v3806
        %v3808 = vpop.f32.mrb[0].mxu0
        %v3809 = vpop.f32.mrb[0].mxu0
        %v3810 = vadd.f32 0.0, %v3809
        %v3811 = vpop.f32.mrb[0].mxu0
        %3812 = vmatprep.mubr.bf16.mxu0 0
        %3813 = vmatmul.mubr.bf16.gmra.mrb[0].mxu0 %v3229
        %v3814 = vpop.f32.mrb[0].mxu0
        %v3815 = vadd.f32 0.0, %v3814
        %v3816 = vpop.f32.mrb[0].mxu0
        %v3817 = vpop.f32.mrb[0].mxu0
        %v3818 = vadd.f32 0.0, %v3817
        %v3819 = vpop.f32.mrb[0].mxu0
        %3820 = vmatprep.mubr.bf16.mxu0 0
        %3821 = vmatmul.mubr.bf16.gmra.mrb[0].mxu0 %v3231
        %v3822 = vpop.f32.mrb[0].mxu0
        %v3823 = vadd.f32 0.0, %v3822
        %v3824 = vpop.f32.mrb[0].mxu0
        %v3825 = vpop.f32.mrb[0].mxu0
        %v3826 = vadd.f32 0.0, %v3825
        %v3827 = vpop.f32.mrb[0].mxu0
        %3828 = vmatprep.mubr.bf16.mxu0 0
        %3829 = vmatmul.mubr.bf16.gmra.mrb[0].mxu0 %v3234
        %v3830 = vpop.f32.mrb[0].mxu0
        %v3831 = vadd.f32 0.0, %v3830
        %v3832 = vpop.f32.mrb[0].mxu0
        %v3833 = vpop.f32.mrb[0].mxu0
        %v3834 = vadd.f32 0.0, %v3833
        %v3835 = vpop.f32.mrb[0].mxu0
        %3836 = vmatprep.mubr.bf16.mxu0 0
        %3837 = vmatmul.mubr.bf16.gmra.mrb[0].mxu0 %v3236
        %v3838 = vpop.f32.mrb[0].mxu0
        %v3839 = vadd.f32 0.0, %v3838
        %v3840 = vpop.f32.mrb[0].mxu0
        %v3841 = vpop.f32.mrb[0].mxu0
        %v3842 = vadd.f32 0.0, %v3841
        %v3843 = vpop.f32.mrb[0].mxu0
        %3844 = vmatprep.mubr.bf16.mxu0 0
        %3845 = vmatmul.mubr.bf16.gmra.mrb[0].mxu0 %v3239
        %v3846 = vpop.f32.mrb[0].mxu0
        %v3847 = vadd.f32 0.0, %v3846
        %v3848 = vpop.f32.mrb[0].mxu0
        %v3849 = vpop.f32.mrb[0].mxu0
        %v3850 = vadd.f32 0.0, %v3849
        %v3851 = vpop.f32.mrb[0].mxu0
        %3852 = vmatprep.mubr.bf16.mxu0 0
        %3853 = vmatmul.mubr.bf16.gmra.mrb[0].mxu0 %v3241
        %v3854 = vpop.f32.mrb[0].mxu0
        %v3855 = vadd.f32 0.0, %v3854
        %v3856 = vpop.f32.mrb[0].mxu0
        %v3857 = vpop.f32.mrb[0].mxu0
        %v3858 = vadd.f32 0.0, %v3857
        %v3859 = vpop.f32.mrb[0].mxu0
        %3860 = vmatprep.mubr.bf16.mxu0 0
        %3861 = vmatmul.mubr.bf16.gmra.mrb[0].mxu0 %v3244
        %v3862 = vpop.f32.mrb[0].mxu0
        %v3863 = vadd.f32 0.0, %v3862
        %v3864 = vpop.f32.mrb[0].mxu0
        %v3865 = vpop.f32.mrb[0].mxu0
        %v3866 = vadd.f32 0.0, %v3865
        %v3867 = vpop.f32.mrb[0].mxu0
        %3868 = vmatprep.mubr.bf16.mxu0 0
        %3869 = vmatmul.mubr.bf16.gmra.mrb[0].mxu0 %v3246
        %v3870 = vpop.f32.mrb[0].mxu0
        %v3871 = vadd.f32 0.0, %v3870
        %v3872 = vpop.f32.mrb[0].mxu0
        %v3873 = vpop.f32.mrb[0].mxu0
        %v3874 = vadd.f32 0.0, %v3873
        %v3875 = vpop.f32.mrb[0].mxu0
        %3876 = vmatprep.mubr.bf16.mxu0 0
        %3877 = vmatmul.mubr.bf16.gmra.mrb[0].mxu0 %v3249
        %v3878 = vpop.f32.mrb[0].mxu0
        %v3879 = vadd.f32 0.0, %v3878
        %v3880 = vpop.f32.mrb[0].mxu0
        %v3881 = vpop.f32.mrb[0].mxu0
        %v3882 = vadd.f32 0.0, %v3881
        %v3883 = vpop.f32.mrb[0].mxu0
        %3884 = vmatprep.mubr.bf16.mxu0 0
        %3885 = vmatmul.mubr.bf16.gmra.mrb[0].mxu0 %v3251
        %v3886 = vpop.f32.mrb[0].mxu0
        %v3887 = vadd.f32 0.0, %v3886
        %v3888 = vpop.f32.mrb[0].mxu0
        %v3889 = vpop.f32.mrb[0].mxu0
        %v3890 = vadd.f32 0.0, %v3889
        %v3891 = vpop.f32.mrb[0].mxu0
        %3892 = vmatprep.mubr.bf16.mxu0 0
        %3893 = vmatmul.mubr.bf16.gmra.mrb[0].mxu0 %v3254
        %v3894 = vpop.f32.mrb[0].mxu0
        %v3895 = vadd.f32 0.0, %v3894
        %v3896 = vpop.f32.mrb[0].mxu0
        %v3897 = vpop.f32.mrb[0].mxu0
        %v3898 = vadd.f32 0.0, %v3897
        %v3899 = vpop.f32.mrb[0].mxu0
        %3900 = vmatprep.mubr.bf16.mxu0 0
        %3901 = vmatmul.mubr.bf16.gmra.mrb[0].mxu0 %v3256
        %v3902 = vpop.f32.mrb[0].mxu0
        %v3903 = vadd.f32 0.0, %v3902
        %v3904 = vpop.f32.mrb[0].mxu0
        %v3905 = vpop.f32.mrb[0].mxu0
        %v3906 = vadd.f32 0.0, %v3905
        %v3907 = vpop.f32.mrb[0].mxu0
        %3908 = vmatprep.mubr.bf16.mxu0 0
        %3909 = vmatmul.mubr.bf16.gmra.mrb[0].mxu0 %v3259
        %v3910 = vpop.f32.mrb[0].mxu0
        %v3911 = vadd.f32 0.0, %v3910
        %v3912 = vpop.f32.mrb[0].mxu0
        %v3913 = vpop.f32.mrb[0].mxu0
        %v3914 = vadd.f32 0.0, %v3913
        %v3915 = vpop.f32.mrb[0].mxu0
        %3916 = vmatprep.mubr.bf16.mxu0 0
        %3917 = vmatmul.mubr.bf16.gmra.mrb[0].mxu0 %v3261
        %v3918 = vpop.f32.mrb[0].mxu0
        %v3919 = vadd.f32 0.0, %v3918
        %v3920 = vpop.f32.mrb[0].mxu0
        %v3921 = vpop.f32.mrb[0].mxu0
        %v3922 = vadd.f32 0.0, %v3921
        %v3923 = vpop.f32.mrb[0].mxu0
        %3924 = vmatprep.mubr.bf16.mxu0 0
        %3925 = vmatmul.mubr.bf16.gmra.mrb[0].mxu0 %v3264
        %v3926 = vpop.f32.mrb[0].mxu0
        %v3927 = vadd.f32 0.0, %v3926
        %v3928 = vpop.f32.mrb[0].mxu0
        %v3929 = vpop.f32.mrb[0].mxu0
        %v3930 = vadd.f32 0.0, %v3929
        %v3931 = vpop.f32.mrb[0].mxu0
        %3932 = vmatprep.mubr.bf16.mxu0 0
        %3933 = vmatmul.mubr.bf16.gmra.mrb[0].mxu0 %v3266
        %v3934 = vpop.f32.mrb[0].mxu0
        %v3935 = vadd.f32 0.0, %v3934
        %v3936 = vpop.f32.mrb[0].mxu0
        %v3937 = vpop.f32.mrb[0].mxu0
        %v3938 = vadd.f32 0.0, %v3937
        %v3939 = vpop.f32.mrb[0].mxu0
        %3940 = vdwg.mxu0
        %v3941 = vadd.f32 %v2532, %v3431
        %v3942 = vadd.f32 %v2535, %v3434
        %v3943 = vadd.f32 %v2540, %v3439
        %v3944 = vadd.f32 %v2543, %v3442
        %v3945 = vadd.f32 %v2548, %v3447
        %v3946 = vadd.f32 %v2551, %v3450
        %v3947 = vadd.f32 %v2556, %v3455
        %v3948 = vadd.f32 %v2559, %v3458
        %v3949 = vadd.f32 %v2564, %v3463
        %v3950 = vadd.f32 %v2567, %v3466
        %v3951 = vadd.f32 %v2572, %v3471
        %v3952 = vadd.f32 %v2575, %v3474
        %v3953 = vadd.f32 %v2580, %v3479
        %v3954 = vadd.f32 %v2583, %v3482
        %v3955 = vadd.f32 %v2588, %v3487
        %v3956 = vadd.f32 %v2591, %v3490
        %v3957 = vadd.f32 %v2596, %v3495
        %v3958 = vadd.f32 %v2599, %v3498
        %v3959 = vadd.f32 %v2604, %v3503
        %v3960 = vadd.f32 %v2607, %v3506
        %v3961 = vadd.f32 %v2612, %v3511
        %v3962 = vadd.f32 %v2615, %v3514
        %v3963 = vadd.f32 %v2620, %v3519
        %v3964 = vadd.f32 %v2623, %v3522
        %v3965 = vadd.f32 %v2628, %v3527
        %v3966 = vadd.f32 %v2631, %v3530
        %v3967 = vadd.f32 %v2636, %v3535
        %v3968 = vadd.f32 %v2639, %v3538
        %v3969 = vadd.f32 %v2644, %v3543
        %v3970 = vadd.f32 %v2647, %v3546
        %v3971 = vadd.f32 %v2652, %v3551
        %v3972 = vadd.f32 %v2655, %v3554
        %v3973 = vadd.f32 %v2660, %v3559
        %v3974 = vadd.f32 %v2663, %v3562
        %v3975 = vadd.f32 %v2668, %v3567
        %v3976 = vadd.f32 %v2671, %v3570
        %v3977 = vadd.f32 %v2676, %v3575
        %v3978 = vadd.f32 %v2679, %v3578
        %v3979 = vadd.f32 %v2684, %v3583
        %v3980 = vadd.f32 %v2687, %v3586
        %v3981 = vadd.f32 %v2692, %v3591
        %v3982 = vadd.f32 %v2695, %v3594
        %v3983 = vadd.f32 %v2700, %v3599
        %v3984 = vadd.f32 %v2703, %v3602
        %v3985 = vadd.f32 %v2708, %v3607
        %v3986 = vadd.f32 %v2711, %v3610
        %v3987 = vadd.f32 %v2716, %v3615
        %v3988 = vadd.f32 %v2719, %v3618
        %v3989 = vadd.f32 %v2724, %v3623
        %v3990 = vadd.f32 %v2727, %v3626
        %v3991 = vadd.f32 %v2732, %v3631
        %v3992 = vadd.f32 %v2735, %v3634
        %v3993 = vadd.f32 %v2740, %v3639
        %v3994 = vadd.f32 %v2743, %v3642
        %v3995 = vadd.f32 %v2748, %v3647
        %v3996 = vadd.f32 %v2751, %v3650
        %v3997 = vadd.f32 %v2756, %v3655
        %v3998 = vadd.f32 %v2759, %v3658
        %v3999 = vadd.f32 %v2764, %v3663
        %v4000 = vadd.f32 %v2767, %v3666
        %v4001 = vadd.f32 %v2772, %v3671
        %v4002 = vadd.f32 %v2775, %v3674
        %v4003 = vadd.f32 %v2780, %v3679
        %v4004 = vadd.f32 %v2783, %v3682
        %v4005 = vadd.f32 %v2788, %v3687
        %v4006 = vadd.f32 %v2791, %v3690
        %v4007 = vadd.f32 %v2796, %v3695
        %v4008 = vadd.f32 %v2799, %v3698
        %v4009 = vadd.f32 %v2804, %v3703
        %v4010 = vadd.f32 %v2807, %v3706
        %v4011 = vadd.f32 %v2812, %v3711
        %v4012 = vadd.f32 %v2815, %v3714
        %v4013 = vadd.f32 %v2820, %v3719
        %v4014 = vadd.f32 %v2823, %v3722
        %v4015 = vadd.f32 %v2828, %v3727
        %v4016 = vadd.f32 %v2831, %v3730
        %v4017 = vadd.f32 %v2836, %v3735
        %v4018 = vadd.f32 %v2839, %v3738
        %v4019 = vadd.f32 %v2844, %v3743
        %v4020 = vadd.f32 %v2847, %v3746
        %v4021 = vadd.f32 %v2852, %v3751
        %v4022 = vadd.f32 %v2855, %v3754
        %v4023 = vadd.f32 %v2860, %v3759
        %v4024 = vadd.f32 %v2863, %v3762
        %v4025 = vadd.f32 %v2868, %v3767
        %v4026 = vadd.f32 %v2871, %v3770
        %v4027 = vadd.f32 %v2876, %v3775
        %v4028 = vadd.f32 %v2879, %v3778
        %v4029 = vadd.f32 %v2884, %v3783
        %v4030 = vadd.f32 %v2887, %v3786
        %v4031 = vadd.f32 %v2892, %v3791
        %v4032 = vadd.f32 %v2895, %v3794
        %v4033 = vadd.f32 %v2900, %v3799
        %v4034 = vadd.f32 %v2903, %v3802
        %v4035 = vadd.f32 %v2908, %v3807
        %v4036 = vadd.f32 %v2911, %v3810
        %v4037 = vadd.f32 %v2916, %v3815
        %v4038 = vadd.f32 %v2919, %v3818
        %v4039 = vadd.f32 %v2924, %v3823
        %v4040 = vadd.f32 %v2927, %v3826
        %v4041 = vadd.f32 %v2932, %v3831
        %v4042 = vadd.f32 %v2935, %v3834
        %v4043 = vadd.f32 %v2940, %v3839
        %v4044 = vadd.f32 %v2943, %v3842
        %v4045 = vadd.f32 %v2948, %v3847
        %v4046 = vadd.f32 %v2951, %v3850
        %v4047 = vadd.f32 %v2956, %v3855
        %v4048 = vadd.f32 %v2959, %v3858
        %v4049 = vadd.f32 %v2964, %v3863
        %v4050 = vadd.f32 %v2967, %v3866
        %v4051 = vadd.f32 %v2972, %v3871
        %v4052 = vadd.f32 %v2975, %v3874
        %v4053 = vadd.f32 %v2980, %v3879
        %v4054 = vadd.f32 %v2983, %v3882
        %v4055 = vadd.f32 %v2988, %v3887
        %v4056 = vadd.f32 %v2991, %v3890
        %v4057 = vadd.f32 %v2996, %v3895
        %v4058 = vadd.f32 %v2999, %v3898
        %v4059 = vadd.f32 %v3004, %v3903
        %v4060 = vadd.f32 %v3007, %v3906
        %v4061 = vadd.f32 %v3012, %v3911
        %v4062 = vadd.f32 %v3015, %v3914
        %v4063 = vadd.f32 %v3020, %v3919
        %v4064 = vadd.f32 %v3023, %v3922
        %v4065 = vadd.f32 %v3028, %v3927
        %v4066 = vadd.f32 %v3031, %v3930
        %v4067 = vadd.f32 %v3036, %v3935
        %v4068 = vadd.f32 %v3039, %v3938
        %s4069 = scalar_lea.vmem [#allocation5], 192
        %v4070 = vld [vmem:[%s4069] sm:$0xf]
        %v4071 = vld [vmem:[%s4069 + $0x4] sm:$0xf]
        %v4072 = vld [vmem:[%s4069 + $0x8] sm:$0xf]
        %v4073 = vld [vmem:[%s4069 + $0xc] sm:$0xf]
        %v4074 = vld [vmem:[%s4069 + $0x10] sm:$0xf]
        %v4075 = vld [vmem:[%s4069 + $0x14] sm:$0xf]
        %v4076 = vld [vmem:[%s4069 + $0x18] sm:$0xf]
        %v4077 = vld [vmem:[%s4069 + $0x1c] sm:$0xf]
        %v4078 = vld [vmem:[%s4069 + $0x20] sm:$0xf]
        %v4079 = vld [vmem:[%s4069 + $0x24] sm:$0xf]
        %v4080 = vld [vmem:[%s4069 + $0x28] sm:$0xf]
        %v4081 = vld [vmem:[%s4069 + $0x2c] sm:$0xf]
        %v4082 = vld [vmem:[%s4069 + $0x30] sm:$0xf]
        %v4083 = vld [vmem:[%s4069 + $0x34] sm:$0xf]
        %v4084 = vld [vmem:[%s4069 + $0x38] sm:$0xf]
        %v4085 = vld [vmem:[%s4069 + $0x3c] sm:$0xf]
        %v4102 = vunpack.c.l.b16 %v4070
        %v4103 = vunpack.c.l.b16 %v4071
        %v4104 = vunpack.c.l.b16 %v4072
        %v4105 = vunpack.c.l.b16 %v4073
        %v4106 = vunpack.c.l.b16 %v4074
        %v4107 = vunpack.c.l.b16 %v4075
        %v4108 = vunpack.c.l.b16 %v4076
        %v4109 = vunpack.c.l.b16 %v4077
        %v4110 = vunpack.c.l.b16 %v4078
        %v4111 = vunpack.c.l.b16 %v4079
        %v4112 = vunpack.c.l.b16 %v4080
        %v4113 = vunpack.c.l.b16 %v4081
        %v4114 = vunpack.c.l.b16 %v4082
        %v4115 = vunpack.c.l.b16 %v4083
        %v4116 = vunpack.c.l.b16 %v4084
        %v4117 = vunpack.c.l.b16 %v4085
        %v4118 = vpack.c.b16 %v4103, %v4102
        %v4119 = vpack.c.b16 %v4105, %v4104
        %v4120 = vpack.c.b16 %v4107, %v4106
        %v4121 = vpack.c.b16 %v4109, %v4108
        %v4122 = vpack.c.b16 %v4111, %v4110
        %v4123 = vpack.c.b16 %v4113, %v4112
        %v4124 = vpack.c.b16 %v4115, %v4114
        %v4125 = vpack.c.b16 %v4117, %v4116
        %4134 = vmatprep.subr.bf16.mxu0 0
        %4135 = vmatpush1.bf16.msra.mxu0 %v4118
        %4136 = vmatprep.subr.bf16.mxu0 0
        %4137 = vmatpush1.bf16.msra.mxu0 %v4119
        %4138 = vmatprep.subr.bf16.mxu0 0
        %4139 = vmatpush1.bf16.msra.mxu0 %v4120
        %4140 = vmatprep.subr.bf16.mxu0 0
        %4141 = vmatpush1.bf16.msra.mxu0 %v4121
        %4142 = vmatprep.subr.bf16.mxu0 0
        %4143 = vmatpush1.bf16.msra.mxu0 %v4122
        %4144 = vmatprep.subr.bf16.mxu0 0
        %4145 = vmatpush1.bf16.msra.mxu0 %v4123
        %4146 = vmatprep.subr.bf16.mxu0 0
        %4147 = vmatpush1.bf16.msra.mxu0 %v4124
        %4148 = vmatprep.subr.bf16.mxu0 0
        %4149 = vmatpush1.bf16.msra.mxu0 %v4125
        %4150 = vmatprep.subr.bf16.mxu0 0
        %4151 = vmatpush1.bf16.msra.mxu0 0
        %4152 = vmatprep.subr.bf16.mxu0 0
        %4153 = vmatpush1.bf16.msra.mxu0 0
        %4154 = vmatprep.subr.bf16.mxu0 0
        %4155 = vmatpush1.bf16.msra.mxu0 0
        %4156 = vmatprep.subr.bf16.mxu0 0
        %4157 = vmatpush1.bf16.msra.mxu0 0
        %4158 = vmatprep.subr.bf16.mxu0 0
        %4159 = vmatpush1.bf16.msra.mxu0 0
        %4160 = vmatprep.subr.bf16.mxu0 0
        %4161 = vmatpush1.bf16.msra.mxu0 0
        %4162 = vmatprep.subr.bf16.mxu0 0
        %4163 = vmatpush1.bf16.msra.mxu0 0
        %4164 = vmatprep.subr.bf16.mxu0 0
        %4165 = vmatpush1.bf16.msra.mxu0 0
        %4166 = vmatprep.mubr.bf16.mxu0 0
        %4167 = vmatmul.mubr.bf16.gmra.mrb[0].mxu0 %v1053
        %v4168 = vpop.f32.mrb[0].mxu0
        %v4169 = vadd.f32 0.0, %v4168
        %v4170 = vpop.f32.mrb[0].mxu0
        %v4171 = vpop.f32.mrb[0].mxu0
        %v4172 = vadd.f32 0.0, %v4171
        %v4173 = vpop.f32.mrb[0].mxu0
        %4174 = vmatprep.mubr.bf16.mxu0 0
        %4175 = vmatmul.mubr.bf16.gmra.mrb[0].mxu0 %v485
        %v4176 = vpop.f32.mrb[0].mxu0
        %v4177 = vadd.f32 0.0, %v4176
        %v4178 = vpop.f32.mrb[0].mxu0
        %v4179 = vpop.f32.mrb[0].mxu0
        %v4180 = vadd.f32 0.0, %v4179
        %v4181 = vpop.f32.mrb[0].mxu0
        %4182 = vmatprep.mubr.bf16.mxu0 0
        %4183 = vmatmul.mubr.bf16.gmra.mrb[0].mxu0 %v1054
        %v4184 = vpop.f32.mrb[0].mxu0
        %v4185 = vadd.f32 0.0, %v4184
        %v4186 = vpop.f32.mrb[0].mxu0
        %v4187 = vpop.f32.mrb[0].mxu0
        %v4188 = vadd.f32 0.0, %v4187
        %v4189 = vpop.f32.mrb[0].mxu0
        %4190 = vmatprep.mubr.bf16.mxu0 0
        %4191 = vmatmul.mubr.bf16.gmra.mrb[0].mxu0 %v500
        %v4192 = vpop.f32.mrb[0].mxu0
        %v4193 = vadd.f32 0.0, %v4192
        %v4194 = vpop.f32.mrb[0].mxu0
        %v4195 = vpop.f32.mrb[0].mxu0
        %v4196 = vadd.f32 0.0, %v4195
        %v4197 = vpop.f32.mrb[0].mxu0
        %4198 = vmatprep.mubr.bf16.mxu0 0
        %4199 = vmatmul.mubr.bf16.gmra.mrb[0].mxu0 %v1055
        %v4200 = vpop.f32.mrb[0].mxu0
        %v4201 = vadd.f32 0.0, %v4200
        %v4202 = vpop.f32.mrb[0].mxu0
        %v4203 = vpop.f32.mrb[0].mxu0
        %v4204 = vadd.f32 0.0, %v4203
        %v4205 = vpop.f32.mrb[0].mxu0
        %4206 = vmatprep.mubr.bf16.mxu0 0
        %4207 = vmatmul.mubr.bf16.gmra.mrb[0].mxu0 %v515
        %v4208 = vpop.f32.mrb[0].mxu0
        %v4209 = vadd.f32 0.0, %v4208
        %v4210 = vpop.f32.mrb[0].mxu0
        %v4211 = vpop.f32.mrb[0].mxu0
        %v4212 = vadd.f32 0.0, %v4211
        %v4213 = vpop.f32.mrb[0].mxu0
        %4214 = vmatprep.mubr.bf16.mxu0 0
        %4215 = vmatmul.mubr.bf16.gmra.mrb[0].mxu0 %v1056
        %v4216 = vpop.f32.mrb[0].mxu0
        %v4217 = vadd.f32 0.0, %v4216
        %v4218 = vpop.f32.mrb[0].mxu0
        %v4219 = vpop.f32.mrb[0].mxu0
        %v4220 = vadd.f32 0.0, %v4219
        %v4221 = vpop.f32.mrb[0].mxu0
        %4222 = vmatprep.mubr.bf16.mxu0 0
        %4223 = vmatmul.mubr.bf16.gmra.mrb[0].mxu0 %v530
        %v4224 = vpop.f32.mrb[0].mxu0
        %v4225 = vadd.f32 0.0, %v4224
        %v4226 = vpop.f32.mrb[0].mxu0
        %v4227 = vpop.f32.mrb[0].mxu0
        %v4228 = vadd.f32 0.0, %v4227
        %v4229 = vpop.f32.mrb[0].mxu0
        %4230 = vmatprep.mubr.bf16.mxu0 0
        %4231 = vmatmul.mubr.bf16.gmra.mrb[0].mxu0 %v1057
        %v4232 = vpop.f32.mrb[0].mxu0
        %v4233 = vadd.f32 0.0, %v4232
        %v4234 = vpop.f32.mrb[0].mxu0
        %v4235 = vpop.f32.mrb[0].mxu0
        %v4236 = vadd.f32 0.0, %v4235
        %v4237 = vpop.f32.mrb[0].mxu0
        %4238 = vmatprep.mubr.bf16.mxu0 0
        %4239 = vmatmul.mubr.bf16.gmra.mrb[0].mxu0 %v545
        %v4240 = vpop.f32.mrb[0].mxu0
        %v4241 = vadd.f32 0.0, %v4240
        %v4242 = vpop.f32.mrb[0].mxu0
        %v4243 = vpop.f32.mrb[0].mxu0
        %v4244 = vadd.f32 0.0, %v4243
        %v4245 = vpop.f32.mrb[0].mxu0
        %4246 = vmatprep.mubr.bf16.mxu0 0
        %4247 = vmatmul.mubr.bf16.gmra.mrb[0].mxu0 %v1058
        %v4248 = vpop.f32.mrb[0].mxu0
        %v4249 = vadd.f32 0.0, %v4248
        %v4250 = vpop.f32.mrb[0].mxu0
        %v4251 = vpop.f32.mrb[0].mxu0
        %v4252 = vadd.f32 0.0, %v4251
        %v4253 = vpop.f32.mrb[0].mxu0
        %4254 = vmatprep.mubr.bf16.mxu0 0
        %4255 = vmatmul.mubr.bf16.gmra.mrb[0].mxu0 %v560
        %v4256 = vpop.f32.mrb[0].mxu0
        %v4257 = vadd.f32 0.0, %v4256
        %v4258 = vpop.f32.mrb[0].mxu0
        %v4259 = vpop.f32.mrb[0].mxu0
        %v4260 = vadd.f32 0.0, %v4259
        %v4261 = vpop.f32.mrb[0].mxu0
        %4262 = vmatprep.mubr.bf16.mxu0 0
        %4263 = vmatmul.mubr.bf16.gmra.mrb[0].mxu0 %v1059
        %v4264 = vpop.f32.mrb[0].mxu0
        %v4265 = vadd.f32 0.0, %v4264
        %v4266 = vpop.f32.mrb[0].mxu0
        %v4267 = vpop.f32.mrb[0].mxu0
        %v4268 = vadd.f32 0.0, %v4267
        %v4269 = vpop.f32.mrb[0].mxu0
        %4270 = vmatprep.mubr.bf16.mxu0 0
        %4271 = vmatmul.mubr.bf16.gmra.mrb[0].mxu0 %v575
        %v4272 = vpop.f32.mrb[0].mxu0
        %v4273 = vadd.f32 0.0, %v4272
        %v4274 = vpop.f32.mrb[0].mxu0
        %v4275 = vpop.f32.mrb[0].mxu0
        %v4276 = vadd.f32 0.0, %v4275
        %v4277 = vpop.f32.mrb[0].mxu0
        %4278 = vmatprep.mubr.bf16.mxu0 0
        %4279 = vmatmul.mubr.bf16.gmra.mrb[0].mxu0 %v1060
        %v4280 = vpop.f32.mrb[0].mxu0
        %v4281 = vadd.f32 0.0, %v4280
        %v4282 = vpop.f32.mrb[0].mxu0
        %v4283 = vpop.f32.mrb[0].mxu0
        %v4284 = vadd.f32 0.0, %v4283
        %v4285 = vpop.f32.mrb[0].mxu0
        %4286 = vmatprep.mubr.bf16.mxu0 0
        %4287 = vmatmul.mubr.bf16.gmra.mrb[0].mxu0 %v590
        %v4288 = vpop.f32.mrb[0].mxu0
        %v4289 = vadd.f32 0.0, %v4288
        %v4290 = vpop.f32.mrb[0].mxu0
        %v4291 = vpop.f32.mrb[0].mxu0
        %v4292 = vadd.f32 0.0, %v4291
        %v4293 = vpop.f32.mrb[0].mxu0
        %4294 = vmatprep.mubr.bf16.mxu0 0
        %4295 = vmatmul.mubr.bf16.gmra.mrb[0].mxu0 %v1061
        %v4296 = vpop.f32.mrb[0].mxu0
        %v4297 = vadd.f32 0.0, %v4296
        %v4298 = vpop.f32.mrb[0].mxu0
        %v4299 = vpop.f32.mrb[0].mxu0
        %v4300 = vadd.f32 0.0, %v4299
        %v4301 = vpop.f32.mrb[0].mxu0
        %4302 = vmatprep.mubr.bf16.mxu0 0
        %4303 = vmatmul.mubr.bf16.gmra.mrb[0].mxu0 %v605
        %v4304 = vpop.f32.mrb[0].mxu0
        %v4305 = vadd.f32 0.0, %v4304
        %v4306 = vpop.f32.mrb[0].mxu0
        %v4307 = vpop.f32.mrb[0].mxu0
        %v4308 = vadd.f32 0.0, %v4307
        %v4309 = vpop.f32.mrb[0].mxu0
        %4310 = vmatprep.mubr.bf16.mxu0 0
        %4311 = vmatmul.mubr.bf16.gmra.mrb[0].mxu0 %v1062
        %v4312 = vpop.f32.mrb[0].mxu0
        %v4313 = vadd.f32 0.0, %v4312
        %v4314 = vpop.f32.mrb[0].mxu0
        %v4315 = vpop.f32.mrb[0].mxu0
        %v4316 = vadd.f32 0.0, %v4315
        %v4317 = vpop.f32.mrb[0].mxu0
        %4318 = vmatprep.mubr.bf16.mxu0 0
        %4319 = vmatmul.mubr.bf16.gmra.mrb[0].mxu0 %v620
        %v4320 = vpop.f32.mrb[0].mxu0
        %v4321 = vadd.f32 0.0, %v4320
        %v4322 = vpop.f32.mrb[0].mxu0
        %v4323 = vpop.f32.mrb[0].mxu0
        %v4324 = vadd.f32 0.0, %v4323
        %v4325 = vpop.f32.mrb[0].mxu0
        %4326 = vmatprep.mubr.bf16.mxu0 0
        %4327 = vmatmul.mubr.bf16.gmra.mrb[0].mxu0 %v1063
        %v4328 = vpop.f32.mrb[0].mxu0
        %v4329 = vadd.f32 0.0, %v4328
        %v4330 = vpop.f32.mrb[0].mxu0
        %v4331 = vpop.f32.mrb[0].mxu0
        %v4332 = vadd.f32 0.0, %v4331
        %v4333 = vpop.f32.mrb[0].mxu0
        %4334 = vmatprep.mubr.bf16.mxu0 0
        %4335 = vmatmul.mubr.bf16.gmra.mrb[0].mxu0 %v635
        %v4336 = vpop.f32.mrb[0].mxu0
        %v4337 = vadd.f32 0.0, %v4336
        %v4338 = vpop.f32.mrb[0].mxu0
        %v4339 = vpop.f32.mrb[0].mxu0
        %v4340 = vadd.f32 0.0, %v4339
        %v4341 = vpop.f32.mrb[0].mxu0
        %4342 = vmatprep.mubr.bf16.mxu0 0
        %4343 = vmatmul.mubr.bf16.gmra.mrb[0].mxu0 %v1064
        %v4344 = vpop.f32.mrb[0].mxu0
        %v4345 = vadd.f32 0.0, %v4344
        %v4346 = vpop.f32.mrb[0].mxu0
        %v4347 = vpop.f32.mrb[0].mxu0
        %v4348 = vadd.f32 0.0, %v4347
        %v4349 = vpop.f32.mrb[0].mxu0
        %4350 = vmatprep.mubr.bf16.mxu0 0
        %4351 = vmatmul.mubr.bf16.gmra.mrb[0].mxu0 %v650
        %v4352 = vpop.f32.mrb[0].mxu0
        %v4353 = vadd.f32 0.0, %v4352
        %v4354 = vpop.f32.mrb[0].mxu0
        %v4355 = vpop.f32.mrb[0].mxu0
        %v4356 = vadd.f32 0.0, %v4355
        %v4357 = vpop.f32.mrb[0].mxu0
        %4358 = vmatprep.mubr.bf16.mxu0 0
        %4359 = vmatmul.mubr.bf16.gmra.mrb[0].mxu0 %v1065
        %v4360 = vpop.f32.mrb[0].mxu0
        %v4361 = vadd.f32 0.0, %v4360
        %v4362 = vpop.f32.mrb[0].mxu0
        %v4363 = vpop.f32.mrb[0].mxu0
        %v4364 = vadd.f32 0.0, %v4363
        %v4365 = vpop.f32.mrb[0].mxu0
        %4366 = vmatprep.mubr.bf16.mxu0 0
        %4367 = vmatmul.mubr.bf16.gmra.mrb[0].mxu0 %v665
        %v4368 = vpop.f32.mrb[0].mxu0
        %v4369 = vadd.f32 0.0, %v4368
        %v4370 = vpop.f32.mrb[0].mxu0
        %v4371 = vpop.f32.mrb[0].mxu0
        %v4372 = vadd.f32 0.0, %v4371
        %v4373 = vpop.f32.mrb[0].mxu0
        %4374 = vmatprep.mubr.bf16.mxu0 0
        %4375 = vmatmul.mubr.bf16.gmra.mrb[0].mxu0 %v1066
        %v4376 = vpop.f32.mrb[0].mxu0
        %v4377 = vadd.f32 0.0, %v4376
        %v4378 = vpop.f32.mrb[0].mxu0
        %v4379 = vpop.f32.mrb[0].mxu0
        %v4380 = vadd.f32 0.0, %v4379
        %v4381 = vpop.f32.mrb[0].mxu0
        %4382 = vmatprep.mubr.bf16.mxu0 0
        %4383 = vmatmul.mubr.bf16.gmra.mrb[0].mxu0 %v680
        %v4384 = vpop.f32.mrb[0].mxu0
        %v4385 = vadd.f32 0.0, %v4384
        %v4386 = vpop.f32.mrb[0].mxu0
        %v4387 = vpop.f32.mrb[0].mxu0
        %v4388 = vadd.f32 0.0, %v4387
        %v4389 = vpop.f32.mrb[0].mxu0
        %4390 = vmatprep.mubr.bf16.mxu0 0
        %4391 = vmatmul.mubr.bf16.gmra.mrb[0].mxu0 %v1067
        %v4392 = vpop.f32.mrb[0].mxu0
        %v4393 = vadd.f32 0.0, %v4392
        %v4394 = vpop.f32.mrb[0].mxu0
        %v4395 = vpop.f32.mrb[0].mxu0
        %v4396 = vadd.f32 0.0, %v4395
        %v4397 = vpop.f32.mrb[0].mxu0
        %4398 = vmatprep.mubr.bf16.mxu0 0
        %4399 = vmatmul.mubr.bf16.gmra.mrb[0].mxu0 %v695
        %v4400 = vpop.f32.mrb[0].mxu0
        %v4401 = vadd.f32 0.0, %v4400
        %v4402 = vpop.f32.mrb[0].mxu0
        %v4403 = vpop.f32.mrb[0].mxu0
        %v4404 = vadd.f32 0.0, %v4403
        %v4405 = vpop.f32.mrb[0].mxu0
        %4406 = vmatprep.mubr.bf16.mxu0 0
        %4407 = vmatmul.mubr.bf16.gmra.mrb[0].mxu0 %v1068
        %v4408 = vpop.f32.mrb[0].mxu0
        %v4409 = vadd.f32 0.0, %v4408
        %v4410 = vpop.f32.mrb[0].mxu0
        %v4411 = vpop.f32.mrb[0].mxu0
        %v4412 = vadd.f32 0.0, %v4411
        %v4413 = vpop.f32.mrb[0].mxu0
        %4414 = vmatprep.mubr.bf16.mxu0 0
        %4415 = vmatmul.mubr.bf16.gmra.mrb[0].mxu0 %v710
        %v4416 = vpop.f32.mrb[0].mxu0
        %v4417 = vadd.f32 0.0, %v4416
        %v4418 = vpop.f32.mrb[0].mxu0
        %v4419 = vpop.f32.mrb[0].mxu0
        %v4420 = vadd.f32 0.0, %v4419
        %v4421 = vpop.f32.mrb[0].mxu0
        %4422 = vmatprep.mubr.bf16.mxu0 0
        %4423 = vmatmul.mubr.bf16.gmra.mrb[0].mxu0 %v1069
        %v4424 = vpop.f32.mrb[0].mxu0
        %v4425 = vadd.f32 0.0, %v4424
        %v4426 = vpop.f32.mrb[0].mxu0
        %v4427 = vpop.f32.mrb[0].mxu0
        %v4428 = vadd.f32 0.0, %v4427
        %v4429 = vpop.f32.mrb[0].mxu0
        %4430 = vmatprep.mubr.bf16.mxu0 0
        %4431 = vmatmul.mubr.bf16.gmra.mrb[0].mxu0 %v725
        %v4432 = vpop.f32.mrb[0].mxu0
        %v4433 = vadd.f32 0.0, %v4432
        %v4434 = vpop.f32.mrb[0].mxu0
        %v4435 = vpop.f32.mrb[0].mxu0
        %v4436 = vadd.f32 0.0, %v4435
        %v4437 = vpop.f32.mrb[0].mxu0
        %4438 = vmatprep.mubr.bf16.mxu0 0
        %4439 = vmatmul.mubr.bf16.gmra.mrb[0].mxu0 %v1070
        %v4440 = vpop.f32.mrb[0].mxu0
        %v4441 = vadd.f32 0.0, %v4440
        %v4442 = vpop.f32.mrb[0].mxu0
        %v4443 = vpop.f32.mrb[0].mxu0
        %v4444 = vadd.f32 0.0, %v4443
        %v4445 = vpop.f32.mrb[0].mxu0
        %4446 = vmatprep.mubr.bf16.mxu0 0
        %4447 = vmatmul.mubr.bf16.gmra.mrb[0].mxu0 %v740
        %v4448 = vpop.f32.mrb[0].mxu0
        %v4449 = vadd.f32 0.0, %v4448
        %v4450 = vpop.f32.mrb[0].mxu0
        %v4451 = vpop.f32.mrb[0].mxu0
        %v4452 = vadd.f32 0.0, %v4451
        %v4453 = vpop.f32.mrb[0].mxu0
        %4454 = vmatprep.mubr.bf16.mxu0 0
        %4455 = vmatmul.mubr.bf16.gmra.mrb[0].mxu0 %v1071
        %v4456 = vpop.f32.mrb[0].mxu0
        %v4457 = vadd.f32 0.0, %v4456
        %v4458 = vpop.f32.mrb[0].mxu0
        %v4459 = vpop.f32.mrb[0].mxu0
        %v4460 = vadd.f32 0.0, %v4459
        %v4461 = vpop.f32.mrb[0].mxu0
        %4462 = vmatprep.mubr.bf16.mxu0 0
        %4463 = vmatmul.mubr.bf16.gmra.mrb[0].mxu0 %v755
        %v4464 = vpop.f32.mrb[0].mxu0
        %v4465 = vadd.f32 0.0, %v4464
        %v4466 = vpop.f32.mrb[0].mxu0
        %v4467 = vpop.f32.mrb[0].mxu0
        %v4468 = vadd.f32 0.0, %v4467
        %v4469 = vpop.f32.mrb[0].mxu0
        %4470 = vmatprep.mubr.bf16.mxu0 0
        %4471 = vmatmul.mubr.bf16.gmra.mrb[0].mxu0 %v1072
        %v4472 = vpop.f32.mrb[0].mxu0
        %v4473 = vadd.f32 0.0, %v4472
        %v4474 = vpop.f32.mrb[0].mxu0
        %v4475 = vpop.f32.mrb[0].mxu0
        %v4476 = vadd.f32 0.0, %v4475
        %v4477 = vpop.f32.mrb[0].mxu0
        %4478 = vmatprep.mubr.bf16.mxu0 0
        %4479 = vmatmul.mubr.bf16.gmra.mrb[0].mxu0 %v770
        %v4480 = vpop.f32.mrb[0].mxu0
        %v4481 = vadd.f32 0.0, %v4480
        %v4482 = vpop.f32.mrb[0].mxu0
        %v4483 = vpop.f32.mrb[0].mxu0
        %v4484 = vadd.f32 0.0, %v4483
        %v4485 = vpop.f32.mrb[0].mxu0
        %4486 = vmatprep.mubr.bf16.mxu0 0
        %4487 = vmatmul.mubr.bf16.gmra.mrb[0].mxu0 %v1073
        %v4488 = vpop.f32.mrb[0].mxu0
        %v4489 = vadd.f32 0.0, %v4488
        %v4490 = vpop.f32.mrb[0].mxu0
        %v4491 = vpop.f32.mrb[0].mxu0
        %v4492 = vadd.f32 0.0, %v4491
        %v4493 = vpop.f32.mrb[0].mxu0
        %4494 = vmatprep.mubr.bf16.mxu0 0
        %4495 = vmatmul.mubr.bf16.gmra.mrb[0].mxu0 %v785
        %v4496 = vpop.f32.mrb[0].mxu0
        %v4497 = vadd.f32 0.0, %v4496
        %v4498 = vpop.f32.mrb[0].mxu0
        %v4499 = vpop.f32.mrb[0].mxu0
        %v4500 = vadd.f32 0.0, %v4499
        %v4501 = vpop.f32.mrb[0].mxu0
        %4502 = vmatprep.mubr.bf16.mxu0 0
        %4503 = vmatmul.mubr.bf16.gmra.mrb[0].mxu0 %v1074
        %v4504 = vpop.f32.mrb[0].mxu0
        %v4505 = vadd.f32 0.0, %v4504
        %v4506 = vpop.f32.mrb[0].mxu0
        %v4507 = vpop.f32.mrb[0].mxu0
        %v4508 = vadd.f32 0.0, %v4507
        %v4509 = vpop.f32.mrb[0].mxu0
        %4510 = vmatprep.mubr.bf16.mxu0 0
        %4511 = vmatmul.mubr.bf16.gmra.mrb[0].mxu0 %v800
        %v4512 = vpop.f32.mrb[0].mxu0
        %v4513 = vadd.f32 0.0, %v4512
        %v4514 = vpop.f32.mrb[0].mxu0
        %v4515 = vpop.f32.mrb[0].mxu0
        %v4516 = vadd.f32 0.0, %v4515
        %v4517 = vpop.f32.mrb[0].mxu0
        %4518 = vmatprep.mubr.bf16.mxu0 0
        %4519 = vmatmul.mubr.bf16.gmra.mrb[0].mxu0 %v1075
        %v4520 = vpop.f32.mrb[0].mxu0
        %v4521 = vadd.f32 0.0, %v4520
        %v4522 = vpop.f32.mrb[0].mxu0
        %v4523 = vpop.f32.mrb[0].mxu0
        %v4524 = vadd.f32 0.0, %v4523
        %v4525 = vpop.f32.mrb[0].mxu0
        %4526 = vmatprep.mubr.bf16.mxu0 0
        %4527 = vmatmul.mubr.bf16.gmra.mrb[0].mxu0 %v815
        %v4528 = vpop.f32.mrb[0].mxu0
        %v4529 = vadd.f32 0.0, %v4528
        %v4530 = vpop.f32.mrb[0].mxu0
        %v4531 = vpop.f32.mrb[0].mxu0
        %v4532 = vadd.f32 0.0, %v4531
        %v4533 = vpop.f32.mrb[0].mxu0
        %4534 = vmatprep.mubr.bf16.mxu0 0
        %4535 = vmatmul.mubr.bf16.gmra.mrb[0].mxu0 %v1076
        %v4536 = vpop.f32.mrb[0].mxu0
        %v4537 = vadd.f32 0.0, %v4536
        %v4538 = vpop.f32.mrb[0].mxu0
        %v4539 = vpop.f32.mrb[0].mxu0
        %v4540 = vadd.f32 0.0, %v4539
        %v4541 = vpop.f32.mrb[0].mxu0
        %4542 = vmatprep.mubr.bf16.mxu0 0
        %4543 = vmatmul.mubr.bf16.gmra.mrb[0].mxu0 %v830
        %v4544 = vpop.f32.mrb[0].mxu0
        %v4545 = vadd.f32 0.0, %v4544
        %v4546 = vpop.f32.mrb[0].mxu0
        %v4547 = vpop.f32.mrb[0].mxu0
        %v4548 = vadd.f32 0.0, %v4547
        %v4549 = vpop.f32.mrb[0].mxu0
        %4550 = vmatprep.mubr.bf16.mxu0 0
        %4551 = vmatmul.mubr.bf16.gmra.mrb[0].mxu0 %v1077
        %v4552 = vpop.f32.mrb[0].mxu0
        %v4553 = vadd.f32 0.0, %v4552
        %v4554 = vpop.f32.mrb[0].mxu0
        %v4555 = vpop.f32.mrb[0].mxu0
        %v4556 = vadd.f32 0.0, %v4555
        %v4557 = vpop.f32.mrb[0].mxu0
        %4558 = vmatprep.mubr.bf16.mxu0 0
        %4559 = vmatmul.mubr.bf16.gmra.mrb[0].mxu0 %v845
        %v4560 = vpop.f32.mrb[0].mxu0
        %v4561 = vadd.f32 0.0, %v4560
        %v4562 = vpop.f32.mrb[0].mxu0
        %v4563 = vpop.f32.mrb[0].mxu0
        %v4564 = vadd.f32 0.0, %v4563
        %v4565 = vpop.f32.mrb[0].mxu0
        %4566 = vmatprep.mubr.bf16.mxu0 0
        %4567 = vmatmul.mubr.bf16.gmra.mrb[0].mxu0 %v1078
        %v4568 = vpop.f32.mrb[0].mxu0
        %v4569 = vadd.f32 0.0, %v4568
        %v4570 = vpop.f32.mrb[0].mxu0
        %v4571 = vpop.f32.mrb[0].mxu0
        %v4572 = vadd.f32 0.0, %v4571
        %v4573 = vpop.f32.mrb[0].mxu0
        %4574 = vmatprep.mubr.bf16.mxu0 0
        %4575 = vmatmul.mubr.bf16.gmra.mrb[0].mxu0 %v860
        %v4576 = vpop.f32.mrb[0].mxu0
        %v4577 = vadd.f32 0.0, %v4576
        %v4578 = vpop.f32.mrb[0].mxu0
        %v4579 = vpop.f32.mrb[0].mxu0
        %v4580 = vadd.f32 0.0, %v4579
        %v4581 = vpop.f32.mrb[0].mxu0
        %4582 = vmatprep.mubr.bf16.mxu0 0
        %4583 = vmatmul.mubr.bf16.gmra.mrb[0].mxu0 %v1079
        %v4584 = vpop.f32.mrb[0].mxu0
        %v4585 = vadd.f32 0.0, %v4584
        %v4586 = vpop.f32.mrb[0].mxu0
        %v4587 = vpop.f32.mrb[0].mxu0
        %v4588 = vadd.f32 0.0, %v4587
        %v4589 = vpop.f32.mrb[0].mxu0
        %4590 = vmatprep.mubr.bf16.mxu0 0
        %4591 = vmatmul.mubr.bf16.gmra.mrb[0].mxu0 %v875
        %v4592 = vpop.f32.mrb[0].mxu0
        %v4593 = vadd.f32 0.0, %v4592
        %v4594 = vpop.f32.mrb[0].mxu0
        %v4595 = vpop.f32.mrb[0].mxu0
        %v4596 = vadd.f32 0.0, %v4595
        %v4597 = vpop.f32.mrb[0].mxu0
        %4598 = vmatprep.mubr.bf16.mxu0 0
        %4599 = vmatmul.mubr.bf16.gmra.mrb[0].mxu0 %v1080
        %v4600 = vpop.f32.mrb[0].mxu0
        %v4601 = vadd.f32 0.0, %v4600
        %v4602 = vpop.f32.mrb[0].mxu0
        %v4603 = vpop.f32.mrb[0].mxu0
        %v4604 = vadd.f32 0.0, %v4603
        %v4605 = vpop.f32.mrb[0].mxu0
        %4606 = vmatprep.mubr.bf16.mxu0 0
        %4607 = vmatmul.mubr.bf16.gmra.mrb[0].mxu0 %v890
        %v4608 = vpop.f32.mrb[0].mxu0
        %v4609 = vadd.f32 0.0, %v4608
        %v4610 = vpop.f32.mrb[0].mxu0
        %v4611 = vpop.f32.mrb[0].mxu0
        %v4612 = vadd.f32 0.0, %v4611
        %v4613 = vpop.f32.mrb[0].mxu0
        %4614 = vmatprep.mubr.bf16.mxu0 0
        %4615 = vmatmul.mubr.bf16.gmra.mrb[0].mxu0 %v1081
        %v4616 = vpop.f32.mrb[0].mxu0
        %v4617 = vadd.f32 0.0, %v4616
        %v4618 = vpop.f32.mrb[0].mxu0
        %v4619 = vpop.f32.mrb[0].mxu0
        %v4620 = vadd.f32 0.0, %v4619
        %v4621 = vpop.f32.mrb[0].mxu0
        %4622 = vmatprep.mubr.bf16.mxu0 0
        %4623 = vmatmul.mubr.bf16.gmra.mrb[0].mxu0 %v905
        %v4624 = vpop.f32.mrb[0].mxu0
        %v4625 = vadd.f32 0.0, %v4624
        %v4626 = vpop.f32.mrb[0].mxu0
        %v4627 = vpop.f32.mrb[0].mxu0
        %v4628 = vadd.f32 0.0, %v4627
        %v4629 = vpop.f32.mrb[0].mxu0
        %4630 = vmatprep.mubr.bf16.mxu0 0
        %4631 = vmatmul.mubr.bf16.gmra.mrb[0].mxu0 %v1082
        %v4632 = vpop.f32.mrb[0].mxu0
        %v4633 = vadd.f32 0.0, %v4632
        %v4634 = vpop.f32.mrb[0].mxu0
        %v4635 = vpop.f32.mrb[0].mxu0
        %v4636 = vadd.f32 0.0, %v4635
        %v4637 = vpop.f32.mrb[0].mxu0
        %4638 = vmatprep.mubr.bf16.mxu0 0
        %4639 = vmatmul.mubr.bf16.gmra.mrb[0].mxu0 %v920
        %v4640 = vpop.f32.mrb[0].mxu0
        %v4641 = vadd.f32 0.0, %v4640
        %v4642 = vpop.f32.mrb[0].mxu0
        %v4643 = vpop.f32.mrb[0].mxu0
        %v4644 = vadd.f32 0.0, %v4643
        %v4645 = vpop.f32.mrb[0].mxu0
        %4646 = vmatprep.mubr.bf16.mxu0 0
        %4647 = vmatmul.mubr.bf16.gmra.mrb[0].mxu0 %v1083
        %v4648 = vpop.f32.mrb[0].mxu0
        %v4649 = vadd.f32 0.0, %v4648
        %v4650 = vpop.f32.mrb[0].mxu0
        %v4651 = vpop.f32.mrb[0].mxu0
        %v4652 = vadd.f32 0.0, %v4651
        %v4653 = vpop.f32.mrb[0].mxu0
        %4654 = vmatprep.mubr.bf16.mxu0 0
        %4655 = vmatmul.mubr.bf16.gmra.mrb[0].mxu0 %v935
        %v4656 = vpop.f32.mrb[0].mxu0
        %v4657 = vadd.f32 0.0, %v4656
        %v4658 = vpop.f32.mrb[0].mxu0
        %v4659 = vpop.f32.mrb[0].mxu0
        %v4660 = vadd.f32 0.0, %v4659
        %v4661 = vpop.f32.mrb[0].mxu0
        %4662 = vmatprep.mubr.bf16.mxu0 0
        %4663 = vmatmul.mubr.bf16.gmra.mrb[0].mxu0 %v1084
        %v4664 = vpop.f32.mrb[0].mxu0
        %v4665 = vadd.f32 0.0, %v4664
        %v4666 = vpop.f32.mrb[0].mxu0
        %v4667 = vpop.f32.mrb[0].mxu0
        %v4668 = vadd.f32 0.0, %v4667
        %v4669 = vpop.f32.mrb[0].mxu0
        %4670 = vmatprep.mubr.bf16.mxu0 0
        %4671 = vmatmul.mubr.bf16.gmra.mrb[0].mxu0 %v950
        %v4672 = vpop.f32.mrb[0].mxu0
        %v4673 = vadd.f32 0.0, %v4672
        %v4674 = vpop.f32.mrb[0].mxu0
        %v4675 = vpop.f32.mrb[0].mxu0
        %v4676 = vadd.f32 0.0, %v4675
        %v4677 = vpop.f32.mrb[0].mxu0
        %4678 = vdwg.mxu0
        %v4679 = vadd.f32 %v3941, %v4169
        %v4680 = vadd.f32 %v3942, %v4172
        %v4681 = vadd.f32 %v3943, %v4177
        %v4682 = vadd.f32 %v3944, %v4180
        %v4683 = vadd.f32 %v3945, %v4185
        %v4684 = vadd.f32 %v3946, %v4188
        %v4685 = vadd.f32 %v3947, %v4193
        %v4686 = vadd.f32 %v3948, %v4196
        %v4687 = vadd.f32 %v3949, %v4201
        %v4688 = vadd.f32 %v3950, %v4204
        %v4689 = vadd.f32 %v3951, %v4209
        %v4690 = vadd.f32 %v3952, %v4212
        %v4691 = vadd.f32 %v3953, %v4217
        %v4692 = vadd.f32 %v3954, %v4220
        %v4693 = vadd.f32 %v3955, %v4225
        %v4694 = vadd.f32 %v3956, %v4228
        %v4695 = vadd.f32 %v3957, %v4233
        %v4696 = vadd.f32 %v3958, %v4236
        %v4697 = vadd.f32 %v3959, %v4241
        %v4698 = vadd.f32 %v3960, %v4244
        %v4699 = vadd.f32 %v3961, %v4249
        %v4700 = vadd.f32 %v3962, %v4252
        %v4701 = vadd.f32 %v3963, %v4257
        %v4702 = vadd.f32 %v3964, %v4260
        %v4703 = vadd.f32 %v3965, %v4265
        %v4704 = vadd.f32 %v3966, %v4268
        %v4705 = vadd.f32 %v3967, %v4273
        %v4706 = vadd.f32 %v3968, %v4276
        %v4707 = vadd.f32 %v3969, %v4281
        %v4708 = vadd.f32 %v3970, %v4284
        %v4709 = vadd.f32 %v3971, %v4289
        %v4710 = vadd.f32 %v3972, %v4292
        %v4711 = vadd.f32 %v3973, %v4297
        %v4712 = vadd.f32 %v3974, %v4300
        %v4713 = vadd.f32 %v3975, %v4305
        %v4714 = vadd.f32 %v3976, %v4308
        %v4715 = vadd.f32 %v3977, %v4313
        %v4716 = vadd.f32 %v3978, %v4316
        %v4717 = vadd.f32 %v3979, %v4321
        %v4718 = vadd.f32 %v3980, %v4324
        %v4719 = vadd.f32 %v3981, %v4329
        %v4720 = vadd.f32 %v3982, %v4332
        %v4721 = vadd.f32 %v3983, %v4337
        %v4722 = vadd.f32 %v3984, %v4340
        %v4723 = vadd.f32 %v3985, %v4345
        %v4724 = vadd.f32 %v3986, %v4348
        %v4725 = vadd.f32 %v3987, %v4353
        %v4726 = vadd.f32 %v3988, %v4356
        %v4727 = vadd.f32 %v3989, %v4361
        %v4728 = vadd.f32 %v3990, %v4364
        %v4729 = vadd.f32 %v3991, %v4369
        %v4730 = vadd.f32 %v3992, %v4372
        %v4731 = vadd.f32 %v3993, %v4377
        %v4732 = vadd.f32 %v3994, %v4380
        %v4733 = vadd.f32 %v3995, %v4385
        %v4734 = vadd.f32 %v3996, %v4388
        %v4735 = vadd.f32 %v3997, %v4393
        %v4736 = vadd.f32 %v3998, %v4396
        %v4737 = vadd.f32 %v3999, %v4401
        %v4738 = vadd.f32 %v4000, %v4404
        %v4739 = vadd.f32 %v4001, %v4409
        %v4740 = vadd.f32 %v4002, %v4412
        %v4741 = vadd.f32 %v4003, %v4417
        %v4742 = vadd.f32 %v4004, %v4420
        %v4743 = vadd.f32 %v4005, %v4425
        %v4744 = vadd.f32 %v4006, %v4428
        %v4745 = vadd.f32 %v4007, %v4433
        %v4746 = vadd.f32 %v4008, %v4436
        %v4747 = vadd.f32 %v4009, %v4441
        %v4748 = vadd.f32 %v4010, %v4444
        %v4749 = vadd.f32 %v4011, %v4449
        %v4750 = vadd.f32 %v4012, %v4452
        %v4751 = vadd.f32 %v4013, %v4457
        %v4752 = vadd.f32 %v4014, %v4460
        %v4753 = vadd.f32 %v4015, %v4465
        %v4754 = vadd.f32 %v4016, %v4468
        %v4755 = vadd.f32 %v4017, %v4473
        %v4756 = vadd.f32 %v4018, %v4476
        %v4757 = vadd.f32 %v4019, %v4481
        %v4758 = vadd.f32 %v4020, %v4484
        %v4759 = vadd.f32 %v4021, %v4489
        %v4760 = vadd.f32 %v4022, %v4492
        %v4761 = vadd.f32 %v4023, %v4497
        %v4762 = vadd.f32 %v4024, %v4500
        %v4763 = vadd.f32 %v4025, %v4505
        %v4764 = vadd.f32 %v4026, %v4508
        %v4765 = vadd.f32 %v4027, %v4513
        %v4766 = vadd.f32 %v4028, %v4516
        %v4767 = vadd.f32 %v4029, %v4521
        %v4768 = vadd.f32 %v4030, %v4524
        %v4769 = vadd.f32 %v4031, %v4529
        %v4770 = vadd.f32 %v4032, %v4532
        %v4771 = vadd.f32 %v4033, %v4537
        %v4772 = vadd.f32 %v4034, %v4540
        %v4773 = vadd.f32 %v4035, %v4545
        %v4774 = vadd.f32 %v4036, %v4548
        %v4775 = vadd.f32 %v4037, %v4553
        %v4776 = vadd.f32 %v4038, %v4556
        %v4777 = vadd.f32 %v4039, %v4561
        %v4778 = vadd.f32 %v4040, %v4564
        %v4779 = vadd.f32 %v4041, %v4569
        %v4780 = vadd.f32 %v4042, %v4572
        %v4781 = vadd.f32 %v4043, %v4577
        %v4782 = vadd.f32 %v4044, %v4580
        %v4783 = vadd.f32 %v4045, %v4585
        %v4784 = vadd.f32 %v4046, %v4588
        %v4785 = vadd.f32 %v4047, %v4593
        %v4786 = vadd.f32 %v4048, %v4596
        %v4787 = vadd.f32 %v4049, %v4601
        %v4788 = vadd.f32 %v4050, %v4604
        %v4789 = vadd.f32 %v4051, %v4609
        %v4790 = vadd.f32 %v4052, %v4612
        %v4791 = vadd.f32 %v4053, %v4617
        %v4792 = vadd.f32 %v4054, %v4620
        %v4793 = vadd.f32 %v4055, %v4625
        %v4794 = vadd.f32 %v4056, %v4628
        %v4795 = vadd.f32 %v4057, %v4633
        %v4796 = vadd.f32 %v4058, %v4636
        %v4797 = vadd.f32 %v4059, %v4641
        %v4798 = vadd.f32 %v4060, %v4644
        %v4799 = vadd.f32 %v4061, %v4649
        %v4800 = vadd.f32 %v4062, %v4652
        %v4801 = vadd.f32 %v4063, %v4657
        %v4802 = vadd.f32 %v4064, %v4660
        %v4803 = vadd.f32 %v4065, %v4665
        %v4804 = vadd.f32 %v4066, %v4668
        %v4805 = vadd.f32 %v4067, %v4673
        %v4806 = vadd.f32 %v4068, %v4676
        %v4808 = vshrl.u32 %v1084, 16
        %v4810 = vshll.u32 %v1084, 16
        %v4812 = vrot.slane %v4810, 1
        %v4813 = vor.u32 %v4808, %v4812
        %v4815 = vshll.u32 %v950, 16
        %v4817 = vrot.slane %v4815, 1
        %v4818 = vsel %vm1134, %v4813, %v4817
        %v4819 = vshrl.u32 %v950, 16
        %v4821 = vor.u32 %v4819, %v4817
        %v4823 = vshll.u32 %v1117, 16
        %v4825 = vrot.slane %v4823, 1
        %v4826 = vsel %vm1134, %v4821, %v4825
        %s4829 = scalar_lea.vmem [#allocation5], 256
        %v4830 = vld [vmem:[%s4829] sm:$0xf]
        %v4831 = vld [vmem:[%s4829 + $0x4] sm:$0xf]
        %v4832 = vld [vmem:[%s4829 + $0x8] sm:$0xf]
        %v4833 = vld [vmem:[%s4829 + $0xc] sm:$0xf]
        %v4834 = vld [vmem:[%s4829 + $0x10] sm:$0xf]
        %v4835 = vld [vmem:[%s4829 + $0x14] sm:$0xf]
        %v4836 = vld [vmem:[%s4829 + $0x18] sm:$0xf]
        %v4837 = vld [vmem:[%s4829 + $0x1c] sm:$0xf]
        %v4838 = vld [vmem:[%s4829 + $0x20] sm:$0xf]
        %v4839 = vld [vmem:[%s4829 + $0x24] sm:$0xf]
        %v4840 = vld [vmem:[%s4829 + $0x28] sm:$0xf]
        %v4841 = vld [vmem:[%s4829 + $0x2c] sm:$0xf]
        %v4842 = vld [vmem:[%s4829 + $0x30] sm:$0xf]
        %v4843 = vld [vmem:[%s4829 + $0x34] sm:$0xf]
        %v4844 = vld [vmem:[%s4829 + $0x38] sm:$0xf]
        %v4845 = vld [vmem:[%s4829 + $0x3c] sm:$0xf]
        %v4862 = vunpack.c.l.b16 %v4830
        %v4863 = vunpack.c.l.b16 %v4831
        %v4864 = vunpack.c.l.b16 %v4832
        %v4865 = vunpack.c.l.b16 %v4833
        %v4866 = vunpack.c.l.b16 %v4834
        %v4867 = vunpack.c.l.b16 %v4835
        %v4868 = vunpack.c.l.b16 %v4836
        %v4869 = vunpack.c.l.b16 %v4837
        %v4870 = vunpack.c.l.b16 %v4838
        %v4871 = vunpack.c.l.b16 %v4839
        %v4872 = vunpack.c.l.b16 %v4840
        %v4873 = vunpack.c.l.b16 %v4841
        %v4874 = vunpack.c.l.b16 %v4842
        %v4875 = vunpack.c.l.b16 %v4843
        %v4876 = vunpack.c.l.b16 %v4844
        %v4877 = vunpack.c.l.b16 %v4845
        %v4878 = vpack.c.b16 %v4863, %v4862
        %v4879 = vpack.c.b16 %v4865, %v4864
        %v4880 = vpack.c.b16 %v4867, %v4866
        %v4881 = vpack.c.b16 %v4869, %v4868
        %v4882 = vpack.c.b16 %v4871, %v4870
        %v4883 = vpack.c.b16 %v4873, %v4872
        %v4884 = vpack.c.b16 %v4875, %v4874
        %v4885 = vpack.c.b16 %v4877, %v4876
        %4894 = vmatprep.subr.bf16.mxu0 0
        %4895 = vmatpush1.bf16.msra.mxu0 %v4878
        %4896 = vmatprep.subr.bf16.mxu0 0
        %4897 = vmatpush1.bf16.msra.mxu0 %v4879
        %4898 = vmatprep.subr.bf16.mxu0 0
        %4899 = vmatpush1.bf16.msra.mxu0 %v4880
        %4900 = vmatprep.subr.bf16.mxu0 0
        %4901 = vmatpush1.bf16.msra.mxu0 %v4881
        %4902 = vmatprep.subr.bf16.mxu0 0
        %4903 = vmatpush1.bf16.msra.mxu0 %v4882
        %4904 = vmatprep.subr.bf16.mxu0 0
        %4905 = vmatpush1.bf16.msra.mxu0 %v4883
        %4906 = vmatprep.subr.bf16.mxu0 0
        %4907 = vmatpush1.bf16.msra.mxu0 %v4884
        %4908 = vmatprep.subr.bf16.mxu0 0
        %4909 = vmatpush1.bf16.msra.mxu0 %v4885
        %4910 = vmatprep.subr.bf16.mxu0 0
        %4911 = vmatpush1.bf16.msra.mxu0 0
        %4912 = vmatprep.subr.bf16.mxu0 0
        %4913 = vmatpush1.bf16.msra.mxu0 0
        %4914 = vmatprep.subr.bf16.mxu0 0
        %4915 = vmatpush1.bf16.msra.mxu0 0
        %4916 = vmatprep.subr.bf16.mxu0 0
        %4917 = vmatpush1.bf16.msra.mxu0 0
        %4918 = vmatprep.subr.bf16.mxu0 0
        %4919 = vmatpush1.bf16.msra.mxu0 0
        %4920 = vmatprep.subr.bf16.mxu0 0
        %4921 = vmatpush1.bf16.msra.mxu0 0
        %4922 = vmatprep.subr.bf16.mxu0 0
        %4923 = vmatpush1.bf16.msra.mxu0 0
        %4924 = vmatprep.subr.bf16.mxu0 0
        %4925 = vmatpush1.bf16.msra.mxu0 0
        %4926 = vmatprep.mubr.bf16.mxu0 0
        %4927 = vmatmul.mubr.bf16.gmra.mrb[0].mxu0 %v1166
        %v4928 = vpop.f32.mrb[0].mxu0
        %v4929 = vadd.f32 0.0, %v4928
        %v4930 = vpop.f32.mrb[0].mxu0
        %v4931 = vpop.f32.mrb[0].mxu0
        %v4932 = vadd.f32 0.0, %v4931
        %v4933 = vpop.f32.mrb[0].mxu0
        %4934 = vmatprep.mubr.bf16.mxu0 0
        %4935 = vmatmul.mubr.bf16.gmra.mrb[0].mxu0 %v1174
        %v4936 = vpop.f32.mrb[0].mxu0
        %v4937 = vadd.f32 0.0, %v4936
        %v4938 = vpop.f32.mrb[0].mxu0
        %v4939 = vpop.f32.mrb[0].mxu0
        %v4940 = vadd.f32 0.0, %v4939
        %v4941 = vpop.f32.mrb[0].mxu0
        %4942 = vmatprep.mubr.bf16.mxu0 0
        %4943 = vmatmul.mubr.bf16.gmra.mrb[0].mxu0 %v1186
        %v4944 = vpop.f32.mrb[0].mxu0
        %v4945 = vadd.f32 0.0, %v4944
        %v4946 = vpop.f32.mrb[0].mxu0
        %v4947 = vpop.f32.mrb[0].mxu0
        %v4948 = vadd.f32 0.0, %v4947
        %v4949 = vpop.f32.mrb[0].mxu0
        %4950 = vmatprep.mubr.bf16.mxu0 0
        %4951 = vmatmul.mubr.bf16.gmra.mrb[0].mxu0 %v1194
        %v4952 = vpop.f32.mrb[0].mxu0
        %v4953 = vadd.f32 0.0, %v4952
        %v4954 = vpop.f32.mrb[0].mxu0
        %v4955 = vpop.f32.mrb[0].mxu0
        %v4956 = vadd.f32 0.0, %v4955
        %v4957 = vpop.f32.mrb[0].mxu0
        %4958 = vmatprep.mubr.bf16.mxu0 0
        %4959 = vmatmul.mubr.bf16.gmra.mrb[0].mxu0 %v1206
        %v4960 = vpop.f32.mrb[0].mxu0
        %v4961 = vadd.f32 0.0, %v4960
        %v4962 = vpop.f32.mrb[0].mxu0
        %v4963 = vpop.f32.mrb[0].mxu0
        %v4964 = vadd.f32 0.0, %v4963
        %v4965 = vpop.f32.mrb[0].mxu0
        %4966 = vmatprep.mubr.bf16.mxu0 0
        %4967 = vmatmul.mubr.bf16.gmra.mrb[0].mxu0 %v1214
        %v4968 = vpop.f32.mrb[0].mxu0
        %v4969 = vadd.f32 0.0, %v4968
        %v4970 = vpop.f32.mrb[0].mxu0
        %v4971 = vpop.f32.mrb[0].mxu0
        %v4972 = vadd.f32 0.0, %v4971
        %v4973 = vpop.f32.mrb[0].mxu0
        %4974 = vmatprep.mubr.bf16.mxu0 0
        %4975 = vmatmul.mubr.bf16.gmra.mrb[0].mxu0 %v1226
        %v4976 = vpop.f32.mrb[0].mxu0
        %v4977 = vadd.f32 0.0, %v4976
        %v4978 = vpop.f32.mrb[0].mxu0
        %v4979 = vpop.f32.mrb[0].mxu0
        %v4980 = vadd.f32 0.0, %v4979
        %v4981 = vpop.f32.mrb[0].mxu0
        %4982 = vmatprep.mubr.bf16.mxu0 0
        %4983 = vmatmul.mubr.bf16.gmra.mrb[0].mxu0 %v1234
        %v4984 = vpop.f32.mrb[0].mxu0
        %v4985 = vadd.f32 0.0, %v4984
        %v4986 = vpop.f32.mrb[0].mxu0
        %v4987 = vpop.f32.mrb[0].mxu0
        %v4988 = vadd.f32 0.0, %v4987
        %v4989 = vpop.f32.mrb[0].mxu0
        %4990 = vmatprep.mubr.bf16.mxu0 0
        %4991 = vmatmul.mubr.bf16.gmra.mrb[0].mxu0 %v1246
        %v4992 = vpop.f32.mrb[0].mxu0
        %v4993 = vadd.f32 0.0, %v4992
        %v4994 = vpop.f32.mrb[0].mxu0
        %v4995 = vpop.f32.mrb[0].mxu0
        %v4996 = vadd.f32 0.0, %v4995
        %v4997 = vpop.f32.mrb[0].mxu0
        %4998 = vmatprep.mubr.bf16.mxu0 0
        %4999 = vmatmul.mubr.bf16.gmra.mrb[0].mxu0 %v1254
        %v5000 = vpop.f32.mrb[0].mxu0
        %v5001 = vadd.f32 0.0, %v5000
        %v5002 = vpop.f32.mrb[0].mxu0
        %v5003 = vpop.f32.mrb[0].mxu0
        %v5004 = vadd.f32 0.0, %v5003
        %v5005 = vpop.f32.mrb[0].mxu0
        %5006 = vmatprep.mubr.bf16.mxu0 0
        %5007 = vmatmul.mubr.bf16.gmra.mrb[0].mxu0 %v1266
        %v5008 = vpop.f32.mrb[0].mxu0
        %v5009 = vadd.f32 0.0, %v5008
        %v5010 = vpop.f32.mrb[0].mxu0
        %v5011 = vpop.f32.mrb[0].mxu0
        %v5012 = vadd.f32 0.0, %v5011
        %v5013 = vpop.f32.mrb[0].mxu0
        %5014 = vmatprep.mubr.bf16.mxu0 0
        %5015 = vmatmul.mubr.bf16.gmra.mrb[0].mxu0 %v1274
        %v5016 = vpop.f32.mrb[0].mxu0
        %v5017 = vadd.f32 0.0, %v5016
        %v5018 = vpop.f32.mrb[0].mxu0
        %v5019 = vpop.f32.mrb[0].mxu0
        %v5020 = vadd.f32 0.0, %v5019
        %v5021 = vpop.f32.mrb[0].mxu0
        %5022 = vmatprep.mubr.bf16.mxu0 0
        %5023 = vmatmul.mubr.bf16.gmra.mrb[0].mxu0 %v1286
        %v5024 = vpop.f32.mrb[0].mxu0
        %v5025 = vadd.f32 0.0, %v5024
        %v5026 = vpop.f32.mrb[0].mxu0
        %v5027 = vpop.f32.mrb[0].mxu0
        %v5028 = vadd.f32 0.0, %v5027
        %v5029 = vpop.f32.mrb[0].mxu0
        %5030 = vmatprep.mubr.bf16.mxu0 0
        %5031 = vmatmul.mubr.bf16.gmra.mrb[0].mxu0 %v1294
        %v5032 = vpop.f32.mrb[0].mxu0
        %v5033 = vadd.f32 0.0, %v5032
        %v5034 = vpop.f32.mrb[0].mxu0
        %v5035 = vpop.f32.mrb[0].mxu0
        %v5036 = vadd.f32 0.0, %v5035
        %v5037 = vpop.f32.mrb[0].mxu0
        %5038 = vmatprep.mubr.bf16.mxu0 0
        %5039 = vmatmul.mubr.bf16.gmra.mrb[0].mxu0 %v1306
        %v5040 = vpop.f32.mrb[0].mxu0
        %v5041 = vadd.f32 0.0, %v5040
        %v5042 = vpop.f32.mrb[0].mxu0
        %v5043 = vpop.f32.mrb[0].mxu0
        %v5044 = vadd.f32 0.0, %v5043
        %v5045 = vpop.f32.mrb[0].mxu0
        %5046 = vmatprep.mubr.bf16.mxu0 0
        %5047 = vmatmul.mubr.bf16.gmra.mrb[0].mxu0 %v1314
        %v5048 = vpop.f32.mrb[0].mxu0
        %v5049 = vadd.f32 0.0, %v5048
        %v5050 = vpop.f32.mrb[0].mxu0
        %v5051 = vpop.f32.mrb[0].mxu0
        %v5052 = vadd.f32 0.0, %v5051
        %v5053 = vpop.f32.mrb[0].mxu0
        %5054 = vmatprep.mubr.bf16.mxu0 0
        %5055 = vmatmul.mubr.bf16.gmra.mrb[0].mxu0 %v1326
        %v5056 = vpop.f32.mrb[0].mxu0
        %v5057 = vadd.f32 0.0, %v5056
        %v5058 = vpop.f32.mrb[0].mxu0
        %v5059 = vpop.f32.mrb[0].mxu0
        %v5060 = vadd.f32 0.0, %v5059
        %v5061 = vpop.f32.mrb[0].mxu0
        %5062 = vmatprep.mubr.bf16.mxu0 0
        %5063 = vmatmul.mubr.bf16.gmra.mrb[0].mxu0 %v1334
        %v5064 = vpop.f32.mrb[0].mxu0
        %v5065 = vadd.f32 0.0, %v5064
        %v5066 = vpop.f32.mrb[0].mxu0
        %v5067 = vpop.f32.mrb[0].mxu0
        %v5068 = vadd.f32 0.0, %v5067
        %v5069 = vpop.f32.mrb[0].mxu0
        %5070 = vmatprep.mubr.bf16.mxu0 0
        %5071 = vmatmul.mubr.bf16.gmra.mrb[0].mxu0 %v1346
        %v5072 = vpop.f32.mrb[0].mxu0
        %v5073 = vadd.f32 0.0, %v5072
        %v5074 = vpop.f32.mrb[0].mxu0
        %v5075 = vpop.f32.mrb[0].mxu0
        %v5076 = vadd.f32 0.0, %v5075
        %v5077 = vpop.f32.mrb[0].mxu0
        %5078 = vmatprep.mubr.bf16.mxu0 0
        %5079 = vmatmul.mubr.bf16.gmra.mrb[0].mxu0 %v1354
        %v5080 = vpop.f32.mrb[0].mxu0
        %v5081 = vadd.f32 0.0, %v5080
        %v5082 = vpop.f32.mrb[0].mxu0
        %v5083 = vpop.f32.mrb[0].mxu0
        %v5084 = vadd.f32 0.0, %v5083
        %v5085 = vpop.f32.mrb[0].mxu0
        %5086 = vmatprep.mubr.bf16.mxu0 0
        %5087 = vmatmul.mubr.bf16.gmra.mrb[0].mxu0 %v1366
        %v5088 = vpop.f32.mrb[0].mxu0
        %v5089 = vadd.f32 0.0, %v5088
        %v5090 = vpop.f32.mrb[0].mxu0
        %v5091 = vpop.f32.mrb[0].mxu0
        %v5092 = vadd.f32 0.0, %v5091
        %v5093 = vpop.f32.mrb[0].mxu0
        %5094 = vmatprep.mubr.bf16.mxu0 0
        %5095 = vmatmul.mubr.bf16.gmra.mrb[0].mxu0 %v1374
        %v5096 = vpop.f32.mrb[0].mxu0
        %v5097 = vadd.f32 0.0, %v5096
        %v5098 = vpop.f32.mrb[0].mxu0
        %v5099 = vpop.f32.mrb[0].mxu0
        %v5100 = vadd.f32 0.0, %v5099
        %v5101 = vpop.f32.mrb[0].mxu0
        %5102 = vmatprep.mubr.bf16.mxu0 0
        %5103 = vmatmul.mubr.bf16.gmra.mrb[0].mxu0 %v1386
        %v5104 = vpop.f32.mrb[0].mxu0
        %v5105 = vadd.f32 0.0, %v5104
        %v5106 = vpop.f32.mrb[0].mxu0
        %v5107 = vpop.f32.mrb[0].mxu0
        %v5108 = vadd.f32 0.0, %v5107
        %v5109 = vpop.f32.mrb[0].mxu0
        %5110 = vmatprep.mubr.bf16.mxu0 0
        %5111 = vmatmul.mubr.bf16.gmra.mrb[0].mxu0 %v1394
        %v5112 = vpop.f32.mrb[0].mxu0
        %v5113 = vadd.f32 0.0, %v5112
        %v5114 = vpop.f32.mrb[0].mxu0
        %v5115 = vpop.f32.mrb[0].mxu0
        %v5116 = vadd.f32 0.0, %v5115
        %v5117 = vpop.f32.mrb[0].mxu0
        %5118 = vmatprep.mubr.bf16.mxu0 0
        %5119 = vmatmul.mubr.bf16.gmra.mrb[0].mxu0 %v1406
        %v5120 = vpop.f32.mrb[0].mxu0
        %v5121 = vadd.f32 0.0, %v5120
        %v5122 = vpop.f32.mrb[0].mxu0
        %v5123 = vpop.f32.mrb[0].mxu0
        %v5124 = vadd.f32 0.0, %v5123
        %v5125 = vpop.f32.mrb[0].mxu0
        %5126 = vmatprep.mubr.bf16.mxu0 0
        %5127 = vmatmul.mubr.bf16.gmra.mrb[0].mxu0 %v1414
        %v5128 = vpop.f32.mrb[0].mxu0
        %v5129 = vadd.f32 0.0, %v5128
        %v5130 = vpop.f32.mrb[0].mxu0
        %v5131 = vpop.f32.mrb[0].mxu0
        %v5132 = vadd.f32 0.0, %v5131
        %v5133 = vpop.f32.mrb[0].mxu0
        %5134 = vmatprep.mubr.bf16.mxu0 0
        %5135 = vmatmul.mubr.bf16.gmra.mrb[0].mxu0 %v1426
        %v5136 = vpop.f32.mrb[0].mxu0
        %v5137 = vadd.f32 0.0, %v5136
        %v5138 = vpop.f32.mrb[0].mxu0
        %v5139 = vpop.f32.mrb[0].mxu0
        %v5140 = vadd.f32 0.0, %v5139
        %v5141 = vpop.f32.mrb[0].mxu0
        %5142 = vmatprep.mubr.bf16.mxu0 0
        %5143 = vmatmul.mubr.bf16.gmra.mrb[0].mxu0 %v1434
        %v5144 = vpop.f32.mrb[0].mxu0
        %v5145 = vadd.f32 0.0, %v5144
        %v5146 = vpop.f32.mrb[0].mxu0
        %v5147 = vpop.f32.mrb[0].mxu0
        %v5148 = vadd.f32 0.0, %v5147
        %v5149 = vpop.f32.mrb[0].mxu0
        %5150 = vmatprep.mubr.bf16.mxu0 0
        %5151 = vmatmul.mubr.bf16.gmra.mrb[0].mxu0 %v1446
        %v5152 = vpop.f32.mrb[0].mxu0
        %v5153 = vadd.f32 0.0, %v5152
        %v5154 = vpop.f32.mrb[0].mxu0
        %v5155 = vpop.f32.mrb[0].mxu0
        %v5156 = vadd.f32 0.0, %v5155
        %v5157 = vpop.f32.mrb[0].mxu0
        %5158 = vmatprep.mubr.bf16.mxu0 0
        %5159 = vmatmul.mubr.bf16.gmra.mrb[0].mxu0 %v1454
        %v5160 = vpop.f32.mrb[0].mxu0
        %v5161 = vadd.f32 0.0, %v5160
        %v5162 = vpop.f32.mrb[0].mxu0
        %v5163 = vpop.f32.mrb[0].mxu0
        %v5164 = vadd.f32 0.0, %v5163
        %v5165 = vpop.f32.mrb[0].mxu0
        %5166 = vmatprep.mubr.bf16.mxu0 0
        %5167 = vmatmul.mubr.bf16.gmra.mrb[0].mxu0 %v1466
        %v5168 = vpop.f32.mrb[0].mxu0
        %v5169 = vadd.f32 0.0, %v5168
        %v5170 = vpop.f32.mrb[0].mxu0
        %v5171 = vpop.f32.mrb[0].mxu0
        %v5172 = vadd.f32 0.0, %v5171
        %v5173 = vpop.f32.mrb[0].mxu0
        %5174 = vmatprep.mubr.bf16.mxu0 0
        %5175 = vmatmul.mubr.bf16.gmra.mrb[0].mxu0 %v1474
        %v5176 = vpop.f32.mrb[0].mxu0
        %v5177 = vadd.f32 0.0, %v5176
        %v5178 = vpop.f32.mrb[0].mxu0
        %v5179 = vpop.f32.mrb[0].mxu0
        %v5180 = vadd.f32 0.0, %v5179
        %v5181 = vpop.f32.mrb[0].mxu0
        %5182 = vmatprep.mubr.bf16.mxu0 0
        %5183 = vmatmul.mubr.bf16.gmra.mrb[0].mxu0 %v1486
        %v5184 = vpop.f32.mrb[0].mxu0
        %v5185 = vadd.f32 0.0, %v5184
        %v5186 = vpop.f32.mrb[0].mxu0
        %v5187 = vpop.f32.mrb[0].mxu0
        %v5188 = vadd.f32 0.0, %v5187
        %v5189 = vpop.f32.mrb[0].mxu0
        %5190 = vmatprep.mubr.bf16.mxu0 0
        %5191 = vmatmul.mubr.bf16.gmra.mrb[0].mxu0 %v1494
        %v5192 = vpop.f32.mrb[0].mxu0
        %v5193 = vadd.f32 0.0, %v5192
        %v5194 = vpop.f32.mrb[0].mxu0
        %v5195 = vpop.f32.mrb[0].mxu0
        %v5196 = vadd.f32 0.0, %v5195
        %v5197 = vpop.f32.mrb[0].mxu0
        %5198 = vmatprep.mubr.bf16.mxu0 0
        %5199 = vmatmul.mubr.bf16.gmra.mrb[0].mxu0 %v1506
        %v5200 = vpop.f32.mrb[0].mxu0
        %v5201 = vadd.f32 0.0, %v5200
        %v5202 = vpop.f32.mrb[0].mxu0
        %v5203 = vpop.f32.mrb[0].mxu0
        %v5204 = vadd.f32 0.0, %v5203
        %v5205 = vpop.f32.mrb[0].mxu0
        %5206 = vmatprep.mubr.bf16.mxu0 0
        %5207 = vmatmul.mubr.bf16.gmra.mrb[0].mxu0 %v1514
        %v5208 = vpop.f32.mrb[0].mxu0
        %v5209 = vadd.f32 0.0, %v5208
        %v5210 = vpop.f32.mrb[0].mxu0
        %v5211 = vpop.f32.mrb[0].mxu0
        %v5212 = vadd.f32 0.0, %v5211
        %v5213 = vpop.f32.mrb[0].mxu0
        %5214 = vmatprep.mubr.bf16.mxu0 0
        %5215 = vmatmul.mubr.bf16.gmra.mrb[0].mxu0 %v1526
        %v5216 = vpop.f32.mrb[0].mxu0
        %v5217 = vadd.f32 0.0, %v5216
        %v5218 = vpop.f32.mrb[0].mxu0
        %v5219 = vpop.f32.mrb[0].mxu0
        %v5220 = vadd.f32 0.0, %v5219
        %v5221 = vpop.f32.mrb[0].mxu0
        %5222 = vmatprep.mubr.bf16.mxu0 0
        %5223 = vmatmul.mubr.bf16.gmra.mrb[0].mxu0 %v1534
        %v5224 = vpop.f32.mrb[0].mxu0
        %v5225 = vadd.f32 0.0, %v5224
        %v5226 = vpop.f32.mrb[0].mxu0
        %v5227 = vpop.f32.mrb[0].mxu0
        %v5228 = vadd.f32 0.0, %v5227
        %v5229 = vpop.f32.mrb[0].mxu0
        %5230 = vmatprep.mubr.bf16.mxu0 0
        %5231 = vmatmul.mubr.bf16.gmra.mrb[0].mxu0 %v1546
        %v5232 = vpop.f32.mrb[0].mxu0
        %v5233 = vadd.f32 0.0, %v5232
        %v5234 = vpop.f32.mrb[0].mxu0
        %v5235 = vpop.f32.mrb[0].mxu0
        %v5236 = vadd.f32 0.0, %v5235
        %v5237 = vpop.f32.mrb[0].mxu0
        %5238 = vmatprep.mubr.bf16.mxu0 0
        %5239 = vmatmul.mubr.bf16.gmra.mrb[0].mxu0 %v1554
        %v5240 = vpop.f32.mrb[0].mxu0
        %v5241 = vadd.f32 0.0, %v5240
        %v5242 = vpop.f32.mrb[0].mxu0
        %v5243 = vpop.f32.mrb[0].mxu0
        %v5244 = vadd.f32 0.0, %v5243
        %v5245 = vpop.f32.mrb[0].mxu0
        %5246 = vmatprep.mubr.bf16.mxu0 0
        %5247 = vmatmul.mubr.bf16.gmra.mrb[0].mxu0 %v1566
        %v5248 = vpop.f32.mrb[0].mxu0
        %v5249 = vadd.f32 0.0, %v5248
        %v5250 = vpop.f32.mrb[0].mxu0
        %v5251 = vpop.f32.mrb[0].mxu0
        %v5252 = vadd.f32 0.0, %v5251
        %v5253 = vpop.f32.mrb[0].mxu0
        %5254 = vmatprep.mubr.bf16.mxu0 0
        %5255 = vmatmul.mubr.bf16.gmra.mrb[0].mxu0 %v1574
        %v5256 = vpop.f32.mrb[0].mxu0
        %v5257 = vadd.f32 0.0, %v5256
        %v5258 = vpop.f32.mrb[0].mxu0
        %v5259 = vpop.f32.mrb[0].mxu0
        %v5260 = vadd.f32 0.0, %v5259
        %v5261 = vpop.f32.mrb[0].mxu0
        %5262 = vmatprep.mubr.bf16.mxu0 0
        %5263 = vmatmul.mubr.bf16.gmra.mrb[0].mxu0 %v1586
        %v5264 = vpop.f32.mrb[0].mxu0
        %v5265 = vadd.f32 0.0, %v5264
        %v5266 = vpop.f32.mrb[0].mxu0
        %v5267 = vpop.f32.mrb[0].mxu0
        %v5268 = vadd.f32 0.0, %v5267
        %v5269 = vpop.f32.mrb[0].mxu0
        %5270 = vmatprep.mubr.bf16.mxu0 0
        %5271 = vmatmul.mubr.bf16.gmra.mrb[0].mxu0 %v1594
        %v5272 = vpop.f32.mrb[0].mxu0
        %v5273 = vadd.f32 0.0, %v5272
        %v5274 = vpop.f32.mrb[0].mxu0
        %v5275 = vpop.f32.mrb[0].mxu0
        %v5276 = vadd.f32 0.0, %v5275
        %v5277 = vpop.f32.mrb[0].mxu0
        %5278 = vmatprep.mubr.bf16.mxu0 0
        %5279 = vmatmul.mubr.bf16.gmra.mrb[0].mxu0 %v1606
        %v5280 = vpop.f32.mrb[0].mxu0
        %v5281 = vadd.f32 0.0, %v5280
        %v5282 = vpop.f32.mrb[0].mxu0
        %v5283 = vpop.f32.mrb[0].mxu0
        %v5284 = vadd.f32 0.0, %v5283
        %v5285 = vpop.f32.mrb[0].mxu0
        %5286 = vmatprep.mubr.bf16.mxu0 0
        %5287 = vmatmul.mubr.bf16.gmra.mrb[0].mxu0 %v1614
        %v5288 = vpop.f32.mrb[0].mxu0
        %v5289 = vadd.f32 0.0, %v5288
        %v5290 = vpop.f32.mrb[0].mxu0
        %v5291 = vpop.f32.mrb[0].mxu0
        %v5292 = vadd.f32 0.0, %v5291
        %v5293 = vpop.f32.mrb[0].mxu0
        %5294 = vmatprep.mubr.bf16.mxu0 0
        %5295 = vmatmul.mubr.bf16.gmra.mrb[0].mxu0 %v1626
        %v5296 = vpop.f32.mrb[0].mxu0
        %v5297 = vadd.f32 0.0, %v5296
        %v5298 = vpop.f32.mrb[0].mxu0
        %v5299 = vpop.f32.mrb[0].mxu0
        %v5300 = vadd.f32 0.0, %v5299
        %v5301 = vpop.f32.mrb[0].mxu0
        %5302 = vmatprep.mubr.bf16.mxu0 0
        %5303 = vmatmul.mubr.bf16.gmra.mrb[0].mxu0 %v1634
        %v5304 = vpop.f32.mrb[0].mxu0
        %v5305 = vadd.f32 0.0, %v5304
        %v5306 = vpop.f32.mrb[0].mxu0
        %v5307 = vpop.f32.mrb[0].mxu0
        %v5308 = vadd.f32 0.0, %v5307
        %v5309 = vpop.f32.mrb[0].mxu0
        %5310 = vmatprep.mubr.bf16.mxu0 0
        %5311 = vmatmul.mubr.bf16.gmra.mrb[0].mxu0 %v1646
        %v5312 = vpop.f32.mrb[0].mxu0
        %v5313 = vadd.f32 0.0, %v5312
        %v5314 = vpop.f32.mrb[0].mxu0
        %v5315 = vpop.f32.mrb[0].mxu0
        %v5316 = vadd.f32 0.0, %v5315
        %v5317 = vpop.f32.mrb[0].mxu0
        %5318 = vmatprep.mubr.bf16.mxu0 0
        %5319 = vmatmul.mubr.bf16.gmra.mrb[0].mxu0 %v1654
        %v5320 = vpop.f32.mrb[0].mxu0
        %v5321 = vadd.f32 0.0, %v5320
        %v5322 = vpop.f32.mrb[0].mxu0
        %v5323 = vpop.f32.mrb[0].mxu0
        %v5324 = vadd.f32 0.0, %v5323
        %v5325 = vpop.f32.mrb[0].mxu0
        %5326 = vmatprep.mubr.bf16.mxu0 0
        %5327 = vmatmul.mubr.bf16.gmra.mrb[0].mxu0 %v1666
        %v5328 = vpop.f32.mrb[0].mxu0
        %v5329 = vadd.f32 0.0, %v5328
        %v5330 = vpop.f32.mrb[0].mxu0
        %v5331 = vpop.f32.mrb[0].mxu0
        %v5332 = vadd.f32 0.0, %v5331
        %v5333 = vpop.f32.mrb[0].mxu0
        %5334 = vmatprep.mubr.bf16.mxu0 0
        %5335 = vmatmul.mubr.bf16.gmra.mrb[0].mxu0 %v1674
        %v5336 = vpop.f32.mrb[0].mxu0
        %v5337 = vadd.f32 0.0, %v5336
        %v5338 = vpop.f32.mrb[0].mxu0
        %v5339 = vpop.f32.mrb[0].mxu0
        %v5340 = vadd.f32 0.0, %v5339
        %v5341 = vpop.f32.mrb[0].mxu0
        %5342 = vmatprep.mubr.bf16.mxu0 0
        %5343 = vmatmul.mubr.bf16.gmra.mrb[0].mxu0 %v1686
        %v5344 = vpop.f32.mrb[0].mxu0
        %v5345 = vadd.f32 0.0, %v5344
        %v5346 = vpop.f32.mrb[0].mxu0
        %v5347 = vpop.f32.mrb[0].mxu0
        %v5348 = vadd.f32 0.0, %v5347
        %v5349 = vpop.f32.mrb[0].mxu0
        %5350 = vmatprep.mubr.bf16.mxu0 0
        %5351 = vmatmul.mubr.bf16.gmra.mrb[0].mxu0 %v1694
        %v5352 = vpop.f32.mrb[0].mxu0
        %v5353 = vadd.f32 0.0, %v5352
        %v5354 = vpop.f32.mrb[0].mxu0
        %v5355 = vpop.f32.mrb[0].mxu0
        %v5356 = vadd.f32 0.0, %v5355
        %v5357 = vpop.f32.mrb[0].mxu0
        %5358 = vmatprep.mubr.bf16.mxu0 0
        %5359 = vmatmul.mubr.bf16.gmra.mrb[0].mxu0 %v1706
        %v5360 = vpop.f32.mrb[0].mxu0
        %v5361 = vadd.f32 0.0, %v5360
        %v5362 = vpop.f32.mrb[0].mxu0
        %v5363 = vpop.f32.mrb[0].mxu0
        %v5364 = vadd.f32 0.0, %v5363
        %v5365 = vpop.f32.mrb[0].mxu0
        %5366 = vmatprep.mubr.bf16.mxu0 0
        %5367 = vmatmul.mubr.bf16.gmra.mrb[0].mxu0 %v1714
        %v5368 = vpop.f32.mrb[0].mxu0
        %v5369 = vadd.f32 0.0, %v5368
        %v5370 = vpop.f32.mrb[0].mxu0
        %v5371 = vpop.f32.mrb[0].mxu0
        %v5372 = vadd.f32 0.0, %v5371
        %v5373 = vpop.f32.mrb[0].mxu0
        %5374 = vmatprep.mubr.bf16.mxu0 0
        %5375 = vmatmul.mubr.bf16.gmra.mrb[0].mxu0 %v1726
        %v5376 = vpop.f32.mrb[0].mxu0
        %v5377 = vadd.f32 0.0, %v5376
        %v5378 = vpop.f32.mrb[0].mxu0
        %v5379 = vpop.f32.mrb[0].mxu0
        %v5380 = vadd.f32 0.0, %v5379
        %v5381 = vpop.f32.mrb[0].mxu0
        %5382 = vmatprep.mubr.bf16.mxu0 0
        %5383 = vmatmul.mubr.bf16.gmra.mrb[0].mxu0 %v1734
        %v5384 = vpop.f32.mrb[0].mxu0
        %v5385 = vadd.f32 0.0, %v5384
        %v5386 = vpop.f32.mrb[0].mxu0
        %v5387 = vpop.f32.mrb[0].mxu0
        %v5388 = vadd.f32 0.0, %v5387
        %v5389 = vpop.f32.mrb[0].mxu0
        %5390 = vmatprep.mubr.bf16.mxu0 0
        %5391 = vmatmul.mubr.bf16.gmra.mrb[0].mxu0 %v1746
        %v5392 = vpop.f32.mrb[0].mxu0
        %v5393 = vadd.f32 0.0, %v5392
        %v5394 = vpop.f32.mrb[0].mxu0
        %v5395 = vpop.f32.mrb[0].mxu0
        %v5396 = vadd.f32 0.0, %v5395
        %v5397 = vpop.f32.mrb[0].mxu0
        %5398 = vmatprep.mubr.bf16.mxu0 0
        %5399 = vmatmul.mubr.bf16.gmra.mrb[0].mxu0 %v1754
        %v5400 = vpop.f32.mrb[0].mxu0
        %v5401 = vadd.f32 0.0, %v5400
        %v5402 = vpop.f32.mrb[0].mxu0
        %v5403 = vpop.f32.mrb[0].mxu0
        %v5404 = vadd.f32 0.0, %v5403
        %v5405 = vpop.f32.mrb[0].mxu0
        %5406 = vmatprep.mubr.bf16.mxu0 0
        %5407 = vmatmul.mubr.bf16.gmra.mrb[0].mxu0 %v1766
        %v5408 = vpop.f32.mrb[0].mxu0
        %v5409 = vadd.f32 0.0, %v5408
        %v5410 = vpop.f32.mrb[0].mxu0
        %v5411 = vpop.f32.mrb[0].mxu0
        %v5412 = vadd.f32 0.0, %v5411
        %v5413 = vpop.f32.mrb[0].mxu0
        %5414 = vmatprep.mubr.bf16.mxu0 0
        %5415 = vmatmul.mubr.bf16.gmra.mrb[0].mxu0 %v1774
        %v5416 = vpop.f32.mrb[0].mxu0
        %v5417 = vadd.f32 0.0, %v5416
        %v5418 = vpop.f32.mrb[0].mxu0
        %v5419 = vpop.f32.mrb[0].mxu0
        %v5420 = vadd.f32 0.0, %v5419
        %v5421 = vpop.f32.mrb[0].mxu0
        %5422 = vmatprep.mubr.bf16.mxu0 0
        %5423 = vmatmul.mubr.bf16.gmra.mrb[0].mxu0 %v4818
        %v5424 = vpop.f32.mrb[0].mxu0
        %v5425 = vadd.f32 0.0, %v5424
        %v5426 = vpop.f32.mrb[0].mxu0
        %v5427 = vpop.f32.mrb[0].mxu0
        %v5428 = vadd.f32 0.0, %v5427
        %v5429 = vpop.f32.mrb[0].mxu0
        %5430 = vmatprep.mubr.bf16.mxu0 0
        %5431 = vmatmul.mubr.bf16.gmra.mrb[0].mxu0 %v4826
        %v5432 = vpop.f32.mrb[0].mxu0
        %v5433 = vadd.f32 0.0, %v5432
        %v5434 = vpop.f32.mrb[0].mxu0
        %v5435 = vpop.f32.mrb[0].mxu0
        %v5436 = vadd.f32 0.0, %v5435
        %v5437 = vpop.f32.mrb[0].mxu0
        %5438 = vdwg.mxu0
        %v5439 = vadd.f32 %v4679, %v4929
        %v5440 = vadd.f32 %v4680, %v4932
        %v5441 = vadd.f32 %v4681, %v4937
        %v5442 = vadd.f32 %v4682, %v4940
        %v5443 = vadd.f32 %v4683, %v4945
        %v5444 = vadd.f32 %v4684, %v4948
        %v5445 = vadd.f32 %v4685, %v4953
        %v5446 = vadd.f32 %v4686, %v4956
        %v5447 = vadd.f32 %v4687, %v4961
        %v5448 = vadd.f32 %v4688, %v4964
        %v5449 = vadd.f32 %v4689, %v4969
        %v5450 = vadd.f32 %v4690, %v4972
        %v5451 = vadd.f32 %v4691, %v4977
        %v5452 = vadd.f32 %v4692, %v4980
        %v5453 = vadd.f32 %v4693, %v4985
        %v5454 = vadd.f32 %v4694, %v4988
        %v5455 = vadd.f32 %v4695, %v4993
        %v5456 = vadd.f32 %v4696, %v4996
        %v5457 = vadd.f32 %v4697, %v5001
        %v5458 = vadd.f32 %v4698, %v5004
        %v5459 = vadd.f32 %v4699, %v5009
        %v5460 = vadd.f32 %v4700, %v5012
        %v5461 = vadd.f32 %v4701, %v5017
        %v5462 = vadd.f32 %v4702, %v5020
        %v5463 = vadd.f32 %v4703, %v5025
        %v5464 = vadd.f32 %v4704, %v5028
        %v5465 = vadd.f32 %v4705, %v5033
        %v5466 = vadd.f32 %v4706, %v5036
        %v5467 = vadd.f32 %v4707, %v5041
        %v5468 = vadd.f32 %v4708, %v5044
        %v5469 = vadd.f32 %v4709, %v5049
        %v5470 = vadd.f32 %v4710, %v5052
        %v5471 = vadd.f32 %v4711, %v5057
        %v5472 = vadd.f32 %v4712, %v5060
        %v5473 = vadd.f32 %v4713, %v5065
        %v5474 = vadd.f32 %v4714, %v5068
        %v5475 = vadd.f32 %v4715, %v5073
        %v5476 = vadd.f32 %v4716, %v5076
        %v5477 = vadd.f32 %v4717, %v5081
        %v5478 = vadd.f32 %v4718, %v5084
        %v5479 = vadd.f32 %v4719, %v5089
        %v5480 = vadd.f32 %v4720, %v5092
        %v5481 = vadd.f32 %v4721, %v5097
        %v5482 = vadd.f32 %v4722, %v5100
        %v5483 = vadd.f32 %v4723, %v5105
        %v5484 = vadd.f32 %v4724, %v5108
        %v5485 = vadd.f32 %v4725, %v5113
        %v5486 = vadd.f32 %v4726, %v5116
        %v5487 = vadd.f32 %v4727, %v5121
        %v5488 = vadd.f32 %v4728, %v5124
        %v5489 = vadd.f32 %v4729, %v5129
        %v5490 = vadd.f32 %v4730, %v5132
        %v5491 = vadd.f32 %v4731, %v5137
        %v5492 = vadd.f32 %v4732, %v5140
        %v5493 = vadd.f32 %v4733, %v5145
        %v5494 = vadd.f32 %v4734, %v5148
        %v5495 = vadd.f32 %v4735, %v5153
        %v5496 = vadd.f32 %v4736, %v5156
        %v5497 = vadd.f32 %v4737, %v5161
        %v5498 = vadd.f32 %v4738, %v5164
        %v5499 = vadd.f32 %v4739, %v5169
        %v5500 = vadd.f32 %v4740, %v5172
        %v5501 = vadd.f32 %v4741, %v5177
        %v5502 = vadd.f32 %v4742, %v5180
        %v5503 = vadd.f32 %v4743, %v5185
        %v5504 = vadd.f32 %v4744, %v5188
        %v5505 = vadd.f32 %v4745, %v5193
        %v5506 = vadd.f32 %v4746, %v5196
        %v5507 = vadd.f32 %v4747, %v5201
        %v5508 = vadd.f32 %v4748, %v5204
        %v5509 = vadd.f32 %v4749, %v5209
        %v5510 = vadd.f32 %v4750, %v5212
        %v5511 = vadd.f32 %v4751, %v5217
        %v5512 = vadd.f32 %v4752, %v5220
        %v5513 = vadd.f32 %v4753, %v5225
        %v5514 = vadd.f32 %v4754, %v5228
        %v5515 = vadd.f32 %v4755, %v5233
        %v5516 = vadd.f32 %v4756, %v5236
        %v5517 = vadd.f32 %v4757, %v5241
        %v5518 = vadd.f32 %v4758, %v5244
        %v5519 = vadd.f32 %v4759, %v5249
        %v5520 = vadd.f32 %v4760, %v5252
        %v5521 = vadd.f32 %v4761, %v5257
        %v5522 = vadd.f32 %v4762, %v5260
        %v5523 = vadd.f32 %v4763, %v5265
        %v5524 = vadd.f32 %v4764, %v5268
        %v5525 = vadd.f32 %v4765, %v5273
        %v5526 = vadd.f32 %v4766, %v5276
        %v5527 = vadd.f32 %v4767, %v5281
        %v5528 = vadd.f32 %v4768, %v5284
        %v5529 = vadd.f32 %v4769, %v5289
        %v5530 = vadd.f32 %v4770, %v5292
        %v5531 = vadd.f32 %v4771, %v5297
        %v5532 = vadd.f32 %v4772, %v5300
        %v5533 = vadd.f32 %v4773, %v5305
        %v5534 = vadd.f32 %v4774, %v5308
        %v5535 = vadd.f32 %v4775, %v5313
        %v5536 = vadd.f32 %v4776, %v5316
        %v5537 = vadd.f32 %v4777, %v5321
        %v5538 = vadd.f32 %v4778, %v5324
        %v5539 = vadd.f32 %v4779, %v5329
        %v5540 = vadd.f32 %v4780, %v5332
        %v5541 = vadd.f32 %v4781, %v5337
        %v5542 = vadd.f32 %v4782, %v5340
        %v5543 = vadd.f32 %v4783, %v5345
        %v5544 = vadd.f32 %v4784, %v5348
        %v5545 = vadd.f32 %v4785, %v5353
        %v5546 = vadd.f32 %v4786, %v5356
        %v5547 = vadd.f32 %v4787, %v5361
        %v5548 = vadd.f32 %v4788, %v5364
        %v5549 = vadd.f32 %v4789, %v5369
        %v5550 = vadd.f32 %v4790, %v5372
        %v5551 = vadd.f32 %v4791, %v5377
        %v5552 = vadd.f32 %v4792, %v5380
        %v5553 = vadd.f32 %v4793, %v5385
        %v5554 = vadd.f32 %v4794, %v5388
        %v5555 = vadd.f32 %v4795, %v5393
        %v5556 = vadd.f32 %v4796, %v5396
        %v5557 = vadd.f32 %v4797, %v5401
        %v5558 = vadd.f32 %v4798, %v5404
        %v5559 = vadd.f32 %v4799, %v5409
        %v5560 = vadd.f32 %v4800, %v5412
        %v5561 = vadd.f32 %v4801, %v5417
        %v5562 = vadd.f32 %v4802, %v5420
        %v5563 = vadd.f32 %v4803, %v5425
        %v5564 = vadd.f32 %v4804, %v5428
        %v5565 = vadd.f32 %v4805, %v5433
        %v5566 = vadd.f32 %v4806, %v5436
        %v5569 = vrot.slane %v1084, 1
        %v5570 = vrot.slane %v950, 1
        %v5571 = vsel %vm3106, %v5569, %v5570
        %v5572 = vrot.slane %v1117, 1
        %v5573 = vsel %vm3106, %v5570, %v5572
        %s5576 = scalar_lea.vmem [#allocation5], 320
        %v5577 = vld [vmem:[%s5576] sm:$0xf]
        %v5578 = vld [vmem:[%s5576 + $0x4] sm:$0xf]
        %v5579 = vld [vmem:[%s5576 + $0x8] sm:$0xf]
        %v5580 = vld [vmem:[%s5576 + $0xc] sm:$0xf]
        %v5581 = vld [vmem:[%s5576 + $0x10] sm:$0xf]
        %v5582 = vld [vmem:[%s5576 + $0x14] sm:$0xf]
        %v5583 = vld [vmem:[%s5576 + $0x18] sm:$0xf]
        %v5584 = vld [vmem:[%s5576 + $0x1c] sm:$0xf]
        %v5585 = vld [vmem:[%s5576 + $0x20] sm:$0xf]
        %v5586 = vld [vmem:[%s5576 + $0x24] sm:$0xf]
        %v5587 = vld [vmem:[%s5576 + $0x28] sm:$0xf]
        %v5588 = vld [vmem:[%s5576 + $0x2c] sm:$0xf]
        %v5589 = vld [vmem:[%s5576 + $0x30] sm:$0xf]
        %v5590 = vld [vmem:[%s5576 + $0x34] sm:$0xf]
        %v5591 = vld [vmem:[%s5576 + $0x38] sm:$0xf]
        %v5592 = vld [vmem:[%s5576 + $0x3c] sm:$0xf]
        %v5609 = vunpack.c.l.b16 %v5577
        %v5610 = vunpack.c.l.b16 %v5578
        %v5611 = vunpack.c.l.b16 %v5579
        %v5612 = vunpack.c.l.b16 %v5580
        %v5613 = vunpack.c.l.b16 %v5581
        %v5614 = vunpack.c.l.b16 %v5582
        %v5615 = vunpack.c.l.b16 %v5583
        %v5616 = vunpack.c.l.b16 %v5584
        %v5617 = vunpack.c.l.b16 %v5585
        %v5618 = vunpack.c.l.b16 %v5586
        %v5619 = vunpack.c.l.b16 %v5587
        %v5620 = vunpack.c.l.b16 %v5588
        %v5621 = vunpack.c.l.b16 %v5589
        %v5622 = vunpack.c.l.b16 %v5590
        %v5623 = vunpack.c.l.b16 %v5591
        %v5624 = vunpack.c.l.b16 %v5592
        %v5625 = vpack.c.b16 %v5610, %v5609
        %v5626 = vpack.c.b16 %v5612, %v5611
        %v5627 = vpack.c.b16 %v5614, %v5613
        %v5628 = vpack.c.b16 %v5616, %v5615
        %v5629 = vpack.c.b16 %v5618, %v5617
        %v5630 = vpack.c.b16 %v5620, %v5619
        %v5631 = vpack.c.b16 %v5622, %v5621
        %v5632 = vpack.c.b16 %v5624, %v5623
        %5641 = vmatprep.subr.bf16.mxu0 0
        %5642 = vmatpush1.bf16.msra.mxu0 %v5625
        %5643 = vmatprep.subr.bf16.mxu0 0
        %5644 = vmatpush1.bf16.msra.mxu0 %v5626
        %5645 = vmatprep.subr.bf16.mxu0 0
        %5646 = vmatpush1.bf16.msra.mxu0 %v5627
        %5647 = vmatprep.subr.bf16.mxu0 0
        %5648 = vmatpush1.bf16.msra.mxu0 %v5628
        %5649 = vmatprep.subr.bf16.mxu0 0
        %5650 = vmatpush1.bf16.msra.mxu0 %v5629
        %5651 = vmatprep.subr.bf16.mxu0 0
        %5652 = vmatpush1.bf16.msra.mxu0 %v5630
        %5653 = vmatprep.subr.bf16.mxu0 0
        %5654 = vmatpush1.bf16.msra.mxu0 %v5631
        %5655 = vmatprep.subr.bf16.mxu0 0
        %5656 = vmatpush1.bf16.msra.mxu0 %v5632
        %5657 = vmatprep.subr.bf16.mxu0 0
        %5658 = vmatpush1.bf16.msra.mxu0 0
        %5659 = vmatprep.subr.bf16.mxu0 0
        %5660 = vmatpush1.bf16.msra.mxu0 0
        %5661 = vmatprep.subr.bf16.mxu0 0
        %5662 = vmatpush1.bf16.msra.mxu0 0
        %5663 = vmatprep.subr.bf16.mxu0 0
        %5664 = vmatpush1.bf16.msra.mxu0 0
        %5665 = vmatprep.subr.bf16.mxu0 0
        %5666 = vmatpush1.bf16.msra.mxu0 0
        %5667 = vmatprep.subr.bf16.mxu0 0
        %5668 = vmatpush1.bf16.msra.mxu0 0
        %5669 = vmatprep.subr.bf16.mxu0 0
        %5670 = vmatpush1.bf16.msra.mxu0 0
        %5671 = vmatprep.subr.bf16.mxu0 0
        %5672 = vmatpush1.bf16.msra.mxu0 0
        %5673 = vmatprep.mubr.bf16.mxu0 0
        %5674 = vmatmul.mubr.bf16.gmra.mrb[0].mxu0 %v3114
        %v5675 = vpop.f32.mrb[0].mxu0
        %v5676 = vadd.f32 0.0, %v5675
        %v5677 = vpop.f32.mrb[0].mxu0
        %v5678 = vpop.f32.mrb[0].mxu0
        %v5679 = vadd.f32 0.0, %v5678
        %v5680 = vpop.f32.mrb[0].mxu0
        %5681 = vmatprep.mubr.bf16.mxu0 0
        %5682 = vmatmul.mubr.bf16.gmra.mrb[0].mxu0 %v3116
        %v5683 = vpop.f32.mrb[0].mxu0
        %v5684 = vadd.f32 0.0, %v5683
        %v5685 = vpop.f32.mrb[0].mxu0
        %v5686 = vpop.f32.mrb[0].mxu0
        %v5687 = vadd.f32 0.0, %v5686
        %v5688 = vpop.f32.mrb[0].mxu0
        %5689 = vmatprep.mubr.bf16.mxu0 0
        %5690 = vmatmul.mubr.bf16.gmra.mrb[0].mxu0 %v3119
        %v5691 = vpop.f32.mrb[0].mxu0
        %v5692 = vadd.f32 0.0, %v5691
        %v5693 = vpop.f32.mrb[0].mxu0
        %v5694 = vpop.f32.mrb[0].mxu0
        %v5695 = vadd.f32 0.0, %v5694
        %v5696 = vpop.f32.mrb[0].mxu0
        %5697 = vmatprep.mubr.bf16.mxu0 0
        %5698 = vmatmul.mubr.bf16.gmra.mrb[0].mxu0 %v3121
        %v5699 = vpop.f32.mrb[0].mxu0
        %v5700 = vadd.f32 0.0, %v5699
        %v5701 = vpop.f32.mrb[0].mxu0
        %v5702 = vpop.f32.mrb[0].mxu0
        %v5703 = vadd.f32 0.0, %v5702
        %v5704 = vpop.f32.mrb[0].mxu0
        %5705 = vmatprep.mubr.bf16.mxu0 0
        %5706 = vmatmul.mubr.bf16.gmra.mrb[0].mxu0 %v3124
        %v5707 = vpop.f32.mrb[0].mxu0
        %v5708 = vadd.f32 0.0, %v5707
        %v5709 = vpop.f32.mrb[0].mxu0
        %v5710 = vpop.f32.mrb[0].mxu0
        %v5711 = vadd.f32 0.0, %v5710
        %v5712 = vpop.f32.mrb[0].mxu0
        %5713 = vmatprep.mubr.bf16.mxu0 0
        %5714 = vmatmul.mubr.bf16.gmra.mrb[0].mxu0 %v3126
        %v5715 = vpop.f32.mrb[0].mxu0
        %v5716 = vadd.f32 0.0, %v5715
        %v5717 = vpop.f32.mrb[0].mxu0
        %v5718 = vpop.f32.mrb[0].mxu0
        %v5719 = vadd.f32 0.0, %v5718
        %v5720 = vpop.f32.mrb[0].mxu0
        %5721 = vmatprep.mubr.bf16.mxu0 0
        %5722 = vmatmul.mubr.bf16.gmra.mrb[0].mxu0 %v3129
        %v5723 = vpop.f32.mrb[0].mxu0
        %v5724 = vadd.f32 0.0, %v5723
        %v5725 = vpop.f32.mrb[0].mxu0
        %v5726 = vpop.f32.mrb[0].mxu0
        %v5727 = vadd.f32 0.0, %v5726
        %v5728 = vpop.f32.mrb[0].mxu0
        %5729 = vmatprep.mubr.bf16.mxu0 0
        %5730 = vmatmul.mubr.bf16.gmra.mrb[0].mxu0 %v3131
        %v5731 = vpop.f32.mrb[0].mxu0
        %v5732 = vadd.f32 0.0, %v5731
        %v5733 = vpop.f32.mrb[0].mxu0
        %v5734 = vpop.f32.mrb[0].mxu0
        %v5735 = vadd.f32 0.0, %v5734
        %v5736 = vpop.f32.mrb[0].mxu0
        %5737 = vmatprep.mubr.bf16.mxu0 0
        %5738 = vmatmul.mubr.bf16.gmra.mrb[0].mxu0 %v3134
        %v5739 = vpop.f32.mrb[0].mxu0
        %v5740 = vadd.f32 0.0, %v5739
        %v5741 = vpop.f32.mrb[0].mxu0
        %v5742 = vpop.f32.mrb[0].mxu0
        %v5743 = vadd.f32 0.0, %v5742
        %v5744 = vpop.f32.mrb[0].mxu0
        %5745 = vmatprep.mubr.bf16.mxu0 0
        %5746 = vmatmul.mubr.bf16.gmra.mrb[0].mxu0 %v3136
        %v5747 = vpop.f32.mrb[0].mxu0
        %v5748 = vadd.f32 0.0, %v5747
        %v5749 = vpop.f32.mrb[0].mxu0
        %v5750 = vpop.f32.mrb[0].mxu0
        %v5751 = vadd.f32 0.0, %v5750
        %v5752 = vpop.f32.mrb[0].mxu0
        %5753 = vmatprep.mubr.bf16.mxu0 0
        %5754 = vmatmul.mubr.bf16.gmra.mrb[0].mxu0 %v3139
        %v5755 = vpop.f32.mrb[0].mxu0
        %v5756 = vadd.f32 0.0, %v5755
        %v5757 = vpop.f32.mrb[0].mxu0
        %v5758 = vpop.f32.mrb[0].mxu0
        %v5759 = vadd.f32 0.0, %v5758
        %v5760 = vpop.f32.mrb[0].mxu0
        %5761 = vmatprep.mubr.bf16.mxu0 0
        %5762 = vmatmul.mubr.bf16.gmra.mrb[0].mxu0 %v3141
        %v5763 = vpop.f32.mrb[0].mxu0
        %v5764 = vadd.f32 0.0, %v5763
        %v5765 = vpop.f32.mrb[0].mxu0
        %v5766 = vpop.f32.mrb[0].mxu0
        %v5767 = vadd.f32 0.0, %v5766
        %v5768 = vpop.f32.mrb[0].mxu0
        %5769 = vmatprep.mubr.bf16.mxu0 0
        %5770 = vmatmul.mubr.bf16.gmra.mrb[0].mxu0 %v3144
        %v5771 = vpop.f32.mrb[0].mxu0
        %v5772 = vadd.f32 0.0, %v5771
        %v5773 = vpop.f32.mrb[0].mxu0
        %v5774 = vpop.f32.mrb[0].mxu0
        %v5775 = vadd.f32 0.0, %v5774
        %v5776 = vpop.f32.mrb[0].mxu0
        %5777 = vmatprep.mubr.bf16.mxu0 0
        %5778 = vmatmul.mubr.bf16.gmra.mrb[0].mxu0 %v3146
        %v5779 = vpop.f32.mrb[0].mxu0
        %v5780 = vadd.f32 0.0, %v5779
        %v5781 = vpop.f32.mrb[0].mxu0
        %v5782 = vpop.f32.mrb[0].mxu0
        %v5783 = vadd.f32 0.0, %v5782
        %v5784 = vpop.f32.mrb[0].mxu0
        %5785 = vmatprep.mubr.bf16.mxu0 0
        %5786 = vmatmul.mubr.bf16.gmra.mrb[0].mxu0 %v3149
        %v5787 = vpop.f32.mrb[0].mxu0
        %v5788 = vadd.f32 0.0, %v5787
        %v5789 = vpop.f32.mrb[0].mxu0
        %v5790 = vpop.f32.mrb[0].mxu0
        %v5791 = vadd.f32 0.0, %v5790
        %v5792 = vpop.f32.mrb[0].mxu0
        %5793 = vmatprep.mubr.bf16.mxu0 0
        %5794 = vmatmul.mubr.bf16.gmra.mrb[0].mxu0 %v3151
        %v5795 = vpop.f32.mrb[0].mxu0
        %v5796 = vadd.f32 0.0, %v5795
        %v5797 = vpop.f32.mrb[0].mxu0
        %v5798 = vpop.f32.mrb[0].mxu0
        %v5799 = vadd.f32 0.0, %v5798
        %v5800 = vpop.f32.mrb[0].mxu0
        %5801 = vmatprep.mubr.bf16.mxu0 0
        %5802 = vmatmul.mubr.bf16.gmra.mrb[0].mxu0 %v3154
        %v5803 = vpop.f32.mrb[0].mxu0
        %v5804 = vadd.f32 0.0, %v5803
        %v5805 = vpop.f32.mrb[0].mxu0
        %v5806 = vpop.f32.mrb[0].mxu0
        %v5807 = vadd.f32 0.0, %v5806
        %v5808 = vpop.f32.mrb[0].mxu0
        %5809 = vmatprep.mubr.bf16.mxu0 0
        %5810 = vmatmul.mubr.bf16.gmra.mrb[0].mxu0 %v3156
        %v5811 = vpop.f32.mrb[0].mxu0
        %v5812 = vadd.f32 0.0, %v5811
        %v5813 = vpop.f32.mrb[0].mxu0
        %v5814 = vpop.f32.mrb[0].mxu0
        %v5815 = vadd.f32 0.0, %v5814
        %v5816 = vpop.f32.mrb[0].mxu0
        %5817 = vmatprep.mubr.bf16.mxu0 0
        %5818 = vmatmul.mubr.bf16.gmra.mrb[0].mxu0 %v3159
        %v5819 = vpop.f32.mrb[0].mxu0
        %v5820 = vadd.f32 0.0, %v5819
        %v5821 = vpop.f32.mrb[0].mxu0
        %v5822 = vpop.f32.mrb[0].mxu0
        %v5823 = vadd.f32 0.0, %v5822
        %v5824 = vpop.f32.mrb[0].mxu0
        %5825 = vmatprep.mubr.bf16.mxu0 0
        %5826 = vmatmul.mubr.bf16.gmra.mrb[0].mxu0 %v3161
        %v5827 = vpop.f32.mrb[0].mxu0
        %v5828 = vadd.f32 0.0, %v5827
        %v5829 = vpop.f32.mrb[0].mxu0
        %v5830 = vpop.f32.mrb[0].mxu0
        %v5831 = vadd.f32 0.0, %v5830
        %v5832 = vpop.f32.mrb[0].mxu0
        %5833 = vmatprep.mubr.bf16.mxu0 0
        %5834 = vmatmul.mubr.bf16.gmra.mrb[0].mxu0 %v3164
        %v5835 = vpop.f32.mrb[0].mxu0
        %v5836 = vadd.f32 0.0, %v5835
        %v5837 = vpop.f32.mrb[0].mxu0
        %v5838 = vpop.f32.mrb[0].mxu0
        %v5839 = vadd.f32 0.0, %v5838
        %v5840 = vpop.f32.mrb[0].mxu0
        %5841 = vmatprep.mubr.bf16.mxu0 0
        %5842 = vmatmul.mubr.bf16.gmra.mrb[0].mxu0 %v3166
        %v5843 = vpop.f32.mrb[0].mxu0
        %v5844 = vadd.f32 0.0, %v5843
        %v5845 = vpop.f32.mrb[0].mxu0
        %v5846 = vpop.f32.mrb[0].mxu0
        %v5847 = vadd.f32 0.0, %v5846
        %v5848 = vpop.f32.mrb[0].mxu0
        %5849 = vmatprep.mubr.bf16.mxu0 0
        %5850 = vmatmul.mubr.bf16.gmra.mrb[0].mxu0 %v3169
        %v5851 = vpop.f32.mrb[0].mxu0
        %v5852 = vadd.f32 0.0, %v5851
        %v5853 = vpop.f32.mrb[0].mxu0
        %v5854 = vpop.f32.mrb[0].mxu0
        %v5855 = vadd.f32 0.0, %v5854
        %v5856 = vpop.f32.mrb[0].mxu0
        %5857 = vmatprep.mubr.bf16.mxu0 0
        %5858 = vmatmul.mubr.bf16.gmra.mrb[0].mxu0 %v3171
        %v5859 = vpop.f32.mrb[0].mxu0
        %v5860 = vadd.f32 0.0, %v5859
        %v5861 = vpop.f32.mrb[0].mxu0
        %v5862 = vpop.f32.mrb[0].mxu0
        %v5863 = vadd.f32 0.0, %v5862
        %v5864 = vpop.f32.mrb[0].mxu0
        %5865 = vmatprep.mubr.bf16.mxu0 0
        %5866 = vmatmul.mubr.bf16.gmra.mrb[0].mxu0 %v3174
        %v5867 = vpop.f32.mrb[0].mxu0
        %v5868 = vadd.f32 0.0, %v5867
        %v5869 = vpop.f32.mrb[0].mxu0
        %v5870 = vpop.f32.mrb[0].mxu0
        %v5871 = vadd.f32 0.0, %v5870
        %v5872 = vpop.f32.mrb[0].mxu0
        %5873 = vmatprep.mubr.bf16.mxu0 0
        %5874 = vmatmul.mubr.bf16.gmra.mrb[0].mxu0 %v3176
        %v5875 = vpop.f32.mrb[0].mxu0
        %v5876 = vadd.f32 0.0, %v5875
        %v5877 = vpop.f32.mrb[0].mxu0
        %v5878 = vpop.f32.mrb[0].mxu0
        %v5879 = vadd.f32 0.0, %v5878
        %v5880 = vpop.f32.mrb[0].mxu0
        %5881 = vmatprep.mubr.bf16.mxu0 0
        %5882 = vmatmul.mubr.bf16.gmra.mrb[0].mxu0 %v3179
        %v5883 = vpop.f32.mrb[0].mxu0
        %v5884 = vadd.f32 0.0, %v5883
        %v5885 = vpop.f32.mrb[0].mxu0
        %v5886 = vpop.f32.mrb[0].mxu0
        %v5887 = vadd.f32 0.0, %v5886
        %v5888 = vpop.f32.mrb[0].mxu0
        %5889 = vmatprep.mubr.bf16.mxu0 0
        %5890 = vmatmul.mubr.bf16.gmra.mrb[0].mxu0 %v3181
        %v5891 = vpop.f32.mrb[0].mxu0
        %v5892 = vadd.f32 0.0, %v5891
        %v5893 = vpop.f32.mrb[0].mxu0
        %v5894 = vpop.f32.mrb[0].mxu0
        %v5895 = vadd.f32 0.0, %v5894
        %v5896 = vpop.f32.mrb[0].mxu0
        %5897 = vmatprep.mubr.bf16.mxu0 0
        %5898 = vmatmul.mubr.bf16.gmra.mrb[0].mxu0 %v3184
        %v5899 = vpop.f32.mrb[0].mxu0
        %v5900 = vadd.f32 0.0, %v5899
        %v5901 = vpop.f32.mrb[0].mxu0
        %v5902 = vpop.f32.mrb[0].mxu0
        %v5903 = vadd.f32 0.0, %v5902
        %v5904 = vpop.f32.mrb[0].mxu0
        %5905 = vmatprep.mubr.bf16.mxu0 0
        %5906 = vmatmul.mubr.bf16.gmra.mrb[0].mxu0 %v3186
        %v5907 = vpop.f32.mrb[0].mxu0
        %v5908 = vadd.f32 0.0, %v5907
        %v5909 = vpop.f32.mrb[0].mxu0
        %v5910 = vpop.f32.mrb[0].mxu0
        %v5911 = vadd.f32 0.0, %v5910
        %v5912 = vpop.f32.mrb[0].mxu0
        %5913 = vmatprep.mubr.bf16.mxu0 0
        %5914 = vmatmul.mubr.bf16.gmra.mrb[0].mxu0 %v3189
        %v5915 = vpop.f32.mrb[0].mxu0
        %v5916 = vadd.f32 0.0, %v5915
        %v5917 = vpop.f32.mrb[0].mxu0
        %v5918 = vpop.f32.mrb[0].mxu0
        %v5919 = vadd.f32 0.0, %v5918
        %v5920 = vpop.f32.mrb[0].mxu0
        %5921 = vmatprep.mubr.bf16.mxu0 0
        %5922 = vmatmul.mubr.bf16.gmra.mrb[0].mxu0 %v3191
        %v5923 = vpop.f32.mrb[0].mxu0
        %v5924 = vadd.f32 0.0, %v5923
        %v5925 = vpop.f32.mrb[0].mxu0
        %v5926 = vpop.f32.mrb[0].mxu0
        %v5927 = vadd.f32 0.0, %v5926
        %v5928 = vpop.f32.mrb[0].mxu0
        %5929 = vmatprep.mubr.bf16.mxu0 0
        %5930 = vmatmul.mubr.bf16.gmra.mrb[0].mxu0 %v3194
        %v5931 = vpop.f32.mrb[0].mxu0
        %v5932 = vadd.f32 0.0, %v5931
        %v5933 = vpop.f32.mrb[0].mxu0
        %v5934 = vpop.f32.mrb[0].mxu0
        %v5935 = vadd.f32 0.0, %v5934
        %v5936 = vpop.f32.mrb[0].mxu0
        %5937 = vmatprep.mubr.bf16.mxu0 0
        %5938 = vmatmul.mubr.bf16.gmra.mrb[0].mxu0 %v3196
        %v5939 = vpop.f32.mrb[0].mxu0
        %v5940 = vadd.f32 0.0, %v5939
        %v5941 = vpop.f32.mrb[0].mxu0
        %v5942 = vpop.f32.mrb[0].mxu0
        %v5943 = vadd.f32 0.0, %v5942
        %v5944 = vpop.f32.mrb[0].mxu0
        %5945 = vmatprep.mubr.bf16.mxu0 0
        %5946 = vmatmul.mubr.bf16.gmra.mrb[0].mxu0 %v3199
        %v5947 = vpop.f32.mrb[0].mxu0
        %v5948 = vadd.f32 0.0, %v5947
        %v5949 = vpop.f32.mrb[0].mxu0
        %v5950 = vpop.f32.mrb[0].mxu0
        %v5951 = vadd.f32 0.0, %v5950
        %v5952 = vpop.f32.mrb[0].mxu0
        %5953 = vmatprep.mubr.bf16.mxu0 0
        %5954 = vmatmul.mubr.bf16.gmra.mrb[0].mxu0 %v3201
        %v5955 = vpop.f32.mrb[0].mxu0
        %v5956 = vadd.f32 0.0, %v5955
        %v5957 = vpop.f32.mrb[0].mxu0
        %v5958 = vpop.f32.mrb[0].mxu0
        %v5959 = vadd.f32 0.0, %v5958
        %v5960 = vpop.f32.mrb[0].mxu0
        %5961 = vmatprep.mubr.bf16.mxu0 0
        %5962 = vmatmul.mubr.bf16.gmra.mrb[0].mxu0 %v3204
        %v5963 = vpop.f32.mrb[0].mxu0
        %v5964 = vadd.f32 0.0, %v5963
        %v5965 = vpop.f32.mrb[0].mxu0
        %v5966 = vpop.f32.mrb[0].mxu0
        %v5967 = vadd.f32 0.0, %v5966
        %v5968 = vpop.f32.mrb[0].mxu0
        %5969 = vmatprep.mubr.bf16.mxu0 0
        %5970 = vmatmul.mubr.bf16.gmra.mrb[0].mxu0 %v3206
        %v5971 = vpop.f32.mrb[0].mxu0
        %v5972 = vadd.f32 0.0, %v5971
        %v5973 = vpop.f32.mrb[0].mxu0
        %v5974 = vpop.f32.mrb[0].mxu0
        %v5975 = vadd.f32 0.0, %v5974
        %v5976 = vpop.f32.mrb[0].mxu0
        %5977 = vmatprep.mubr.bf16.mxu0 0
        %5978 = vmatmul.mubr.bf16.gmra.mrb[0].mxu0 %v3209
        %v5979 = vpop.f32.mrb[0].mxu0
        %v5980 = vadd.f32 0.0, %v5979
        %v5981 = vpop.f32.mrb[0].mxu0
        %v5982 = vpop.f32.mrb[0].mxu0
        %v5983 = vadd.f32 0.0, %v5982
        %v5984 = vpop.f32.mrb[0].mxu0
        %5985 = vmatprep.mubr.bf16.mxu0 0
        %5986 = vmatmul.mubr.bf16.gmra.mrb[0].mxu0 %v3211
        %v5987 = vpop.f32.mrb[0].mxu0
        %v5988 = vadd.f32 0.0, %v5987
        %v5989 = vpop.f32.mrb[0].mxu0
        %v5990 = vpop.f32.mrb[0].mxu0
        %v5991 = vadd.f32 0.0, %v5990
        %v5992 = vpop.f32.mrb[0].mxu0
        %5993 = vmatprep.mubr.bf16.mxu0 0
        %5994 = vmatmul.mubr.bf16.gmra.mrb[0].mxu0 %v3214
        %v5995 = vpop.f32.mrb[0].mxu0
        %v5996 = vadd.f32 0.0, %v5995
        %v5997 = vpop.f32.mrb[0].mxu0
        %v5998 = vpop.f32.mrb[0].mxu0
        %v5999 = vadd.f32 0.0, %v5998
        %v6000 = vpop.f32.mrb[0].mxu0
        %6001 = vmatprep.mubr.bf16.mxu0 0
        %6002 = vmatmul.mubr.bf16.gmra.mrb[0].mxu0 %v3216
        %v6003 = vpop.f32.mrb[0].mxu0
        %v6004 = vadd.f32 0.0, %v6003
        %v6005 = vpop.f32.mrb[0].mxu0
        %v6006 = vpop.f32.mrb[0].mxu0
        %v6007 = vadd.f32 0.0, %v6006
        %v6008 = vpop.f32.mrb[0].mxu0
        %6009 = vmatprep.mubr.bf16.mxu0 0
        %6010 = vmatmul.mubr.bf16.gmra.mrb[0].mxu0 %v3219
        %v6011 = vpop.f32.mrb[0].mxu0
        %v6012 = vadd.f32 0.0, %v6011
        %v6013 = vpop.f32.mrb[0].mxu0
        %v6014 = vpop.f32.mrb[0].mxu0
        %v6015 = vadd.f32 0.0, %v6014
        %v6016 = vpop.f32.mrb[0].mxu0
        %6017 = vmatprep.mubr.bf16.mxu0 0
        %6018 = vmatmul.mubr.bf16.gmra.mrb[0].mxu0 %v3221
        %v6019 = vpop.f32.mrb[0].mxu0
        %v6020 = vadd.f32 0.0, %v6019
        %v6021 = vpop.f32.mrb[0].mxu0
        %v6022 = vpop.f32.mrb[0].mxu0
        %v6023 = vadd.f32 0.0, %v6022
        %v6024 = vpop.f32.mrb[0].mxu0
        %6025 = vmatprep.mubr.bf16.mxu0 0
        %6026 = vmatmul.mubr.bf16.gmra.mrb[0].mxu0 %v3224
        %v6027 = vpop.f32.mrb[0].mxu0
        %v6028 = vadd.f32 0.0, %v6027
        %v6029 = vpop.f32.mrb[0].mxu0
        %v6030 = vpop.f32.mrb[0].mxu0
        %v6031 = vadd.f32 0.0, %v6030
        %v6032 = vpop.f32.mrb[0].mxu0
        %6033 = vmatprep.mubr.bf16.mxu0 0
        %6034 = vmatmul.mubr.bf16.gmra.mrb[0].mxu0 %v3226
        %v6035 = vpop.f32.mrb[0].mxu0
        %v6036 = vadd.f32 0.0, %v6035
        %v6037 = vpop.f32.mrb[0].mxu0
        %v6038 = vpop.f32.mrb[0].mxu0
        %v6039 = vadd.f32 0.0, %v6038
        %v6040 = vpop.f32.mrb[0].mxu0
        %6041 = vmatprep.mubr.bf16.mxu0 0
        %6042 = vmatmul.mubr.bf16.gmra.mrb[0].mxu0 %v3229
        %v6043 = vpop.f32.mrb[0].mxu0
        %v6044 = vadd.f32 0.0, %v6043
        %v6045 = vpop.f32.mrb[0].mxu0
        %v6046 = vpop.f32.mrb[0].mxu0
        %v6047 = vadd.f32 0.0, %v6046
        %v6048 = vpop.f32.mrb[0].mxu0
        %6049 = vmatprep.mubr.bf16.mxu0 0
        %6050 = vmatmul.mubr.bf16.gmra.mrb[0].mxu0 %v3231
        %v6051 = vpop.f32.mrb[0].mxu0
        %v6052 = vadd.f32 0.0, %v6051
        %v6053 = vpop.f32.mrb[0].mxu0
        %v6054 = vpop.f32.mrb[0].mxu0
        %v6055 = vadd.f32 0.0, %v6054
        %v6056 = vpop.f32.mrb[0].mxu0
        %6057 = vmatprep.mubr.bf16.mxu0 0
        %6058 = vmatmul.mubr.bf16.gmra.mrb[0].mxu0 %v3234
        %v6059 = vpop.f32.mrb[0].mxu0
        %v6060 = vadd.f32 0.0, %v6059
        %v6061 = vpop.f32.mrb[0].mxu0
        %v6062 = vpop.f32.mrb[0].mxu0
        %v6063 = vadd.f32 0.0, %v6062
        %v6064 = vpop.f32.mrb[0].mxu0
        %6065 = vmatprep.mubr.bf16.mxu0 0
        %6066 = vmatmul.mubr.bf16.gmra.mrb[0].mxu0 %v3236
        %v6067 = vpop.f32.mrb[0].mxu0
        %v6068 = vadd.f32 0.0, %v6067
        %v6069 = vpop.f32.mrb[0].mxu0
        %v6070 = vpop.f32.mrb[0].mxu0
        %v6071 = vadd.f32 0.0, %v6070
        %v6072 = vpop.f32.mrb[0].mxu0
        %6073 = vmatprep.mubr.bf16.mxu0 0
        %6074 = vmatmul.mubr.bf16.gmra.mrb[0].mxu0 %v3239
        %v6075 = vpop.f32.mrb[0].mxu0
        %v6076 = vadd.f32 0.0, %v6075
        %v6077 = vpop.f32.mrb[0].mxu0
        %v6078 = vpop.f32.mrb[0].mxu0
        %v6079 = vadd.f32 0.0, %v6078
        %v6080 = vpop.f32.mrb[0].mxu0
        %6081 = vmatprep.mubr.bf16.mxu0 0
        %6082 = vmatmul.mubr.bf16.gmra.mrb[0].mxu0 %v3241
        %v6083 = vpop.f32.mrb[0].mxu0
        %v6084 = vadd.f32 0.0, %v6083
        %v6085 = vpop.f32.mrb[0].mxu0
        %v6086 = vpop.f32.mrb[0].mxu0
        %v6087 = vadd.f32 0.0, %v6086
        %v6088 = vpop.f32.mrb[0].mxu0
        %6089 = vmatprep.mubr.bf16.mxu0 0
        %6090 = vmatmul.mubr.bf16.gmra.mrb[0].mxu0 %v3244
        %v6091 = vpop.f32.mrb[0].mxu0
        %v6092 = vadd.f32 0.0, %v6091
        %v6093 = vpop.f32.mrb[0].mxu0
        %v6094 = vpop.f32.mrb[0].mxu0
        %v6095 = vadd.f32 0.0, %v6094
        %v6096 = vpop.f32.mrb[0].mxu0
        %6097 = vmatprep.mubr.bf16.mxu0 0
        %6098 = vmatmul.mubr.bf16.gmra.mrb[0].mxu0 %v3246
        %v6099 = vpop.f32.mrb[0].mxu0
        %v6100 = vadd.f32 0.0, %v6099
        %v6101 = vpop.f32.mrb[0].mxu0
        %v6102 = vpop.f32.mrb[0].mxu0
        %v6103 = vadd.f32 0.0, %v6102
        %v6104 = vpop.f32.mrb[0].mxu0
        %6105 = vmatprep.mubr.bf16.mxu0 0
        %6106 = vmatmul.mubr.bf16.gmra.mrb[0].mxu0 %v3249
        %v6107 = vpop.f32.mrb[0].mxu0
        %v6108 = vadd.f32 0.0, %v6107
        %v6109 = vpop.f32.mrb[0].mxu0
        %v6110 = vpop.f32.mrb[0].mxu0
        %v6111 = vadd.f32 0.0, %v6110
        %v6112 = vpop.f32.mrb[0].mxu0
        %6113 = vmatprep.mubr.bf16.mxu0 0
        %6114 = vmatmul.mubr.bf16.gmra.mrb[0].mxu0 %v3251
        %v6115 = vpop.f32.mrb[0].mxu0
        %v6116 = vadd.f32 0.0, %v6115
        %v6117 = vpop.f32.mrb[0].mxu0
        %v6118 = vpop.f32.mrb[0].mxu0
        %v6119 = vadd.f32 0.0, %v6118
        %v6120 = vpop.f32.mrb[0].mxu0
        %6121 = vmatprep.mubr.bf16.mxu0 0
        %6122 = vmatmul.mubr.bf16.gmra.mrb[0].mxu0 %v3254
        %v6123 = vpop.f32.mrb[0].mxu0
        %v6124 = vadd.f32 0.0, %v6123
        %v6125 = vpop.f32.mrb[0].mxu0
        %v6126 = vpop.f32.mrb[0].mxu0
        %v6127 = vadd.f32 0.0, %v6126
        %v6128 = vpop.f32.mrb[0].mxu0
        %6129 = vmatprep.mubr.bf16.mxu0 0
        %6130 = vmatmul.mubr.bf16.gmra.mrb[0].mxu0 %v3256
        %v6131 = vpop.f32.mrb[0].mxu0
        %v6132 = vadd.f32 0.0, %v6131
        %v6133 = vpop.f32.mrb[0].mxu0
        %v6134 = vpop.f32.mrb[0].mxu0
        %v6135 = vadd.f32 0.0, %v6134
        %v6136 = vpop.f32.mrb[0].mxu0
        %6137 = vmatprep.mubr.bf16.mxu0 0
        %6138 = vmatmul.mubr.bf16.gmra.mrb[0].mxu0 %v3259
        %v6139 = vpop.f32.mrb[0].mxu0
        %v6140 = vadd.f32 0.0, %v6139
        %v6141 = vpop.f32.mrb[0].mxu0
        %v6142 = vpop.f32.mrb[0].mxu0
        %v6143 = vadd.f32 0.0, %v6142
        %v6144 = vpop.f32.mrb[0].mxu0
        %6145 = vmatprep.mubr.bf16.mxu0 0
        %6146 = vmatmul.mubr.bf16.gmra.mrb[0].mxu0 %v3261
        %v6147 = vpop.f32.mrb[0].mxu0
        %v6148 = vadd.f32 0.0, %v6147
        %v6149 = vpop.f32.mrb[0].mxu0
        %v6150 = vpop.f32.mrb[0].mxu0
        %v6151 = vadd.f32 0.0, %v6150
        %v6152 = vpop.f32.mrb[0].mxu0
        %6153 = vmatprep.mubr.bf16.mxu0 0
        %6154 = vmatmul.mubr.bf16.gmra.mrb[0].mxu0 %v3264
        %v6155 = vpop.f32.mrb[0].mxu0
        %v6156 = vadd.f32 0.0, %v6155
        %v6157 = vpop.f32.mrb[0].mxu0
        %v6158 = vpop.f32.mrb[0].mxu0
        %v6159 = vadd.f32 0.0, %v6158
        %v6160 = vpop.f32.mrb[0].mxu0
        %6161 = vmatprep.mubr.bf16.mxu0 0
        %6162 = vmatmul.mubr.bf16.gmra.mrb[0].mxu0 %v3266
        %v6163 = vpop.f32.mrb[0].mxu0
        %v6164 = vadd.f32 0.0, %v6163
        %v6165 = vpop.f32.mrb[0].mxu0
        %v6166 = vpop.f32.mrb[0].mxu0
        %v6167 = vadd.f32 0.0, %v6166
        %v6168 = vpop.f32.mrb[0].mxu0
        %6169 = vmatprep.mubr.bf16.mxu0 0
        %6170 = vmatmul.mubr.bf16.gmra.mrb[0].mxu0 %v5571
        %v6171 = vpop.f32.mrb[0].mxu0
        %v6172 = vadd.f32 0.0, %v6171
        %v6173 = vpop.f32.mrb[0].mxu0
        %v6174 = vpop.f32.mrb[0].mxu0
        %v6175 = vadd.f32 0.0, %v6174
        %v6176 = vpop.f32.mrb[0].mxu0
        %6177 = vmatprep.mubr.bf16.mxu0 0
        %6178 = vmatmul.mubr.bf16.gmra.mrb[0].mxu0 %v5573
        %v6179 = vpop.f32.mrb[0].mxu0
        %v6180 = vadd.f32 0.0, %v6179
        %v6181 = vpop.f32.mrb[0].mxu0
        %v6182 = vpop.f32.mrb[0].mxu0
        %v6183 = vadd.f32 0.0, %v6182
        %v6184 = vpop.f32.mrb[0].mxu0
        %6185 = vdwg.mxu0
        %v6186 = vadd.f32 %v5439, %v5676
        %v6187 = vadd.f32 %v5440, %v5679
        %v6188 = vadd.f32 %v5441, %v5684
        %v6189 = vadd.f32 %v5442, %v5687
        %v6190 = vadd.f32 %v5443, %v5692
        %v6191 = vadd.f32 %v5444, %v5695
        %v6192 = vadd.f32 %v5445, %v5700
        %v6193 = vadd.f32 %v5446, %v5703
        %v6194 = vadd.f32 %v5447, %v5708
        %v6195 = vadd.f32 %v5448, %v5711
        %v6196 = vadd.f32 %v5449, %v5716
        %v6197 = vadd.f32 %v5450, %v5719
        %v6198 = vadd.f32 %v5451, %v5724
        %v6199 = vadd.f32 %v5452, %v5727
        %v6200 = vadd.f32 %v5453, %v5732
        %v6201 = vadd.f32 %v5454, %v5735
        %v6202 = vadd.f32 %v5455, %v5740
        %v6203 = vadd.f32 %v5456, %v5743
        %v6204 = vadd.f32 %v5457, %v5748
        %v6205 = vadd.f32 %v5458, %v5751
        %v6206 = vadd.f32 %v5459, %v5756
        %v6207 = vadd.f32 %v5460, %v5759
        %v6208 = vadd.f32 %v5461, %v5764
        %v6209 = vadd.f32 %v5462, %v5767
        %v6210 = vadd.f32 %v5463, %v5772
        %v6211 = vadd.f32 %v5464, %v5775
        %v6212 = vadd.f32 %v5465, %v5780
        %v6213 = vadd.f32 %v5466, %v5783
        %v6214 = vadd.f32 %v5467, %v5788
        %v6215 = vadd.f32 %v5468, %v5791
        %v6216 = vadd.f32 %v5469, %v5796
        %v6217 = vadd.f32 %v5470, %v5799
        %v6218 = vadd.f32 %v5471, %v5804
        %v6219 = vadd.f32 %v5472, %v5807
        %v6220 = vadd.f32 %v5473, %v5812
        %v6221 = vadd.f32 %v5474, %v5815
        %v6222 = vadd.f32 %v5475, %v5820
        %v6223 = vadd.f32 %v5476, %v5823
        %v6224 = vadd.f32 %v5477, %v5828
        %v6225 = vadd.f32 %v5478, %v5831
        %v6226 = vadd.f32 %v5479, %v5836
        %v6227 = vadd.f32 %v5480, %v5839
        %v6228 = vadd.f32 %v5481, %v5844
        %v6229 = vadd.f32 %v5482, %v5847
        %v6230 = vadd.f32 %v5483, %v5852
        %v6231 = vadd.f32 %v5484, %v5855
        %v6232 = vadd.f32 %v5485, %v5860
        %v6233 = vadd.f32 %v5486, %v5863
        %v6234 = vadd.f32 %v5487, %v5868
        %v6235 = vadd.f32 %v5488, %v5871
        %v6236 = vadd.f32 %v5489, %v5876
        %v6237 = vadd.f32 %v5490, %v5879
        %v6238 = vadd.f32 %v5491, %v5884
        %v6239 = vadd.f32 %v5492, %v5887
        %v6240 = vadd.f32 %v5493, %v5892
        %v6241 = vadd.f32 %v5494, %v5895
        %v6242 = vadd.f32 %v5495, %v5900
        %v6243 = vadd.f32 %v5496, %v5903
        %v6244 = vadd.f32 %v5497, %v5908
        %v6245 = vadd.f32 %v5498, %v5911
        %v6246 = vadd.f32 %v5499, %v5916
        %v6247 = vadd.f32 %v5500, %v5919
        %v6248 = vadd.f32 %v5501, %v5924
        %v6249 = vadd.f32 %v5502, %v5927
        %v6250 = vadd.f32 %v5503, %v5932
        %v6251 = vadd.f32 %v5504, %v5935
        %v6252 = vadd.f32 %v5505, %v5940
        %v6253 = vadd.f32 %v5506, %v5943
        %v6254 = vadd.f32 %v5507, %v5948
        %v6255 = vadd.f32 %v5508, %v5951
        %v6256 = vadd.f32 %v5509, %v5956
        %v6257 = vadd.f32 %v5510, %v5959
        %v6258 = vadd.f32 %v5511, %v5964
        %v6259 = vadd.f32 %v5512, %v5967
        %v6260 = vadd.f32 %v5513, %v5972
        %v6261 = vadd.f32 %v5514, %v5975
        %v6262 = vadd.f32 %v5515, %v5980
        %v6263 = vadd.f32 %v5516, %v5983
        %v6264 = vadd.f32 %v5517, %v5988
        %v6265 = vadd.f32 %v5518, %v5991
        %v6266 = vadd.f32 %v5519, %v5996
        %v6267 = vadd.f32 %v5520, %v5999
        %v6268 = vadd.f32 %v5521, %v6004
        %v6269 = vadd.f32 %v5522, %v6007
        %v6270 = vadd.f32 %v5523, %v6012
        %v6271 = vadd.f32 %v5524, %v6015
        %v6272 = vadd.f32 %v5525, %v6020
        %v6273 = vadd.f32 %v5526, %v6023
        %v6274 = vadd.f32 %v5527, %v6028
        %v6275 = vadd.f32 %v5528, %v6031
        %v6276 = vadd.f32 %v5529, %v6036
        %v6277 = vadd.f32 %v5530, %v6039
        %v6278 = vadd.f32 %v5531, %v6044
        %v6279 = vadd.f32 %v5532, %v6047
        %v6280 = vadd.f32 %v5533, %v6052
        %v6281 = vadd.f32 %v5534, %v6055
        %v6282 = vadd.f32 %v5535, %v6060
        %v6283 = vadd.f32 %v5536, %v6063
        %v6284 = vadd.f32 %v5537, %v6068
        %v6285 = vadd.f32 %v5538, %v6071
        %v6286 = vadd.f32 %v5539, %v6076
        %v6287 = vadd.f32 %v5540, %v6079
        %v6288 = vadd.f32 %v5541, %v6084
        %v6289 = vadd.f32 %v5542, %v6087
        %v6290 = vadd.f32 %v5543, %v6092
        %v6291 = vadd.f32 %v5544, %v6095
        %v6292 = vadd.f32 %v5545, %v6100
        %v6293 = vadd.f32 %v5546, %v6103
        %v6294 = vadd.f32 %v5547, %v6108
        %v6295 = vadd.f32 %v5548, %v6111
        %v6296 = vadd.f32 %v5549, %v6116
        %v6297 = vadd.f32 %v5550, %v6119
        %v6298 = vadd.f32 %v5551, %v6124
        %v6299 = vadd.f32 %v5552, %v6127
        %v6300 = vadd.f32 %v5553, %v6132
        %v6301 = vadd.f32 %v5554, %v6135
        %v6302 = vadd.f32 %v5555, %v6140
        %v6303 = vadd.f32 %v5556, %v6143
        %v6304 = vadd.f32 %v5557, %v6148
        %v6305 = vadd.f32 %v5558, %v6151
        %v6306 = vadd.f32 %v5559, %v6156
        %v6307 = vadd.f32 %v5560, %v6159
        %v6308 = vadd.f32 %v5561, %v6164
        %v6309 = vadd.f32 %v5562, %v6167
        %v6310 = vadd.f32 %v5563, %v6172
        %v6311 = vadd.f32 %v5564, %v6175
        %v6312 = vadd.f32 %v5565, %v6180
        %v6313 = vadd.f32 %v5566, %v6183
        %s6314 = scalar_lea.vmem [#allocation5], 384
        %v6315 = vld [vmem:[%s6314] sm:$0xf]
        %v6316 = vld [vmem:[%s6314 + $0x4] sm:$0xf]
        %v6317 = vld [vmem:[%s6314 + $0x8] sm:$0xf]
        %v6318 = vld [vmem:[%s6314 + $0xc] sm:$0xf]
        %v6319 = vld [vmem:[%s6314 + $0x10] sm:$0xf]
        %v6320 = vld [vmem:[%s6314 + $0x14] sm:$0xf]
        %v6321 = vld [vmem:[%s6314 + $0x18] sm:$0xf]
        %v6322 = vld [vmem:[%s6314 + $0x1c] sm:$0xf]
        %v6323 = vld [vmem:[%s6314 + $0x20] sm:$0xf]
        %v6324 = vld [vmem:[%s6314 + $0x24] sm:$0xf]
        %v6325 = vld [vmem:[%s6314 + $0x28] sm:$0xf]
        %v6326 = vld [vmem:[%s6314 + $0x2c] sm:$0xf]
        %v6327 = vld [vmem:[%s6314 + $0x30] sm:$0xf]
        %v6328 = vld [vmem:[%s6314 + $0x34] sm:$0xf]
        %v6329 = vld [vmem:[%s6314 + $0x38] sm:$0xf]
        %v6330 = vld [vmem:[%s6314 + $0x3c] sm:$0xf]
        %v6347 = vunpack.c.l.b16 %v6315
        %v6348 = vunpack.c.l.b16 %v6316
        %v6349 = vunpack.c.l.b16 %v6317
        %v6350 = vunpack.c.l.b16 %v6318
        %v6351 = vunpack.c.l.b16 %v6319
        %v6352 = vunpack.c.l.b16 %v6320
        %v6353 = vunpack.c.l.b16 %v6321
        %v6354 = vunpack.c.l.b16 %v6322
        %v6355 = vunpack.c.l.b16 %v6323
        %v6356 = vunpack.c.l.b16 %v6324
        %v6357 = vunpack.c.l.b16 %v6325
        %v6358 = vunpack.c.l.b16 %v6326
        %v6359 = vunpack.c.l.b16 %v6327
        %v6360 = vunpack.c.l.b16 %v6328
        %v6361 = vunpack.c.l.b16 %v6329
        %v6362 = vunpack.c.l.b16 %v6330
        %v6363 = vpack.c.b16 %v6348, %v6347
        %v6364 = vpack.c.b16 %v6350, %v6349
        %v6365 = vpack.c.b16 %v6352, %v6351
        %v6366 = vpack.c.b16 %v6354, %v6353
        %v6367 = vpack.c.b16 %v6356, %v6355
        %v6368 = vpack.c.b16 %v6358, %v6357
        %v6369 = vpack.c.b16 %v6360, %v6359
        %v6370 = vpack.c.b16 %v6362, %v6361
        %6379 = vmatprep.subr.bf16.mxu0 0
        %6380 = vmatpush1.bf16.msra.mxu0 %v6363
        %6381 = vmatprep.subr.bf16.mxu0 0
        %6382 = vmatpush1.bf16.msra.mxu0 %v6364
        %6383 = vmatprep.subr.bf16.mxu0 0
        %6384 = vmatpush1.bf16.msra.mxu0 %v6365
        %6385 = vmatprep.subr.bf16.mxu0 0
        %6386 = vmatpush1.bf16.msra.mxu0 %v6366
        %6387 = vmatprep.subr.bf16.mxu0 0
        %6388 = vmatpush1.bf16.msra.mxu0 %v6367
        %6389 = vmatprep.subr.bf16.mxu0 0
        %6390 = vmatpush1.bf16.msra.mxu0 %v6368
        %6391 = vmatprep.subr.bf16.mxu0 0
        %6392 = vmatpush1.bf16.msra.mxu0 %v6369
        %6393 = vmatprep.subr.bf16.mxu0 0
        %6394 = vmatpush1.bf16.msra.mxu0 %v6370
        %6395 = vmatprep.subr.bf16.mxu0 0
        %6396 = vmatpush1.bf16.msra.mxu0 0
        %6397 = vmatprep.subr.bf16.mxu0 0
        %6398 = vmatpush1.bf16.msra.mxu0 0
        %6399 = vmatprep.subr.bf16.mxu0 0
        %6400 = vmatpush1.bf16.msra.mxu0 0
        %6401 = vmatprep.subr.bf16.mxu0 0
        %6402 = vmatpush1.bf16.msra.mxu0 0
        %6403 = vmatprep.subr.bf16.mxu0 0
        %6404 = vmatpush1.bf16.msra.mxu0 0
        %6405 = vmatprep.subr.bf16.mxu0 0
        %6406 = vmatpush1.bf16.msra.mxu0 0
        %6407 = vmatprep.subr.bf16.mxu0 0
        %6408 = vmatpush1.bf16.msra.mxu0 0
        %6409 = vmatprep.subr.bf16.mxu0 0
        %6410 = vmatpush1.bf16.msra.mxu0 0
        %6411 = vmatprep.mubr.bf16.mxu0 0
        %6412 = vmatmul.mubr.bf16.gmra.mrb[0].mxu0 %v1054
        %v6413 = vpop.f32.mrb[0].mxu0
        %v6414 = vadd.f32 0.0, %v6413
        %v6415 = vpop.f32.mrb[0].mxu0
        %v6416 = vpop.f32.mrb[0].mxu0
        %v6417 = vadd.f32 0.0, %v6416
        %v6418 = vpop.f32.mrb[0].mxu0
        %6419 = vmatprep.mubr.bf16.mxu0 0
        %6420 = vmatmul.mubr.bf16.gmra.mrb[0].mxu0 %v500
        %v6421 = vpop.f32.mrb[0].mxu0
        %v6422 = vadd.f32 0.0, %v6421
        %v6423 = vpop.f32.mrb[0].mxu0
        %v6424 = vpop.f32.mrb[0].mxu0
        %v6425 = vadd.f32 0.0, %v6424
        %v6426 = vpop.f32.mrb[0].mxu0
        %6427 = vmatprep.mubr.bf16.mxu0 0
        %6428 = vmatmul.mubr.bf16.gmra.mrb[0].mxu0 %v1055
        %v6429 = vpop.f32.mrb[0].mxu0
        %v6430 = vadd.f32 0.0, %v6429
        %v6431 = vpop.f32.mrb[0].mxu0
        %v6432 = vpop.f32.mrb[0].mxu0
        %v6433 = vadd.f32 0.0, %v6432
        %v6434 = vpop.f32.mrb[0].mxu0
        %6435 = vmatprep.mubr.bf16.mxu0 0
        %6436 = vmatmul.mubr.bf16.gmra.mrb[0].mxu0 %v515
        %v6437 = vpop.f32.mrb[0].mxu0
        %v6438 = vadd.f32 0.0, %v6437
        %v6439 = vpop.f32.mrb[0].mxu0
        %v6440 = vpop.f32.mrb[0].mxu0
        %v6441 = vadd.f32 0.0, %v6440
        %v6442 = vpop.f32.mrb[0].mxu0
        %6443 = vmatprep.mubr.bf16.mxu0 0
        %6444 = vmatmul.mubr.bf16.gmra.mrb[0].mxu0 %v1056
        %v6445 = vpop.f32.mrb[0].mxu0
        %v6446 = vadd.f32 0.0, %v6445
        %v6447 = vpop.f32.mrb[0].mxu0
        %v6448 = vpop.f32.mrb[0].mxu0
        %v6449 = vadd.f32 0.0, %v6448
        %v6450 = vpop.f32.mrb[0].mxu0
        %6451 = vmatprep.mubr.bf16.mxu0 0
        %6452 = vmatmul.mubr.bf16.gmra.mrb[0].mxu0 %v530
        %v6453 = vpop.f32.mrb[0].mxu0
        %v6454 = vadd.f32 0.0, %v6453
        %v6455 = vpop.f32.mrb[0].mxu0
        %v6456 = vpop.f32.mrb[0].mxu0
        %v6457 = vadd.f32 0.0, %v6456
        %v6458 = vpop.f32.mrb[0].mxu0
        %6459 = vmatprep.mubr.bf16.mxu0 0
        %6460 = vmatmul.mubr.bf16.gmra.mrb[0].mxu0 %v1057
        %v6461 = vpop.f32.mrb[0].mxu0
        %v6462 = vadd.f32 0.0, %v6461
        %v6463 = vpop.f32.mrb[0].mxu0
        %v6464 = vpop.f32.mrb[0].mxu0
        %v6465 = vadd.f32 0.0, %v6464
        %v6466 = vpop.f32.mrb[0].mxu0
        %6467 = vmatprep.mubr.bf16.mxu0 0
        %6468 = vmatmul.mubr.bf16.gmra.mrb[0].mxu0 %v545
        %v6469 = vpop.f32.mrb[0].mxu0
        %v6470 = vadd.f32 0.0, %v6469
        %v6471 = vpop.f32.mrb[0].mxu0
        %v6472 = vpop.f32.mrb[0].mxu0
        %v6473 = vadd.f32 0.0, %v6472
        %v6474 = vpop.f32.mrb[0].mxu0
        %6475 = vmatprep.mubr.bf16.mxu0 0
        %6476 = vmatmul.mubr.bf16.gmra.mrb[0].mxu0 %v1058
        %v6477 = vpop.f32.mrb[0].mxu0
        %v6478 = vadd.f32 0.0, %v6477
        %v6479 = vpop.f32.mrb[0].mxu0
        %v6480 = vpop.f32.mrb[0].mxu0
        %v6481 = vadd.f32 0.0, %v6480
        %v6482 = vpop.f32.mrb[0].mxu0
        %6483 = vmatprep.mubr.bf16.mxu0 0
        %6484 = vmatmul.mubr.bf16.gmra.mrb[0].mxu0 %v560
        %v6485 = vpop.f32.mrb[0].mxu0
        %v6486 = vadd.f32 0.0, %v6485
        %v6487 = vpop.f32.mrb[0].mxu0
        %v6488 = vpop.f32.mrb[0].mxu0
        %v6489 = vadd.f32 0.0, %v6488
        %v6490 = vpop.f32.mrb[0].mxu0
        %6491 = vmatprep.mubr.bf16.mxu0 0
        %6492 = vmatmul.mubr.bf16.gmra.mrb[0].mxu0 %v1059
        %v6493 = vpop.f32.mrb[0].mxu0
        %v6494 = vadd.f32 0.0, %v6493
        %v6495 = vpop.f32.mrb[0].mxu0
        %v6496 = vpop.f32.mrb[0].mxu0
        %v6497 = vadd.f32 0.0, %v6496
        %v6498 = vpop.f32.mrb[0].mxu0
        %6499 = vmatprep.mubr.bf16.mxu0 0
        %6500 = vmatmul.mubr.bf16.gmra.mrb[0].mxu0 %v575
        %v6501 = vpop.f32.mrb[0].mxu0
        %v6502 = vadd.f32 0.0, %v6501
        %v6503 = vpop.f32.mrb[0].mxu0
        %v6504 = vpop.f32.mrb[0].mxu0
        %v6505 = vadd.f32 0.0, %v6504
        %v6506 = vpop.f32.mrb[0].mxu0
        %6507 = vmatprep.mubr.bf16.mxu0 0
        %6508 = vmatmul.mubr.bf16.gmra.mrb[0].mxu0 %v1060
        %v6509 = vpop.f32.mrb[0].mxu0
        %v6510 = vadd.f32 0.0, %v6509
        %v6511 = vpop.f32.mrb[0].mxu0
        %v6512 = vpop.f32.mrb[0].mxu0
        %v6513 = vadd.f32 0.0, %v6512
        %v6514 = vpop.f32.mrb[0].mxu0
        %6515 = vmatprep.mubr.bf16.mxu0 0
        %6516 = vmatmul.mubr.bf16.gmra.mrb[0].mxu0 %v590
        %v6517 = vpop.f32.mrb[0].mxu0
        %v6518 = vadd.f32 0.0, %v6517
        %v6519 = vpop.f32.mrb[0].mxu0
        %v6520 = vpop.f32.mrb[0].mxu0
        %v6521 = vadd.f32 0.0, %v6520
        %v6522 = vpop.f32.mrb[0].mxu0
        %6523 = vmatprep.mubr.bf16.mxu0 0
        %6524 = vmatmul.mubr.bf16.gmra.mrb[0].mxu0 %v1061
        %v6525 = vpop.f32.mrb[0].mxu0
        %v6526 = vadd.f32 0.0, %v6525
        %v6527 = vpop.f32.mrb[0].mxu0
        %v6528 = vpop.f32.mrb[0].mxu0
        %v6529 = vadd.f32 0.0, %v6528
        %v6530 = vpop.f32.mrb[0].mxu0
        %6531 = vmatprep.mubr.bf16.mxu0 0
        %6532 = vmatmul.mubr.bf16.gmra.mrb[0].mxu0 %v605
        %v6533 = vpop.f32.mrb[0].mxu0
        %v6534 = vadd.f32 0.0, %v6533
        %v6535 = vpop.f32.mrb[0].mxu0
        %v6536 = vpop.f32.mrb[0].mxu0
        %v6537 = vadd.f32 0.0, %v6536
        %v6538 = vpop.f32.mrb[0].mxu0
        %6539 = vmatprep.mubr.bf16.mxu0 0
        %6540 = vmatmul.mubr.bf16.gmra.mrb[0].mxu0 %v1062
        %v6541 = vpop.f32.mrb[0].mxu0
        %v6542 = vadd.f32 0.0, %v6541
        %v6543 = vpop.f32.mrb[0].mxu0
        %v6544 = vpop.f32.mrb[0].mxu0
        %v6545 = vadd.f32 0.0, %v6544
        %v6546 = vpop.f32.mrb[0].mxu0
        %6547 = vmatprep.mubr.bf16.mxu0 0
        %6548 = vmatmul.mubr.bf16.gmra.mrb[0].mxu0 %v620
        %v6549 = vpop.f32.mrb[0].mxu0
        %v6550 = vadd.f32 0.0, %v6549
        %v6551 = vpop.f32.mrb[0].mxu0
        %v6552 = vpop.f32.mrb[0].mxu0
        %v6553 = vadd.f32 0.0, %v6552
        %v6554 = vpop.f32.mrb[0].mxu0
        %6555 = vmatprep.mubr.bf16.mxu0 0
        %6556 = vmatmul.mubr.bf16.gmra.mrb[0].mxu0 %v1063
        %v6557 = vpop.f32.mrb[0].mxu0
        %v6558 = vadd.f32 0.0, %v6557
        %v6559 = vpop.f32.mrb[0].mxu0
        %v6560 = vpop.f32.mrb[0].mxu0
        %v6561 = vadd.f32 0.0, %v6560
        %v6562 = vpop.f32.mrb[0].mxu0
        %6563 = vmatprep.mubr.bf16.mxu0 0
        %6564 = vmatmul.mubr.bf16.gmra.mrb[0].mxu0 %v635
        %v6565 = vpop.f32.mrb[0].mxu0
        %v6566 = vadd.f32 0.0, %v6565
        %v6567 = vpop.f32.mrb[0].mxu0
        %v6568 = vpop.f32.mrb[0].mxu0
        %v6569 = vadd.f32 0.0, %v6568
        %v6570 = vpop.f32.mrb[0].mxu0
        %6571 = vmatprep.mubr.bf16.mxu0 0
        %6572 = vmatmul.mubr.bf16.gmra.mrb[0].mxu0 %v1064
        %v6573 = vpop.f32.mrb[0].mxu0
        %v6574 = vadd.f32 0.0, %v6573
        %v6575 = vpop.f32.mrb[0].mxu0
        %v6576 = vpop.f32.mrb[0].mxu0
        %v6577 = vadd.f32 0.0, %v6576
        %v6578 = vpop.f32.mrb[0].mxu0
        %6579 = vmatprep.mubr.bf16.mxu0 0
        %6580 = vmatmul.mubr.bf16.gmra.mrb[0].mxu0 %v650
        %v6581 = vpop.f32.mrb[0].mxu0
        %v6582 = vadd.f32 0.0, %v6581
        %v6583 = vpop.f32.mrb[0].mxu0
        %v6584 = vpop.f32.mrb[0].mxu0
        %v6585 = vadd.f32 0.0, %v6584
        %v6586 = vpop.f32.mrb[0].mxu0
        %6587 = vmatprep.mubr.bf16.mxu0 0
        %6588 = vmatmul.mubr.bf16.gmra.mrb[0].mxu0 %v1065
        %v6589 = vpop.f32.mrb[0].mxu0
        %v6590 = vadd.f32 0.0, %v6589
        %v6591 = vpop.f32.mrb[0].mxu0
        %v6592 = vpop.f32.mrb[0].mxu0
        %v6593 = vadd.f32 0.0, %v6592
        %v6594 = vpop.f32.mrb[0].mxu0
        %6595 = vmatprep.mubr.bf16.mxu0 0
        %6596 = vmatmul.mubr.bf16.gmra.mrb[0].mxu0 %v665
        %v6597 = vpop.f32.mrb[0].mxu0
        %v6598 = vadd.f32 0.0, %v6597
        %v6599 = vpop.f32.mrb[0].mxu0
        %v6600 = vpop.f32.mrb[0].mxu0
        %v6601 = vadd.f32 0.0, %v6600
        %v6602 = vpop.f32.mrb[0].mxu0
        %6603 = vmatprep.mubr.bf16.mxu0 0
        %6604 = vmatmul.mubr.bf16.gmra.mrb[0].mxu0 %v1066
        %v6605 = vpop.f32.mrb[0].mxu0
        %v6606 = vadd.f32 0.0, %v6605
        %v6607 = vpop.f32.mrb[0].mxu0
        %v6608 = vpop.f32.mrb[0].mxu0
        %v6609 = vadd.f32 0.0, %v6608
        %v6610 = vpop.f32.mrb[0].mxu0
        %6611 = vmatprep.mubr.bf16.mxu0 0
        %6612 = vmatmul.mubr.bf16.gmra.mrb[0].mxu0 %v680
        %v6613 = vpop.f32.mrb[0].mxu0
        %v6614 = vadd.f32 0.0, %v6613
        %v6615 = vpop.f32.mrb[0].mxu0
        %v6616 = vpop.f32.mrb[0].mxu0
        %v6617 = vadd.f32 0.0, %v6616
        %v6618 = vpop.f32.mrb[0].mxu0
        %6619 = vmatprep.mubr.bf16.mxu0 0
        %6620 = vmatmul.mubr.bf16.gmra.mrb[0].mxu0 %v1067
        %v6621 = vpop.f32.mrb[0].mxu0
        %v6622 = vadd.f32 0.0, %v6621
        %v6623 = vpop.f32.mrb[0].mxu0
        %v6624 = vpop.f32.mrb[0].mxu0
        %v6625 = vadd.f32 0.0, %v6624
        %v6626 = vpop.f32.mrb[0].mxu0
        %6627 = vmatprep.mubr.bf16.mxu0 0
        %6628 = vmatmul.mubr.bf16.gmra.mrb[0].mxu0 %v695
        %v6629 = vpop.f32.mrb[0].mxu0
        %v6630 = vadd.f32 0.0, %v6629
        %v6631 = vpop.f32.mrb[0].mxu0
        %v6632 = vpop.f32.mrb[0].mxu0
        %v6633 = vadd.f32 0.0, %v6632
        %v6634 = vpop.f32.mrb[0].mxu0
        %6635 = vmatprep.mubr.bf16.mxu0 0
        %6636 = vmatmul.mubr.bf16.gmra.mrb[0].mxu0 %v1068
        %v6637 = vpop.f32.mrb[0].mxu0
        %v6638 = vadd.f32 0.0, %v6637
        %v6639 = vpop.f32.mrb[0].mxu0
        %v6640 = vpop.f32.mrb[0].mxu0
        %v6641 = vadd.f32 0.0, %v6640
        %v6642 = vpop.f32.mrb[0].mxu0
        %6643 = vmatprep.mubr.bf16.mxu0 0
        %6644 = vmatmul.mubr.bf16.gmra.mrb[0].mxu0 %v710
        %v6645 = vpop.f32.mrb[0].mxu0
        %v6646 = vadd.f32 0.0, %v6645
        %v6647 = vpop.f32.mrb[0].mxu0
        %v6648 = vpop.f32.mrb[0].mxu0
        %v6649 = vadd.f32 0.0, %v6648
        %v6650 = vpop.f32.mrb[0].mxu0
        %6651 = vmatprep.mubr.bf16.mxu0 0
        %6652 = vmatmul.mubr.bf16.gmra.mrb[0].mxu0 %v1069
        %v6653 = vpop.f32.mrb[0].mxu0
        %v6654 = vadd.f32 0.0, %v6653
        %v6655 = vpop.f32.mrb[0].mxu0
        %v6656 = vpop.f32.mrb[0].mxu0
        %v6657 = vadd.f32 0.0, %v6656
        %v6658 = vpop.f32.mrb[0].mxu0
        %6659 = vmatprep.mubr.bf16.mxu0 0
        %6660 = vmatmul.mubr.bf16.gmra.mrb[0].mxu0 %v725
        %v6661 = vpop.f32.mrb[0].mxu0
        %v6662 = vadd.f32 0.0, %v6661
        %v6663 = vpop.f32.mrb[0].mxu0
        %v6664 = vpop.f32.mrb[0].mxu0
        %v6665 = vadd.f32 0.0, %v6664
        %v6666 = vpop.f32.mrb[0].mxu0
        %6667 = vmatprep.mubr.bf16.mxu0 0
        %6668 = vmatmul.mubr.bf16.gmra.mrb[0].mxu0 %v1070
        %v6669 = vpop.f32.mrb[0].mxu0
        %v6670 = vadd.f32 0.0, %v6669
        %v6671 = vpop.f32.mrb[0].mxu0
        %v6672 = vpop.f32.mrb[0].mxu0
        %v6673 = vadd.f32 0.0, %v6672
        %v6674 = vpop.f32.mrb[0].mxu0
        %6675 = vmatprep.mubr.bf16.mxu0 0
        %6676 = vmatmul.mubr.bf16.gmra.mrb[0].mxu0 %v740
        %v6677 = vpop.f32.mrb[0].mxu0
        %v6678 = vadd.f32 0.0, %v6677
        %v6679 = vpop.f32.mrb[0].mxu0
        %v6680 = vpop.f32.mrb[0].mxu0
        %v6681 = vadd.f32 0.0, %v6680
        %v6682 = vpop.f32.mrb[0].mxu0
        %6683 = vmatprep.mubr.bf16.mxu0 0
        %6684 = vmatmul.mubr.bf16.gmra.mrb[0].mxu0 %v1071
        %v6685 = vpop.f32.mrb[0].mxu0
        %v6686 = vadd.f32 0.0, %v6685
        %v6687 = vpop.f32.mrb[0].mxu0
        %v6688 = vpop.f32.mrb[0].mxu0
        %v6689 = vadd.f32 0.0, %v6688
        %v6690 = vpop.f32.mrb[0].mxu0
        %6691 = vmatprep.mubr.bf16.mxu0 0
        %6692 = vmatmul.mubr.bf16.gmra.mrb[0].mxu0 %v755
        %v6693 = vpop.f32.mrb[0].mxu0
        %v6694 = vadd.f32 0.0, %v6693
        %v6695 = vpop.f32.mrb[0].mxu0
        %v6696 = vpop.f32.mrb[0].mxu0
        %v6697 = vadd.f32 0.0, %v6696
        %v6698 = vpop.f32.mrb[0].mxu0
        %6699 = vmatprep.mubr.bf16.mxu0 0
        %6700 = vmatmul.mubr.bf16.gmra.mrb[0].mxu0 %v1072
        %v6701 = vpop.f32.mrb[0].mxu0
        %v6702 = vadd.f32 0.0, %v6701
        %v6703 = vpop.f32.mrb[0].mxu0
        %v6704 = vpop.f32.mrb[0].mxu0
        %v6705 = vadd.f32 0.0, %v6704
        %v6706 = vpop.f32.mrb[0].mxu0
        %6707 = vmatprep.mubr.bf16.mxu0 0
        %6708 = vmatmul.mubr.bf16.gmra.mrb[0].mxu0 %v770
        %v6709 = vpop.f32.mrb[0].mxu0
        %v6710 = vadd.f32 0.0, %v6709
        %v6711 = vpop.f32.mrb[0].mxu0
        %v6712 = vpop.f32.mrb[0].mxu0
        %v6713 = vadd.f32 0.0, %v6712
        %v6714 = vpop.f32.mrb[0].mxu0
        %6715 = vmatprep.mubr.bf16.mxu0 0
        %6716 = vmatmul.mubr.bf16.gmra.mrb[0].mxu0 %v1073
        %v6717 = vpop.f32.mrb[0].mxu0
        %v6718 = vadd.f32 0.0, %v6717
        %v6719 = vpop.f32.mrb[0].mxu0
        %v6720 = vpop.f32.mrb[0].mxu0
        %v6721 = vadd.f32 0.0, %v6720
        %v6722 = vpop.f32.mrb[0].mxu0
        %6723 = vmatprep.mubr.bf16.mxu0 0
        %6724 = vmatmul.mubr.bf16.gmra.mrb[0].mxu0 %v785
        %v6725 = vpop.f32.mrb[0].mxu0
        %v6726 = vadd.f32 0.0, %v6725
        %v6727 = vpop.f32.mrb[0].mxu0
        %v6728 = vpop.f32.mrb[0].mxu0
        %v6729 = vadd.f32 0.0, %v6728
        %v6730 = vpop.f32.mrb[0].mxu0
        %6731 = vmatprep.mubr.bf16.mxu0 0
        %6732 = vmatmul.mubr.bf16.gmra.mrb[0].mxu0 %v1074
        %v6733 = vpop.f32.mrb[0].mxu0
        %v6734 = vadd.f32 0.0, %v6733
        %v6735 = vpop.f32.mrb[0].mxu0
        %v6736 = vpop.f32.mrb[0].mxu0
        %v6737 = vadd.f32 0.0, %v6736
        %v6738 = vpop.f32.mrb[0].mxu0
        %6739 = vmatprep.mubr.bf16.mxu0 0
        %6740 = vmatmul.mubr.bf16.gmra.mrb[0].mxu0 %v800
        %v6741 = vpop.f32.mrb[0].mxu0
        %v6742 = vadd.f32 0.0, %v6741
        %v6743 = vpop.f32.mrb[0].mxu0
        %v6744 = vpop.f32.mrb[0].mxu0
        %v6745 = vadd.f32 0.0, %v6744
        %v6746 = vpop.f32.mrb[0].mxu0
        %6747 = vmatprep.mubr.bf16.mxu0 0
        %6748 = vmatmul.mubr.bf16.gmra.mrb[0].mxu0 %v1075
        %v6749 = vpop.f32.mrb[0].mxu0
        %v6750 = vadd.f32 0.0, %v6749
        %v6751 = vpop.f32.mrb[0].mxu0
        %v6752 = vpop.f32.mrb[0].mxu0
        %v6753 = vadd.f32 0.0, %v6752
        %v6754 = vpop.f32.mrb[0].mxu0
        %6755 = vmatprep.mubr.bf16.mxu0 0
        %6756 = vmatmul.mubr.bf16.gmra.mrb[0].mxu0 %v815
        %v6757 = vpop.f32.mrb[0].mxu0
        %v6758 = vadd.f32 0.0, %v6757
        %v6759 = vpop.f32.mrb[0].mxu0
        %v6760 = vpop.f32.mrb[0].mxu0
        %v6761 = vadd.f32 0.0, %v6760
        %v6762 = vpop.f32.mrb[0].mxu0
        %6763 = vmatprep.mubr.bf16.mxu0 0
        %6764 = vmatmul.mubr.bf16.gmra.mrb[0].mxu0 %v1076
        %v6765 = vpop.f32.mrb[0].mxu0
        %v6766 = vadd.f32 0.0, %v6765
        %v6767 = vpop.f32.mrb[0].mxu0
        %v6768 = vpop.f32.mrb[0].mxu0
        %v6769 = vadd.f32 0.0, %v6768
        %v6770 = vpop.f32.mrb[0].mxu0
        %6771 = vmatprep.mubr.bf16.mxu0 0
        %6772 = vmatmul.mubr.bf16.gmra.mrb[0].mxu0 %v830
        %v6773 = vpop.f32.mrb[0].mxu0
        %v6774 = vadd.f32 0.0, %v6773
        %v6775 = vpop.f32.mrb[0].mxu0
        %v6776 = vpop.f32.mrb[0].mxu0
        %v6777 = vadd.f32 0.0, %v6776
        %v6778 = vpop.f32.mrb[0].mxu0
        %6779 = vmatprep.mubr.bf16.mxu0 0
        %6780 = vmatmul.mubr.bf16.gmra.mrb[0].mxu0 %v1077
        %v6781 = vpop.f32.mrb[0].mxu0
        %v6782 = vadd.f32 0.0, %v6781
        %v6783 = vpop.f32.mrb[0].mxu0
        %v6784 = vpop.f32.mrb[0].mxu0
        %v6785 = vadd.f32 0.0, %v6784
        %v6786 = vpop.f32.mrb[0].mxu0
        %6787 = vmatprep.mubr.bf16.mxu0 0
        %6788 = vmatmul.mubr.bf16.gmra.mrb[0].mxu0 %v845
        %v6789 = vpop.f32.mrb[0].mxu0
        %v6790 = vadd.f32 0.0, %v6789
        %v6791 = vpop.f32.mrb[0].mxu0
        %v6792 = vpop.f32.mrb[0].mxu0
        %v6793 = vadd.f32 0.0, %v6792
        %v6794 = vpop.f32.mrb[0].mxu0
        %6795 = vmatprep.mubr.bf16.mxu0 0
        %6796 = vmatmul.mubr.bf16.gmra.mrb[0].mxu0 %v1078
        %v6797 = vpop.f32.mrb[0].mxu0
        %v6798 = vadd.f32 0.0, %v6797
        %v6799 = vpop.f32.mrb[0].mxu0
        %v6800 = vpop.f32.mrb[0].mxu0
        %v6801 = vadd.f32 0.0, %v6800
        %v6802 = vpop.f32.mrb[0].mxu0
        %6803 = vmatprep.mubr.bf16.mxu0 0
        %6804 = vmatmul.mubr.bf16.gmra.mrb[0].mxu0 %v860
        %v6805 = vpop.f32.mrb[0].mxu0
        %v6806 = vadd.f32 0.0, %v6805
        %v6807 = vpop.f32.mrb[0].mxu0
        %v6808 = vpop.f32.mrb[0].mxu0
        %v6809 = vadd.f32 0.0, %v6808
        %v6810 = vpop.f32.mrb[0].mxu0
        %6811 = vmatprep.mubr.bf16.mxu0 0
        %6812 = vmatmul.mubr.bf16.gmra.mrb[0].mxu0 %v1079
        %v6813 = vpop.f32.mrb[0].mxu0
        %v6814 = vadd.f32 0.0, %v6813
        %v6815 = vpop.f32.mrb[0].mxu0
        %v6816 = vpop.f32.mrb[0].mxu0
        %v6817 = vadd.f32 0.0, %v6816
        %v6818 = vpop.f32.mrb[0].mxu0
        %6819 = vmatprep.mubr.bf16.mxu0 0
        %6820 = vmatmul.mubr.bf16.gmra.mrb[0].mxu0 %v875
        %v6821 = vpop.f32.mrb[0].mxu0
        %v6822 = vadd.f32 0.0, %v6821
        %v6823 = vpop.f32.mrb[0].mxu0
        %v6824 = vpop.f32.mrb[0].mxu0
        %v6825 = vadd.f32 0.0, %v6824
        %v6826 = vpop.f32.mrb[0].mxu0
        %6827 = vmatprep.mubr.bf16.mxu0 0
        %6828 = vmatmul.mubr.bf16.gmra.mrb[0].mxu0 %v1080
        %v6829 = vpop.f32.mrb[0].mxu0
        %v6830 = vadd.f32 0.0, %v6829
        %v6831 = vpop.f32.mrb[0].mxu0
        %v6832 = vpop.f32.mrb[0].mxu0
        %v6833 = vadd.f32 0.0, %v6832
        %v6834 = vpop.f32.mrb[0].mxu0
        %6835 = vmatprep.mubr.bf16.mxu0 0
        %6836 = vmatmul.mubr.bf16.gmra.mrb[0].mxu0 %v890
        %v6837 = vpop.f32.mrb[0].mxu0
        %v6838 = vadd.f32 0.0, %v6837
        %v6839 = vpop.f32.mrb[0].mxu0
        %v6840 = vpop.f32.mrb[0].mxu0
        %v6841 = vadd.f32 0.0, %v6840
        %v6842 = vpop.f32.mrb[0].mxu0
        %6843 = vmatprep.mubr.bf16.mxu0 0
        %6844 = vmatmul.mubr.bf16.gmra.mrb[0].mxu0 %v1081
        %v6845 = vpop.f32.mrb[0].mxu0
        %v6846 = vadd.f32 0.0, %v6845
        %v6847 = vpop.f32.mrb[0].mxu0
        %v6848 = vpop.f32.mrb[0].mxu0
        %v6849 = vadd.f32 0.0, %v6848
        %v6850 = vpop.f32.mrb[0].mxu0
        %6851 = vmatprep.mubr.bf16.mxu0 0
        %6852 = vmatmul.mubr.bf16.gmra.mrb[0].mxu0 %v905
        %v6853 = vpop.f32.mrb[0].mxu0
        %v6854 = vadd.f32 0.0, %v6853
        %v6855 = vpop.f32.mrb[0].mxu0
        %v6856 = vpop.f32.mrb[0].mxu0
        %v6857 = vadd.f32 0.0, %v6856
        %v6858 = vpop.f32.mrb[0].mxu0
        %6859 = vmatprep.mubr.bf16.mxu0 0
        %6860 = vmatmul.mubr.bf16.gmra.mrb[0].mxu0 %v1082
        %v6861 = vpop.f32.mrb[0].mxu0
        %v6862 = vadd.f32 0.0, %v6861
        %v6863 = vpop.f32.mrb[0].mxu0
        %v6864 = vpop.f32.mrb[0].mxu0
        %v6865 = vadd.f32 0.0, %v6864
        %v6866 = vpop.f32.mrb[0].mxu0
        %6867 = vmatprep.mubr.bf16.mxu0 0
        %6868 = vmatmul.mubr.bf16.gmra.mrb[0].mxu0 %v920
        %v6869 = vpop.f32.mrb[0].mxu0
        %v6870 = vadd.f32 0.0, %v6869
        %v6871 = vpop.f32.mrb[0].mxu0
        %v6872 = vpop.f32.mrb[0].mxu0
        %v6873 = vadd.f32 0.0, %v6872
        %v6874 = vpop.f32.mrb[0].mxu0
        %6875 = vmatprep.mubr.bf16.mxu0 0
        %6876 = vmatmul.mubr.bf16.gmra.mrb[0].mxu0 %v1083
        %v6877 = vpop.f32.mrb[0].mxu0
        %v6878 = vadd.f32 0.0, %v6877
        %v6879 = vpop.f32.mrb[0].mxu0
        %v6880 = vpop.f32.mrb[0].mxu0
        %v6881 = vadd.f32 0.0, %v6880
        %v6882 = vpop.f32.mrb[0].mxu0
        %6883 = vmatprep.mubr.bf16.mxu0 0
        %6884 = vmatmul.mubr.bf16.gmra.mrb[0].mxu0 %v935
        %v6885 = vpop.f32.mrb[0].mxu0
        %v6886 = vadd.f32 0.0, %v6885
        %v6887 = vpop.f32.mrb[0].mxu0
        %v6888 = vpop.f32.mrb[0].mxu0
        %v6889 = vadd.f32 0.0, %v6888
        %v6890 = vpop.f32.mrb[0].mxu0
        %6891 = vmatprep.mubr.bf16.mxu0 0
        %6892 = vmatmul.mubr.bf16.gmra.mrb[0].mxu0 %v1084
        %v6893 = vpop.f32.mrb[0].mxu0
        %v6894 = vadd.f32 0.0, %v6893
        %v6895 = vpop.f32.mrb[0].mxu0
        %v6896 = vpop.f32.mrb[0].mxu0
        %v6897 = vadd.f32 0.0, %v6896
        %v6898 = vpop.f32.mrb[0].mxu0
        %6899 = vmatprep.mubr.bf16.mxu0 0
        %6900 = vmatmul.mubr.bf16.gmra.mrb[0].mxu0 %v950
        %v6901 = vpop.f32.mrb[0].mxu0
        %v6902 = vadd.f32 0.0, %v6901
        %v6903 = vpop.f32.mrb[0].mxu0
        %v6904 = vpop.f32.mrb[0].mxu0
        %v6905 = vadd.f32 0.0, %v6904
        %v6906 = vpop.f32.mrb[0].mxu0
        %6907 = vmatprep.mubr.bf16.mxu0 0
        %6908 = vmatmul.mubr.bf16.gmra.mrb[0].mxu0 %v1052
        %v6909 = vpop.f32.mrb[0].mxu0
        %v6910 = vadd.f32 0.0, %v6909
        %v6911 = vpop.f32.mrb[0].mxu0
        %v6912 = vpop.f32.mrb[0].mxu0
        %v6913 = vadd.f32 0.0, %v6912
        %v6914 = vpop.f32.mrb[0].mxu0
        %6915 = vmatprep.mubr.bf16.mxu0 0
        %6916 = vmatmul.mubr.bf16.gmra.mrb[0].mxu0 %v470
        %v6917 = vpop.f32.mrb[0].mxu0
        %v6918 = vadd.f32 0.0, %v6917
        %v6919 = vpop.f32.mrb[0].mxu0
        %v6920 = vpop.f32.mrb[0].mxu0
        %v6921 = vadd.f32 0.0, %v6920
        %v6922 = vpop.f32.mrb[0].mxu0
        %6923 = vdwg.mxu0
        %v6924 = vadd.f32 %v6186, %v6414
        %v6925 = vadd.f32 %v6187, %v6417
        %v6926 = vadd.f32 %v6188, %v6422
        %v6927 = vadd.f32 %v6189, %v6425
        %v6928 = vadd.f32 %v6190, %v6430
        %v6929 = vadd.f32 %v6191, %v6433
        %v6930 = vadd.f32 %v6192, %v6438
        %v6931 = vadd.f32 %v6193, %v6441
        %v6932 = vadd.f32 %v6194, %v6446
        %v6933 = vadd.f32 %v6195, %v6449
        %v6934 = vadd.f32 %v6196, %v6454
        %v6935 = vadd.f32 %v6197, %v6457
        %v6936 = vadd.f32 %v6198, %v6462
        %v6937 = vadd.f32 %v6199, %v6465
        %v6938 = vadd.f32 %v6200, %v6470
        %v6939 = vadd.f32 %v6201, %v6473
        %v6940 = vadd.f32 %v6202, %v6478
        %v6941 = vadd.f32 %v6203, %v6481
        %v6942 = vadd.f32 %v6204, %v6486
        %v6943 = vadd.f32 %v6205, %v6489
        %v6944 = vadd.f32 %v6206, %v6494
        %v6945 = vadd.f32 %v6207, %v6497
        %v6946 = vadd.f32 %v6208, %v6502
        %v6947 = vadd.f32 %v6209, %v6505
        %v6948 = vadd.f32 %v6210, %v6510
        %v6949 = vadd.f32 %v6211, %v6513
        %v6950 = vadd.f32 %v6212, %v6518
        %v6951 = vadd.f32 %v6213, %v6521
        %v6952 = vadd.f32 %v6214, %v6526
        %v6953 = vadd.f32 %v6215, %v6529
        %v6954 = vadd.f32 %v6216, %v6534
        %v6955 = vadd.f32 %v6217, %v6537
        %v6956 = vadd.f32 %v6218, %v6542
        %v6957 = vadd.f32 %v6219, %v6545
        %v6958 = vadd.f32 %v6220, %v6550
        %v6959 = vadd.f32 %v6221, %v6553
        %v6960 = vadd.f32 %v6222, %v6558
        %v6961 = vadd.f32 %v6223, %v6561
        %v6962 = vadd.f32 %v6224, %v6566
        %v6963 = vadd.f32 %v6225, %v6569
        %v6964 = vadd.f32 %v6226, %v6574
        %v6965 = vadd.f32 %v6227, %v6577
        %v6966 = vadd.f32 %v6228, %v6582
        %v6967 = vadd.f32 %v6229, %v6585
        %v6968 = vadd.f32 %v6230, %v6590
        %v6969 = vadd.f32 %v6231, %v6593
        %v6970 = vadd.f32 %v6232, %v6598
        %v6971 = vadd.f32 %v6233, %v6601
        %v6972 = vadd.f32 %v6234, %v6606
        %v6973 = vadd.f32 %v6235, %v6609
        %v6974 = vadd.f32 %v6236, %v6614
        %v6975 = vadd.f32 %v6237, %v6617
        %v6976 = vadd.f32 %v6238, %v6622
        %v6977 = vadd.f32 %v6239, %v6625
        %v6978 = vadd.f32 %v6240, %v6630
        %v6979 = vadd.f32 %v6241, %v6633
        %v6980 = vadd.f32 %v6242, %v6638
        %v6981 = vadd.f32 %v6243, %v6641
        %v6982 = vadd.f32 %v6244, %v6646
        %v6983 = vadd.f32 %v6245, %v6649
        %v6984 = vadd.f32 %v6246, %v6654
        %v6985 = vadd.f32 %v6247, %v6657
        %v6986 = vadd.f32 %v6248, %v6662
        %v6987 = vadd.f32 %v6249, %v6665
        %v6988 = vadd.f32 %v6250, %v6670
        %v6989 = vadd.f32 %v6251, %v6673
        %v6990 = vadd.f32 %v6252, %v6678
        %v6991 = vadd.f32 %v6253, %v6681
        %v6992 = vadd.f32 %v6254, %v6686
        %v6993 = vadd.f32 %v6255, %v6689
        %v6994 = vadd.f32 %v6256, %v6694
        %v6995 = vadd.f32 %v6257, %v6697
        %v6996 = vadd.f32 %v6258, %v6702
        %v6997 = vadd.f32 %v6259, %v6705
        %v6998 = vadd.f32 %v6260, %v6710
        %v6999 = vadd.f32 %v6261, %v6713
        %v7000 = vadd.f32 %v6262, %v6718
        %v7001 = vadd.f32 %v6263, %v6721
        %v7002 = vadd.f32 %v6264, %v6726
        %v7003 = vadd.f32 %v6265, %v6729
        %v7004 = vadd.f32 %v6266, %v6734
        %v7005 = vadd.f32 %v6267, %v6737
        %v7006 = vadd.f32 %v6268, %v6742
        %v7007 = vadd.f32 %v6269, %v6745
        %v7008 = vadd.f32 %v6270, %v6750
        %v7009 = vadd.f32 %v6271, %v6753
        %v7010 = vadd.f32 %v6272, %v6758
        %v7011 = vadd.f32 %v6273, %v6761
        %v7012 = vadd.f32 %v6274, %v6766
        %v7013 = vadd.f32 %v6275, %v6769
        %v7014 = vadd.f32 %v6276, %v6774
        %v7015 = vadd.f32 %v6277, %v6777
        %v7016 = vadd.f32 %v6278, %v6782
        %v7017 = vadd.f32 %v6279, %v6785
        %v7018 = vadd.f32 %v6280, %v6790
        %v7019 = vadd.f32 %v6281, %v6793
        %v7020 = vadd.f32 %v6282, %v6798
        %v7021 = vadd.f32 %v6283, %v6801
        %v7022 = vadd.f32 %v6284, %v6806
        %v7023 = vadd.f32 %v6285, %v6809
        %v7024 = vadd.f32 %v6286, %v6814
        %v7025 = vadd.f32 %v6287, %v6817
        %v7026 = vadd.f32 %v6288, %v6822
        %v7027 = vadd.f32 %v6289, %v6825
        %v7028 = vadd.f32 %v6290, %v6830
        %v7029 = vadd.f32 %v6291, %v6833
        %v7030 = vadd.f32 %v6292, %v6838
        %v7031 = vadd.f32 %v6293, %v6841
        %v7032 = vadd.f32 %v6294, %v6846
        %v7033 = vadd.f32 %v6295, %v6849
        %v7034 = vadd.f32 %v6296, %v6854
        %v7035 = vadd.f32 %v6297, %v6857
        %v7036 = vadd.f32 %v6298, %v6862
        %v7037 = vadd.f32 %v6299, %v6865
        %v7038 = vadd.f32 %v6300, %v6870
        %v7039 = vadd.f32 %v6301, %v6873
        %v7040 = vadd.f32 %v6302, %v6878
        %v7041 = vadd.f32 %v6303, %v6881
        %v7042 = vadd.f32 %v6304, %v6886
        %v7043 = vadd.f32 %v6305, %v6889
        %v7044 = vadd.f32 %v6306, %v6894
        %v7045 = vadd.f32 %v6307, %v6897
        %v7046 = vadd.f32 %v6308, %v6902
        %v7047 = vadd.f32 %v6309, %v6905
        %v7048 = vadd.f32 %v6310, %v6910
        %v7049 = vadd.f32 %v6311, %v6913
        %v7050 = vadd.f32 %v6312, %v6918
        %v7051 = vadd.f32 %v6313, %v6921
        %s7052 = scalar_lea.vmem [#allocation5], 448
        %v7053 = vld [vmem:[%s7052] sm:$0xf]
        %v7054 = vld [vmem:[%s7052 + $0x4] sm:$0xf]
        %v7055 = vld [vmem:[%s7052 + $0x8] sm:$0xf]
        %v7056 = vld [vmem:[%s7052 + $0xc] sm:$0xf]
        %v7057 = vld [vmem:[%s7052 + $0x10] sm:$0xf]
        %v7058 = vld [vmem:[%s7052 + $0x14] sm:$0xf]
        %v7059 = vld [vmem:[%s7052 + $0x18] sm:$0xf]
        %v7060 = vld [vmem:[%s7052 + $0x1c] sm:$0xf]
        %v7061 = vld [vmem:[%s7052 + $0x20] sm:$0xf]
        %v7062 = vld [vmem:[%s7052 + $0x24] sm:$0xf]
        %v7063 = vld [vmem:[%s7052 + $0x28] sm:$0xf]
        %v7064 = vld [vmem:[%s7052 + $0x2c] sm:$0xf]
        %v7065 = vld [vmem:[%s7052 + $0x30] sm:$0xf]
        %v7066 = vld [vmem:[%s7052 + $0x34] sm:$0xf]
        %v7067 = vld [vmem:[%s7052 + $0x38] sm:$0xf]
        %v7068 = vld [vmem:[%s7052 + $0x3c] sm:$0xf]
        %v7085 = vunpack.c.l.b16 %v7053
        %v7086 = vunpack.c.l.b16 %v7054
        %v7087 = vunpack.c.l.b16 %v7055
        %v7088 = vunpack.c.l.b16 %v7056
        %v7089 = vunpack.c.l.b16 %v7057
        %v7090 = vunpack.c.l.b16 %v7058
        %v7091 = vunpack.c.l.b16 %v7059
        %v7092 = vunpack.c.l.b16 %v7060
        %v7093 = vunpack.c.l.b16 %v7061
        %v7094 = vunpack.c.l.b16 %v7062
        %v7095 = vunpack.c.l.b16 %v7063
        %v7096 = vunpack.c.l.b16 %v7064
        %v7097 = vunpack.c.l.b16 %v7065
        %v7098 = vunpack.c.l.b16 %v7066
        %v7099 = vunpack.c.l.b16 %v7067
        %v7100 = vunpack.c.l.b16 %v7068
        %v7101 = vpack.c.b16 %v7086, %v7085
        %v7102 = vpack.c.b16 %v7088, %v7087
        %v7103 = vpack.c.b16 %v7090, %v7089
        %v7104 = vpack.c.b16 %v7092, %v7091
        %v7105 = vpack.c.b16 %v7094, %v7093
        %v7106 = vpack.c.b16 %v7096, %v7095
        %v7107 = vpack.c.b16 %v7098, %v7097
        %v7108 = vpack.c.b16 %v7100, %v7099
        %7117 = vmatprep.subr.bf16.mxu0 0
        %7118 = vmatpush1.bf16.msra.mxu0 %v7101
        %7119 = vmatprep.subr.bf16.mxu0 0
        %7120 = vmatpush1.bf16.msra.mxu0 %v7102
        %7121 = vmatprep.subr.bf16.mxu0 0
        %7122 = vmatpush1.bf16.msra.mxu0 %v7103
        %7123 = vmatprep.subr.bf16.mxu0 0
        %7124 = vmatpush1.bf16.msra.mxu0 %v7104
        %7125 = vmatprep.subr.bf16.mxu0 0
        %7126 = vmatpush1.bf16.msra.mxu0 %v7105
        %7127 = vmatprep.subr.bf16.mxu0 0
        %7128 = vmatpush1.bf16.msra.mxu0 %v7106
        %7129 = vmatprep.subr.bf16.mxu0 0
        %7130 = vmatpush1.bf16.msra.mxu0 %v7107
        %7131 = vmatprep.subr.bf16.mxu0 0
        %7132 = vmatpush1.bf16.msra.mxu0 %v7108
        %7133 = vmatprep.subr.bf16.mxu0 0
        %7134 = vmatpush1.bf16.msra.mxu0 0
        %7135 = vmatprep.subr.bf16.mxu0 0
        %7136 = vmatpush1.bf16.msra.mxu0 0
        %7137 = vmatprep.subr.bf16.mxu0 0
        %7138 = vmatpush1.bf16.msra.mxu0 0
        %7139 = vmatprep.subr.bf16.mxu0 0
        %7140 = vmatpush1.bf16.msra.mxu0 0
        %7141 = vmatprep.subr.bf16.mxu0 0
        %7142 = vmatpush1.bf16.msra.mxu0 0
        %7143 = vmatprep.subr.bf16.mxu0 0
        %7144 = vmatpush1.bf16.msra.mxu0 0
        %7145 = vmatprep.subr.bf16.mxu0 0
        %7146 = vmatpush1.bf16.msra.mxu0 0
        %7147 = vmatprep.subr.bf16.mxu0 0
        %7148 = vmatpush1.bf16.msra.mxu0 0
        %7149 = vmatprep.mubr.bf16.mxu0 0
        %7150 = vmatmul.mubr.bf16.gmra.mrb[0].mxu0 %v1186
        %v7151 = vpop.f32.mrb[0].mxu0
        %v7152 = vadd.f32 0.0, %v7151
        %v7153 = vpop.f32.mrb[0].mxu0
        %v7154 = vpop.f32.mrb[0].mxu0
        %v7155 = vadd.f32 0.0, %v7154
        %v7156 = vpop.f32.mrb[0].mxu0
        %7157 = vmatprep.mubr.bf16.mxu0 0
        %7158 = vmatmul.mubr.bf16.gmra.mrb[0].mxu0 %v1194
        %v7159 = vpop.f32.mrb[0].mxu0
        %v7160 = vadd.f32 0.0, %v7159
        %v7161 = vpop.f32.mrb[0].mxu0
        %v7162 = vpop.f32.mrb[0].mxu0
        %v7163 = vadd.f32 0.0, %v7162
        %v7164 = vpop.f32.mrb[0].mxu0
        %7165 = vmatprep.mubr.bf16.mxu0 0
        %7166 = vmatmul.mubr.bf16.gmra.mrb[0].mxu0 %v1206
        %v7167 = vpop.f32.mrb[0].mxu0
        %v7168 = vadd.f32 0.0, %v7167
        %v7169 = vpop.f32.mrb[0].mxu0
        %v7170 = vpop.f32.mrb[0].mxu0
        %v7171 = vadd.f32 0.0, %v7170
        %v7172 = vpop.f32.mrb[0].mxu0
        %7173 = vmatprep.mubr.bf16.mxu0 0
        %7174 = vmatmul.mubr.bf16.gmra.mrb[0].mxu0 %v1214
        %v7175 = vpop.f32.mrb[0].mxu0
        %v7176 = vadd.f32 0.0, %v7175
        %v7177 = vpop.f32.mrb[0].mxu0
        %v7178 = vpop.f32.mrb[0].mxu0
        %v7179 = vadd.f32 0.0, %v7178
        %v7180 = vpop.f32.mrb[0].mxu0
        %7181 = vmatprep.mubr.bf16.mxu0 0
        %7182 = vmatmul.mubr.bf16.gmra.mrb[0].mxu0 %v1226
        %v7183 = vpop.f32.mrb[0].mxu0
        %v7184 = vadd.f32 0.0, %v7183
        %v7185 = vpop.f32.mrb[0].mxu0
        %v7186 = vpop.f32.mrb[0].mxu0
        %v7187 = vadd.f32 0.0, %v7186
        %v7188 = vpop.f32.mrb[0].mxu0
        %7189 = vmatprep.mubr.bf16.mxu0 0
        %7190 = vmatmul.mubr.bf16.gmra.mrb[0].mxu0 %v1234
        %v7191 = vpop.f32.mrb[0].mxu0
        %v7192 = vadd.f32 0.0, %v7191
        %v7193 = vpop.f32.mrb[0].mxu0
        %v7194 = vpop.f32.mrb[0].mxu0
        %v7195 = vadd.f32 0.0, %v7194
        %v7196 = vpop.f32.mrb[0].mxu0
        %7197 = vmatprep.mubr.bf16.mxu0 0
        %7198 = vmatmul.mubr.bf16.gmra.mrb[0].mxu0 %v1246
        %v7199 = vpop.f32.mrb[0].mxu0
        %v7200 = vadd.f32 0.0, %v7199
        %v7201 = vpop.f32.mrb[0].mxu0
        %v7202 = vpop.f32.mrb[0].mxu0
        %v7203 = vadd.f32 0.0, %v7202
        %v7204 = vpop.f32.mrb[0].mxu0
        %7205 = vmatprep.mubr.bf16.mxu0 0
        %7206 = vmatmul.mubr.bf16.gmra.mrb[0].mxu0 %v1254
        %v7207 = vpop.f32.mrb[0].mxu0
        %v7208 = vadd.f32 0.0, %v7207
        %v7209 = vpop.f32.mrb[0].mxu0
        %v7210 = vpop.f32.mrb[0].mxu0
        %v7211 = vadd.f32 0.0, %v7210
        %v7212 = vpop.f32.mrb[0].mxu0
        %7213 = vmatprep.mubr.bf16.mxu0 0
        %7214 = vmatmul.mubr.bf16.gmra.mrb[0].mxu0 %v1266
        %v7215 = vpop.f32.mrb[0].mxu0
        %v7216 = vadd.f32 0.0, %v7215
        %v7217 = vpop.f32.mrb[0].mxu0
        %v7218 = vpop.f32.mrb[0].mxu0
        %v7219 = vadd.f32 0.0, %v7218
        %v7220 = vpop.f32.mrb[0].mxu0
        %7221 = vmatprep.mubr.bf16.mxu0 0
        %7222 = vmatmul.mubr.bf16.gmra.mrb[0].mxu0 %v1274
        %v7223 = vpop.f32.mrb[0].mxu0
        %v7224 = vadd.f32 0.0, %v7223
        %v7225 = vpop.f32.mrb[0].mxu0
        %v7226 = vpop.f32.mrb[0].mxu0
        %v7227 = vadd.f32 0.0, %v7226
        %v7228 = vpop.f32.mrb[0].mxu0
        %7229 = vmatprep.mubr.bf16.mxu0 0
        %7230 = vmatmul.mubr.bf16.gmra.mrb[0].mxu0 %v1286
        %v7231 = vpop.f32.mrb[0].mxu0
        %v7232 = vadd.f32 0.0, %v7231
        %v7233 = vpop.f32.mrb[0].mxu0
        %v7234 = vpop.f32.mrb[0].mxu0
        %v7235 = vadd.f32 0.0, %v7234
        %v7236 = vpop.f32.mrb[0].mxu0
        %7237 = vmatprep.mubr.bf16.mxu0 0
        %7238 = vmatmul.mubr.bf16.gmra.mrb[0].mxu0 %v1294
        %v7239 = vpop.f32.mrb[0].mxu0
        %v7240 = vadd.f32 0.0, %v7239
        %v7241 = vpop.f32.mrb[0].mxu0
        %v7242 = vpop.f32.mrb[0].mxu0
        %v7243 = vadd.f32 0.0, %v7242
        %v7244 = vpop.f32.mrb[0].mxu0
        %7245 = vmatprep.mubr.bf16.mxu0 0
        %7246 = vmatmul.mubr.bf16.gmra.mrb[0].mxu0 %v1306
        %v7247 = vpop.f32.mrb[0].mxu0
        %v7248 = vadd.f32 0.0, %v7247
        %v7249 = vpop.f32.mrb[0].mxu0
        %v7250 = vpop.f32.mrb[0].mxu0
        %v7251 = vadd.f32 0.0, %v7250
        %v7252 = vpop.f32.mrb[0].mxu0
        %7253 = vmatprep.mubr.bf16.mxu0 0
        %7254 = vmatmul.mubr.bf16.gmra.mrb[0].mxu0 %v1314
        %v7255 = vpop.f32.mrb[0].mxu0
        %v7256 = vadd.f32 0.0, %v7255
        %v7257 = vpop.f32.mrb[0].mxu0
        %v7258 = vpop.f32.mrb[0].mxu0
        %v7259 = vadd.f32 0.0, %v7258
        %v7260 = vpop.f32.mrb[0].mxu0
        %7261 = vmatprep.mubr.bf16.mxu0 0
        %7262 = vmatmul.mubr.bf16.gmra.mrb[0].mxu0 %v1326
        %v7263 = vpop.f32.mrb[0].mxu0
        %v7264 = vadd.f32 0.0, %v7263
        %v7265 = vpop.f32.mrb[0].mxu0
        %v7266 = vpop.f32.mrb[0].mxu0
        %v7267 = vadd.f32 0.0, %v7266
        %v7268 = vpop.f32.mrb[0].mxu0
        %7269 = vmatprep.mubr.bf16.mxu0 0
        %7270 = vmatmul.mubr.bf16.gmra.mrb[0].mxu0 %v1334
        %v7271 = vpop.f32.mrb[0].mxu0
        %v7272 = vadd.f32 0.0, %v7271
        %v7273 = vpop.f32.mrb[0].mxu0
        %v7274 = vpop.f32.mrb[0].mxu0
        %v7275 = vadd.f32 0.0, %v7274
        %v7276 = vpop.f32.mrb[0].mxu0
        %7277 = vmatprep.mubr.bf16.mxu0 0
        %7278 = vmatmul.mubr.bf16.gmra.mrb[0].mxu0 %v1346
        %v7279 = vpop.f32.mrb[0].mxu0
        %v7280 = vadd.f32 0.0, %v7279
        %v7281 = vpop.f32.mrb[0].mxu0
        %v7282 = vpop.f32.mrb[0].mxu0
        %v7283 = vadd.f32 0.0, %v7282
        %v7284 = vpop.f32.mrb[0].mxu0
        %7285 = vmatprep.mubr.bf16.mxu0 0
        %7286 = vmatmul.mubr.bf16.gmra.mrb[0].mxu0 %v1354
        %v7287 = vpop.f32.mrb[0].mxu0
        %v7288 = vadd.f32 0.0, %v7287
        %v7289 = vpop.f32.mrb[0].mxu0
        %v7290 = vpop.f32.mrb[0].mxu0
        %v7291 = vadd.f32 0.0, %v7290
        %v7292 = vpop.f32.mrb[0].mxu0
        %7293 = vmatprep.mubr.bf16.mxu0 0
        %7294 = vmatmul.mubr.bf16.gmra.mrb[0].mxu0 %v1366
        %v7295 = vpop.f32.mrb[0].mxu0
        %v7296 = vadd.f32 0.0, %v7295
        %v7297 = vpop.f32.mrb[0].mxu0
        %v7298 = vpop.f32.mrb[0].mxu0
        %v7299 = vadd.f32 0.0, %v7298
        %v7300 = vpop.f32.mrb[0].mxu0
        %7301 = vmatprep.mubr.bf16.mxu0 0
        %7302 = vmatmul.mubr.bf16.gmra.mrb[0].mxu0 %v1374
        %v7303 = vpop.f32.mrb[0].mxu0
        %v7304 = vadd.f32 0.0, %v7303
        %v7305 = vpop.f32.mrb[0].mxu0
        %v7306 = vpop.f32.mrb[0].mxu0
        %v7307 = vadd.f32 0.0, %v7306
        %v7308 = vpop.f32.mrb[0].mxu0
        %7309 = vmatprep.mubr.bf16.mxu0 0
        %7310 = vmatmul.mubr.bf16.gmra.mrb[0].mxu0 %v1386
        %v7311 = vpop.f32.mrb[0].mxu0
        %v7312 = vadd.f32 0.0, %v7311
        %v7313 = vpop.f32.mrb[0].mxu0
        %v7314 = vpop.f32.mrb[0].mxu0
        %v7315 = vadd.f32 0.0, %v7314
        %v7316 = vpop.f32.mrb[0].mxu0
        %7317 = vmatprep.mubr.bf16.mxu0 0
        %7318 = vmatmul.mubr.bf16.gmra.mrb[0].mxu0 %v1394
        %v7319 = vpop.f32.mrb[0].mxu0
        %v7320 = vadd.f32 0.0, %v7319
        %v7321 = vpop.f32.mrb[0].mxu0
        %v7322 = vpop.f32.mrb[0].mxu0
        %v7323 = vadd.f32 0.0, %v7322
        %v7324 = vpop.f32.mrb[0].mxu0
        %7325 = vmatprep.mubr.bf16.mxu0 0
        %7326 = vmatmul.mubr.bf16.gmra.mrb[0].mxu0 %v1406
        %v7327 = vpop.f32.mrb[0].mxu0
        %v7328 = vadd.f32 0.0, %v7327
        %v7329 = vpop.f32.mrb[0].mxu0
        %v7330 = vpop.f32.mrb[0].mxu0
        %v7331 = vadd.f32 0.0, %v7330
        %v7332 = vpop.f32.mrb[0].mxu0
        %7333 = vmatprep.mubr.bf16.mxu0 0
        %7334 = vmatmul.mubr.bf16.gmra.mrb[0].mxu0 %v1414
        %v7335 = vpop.f32.mrb[0].mxu0
        %v7336 = vadd.f32 0.0, %v7335
        %v7337 = vpop.f32.mrb[0].mxu0
        %v7338 = vpop.f32.mrb[0].mxu0
        %v7339 = vadd.f32 0.0, %v7338
        %v7340 = vpop.f32.mrb[0].mxu0
        %7341 = vmatprep.mubr.bf16.mxu0 0
        %7342 = vmatmul.mubr.bf16.gmra.mrb[0].mxu0 %v1426
        %v7343 = vpop.f32.mrb[0].mxu0
        %v7344 = vadd.f32 0.0, %v7343
        %v7345 = vpop.f32.mrb[0].mxu0
        %v7346 = vpop.f32.mrb[0].mxu0
        %v7347 = vadd.f32 0.0, %v7346
        %v7348 = vpop.f32.mrb[0].mxu0
        %7349 = vmatprep.mubr.bf16.mxu0 0
        %7350 = vmatmul.mubr.bf16.gmra.mrb[0].mxu0 %v1434
        %v7351 = vpop.f32.mrb[0].mxu0
        %v7352 = vadd.f32 0.0, %v7351
        %v7353 = vpop.f32.mrb[0].mxu0
        %v7354 = vpop.f32.mrb[0].mxu0
        %v7355 = vadd.f32 0.0, %v7354
        %v7356 = vpop.f32.mrb[0].mxu0
        %7357 = vmatprep.mubr.bf16.mxu0 0
        %7358 = vmatmul.mubr.bf16.gmra.mrb[0].mxu0 %v1446
        %v7359 = vpop.f32.mrb[0].mxu0
        %v7360 = vadd.f32 0.0, %v7359
        %v7361 = vpop.f32.mrb[0].mxu0
        %v7362 = vpop.f32.mrb[0].mxu0
        %v7363 = vadd.f32 0.0, %v7362
        %v7364 = vpop.f32.mrb[0].mxu0
        %7365 = vmatprep.mubr.bf16.mxu0 0
        %7366 = vmatmul.mubr.bf16.gmra.mrb[0].mxu0 %v1454
        %v7367 = vpop.f32.mrb[0].mxu0
        %v7368 = vadd.f32 0.0, %v7367
        %v7369 = vpop.f32.mrb[0].mxu0
        %v7370 = vpop.f32.mrb[0].mxu0
        %v7371 = vadd.f32 0.0, %v7370
        %v7372 = vpop.f32.mrb[0].mxu0
        %7373 = vmatprep.mubr.bf16.mxu0 0
        %7374 = vmatmul.mubr.bf16.gmra.mrb[0].mxu0 %v1466
        %v7375 = vpop.f32.mrb[0].mxu0
        %v7376 = vadd.f32 0.0, %v7375
        %v7377 = vpop.f32.mrb[0].mxu0
        %v7378 = vpop.f32.mrb[0].mxu0
        %v7379 = vadd.f32 0.0, %v7378
        %v7380 = vpop.f32.mrb[0].mxu0
        %7381 = vmatprep.mubr.bf16.mxu0 0
        %7382 = vmatmul.mubr.bf16.gmra.mrb[0].mxu0 %v1474
        %v7383 = vpop.f32.mrb[0].mxu0
        %v7384 = vadd.f32 0.0, %v7383
        %v7385 = vpop.f32.mrb[0].mxu0
        %v7386 = vpop.f32.mrb[0].mxu0
        %v7387 = vadd.f32 0.0, %v7386
        %v7388 = vpop.f32.mrb[0].mxu0
        %7389 = vmatprep.mubr.bf16.mxu0 0
        %7390 = vmatmul.mubr.bf16.gmra.mrb[0].mxu0 %v1486
        %v7391 = vpop.f32.mrb[0].mxu0
        %v7392 = vadd.f32 0.0, %v7391
        %v7393 = vpop.f32.mrb[0].mxu0
        %v7394 = vpop.f32.mrb[0].mxu0
        %v7395 = vadd.f32 0.0, %v7394
        %v7396 = vpop.f32.mrb[0].mxu0
        %7397 = vmatprep.mubr.bf16.mxu0 0
        %7398 = vmatmul.mubr.bf16.gmra.mrb[0].mxu0 %v1494
        %v7399 = vpop.f32.mrb[0].mxu0
        %v7400 = vadd.f32 0.0, %v7399
        %v7401 = vpop.f32.mrb[0].mxu0
        %v7402 = vpop.f32.mrb[0].mxu0
        %v7403 = vadd.f32 0.0, %v7402
        %v7404 = vpop.f32.mrb[0].mxu0
        %7405 = vmatprep.mubr.bf16.mxu0 0
        %7406 = vmatmul.mubr.bf16.gmra.mrb[0].mxu0 %v1506
        %v7407 = vpop.f32.mrb[0].mxu0
        %v7408 = vadd.f32 0.0, %v7407
        %v7409 = vpop.f32.mrb[0].mxu0
        %v7410 = vpop.f32.mrb[0].mxu0
        %v7411 = vadd.f32 0.0, %v7410
        %v7412 = vpop.f32.mrb[0].mxu0
        %7413 = vmatprep.mubr.bf16.mxu0 0
        %7414 = vmatmul.mubr.bf16.gmra.mrb[0].mxu0 %v1514
        %v7415 = vpop.f32.mrb[0].mxu0
        %v7416 = vadd.f32 0.0, %v7415
        %v7417 = vpop.f32.mrb[0].mxu0
        %v7418 = vpop.f32.mrb[0].mxu0
        %v7419 = vadd.f32 0.0, %v7418
        %v7420 = vpop.f32.mrb[0].mxu0
        %7421 = vmatprep.mubr.bf16.mxu0 0
        %7422 = vmatmul.mubr.bf16.gmra.mrb[0].mxu0 %v1526
        %v7423 = vpop.f32.mrb[0].mxu0
        %v7424 = vadd.f32 0.0, %v7423
        %v7425 = vpop.f32.mrb[0].mxu0
        %v7426 = vpop.f32.mrb[0].mxu0
        %v7427 = vadd.f32 0.0, %v7426
        %v7428 = vpop.f32.mrb[0].mxu0
        %7429 = vmatprep.mubr.bf16.mxu0 0
        %7430 = vmatmul.mubr.bf16.gmra.mrb[0].mxu0 %v1534
        %v7431 = vpop.f32.mrb[0].mxu0
        %v7432 = vadd.f32 0.0, %v7431
        %v7433 = vpop.f32.mrb[0].mxu0
        %v7434 = vpop.f32.mrb[0].mxu0
        %v7435 = vadd.f32 0.0, %v7434
        %v7436 = vpop.f32.mrb[0].mxu0
        %7437 = vmatprep.mubr.bf16.mxu0 0
        %7438 = vmatmul.mubr.bf16.gmra.mrb[0].mxu0 %v1546
        %v7439 = vpop.f32.mrb[0].mxu0
        %v7440 = vadd.f32 0.0, %v7439
        %v7441 = vpop.f32.mrb[0].mxu0
        %v7442 = vpop.f32.mrb[0].mxu0
        %v7443 = vadd.f32 0.0, %v7442
        %v7444 = vpop.f32.mrb[0].mxu0
        %7445 = vmatprep.mubr.bf16.mxu0 0
        %7446 = vmatmul.mubr.bf16.gmra.mrb[0].mxu0 %v1554
        %v7447 = vpop.f32.mrb[0].mxu0
        %v7448 = vadd.f32 0.0, %v7447
        %v7449 = vpop.f32.mrb[0].mxu0
        %v7450 = vpop.f32.mrb[0].mxu0
        %v7451 = vadd.f32 0.0, %v7450
        %v7452 = vpop.f32.mrb[0].mxu0
        %7453 = vmatprep.mubr.bf16.mxu0 0
        %7454 = vmatmul.mubr.bf16.gmra.mrb[0].mxu0 %v1566
        %v7455 = vpop.f32.mrb[0].mxu0
        %v7456 = vadd.f32 0.0, %v7455
        %v7457 = vpop.f32.mrb[0].mxu0
        %v7458 = vpop.f32.mrb[0].mxu0
        %v7459 = vadd.f32 0.0, %v7458
        %v7460 = vpop.f32.mrb[0].mxu0
        %7461 = vmatprep.mubr.bf16.mxu0 0
        %7462 = vmatmul.mubr.bf16.gmra.mrb[0].mxu0 %v1574
        %v7463 = vpop.f32.mrb[0].mxu0
        %v7464 = vadd.f32 0.0, %v7463
        %v7465 = vpop.f32.mrb[0].mxu0
        %v7466 = vpop.f32.mrb[0].mxu0
        %v7467 = vadd.f32 0.0, %v7466
        %v7468 = vpop.f32.mrb[0].mxu0
        %7469 = vmatprep.mubr.bf16.mxu0 0
        %7470 = vmatmul.mubr.bf16.gmra.mrb[0].mxu0 %v1586
        %v7471 = vpop.f32.mrb[0].mxu0
        %v7472 = vadd.f32 0.0, %v7471
        %v7473 = vpop.f32.mrb[0].mxu0
        %v7474 = vpop.f32.mrb[0].mxu0
        %v7475 = vadd.f32 0.0, %v7474
        %v7476 = vpop.f32.mrb[0].mxu0
        %7477 = vmatprep.mubr.bf16.mxu0 0
        %7478 = vmatmul.mubr.bf16.gmra.mrb[0].mxu0 %v1594
        %v7479 = vpop.f32.mrb[0].mxu0
        %v7480 = vadd.f32 0.0, %v7479
        %v7481 = vpop.f32.mrb[0].mxu0
        %v7482 = vpop.f32.mrb[0].mxu0
        %v7483 = vadd.f32 0.0, %v7482
        %v7484 = vpop.f32.mrb[0].mxu0
        %7485 = vmatprep.mubr.bf16.mxu0 0
        %7486 = vmatmul.mubr.bf16.gmra.mrb[0].mxu0 %v1606
        %v7487 = vpop.f32.mrb[0].mxu0
        %v7488 = vadd.f32 0.0, %v7487
        %v7489 = vpop.f32.mrb[0].mxu0
        %v7490 = vpop.f32.mrb[0].mxu0
        %v7491 = vadd.f32 0.0, %v7490
        %v7492 = vpop.f32.mrb[0].mxu0
        %7493 = vmatprep.mubr.bf16.mxu0 0
        %7494 = vmatmul.mubr.bf16.gmra.mrb[0].mxu0 %v1614
        %v7495 = vpop.f32.mrb[0].mxu0
        %v7496 = vadd.f32 0.0, %v7495
        %v7497 = vpop.f32.mrb[0].mxu0
        %v7498 = vpop.f32.mrb[0].mxu0
        %v7499 = vadd.f32 0.0, %v7498
        %v7500 = vpop.f32.mrb[0].mxu0
        %7501 = vmatprep.mubr.bf16.mxu0 0
        %7502 = vmatmul.mubr.bf16.gmra.mrb[0].mxu0 %v1626
        %v7503 = vpop.f32.mrb[0].mxu0
        %v7504 = vadd.f32 0.0, %v7503
        %v7505 = vpop.f32.mrb[0].mxu0
        %v7506 = vpop.f32.mrb[0].mxu0
        %v7507 = vadd.f32 0.0, %v7506
        %v7508 = vpop.f32.mrb[0].mxu0
        %7509 = vmatprep.mubr.bf16.mxu0 0
        %7510 = vmatmul.mubr.bf16.gmra.mrb[0].mxu0 %v1634
        %v7511 = vpop.f32.mrb[0].mxu0
        %v7512 = vadd.f32 0.0, %v7511
        %v7513 = vpop.f32.mrb[0].mxu0
        %v7514 = vpop.f32.mrb[0].mxu0
        %v7515 = vadd.f32 0.0, %v7514
        %v7516 = vpop.f32.mrb[0].mxu0
        %7517 = vmatprep.mubr.bf16.mxu0 0
        %7518 = vmatmul.mubr.bf16.gmra.mrb[0].mxu0 %v1646
        %v7519 = vpop.f32.mrb[0].mxu0
        %v7520 = vadd.f32 0.0, %v7519
        %v7521 = vpop.f32.mrb[0].mxu0
        %v7522 = vpop.f32.mrb[0].mxu0
        %v7523 = vadd.f32 0.0, %v7522
        %v7524 = vpop.f32.mrb[0].mxu0
        %7525 = vmatprep.mubr.bf16.mxu0 0
        %7526 = vmatmul.mubr.bf16.gmra.mrb[0].mxu0 %v1654
        %v7527 = vpop.f32.mrb[0].mxu0
        %v7528 = vadd.f32 0.0, %v7527
        %v7529 = vpop.f32.mrb[0].mxu0
        %v7530 = vpop.f32.mrb[0].mxu0
        %v7531 = vadd.f32 0.0, %v7530
        %v7532 = vpop.f32.mrb[0].mxu0
        %7533 = vmatprep.mubr.bf16.mxu0 0
        %7534 = vmatmul.mubr.bf16.gmra.mrb[0].mxu0 %v1666
        %v7535 = vpop.f32.mrb[0].mxu0
        %v7536 = vadd.f32 0.0, %v7535
        %v7537 = vpop.f32.mrb[0].mxu0
        %v7538 = vpop.f32.mrb[0].mxu0
        %v7539 = vadd.f32 0.0, %v7538
        %v7540 = vpop.f32.mrb[0].mxu0
        %7541 = vmatprep.mubr.bf16.mxu0 0
        %7542 = vmatmul.mubr.bf16.gmra.mrb[0].mxu0 %v1674
        %v7543 = vpop.f32.mrb[0].mxu0
        %v7544 = vadd.f32 0.0, %v7543
        %v7545 = vpop.f32.mrb[0].mxu0
        %v7546 = vpop.f32.mrb[0].mxu0
        %v7547 = vadd.f32 0.0, %v7546
        %v7548 = vpop.f32.mrb[0].mxu0
        %7549 = vmatprep.mubr.bf16.mxu0 0
        %7550 = vmatmul.mubr.bf16.gmra.mrb[0].mxu0 %v1686
        %v7551 = vpop.f32.mrb[0].mxu0
        %v7552 = vadd.f32 0.0, %v7551
        %v7553 = vpop.f32.mrb[0].mxu0
        %v7554 = vpop.f32.mrb[0].mxu0
        %v7555 = vadd.f32 0.0, %v7554
        %v7556 = vpop.f32.mrb[0].mxu0
        %7557 = vmatprep.mubr.bf16.mxu0 0
        %7558 = vmatmul.mubr.bf16.gmra.mrb[0].mxu0 %v1694
        %v7559 = vpop.f32.mrb[0].mxu0
        %v7560 = vadd.f32 0.0, %v7559
        %v7561 = vpop.f32.mrb[0].mxu0
        %v7562 = vpop.f32.mrb[0].mxu0
        %v7563 = vadd.f32 0.0, %v7562
        %v7564 = vpop.f32.mrb[0].mxu0
        %7565 = vmatprep.mubr.bf16.mxu0 0
        %7566 = vmatmul.mubr.bf16.gmra.mrb[0].mxu0 %v1706
        %v7567 = vpop.f32.mrb[0].mxu0
        %v7568 = vadd.f32 0.0, %v7567
        %v7569 = vpop.f32.mrb[0].mxu0
        %v7570 = vpop.f32.mrb[0].mxu0
        %v7571 = vadd.f32 0.0, %v7570
        %v7572 = vpop.f32.mrb[0].mxu0
        %7573 = vmatprep.mubr.bf16.mxu0 0
        %7574 = vmatmul.mubr.bf16.gmra.mrb[0].mxu0 %v1714
        %v7575 = vpop.f32.mrb[0].mxu0
        %v7576 = vadd.f32 0.0, %v7575
        %v7577 = vpop.f32.mrb[0].mxu0
        %v7578 = vpop.f32.mrb[0].mxu0
        %v7579 = vadd.f32 0.0, %v7578
        %v7580 = vpop.f32.mrb[0].mxu0
        %7581 = vmatprep.mubr.bf16.mxu0 0
        %7582 = vmatmul.mubr.bf16.gmra.mrb[0].mxu0 %v1726
        %v7583 = vpop.f32.mrb[0].mxu0
        %v7584 = vadd.f32 0.0, %v7583
        %v7585 = vpop.f32.mrb[0].mxu0
        %v7586 = vpop.f32.mrb[0].mxu0
        %v7587 = vadd.f32 0.0, %v7586
        %v7588 = vpop.f32.mrb[0].mxu0
        %7589 = vmatprep.mubr.bf16.mxu0 0
        %7590 = vmatmul.mubr.bf16.gmra.mrb[0].mxu0 %v1734
        %v7591 = vpop.f32.mrb[0].mxu0
        %v7592 = vadd.f32 0.0, %v7591
        %v7593 = vpop.f32.mrb[0].mxu0
        %v7594 = vpop.f32.mrb[0].mxu0
        %v7595 = vadd.f32 0.0, %v7594
        %v7596 = vpop.f32.mrb[0].mxu0
        %7597 = vmatprep.mubr.bf16.mxu0 0
        %7598 = vmatmul.mubr.bf16.gmra.mrb[0].mxu0 %v1746
        %v7599 = vpop.f32.mrb[0].mxu0
        %v7600 = vadd.f32 0.0, %v7599
        %v7601 = vpop.f32.mrb[0].mxu0
        %v7602 = vpop.f32.mrb[0].mxu0
        %v7603 = vadd.f32 0.0, %v7602
        %v7604 = vpop.f32.mrb[0].mxu0
        %7605 = vmatprep.mubr.bf16.mxu0 0
        %7606 = vmatmul.mubr.bf16.gmra.mrb[0].mxu0 %v1754
        %v7607 = vpop.f32.mrb[0].mxu0
        %v7608 = vadd.f32 0.0, %v7607
        %v7609 = vpop.f32.mrb[0].mxu0
        %v7610 = vpop.f32.mrb[0].mxu0
        %v7611 = vadd.f32 0.0, %v7610
        %v7612 = vpop.f32.mrb[0].mxu0
        %7613 = vmatprep.mubr.bf16.mxu0 0
        %7614 = vmatmul.mubr.bf16.gmra.mrb[0].mxu0 %v1766
        %v7615 = vpop.f32.mrb[0].mxu0
        %v7616 = vadd.f32 0.0, %v7615
        %v7617 = vpop.f32.mrb[0].mxu0
        %v7618 = vpop.f32.mrb[0].mxu0
        %v7619 = vadd.f32 0.0, %v7618
        %v7620 = vpop.f32.mrb[0].mxu0
        %7621 = vmatprep.mubr.bf16.mxu0 0
        %7622 = vmatmul.mubr.bf16.gmra.mrb[0].mxu0 %v1774
        %v7623 = vpop.f32.mrb[0].mxu0
        %v7624 = vadd.f32 0.0, %v7623
        %v7625 = vpop.f32.mrb[0].mxu0
        %v7626 = vpop.f32.mrb[0].mxu0
        %v7627 = vadd.f32 0.0, %v7626
        %v7628 = vpop.f32.mrb[0].mxu0
        %7629 = vmatprep.mubr.bf16.mxu0 0
        %7630 = vmatmul.mubr.bf16.gmra.mrb[0].mxu0 %v4818
        %v7631 = vpop.f32.mrb[0].mxu0
        %v7632 = vadd.f32 0.0, %v7631
        %v7633 = vpop.f32.mrb[0].mxu0
        %v7634 = vpop.f32.mrb[0].mxu0
        %v7635 = vadd.f32 0.0, %v7634
        %v7636 = vpop.f32.mrb[0].mxu0
        %7637 = vmatprep.mubr.bf16.mxu0 0
        %7638 = vmatmul.mubr.bf16.gmra.mrb[0].mxu0 %v4826
        %v7639 = vpop.f32.mrb[0].mxu0
        %v7640 = vadd.f32 0.0, %v7639
        %v7641 = vpop.f32.mrb[0].mxu0
        %v7642 = vpop.f32.mrb[0].mxu0
        %v7643 = vadd.f32 0.0, %v7642
        %v7644 = vpop.f32.mrb[0].mxu0
        %7645 = vmatprep.mubr.bf16.mxu0 0
        %7646 = vmatmul.mubr.bf16.gmra.mrb[0].mxu0 %v1146
        %v7647 = vpop.f32.mrb[0].mxu0
        %v7648 = vadd.f32 0.0, %v7647
        %v7649 = vpop.f32.mrb[0].mxu0
        %v7650 = vpop.f32.mrb[0].mxu0
        %v7651 = vadd.f32 0.0, %v7650
        %v7652 = vpop.f32.mrb[0].mxu0
        %7653 = vmatprep.mubr.bf16.mxu0 0
        %7654 = vmatmul.mubr.bf16.gmra.mrb[0].mxu0 %v1154
        %v7655 = vpop.f32.mrb[0].mxu0
        %v7656 = vadd.f32 0.0, %v7655
        %v7657 = vpop.f32.mrb[0].mxu0
        %v7658 = vpop.f32.mrb[0].mxu0
        %v7659 = vadd.f32 0.0, %v7658
        %v7660 = vpop.f32.mrb[0].mxu0
        %7661 = vdwg.mxu0
        %v7662 = vadd.f32 %v6924, %v7152
        %v7663 = vadd.f32 %v6925, %v7155
        %v7664 = vadd.f32 %v6926, %v7160
        %v7665 = vadd.f32 %v6927, %v7163
        %v7666 = vadd.f32 %v6928, %v7168
        %v7667 = vadd.f32 %v6929, %v7171
        %v7668 = vadd.f32 %v6930, %v7176
        %v7669 = vadd.f32 %v6931, %v7179
        %v7670 = vadd.f32 %v6932, %v7184
        %v7671 = vadd.f32 %v6933, %v7187
        %v7672 = vadd.f32 %v6934, %v7192
        %v7673 = vadd.f32 %v6935, %v7195
        %v7674 = vadd.f32 %v6936, %v7200
        %v7675 = vadd.f32 %v6937, %v7203
        %v7676 = vadd.f32 %v6938, %v7208
        %v7677 = vadd.f32 %v6939, %v7211
        %v7678 = vadd.f32 %v6940, %v7216
        %v7679 = vadd.f32 %v6941, %v7219
        %v7680 = vadd.f32 %v6942, %v7224
        %v7681 = vadd.f32 %v6943, %v7227
        %v7682 = vadd.f32 %v6944, %v7232
        %v7683 = vadd.f32 %v6945, %v7235
        %v7684 = vadd.f32 %v6946, %v7240
        %v7685 = vadd.f32 %v6947, %v7243
        %v7686 = vadd.f32 %v6948, %v7248
        %v7687 = vadd.f32 %v6949, %v7251
        %v7688 = vadd.f32 %v6950, %v7256
        %v7689 = vadd.f32 %v6951, %v7259
        %v7690 = vadd.f32 %v6952, %v7264
        %v7691 = vadd.f32 %v6953, %v7267
        %v7692 = vadd.f32 %v6954, %v7272
        %v7693 = vadd.f32 %v6955, %v7275
        %v7694 = vadd.f32 %v6956, %v7280
        %v7695 = vadd.f32 %v6957, %v7283
        %v7696 = vadd.f32 %v6958, %v7288
        %v7697 = vadd.f32 %v6959, %v7291
        %v7698 = vadd.f32 %v6960, %v7296
        %v7699 = vadd.f32 %v6961, %v7299
        %v7700 = vadd.f32 %v6962, %v7304
        %v7701 = vadd.f32 %v6963, %v7307
        %v7702 = vadd.f32 %v6964, %v7312
        %v7703 = vadd.f32 %v6965, %v7315
        %v7704 = vadd.f32 %v6966, %v7320
        %v7705 = vadd.f32 %v6967, %v7323
        %v7706 = vadd.f32 %v6968, %v7328
        %v7707 = vadd.f32 %v6969, %v7331
        %v7708 = vadd.f32 %v6970, %v7336
        %v7709 = vadd.f32 %v6971, %v7339
        %v7710 = vadd.f32 %v6972, %v7344
        %v7711 = vadd.f32 %v6973, %v7347
        %v7712 = vadd.f32 %v6974, %v7352
        %v7713 = vadd.f32 %v6975, %v7355
        %v7714 = vadd.f32 %v6976, %v7360
        %v7715 = vadd.f32 %v6977, %v7363
        %v7716 = vadd.f32 %v6978, %v7368
        %v7717 = vadd.f32 %v6979, %v7371
        %v7718 = vadd.f32 %v6980, %v7376
        %v7719 = vadd.f32 %v6981, %v7379
        %v7720 = vadd.f32 %v6982, %v7384
        %v7721 = vadd.f32 %v6983, %v7387
        %v7722 = vadd.f32 %v6984, %v7392
        %v7723 = vadd.f32 %v6985, %v7395
        %v7724 = vadd.f32 %v6986, %v7400
        %v7725 = vadd.f32 %v6987, %v7403
        %v7726 = vadd.f32 %v6988, %v7408
        %v7727 = vadd.f32 %v6989, %v7411
        %v7728 = vadd.f32 %v6990, %v7416
        %v7729 = vadd.f32 %v6991, %v7419
        %v7730 = vadd.f32 %v6992, %v7424
        %v7731 = vadd.f32 %v6993, %v7427
        %v7732 = vadd.f32 %v6994, %v7432
        %v7733 = vadd.f32 %v6995, %v7435
        %v7734 = vadd.f32 %v6996, %v7440
        %v7735 = vadd.f32 %v6997, %v7443
        %v7736 = vadd.f32 %v6998, %v7448
        %v7737 = vadd.f32 %v6999, %v7451
        %v7738 = vadd.f32 %v7000, %v7456
        %v7739 = vadd.f32 %v7001, %v7459
        %v7740 = vadd.f32 %v7002, %v7464
        %v7741 = vadd.f32 %v7003, %v7467
        %v7742 = vadd.f32 %v7004, %v7472
        %v7743 = vadd.f32 %v7005, %v7475
        %v7744 = vadd.f32 %v7006, %v7480
        %v7745 = vadd.f32 %v7007, %v7483
        %v7746 = vadd.f32 %v7008, %v7488
        %v7747 = vadd.f32 %v7009, %v7491
        %v7748 = vadd.f32 %v7010, %v7496
        %v7749 = vadd.f32 %v7011, %v7499
        %v7750 = vadd.f32 %v7012, %v7504
        %v7751 = vadd.f32 %v7013, %v7507
        %v7752 = vadd.f32 %v7014, %v7512
        %v7753 = vadd.f32 %v7015, %v7515
        %v7754 = vadd.f32 %v7016, %v7520
        %v7755 = vadd.f32 %v7017, %v7523
        %v7756 = vadd.f32 %v7018, %v7528
        %v7757 = vadd.f32 %v7019, %v7531
        %v7758 = vadd.f32 %v7020, %v7536
        %v7759 = vadd.f32 %v7021, %v7539
        %v7760 = vadd.f32 %v7022, %v7544
        %v7761 = vadd.f32 %v7023, %v7547
        %v7762 = vadd.f32 %v7024, %v7552
        %v7763 = vadd.f32 %v7025, %v7555
        %v7764 = vadd.f32 %v7026, %v7560
        %v7765 = vadd.f32 %v7027, %v7563
        %v7766 = vadd.f32 %v7028, %v7568
        %v7767 = vadd.f32 %v7029, %v7571
        %v7768 = vadd.f32 %v7030, %v7576
        %v7769 = vadd.f32 %v7031, %v7579
        %v7770 = vadd.f32 %v7032, %v7584
        %v7771 = vadd.f32 %v7033, %v7587
        %v7772 = vadd.f32 %v7034, %v7592
        %v7773 = vadd.f32 %v7035, %v7595
        %v7774 = vadd.f32 %v7036, %v7600
        %v7775 = vadd.f32 %v7037, %v7603
        %v7776 = vadd.f32 %v7038, %v7608
        %v7777 = vadd.f32 %v7039, %v7611
        %v7778 = vadd.f32 %v7040, %v7616
        %v7779 = vadd.f32 %v7041, %v7619
        %v7780 = vadd.f32 %v7042, %v7624
        %v7781 = vadd.f32 %v7043, %v7627
        %v7782 = vadd.f32 %v7044, %v7632
        %v7783 = vadd.f32 %v7045, %v7635
        %v7784 = vadd.f32 %v7046, %v7640
        %v7785 = vadd.f32 %v7047, %v7643
        %v7786 = vadd.f32 %v7048, %v7648
        %v7787 = vadd.f32 %v7049, %v7651
        %v7788 = vadd.f32 %v7050, %v7656
        %v7789 = vadd.f32 %v7051, %v7659
        %s7790 = scalar_lea.vmem [#allocation5], 512
        %v7791 = vld [vmem:[%s7790] sm:$0xf]
        %v7792 = vld [vmem:[%s7790 + $0x4] sm:$0xf]
        %v7793 = vld [vmem:[%s7790 + $0x8] sm:$0xf]
        %v7794 = vld [vmem:[%s7790 + $0xc] sm:$0xf]
        %v7795 = vld [vmem:[%s7790 + $0x10] sm:$0xf]
        %v7796 = vld [vmem:[%s7790 + $0x14] sm:$0xf]
        %v7797 = vld [vmem:[%s7790 + $0x18] sm:$0xf]
        %v7798 = vld [vmem:[%s7790 + $0x1c] sm:$0xf]
        %v7799 = vld [vmem:[%s7790 + $0x20] sm:$0xf]
        %v7800 = vld [vmem:[%s7790 + $0x24] sm:$0xf]
        %v7801 = vld [vmem:[%s7790 + $0x28] sm:$0xf]
        %v7802 = vld [vmem:[%s7790 + $0x2c] sm:$0xf]
        %v7803 = vld [vmem:[%s7790 + $0x30] sm:$0xf]
        %v7804 = vld [vmem:[%s7790 + $0x34] sm:$0xf]
        %v7805 = vld [vmem:[%s7790 + $0x38] sm:$0xf]
        %v7806 = vld [vmem:[%s7790 + $0x3c] sm:$0xf]
        %v7823 = vunpack.c.l.b16 %v7791
        %v7824 = vunpack.c.l.b16 %v7792
        %v7825 = vunpack.c.l.b16 %v7793
        %v7826 = vunpack.c.l.b16 %v7794
        %v7827 = vunpack.c.l.b16 %v7795
        %v7828 = vunpack.c.l.b16 %v7796
        %v7829 = vunpack.c.l.b16 %v7797
        %v7830 = vunpack.c.l.b16 %v7798
        %v7831 = vunpack.c.l.b16 %v7799
        %v7832 = vunpack.c.l.b16 %v7800
        %v7833 = vunpack.c.l.b16 %v7801
        %v7834 = vunpack.c.l.b16 %v7802
        %v7835 = vunpack.c.l.b16 %v7803
        %v7836 = vunpack.c.l.b16 %v7804
        %v7837 = vunpack.c.l.b16 %v7805
        %v7838 = vunpack.c.l.b16 %v7806
        %v7839 = vpack.c.b16 %v7824, %v7823
        %v7840 = vpack.c.b16 %v7826, %v7825
        %v7841 = vpack.c.b16 %v7828, %v7827
        %v7842 = vpack.c.b16 %v7830, %v7829
        %v7843 = vpack.c.b16 %v7832, %v7831
        %v7844 = vpack.c.b16 %v7834, %v7833
        %v7845 = vpack.c.b16 %v7836, %v7835
        %v7846 = vpack.c.b16 %v7838, %v7837
        %7855 = vmatprep.subr.bf16.mxu0 0
        %7856 = vmatpush1.bf16.msra.mxu0 %v7839
        %7857 = vmatprep.subr.bf16.mxu0 0
        %7858 = vmatpush1.bf16.msra.mxu0 %v7840
        %7859 = vmatprep.subr.bf16.mxu0 0
        %7860 = vmatpush1.bf16.msra.mxu0 %v7841
        %7861 = vmatprep.subr.bf16.mxu0 0
        %7862 = vmatpush1.bf16.msra.mxu0 %v7842
        %7863 = vmatprep.subr.bf16.mxu0 0
        %7864 = vmatpush1.bf16.msra.mxu0 %v7843
        %7865 = vmatprep.subr.bf16.mxu0 0
        %7866 = vmatpush1.bf16.msra.mxu0 %v7844
        %7867 = vmatprep.subr.bf16.mxu0 0
        %7868 = vmatpush1.bf16.msra.mxu0 %v7845
        %7869 = vmatprep.subr.bf16.mxu0 0
        %7870 = vmatpush1.bf16.msra.mxu0 %v7846
        %7871 = vmatprep.subr.bf16.mxu0 0
        %7872 = vmatpush1.bf16.msra.mxu0 0
        %7873 = vmatprep.subr.bf16.mxu0 0
        %7874 = vmatpush1.bf16.msra.mxu0 0
        %7875 = vmatprep.subr.bf16.mxu0 0
        %7876 = vmatpush1.bf16.msra.mxu0 0
        %7877 = vmatprep.subr.bf16.mxu0 0
        %7878 = vmatpush1.bf16.msra.mxu0 0
        %7879 = vmatprep.subr.bf16.mxu0 0
        %7880 = vmatpush1.bf16.msra.mxu0 0
        %7881 = vmatprep.subr.bf16.mxu0 0
        %7882 = vmatpush1.bf16.msra.mxu0 0
        %7883 = vmatprep.subr.bf16.mxu0 0
        %7884 = vmatpush1.bf16.msra.mxu0 0
        %7885 = vmatprep.subr.bf16.mxu0 0
        %7886 = vmatpush1.bf16.msra.mxu0 0
        %7887 = vmatprep.mubr.bf16.mxu0 0
        %7888 = vmatmul.mubr.bf16.gmra.mrb[0].mxu0 %v3119
        %v7889 = vpop.f32.mrb[0].mxu0
        %v7890 = vadd.f32 0.0, %v7889
        %v7891 = vpop.f32.mrb[0].mxu0
        %v7892 = vpop.f32.mrb[0].mxu0
        %v7893 = vadd.f32 0.0, %v7892
        %v7894 = vpop.f32.mrb[0].mxu0
        %7895 = vmatprep.mubr.bf16.mxu0 0
        %7896 = vmatmul.mubr.bf16.gmra.mrb[0].mxu0 %v3121
        %v7897 = vpop.f32.mrb[0].mxu0
        %v7898 = vadd.f32 0.0, %v7897
        %v7899 = vpop.f32.mrb[0].mxu0
        %v7900 = vpop.f32.mrb[0].mxu0
        %v7901 = vadd.f32 0.0, %v7900
        %v7902 = vpop.f32.mrb[0].mxu0
        %7903 = vmatprep.mubr.bf16.mxu0 0
        %7904 = vmatmul.mubr.bf16.gmra.mrb[0].mxu0 %v3124
        %v7905 = vpop.f32.mrb[0].mxu0
        %v7906 = vadd.f32 0.0, %v7905
        %v7907 = vpop.f32.mrb[0].mxu0
        %v7908 = vpop.f32.mrb[0].mxu0
        %v7909 = vadd.f32 0.0, %v7908
        %v7910 = vpop.f32.mrb[0].mxu0
        %7911 = vmatprep.mubr.bf16.mxu0 0
        %7912 = vmatmul.mubr.bf16.gmra.mrb[0].mxu0 %v3126
        %v7913 = vpop.f32.mrb[0].mxu0
        %v7914 = vadd.f32 0.0, %v7913
        %v7915 = vpop.f32.mrb[0].mxu0
        %v7916 = vpop.f32.mrb[0].mxu0
        %v7917 = vadd.f32 0.0, %v7916
        %v7918 = vpop.f32.mrb[0].mxu0
        %7919 = vmatprep.mubr.bf16.mxu0 0
        %7920 = vmatmul.mubr.bf16.gmra.mrb[0].mxu0 %v3129
        %v7921 = vpop.f32.mrb[0].mxu0
        %v7922 = vadd.f32 0.0, %v7921
        %v7923 = vpop.f32.mrb[0].mxu0
        %v7924 = vpop.f32.mrb[0].mxu0
        %v7925 = vadd.f32 0.0, %v7924
        %v7926 = vpop.f32.mrb[0].mxu0
        %7927 = vmatprep.mubr.bf16.mxu0 0
        %7928 = vmatmul.mubr.bf16.gmra.mrb[0].mxu0 %v3131
        %v7929 = vpop.f32.mrb[0].mxu0
        %v7930 = vadd.f32 0.0, %v7929
        %v7931 = vpop.f32.mrb[0].mxu0
        %v7932 = vpop.f32.mrb[0].mxu0
        %v7933 = vadd.f32 0.0, %v7932
        %v7934 = vpop.f32.mrb[0].mxu0
        %7935 = vmatprep.mubr.bf16.mxu0 0
        %7936 = vmatmul.mubr.bf16.gmra.mrb[0].mxu0 %v3134
        %v7937 = vpop.f32.mrb[0].mxu0
        %v7938 = vadd.f32 0.0, %v7937
        %v7939 = vpop.f32.mrb[0].mxu0
        %v7940 = vpop.f32.mrb[0].mxu0
        %v7941 = vadd.f32 0.0, %v7940
        %v7942 = vpop.f32.mrb[0].mxu0
        %7943 = vmatprep.mubr.bf16.mxu0 0
        %7944 = vmatmul.mubr.bf16.gmra.mrb[0].mxu0 %v3136
        %v7945 = vpop.f32.mrb[0].mxu0
        %v7946 = vadd.f32 0.0, %v7945
        %v7947 = vpop.f32.mrb[0].mxu0
        %v7948 = vpop.f32.mrb[0].mxu0
        %v7949 = vadd.f32 0.0, %v7948
        %v7950 = vpop.f32.mrb[0].mxu0
        %7951 = vmatprep.mubr.bf16.mxu0 0
        %7952 = vmatmul.mubr.bf16.gmra.mrb[0].mxu0 %v3139
        %v7953 = vpop.f32.mrb[0].mxu0
        %v7954 = vadd.f32 0.0, %v7953
        %v7955 = vpop.f32.mrb[0].mxu0
        %v7956 = vpop.f32.mrb[0].mxu0
        %v7957 = vadd.f32 0.0, %v7956
        %v7958 = vpop.f32.mrb[0].mxu0
        %7959 = vmatprep.mubr.bf16.mxu0 0
        %7960 = vmatmul.mubr.bf16.gmra.mrb[0].mxu0 %v3141
        %v7961 = vpop.f32.mrb[0].mxu0
        %v7962 = vadd.f32 0.0, %v7961
        %v7963 = vpop.f32.mrb[0].mxu0
        %v7964 = vpop.f32.mrb[0].mxu0
        %v7965 = vadd.f32 0.0, %v7964
        %v7966 = vpop.f32.mrb[0].mxu0
        %7967 = vmatprep.mubr.bf16.mxu0 0
        %7968 = vmatmul.mubr.bf16.gmra.mrb[0].mxu0 %v3144
        %v7969 = vpop.f32.mrb[0].mxu0
        %v7970 = vadd.f32 0.0, %v7969
        %v7971 = vpop.f32.mrb[0].mxu0
        %v7972 = vpop.f32.mrb[0].mxu0
        %v7973 = vadd.f32 0.0, %v7972
        %v7974 = vpop.f32.mrb[0].mxu0
        %7975 = vmatprep.mubr.bf16.mxu0 0
        %7976 = vmatmul.mubr.bf16.gmra.mrb[0].mxu0 %v3146
        %v7977 = vpop.f32.mrb[0].mxu0
        %v7978 = vadd.f32 0.0, %v7977
        %v7979 = vpop.f32.mrb[0].mxu0
        %v7980 = vpop.f32.mrb[0].mxu0
        %v7981 = vadd.f32 0.0, %v7980
        %v7982 = vpop.f32.mrb[0].mxu0
        %7983 = vmatprep.mubr.bf16.mxu0 0
        %7984 = vmatmul.mubr.bf16.gmra.mrb[0].mxu0 %v3149
        %v7985 = vpop.f32.mrb[0].mxu0
        %v7986 = vadd.f32 0.0, %v7985
        %v7987 = vpop.f32.mrb[0].mxu0
        %v7988 = vpop.f32.mrb[0].mxu0
        %v7989 = vadd.f32 0.0, %v7988
        %v7990 = vpop.f32.mrb[0].mxu0
        %7991 = vmatprep.mubr.bf16.mxu0 0
        %7992 = vmatmul.mubr.bf16.gmra.mrb[0].mxu0 %v3151
        %v7993 = vpop.f32.mrb[0].mxu0
        %v7994 = vadd.f32 0.0, %v7993
        %v7995 = vpop.f32.mrb[0].mxu0
        %v7996 = vpop.f32.mrb[0].mxu0
        %v7997 = vadd.f32 0.0, %v7996
        %v7998 = vpop.f32.mrb[0].mxu0
        %7999 = vmatprep.mubr.bf16.mxu0 0
        %8000 = vmatmul.mubr.bf16.gmra.mrb[0].mxu0 %v3154
        %v8001 = vpop.f32.mrb[0].mxu0
        %v8002 = vadd.f32 0.0, %v8001
        %v8003 = vpop.f32.mrb[0].mxu0
        %v8004 = vpop.f32.mrb[0].mxu0
        %v8005 = vadd.f32 0.0, %v8004
        %v8006 = vpop.f32.mrb[0].mxu0
        %8007 = vmatprep.mubr.bf16.mxu0 0
        %8008 = vmatmul.mubr.bf16.gmra.mrb[0].mxu0 %v3156
        %v8009 = vpop.f32.mrb[0].mxu0
        %v8010 = vadd.f32 0.0, %v8009
        %v8011 = vpop.f32.mrb[0].mxu0
        %v8012 = vpop.f32.mrb[0].mxu0
        %v8013 = vadd.f32 0.0, %v8012
        %v8014 = vpop.f32.mrb[0].mxu0
        %8015 = vmatprep.mubr.bf16.mxu0 0
        %8016 = vmatmul.mubr.bf16.gmra.mrb[0].mxu0 %v3159
        %v8017 = vpop.f32.mrb[0].mxu0
        %v8018 = vadd.f32 0.0, %v8017
        %v8019 = vpop.f32.mrb[0].mxu0
        %v8020 = vpop.f32.mrb[0].mxu0
        %v8021 = vadd.f32 0.0, %v8020
        %v8022 = vpop.f32.mrb[0].mxu0
        %8023 = vmatprep.mubr.bf16.mxu0 0
        %8024 = vmatmul.mubr.bf16.gmra.mrb[0].mxu0 %v3161
        %v8025 = vpop.f32.mrb[0].mxu0
        %v8026 = vadd.f32 0.0, %v8025
        %v8027 = vpop.f32.mrb[0].mxu0
        %v8028 = vpop.f32.mrb[0].mxu0
        %v8029 = vadd.f32 0.0, %v8028
        %v8030 = vpop.f32.mrb[0].mxu0
        %8031 = vmatprep.mubr.bf16.mxu0 0
        %8032 = vmatmul.mubr.bf16.gmra.mrb[0].mxu0 %v3164
        %v8033 = vpop.f32.mrb[0].mxu0
        %v8034 = vadd.f32 0.0, %v8033
        %v8035 = vpop.f32.mrb[0].mxu0
        %v8036 = vpop.f32.mrb[0].mxu0
        %v8037 = vadd.f32 0.0, %v8036
        %v8038 = vpop.f32.mrb[0].mxu0
        %8039 = vmatprep.mubr.bf16.mxu0 0
        %8040 = vmatmul.mubr.bf16.gmra.mrb[0].mxu0 %v3166
        %v8041 = vpop.f32.mrb[0].mxu0
        %v8042 = vadd.f32 0.0, %v8041
        %v8043 = vpop.f32.mrb[0].mxu0
        %v8044 = vpop.f32.mrb[0].mxu0
        %v8045 = vadd.f32 0.0, %v8044
        %v8046 = vpop.f32.mrb[0].mxu0
        %8047 = vmatprep.mubr.bf16.mxu0 0
        %8048 = vmatmul.mubr.bf16.gmra.mrb[0].mxu0 %v3169
        %v8049 = vpop.f32.mrb[0].mxu0
        %v8050 = vadd.f32 0.0, %v8049
        %v8051 = vpop.f32.mrb[0].mxu0
        %v8052 = vpop.f32.mrb[0].mxu0
        %v8053 = vadd.f32 0.0, %v8052
        %v8054 = vpop.f32.mrb[0].mxu0
        %8055 = vmatprep.mubr.bf16.mxu0 0
        %8056 = vmatmul.mubr.bf16.gmra.mrb[0].mxu0 %v3171
        %v8057 = vpop.f32.mrb[0].mxu0
        %v8058 = vadd.f32 0.0, %v8057
        %v8059 = vpop.f32.mrb[0].mxu0
        %v8060 = vpop.f32.mrb[0].mxu0
        %v8061 = vadd.f32 0.0, %v8060
        %v8062 = vpop.f32.mrb[0].mxu0
        %8063 = vmatprep.mubr.bf16.mxu0 0
        %8064 = vmatmul.mubr.bf16.gmra.mrb[0].mxu0 %v3174
        %v8065 = vpop.f32.mrb[0].mxu0
        %v8066 = vadd.f32 0.0, %v8065
        %v8067 = vpop.f32.mrb[0].mxu0
        %v8068 = vpop.f32.mrb[0].mxu0
        %v8069 = vadd.f32 0.0, %v8068
        %v8070 = vpop.f32.mrb[0].mxu0
        %8071 = vmatprep.mubr.bf16.mxu0 0
        %8072 = vmatmul.mubr.bf16.gmra.mrb[0].mxu0 %v3176
        %v8073 = vpop.f32.mrb[0].mxu0
        %v8074 = vadd.f32 0.0, %v8073
        %v8075 = vpop.f32.mrb[0].mxu0
        %v8076 = vpop.f32.mrb[0].mxu0
        %v8077 = vadd.f32 0.0, %v8076
        %v8078 = vpop.f32.mrb[0].mxu0
        %8079 = vmatprep.mubr.bf16.mxu0 0
        %8080 = vmatmul.mubr.bf16.gmra.mrb[0].mxu0 %v3179
        %v8081 = vpop.f32.mrb[0].mxu0
        %v8082 = vadd.f32 0.0, %v8081
        %v8083 = vpop.f32.mrb[0].mxu0
        %v8084 = vpop.f32.mrb[0].mxu0
        %v8085 = vadd.f32 0.0, %v8084
        %v8086 = vpop.f32.mrb[0].mxu0
        %8087 = vmatprep.mubr.bf16.mxu0 0
        %8088 = vmatmul.mubr.bf16.gmra.mrb[0].mxu0 %v3181
        %v8089 = vpop.f32.mrb[0].mxu0
        %v8090 = vadd.f32 0.0, %v8089
        %v8091 = vpop.f32.mrb[0].mxu0
        %v8092 = vpop.f32.mrb[0].mxu0
        %v8093 = vadd.f32 0.0, %v8092
        %v8094 = vpop.f32.mrb[0].mxu0
        %8095 = vmatprep.mubr.bf16.mxu0 0
        %8096 = vmatmul.mubr.bf16.gmra.mrb[0].mxu0 %v3184
        %v8097 = vpop.f32.mrb[0].mxu0
        %v8098 = vadd.f32 0.0, %v8097
        %v8099 = vpop.f32.mrb[0].mxu0
        %v8100 = vpop.f32.mrb[0].mxu0
        %v8101 = vadd.f32 0.0, %v8100
        %v8102 = vpop.f32.mrb[0].mxu0
        %8103 = vmatprep.mubr.bf16.mxu0 0
        %8104 = vmatmul.mubr.bf16.gmra.mrb[0].mxu0 %v3186
        %v8105 = vpop.f32.mrb[0].mxu0
        %v8106 = vadd.f32 0.0, %v8105
        %v8107 = vpop.f32.mrb[0].mxu0
        %v8108 = vpop.f32.mrb[0].mxu0
        %v8109 = vadd.f32 0.0, %v8108
        %v8110 = vpop.f32.mrb[0].mxu0
        %8111 = vmatprep.mubr.bf16.mxu0 0
        %8112 = vmatmul.mubr.bf16.gmra.mrb[0].mxu0 %v3189
        %v8113 = vpop.f32.mrb[0].mxu0
        %v8114 = vadd.f32 0.0, %v8113
        %v8115 = vpop.f32.mrb[0].mxu0
        %v8116 = vpop.f32.mrb[0].mxu0
        %v8117 = vadd.f32 0.0, %v8116
        %v8118 = vpop.f32.mrb[0].mxu0
        %8119 = vmatprep.mubr.bf16.mxu0 0
        %8120 = vmatmul.mubr.bf16.gmra.mrb[0].mxu0 %v3191
        %v8121 = vpop.f32.mrb[0].mxu0
        %v8122 = vadd.f32 0.0, %v8121
        %v8123 = vpop.f32.mrb[0].mxu0
        %v8124 = vpop.f32.mrb[0].mxu0
        %v8125 = vadd.f32 0.0, %v8124
        %v8126 = vpop.f32.mrb[0].mxu0
        %8127 = vmatprep.mubr.bf16.mxu0 0
        %8128 = vmatmul.mubr.bf16.gmra.mrb[0].mxu0 %v3194
        %v8129 = vpop.f32.mrb[0].mxu0
        %v8130 = vadd.f32 0.0, %v8129
        %v8131 = vpop.f32.mrb[0].mxu0
        %v8132 = vpop.f32.mrb[0].mxu0
        %v8133 = vadd.f32 0.0, %v8132
        %v8134 = vpop.f32.mrb[0].mxu0
        %8135 = vmatprep.mubr.bf16.mxu0 0
        %8136 = vmatmul.mubr.bf16.gmra.mrb[0].mxu0 %v3196
        %v8137 = vpop.f32.mrb[0].mxu0
        %v8138 = vadd.f32 0.0, %v8137
        %v8139 = vpop.f32.mrb[0].mxu0
        %v8140 = vpop.f32.mrb[0].mxu0
        %v8141 = vadd.f32 0.0, %v8140
        %v8142 = vpop.f32.mrb[0].mxu0
        %8143 = vmatprep.mubr.bf16.mxu0 0
        %8144 = vmatmul.mubr.bf16.gmra.mrb[0].mxu0 %v3199
        %v8145 = vpop.f32.mrb[0].mxu0
        %v8146 = vadd.f32 0.0, %v8145
        %v8147 = vpop.f32.mrb[0].mxu0
        %v8148 = vpop.f32.mrb[0].mxu0
        %v8149 = vadd.f32 0.0, %v8148
        %v8150 = vpop.f32.mrb[0].mxu0
        %8151 = vmatprep.mubr.bf16.mxu0 0
        %8152 = vmatmul.mubr.bf16.gmra.mrb[0].mxu0 %v3201
        %v8153 = vpop.f32.mrb[0].mxu0
        %v8154 = vadd.f32 0.0, %v8153
        %v8155 = vpop.f32.mrb[0].mxu0
        %v8156 = vpop.f32.mrb[0].mxu0
        %v8157 = vadd.f32 0.0, %v8156
        %v8158 = vpop.f32.mrb[0].mxu0
        %8159 = vmatprep.mubr.bf16.mxu0 0
        %8160 = vmatmul.mubr.bf16.gmra.mrb[0].mxu0 %v3204
        %v8161 = vpop.f32.mrb[0].mxu0
        %v8162 = vadd.f32 0.0, %v8161
        %v8163 = vpop.f32.mrb[0].mxu0
        %v8164 = vpop.f32.mrb[0].mxu0
        %v8165 = vadd.f32 0.0, %v8164
        %v8166 = vpop.f32.mrb[0].mxu0
        %8167 = vmatprep.mubr.bf16.mxu0 0
        %8168 = vmatmul.mubr.bf16.gmra.mrb[0].mxu0 %v3206
        %v8169 = vpop.f32.mrb[0].mxu0
        %v8170 = vadd.f32 0.0, %v8169
        %v8171 = vpop.f32.mrb[0].mxu0
        %v8172 = vpop.f32.mrb[0].mxu0
        %v8173 = vadd.f32 0.0, %v8172
        %v8174 = vpop.f32.mrb[0].mxu0
        %8175 = vmatprep.mubr.bf16.mxu0 0
        %8176 = vmatmul.mubr.bf16.gmra.mrb[0].mxu0 %v3209
        %v8177 = vpop.f32.mrb[0].mxu0
        %v8178 = vadd.f32 0.0, %v8177
        %v8179 = vpop.f32.mrb[0].mxu0
        %v8180 = vpop.f32.mrb[0].mxu0
        %v8181 = vadd.f32 0.0, %v8180
        %v8182 = vpop.f32.mrb[0].mxu0
        %8183 = vmatprep.mubr.bf16.mxu0 0
        %8184 = vmatmul.mubr.bf16.gmra.mrb[0].mxu0 %v3211
        %v8185 = vpop.f32.mrb[0].mxu0
        %v8186 = vadd.f32 0.0, %v8185
        %v8187 = vpop.f32.mrb[0].mxu0
        %v8188 = vpop.f32.mrb[0].mxu0
        %v8189 = vadd.f32 0.0, %v8188
        %v8190 = vpop.f32.mrb[0].mxu0
        %8191 = vmatprep.mubr.bf16.mxu0 0
        %8192 = vmatmul.mubr.bf16.gmra.mrb[0].mxu0 %v3214
        %v8193 = vpop.f32.mrb[0].mxu0
        %v8194 = vadd.f32 0.0, %v8193
        %v8195 = vpop.f32.mrb[0].mxu0
        %v8196 = vpop.f32.mrb[0].mxu0
        %v8197 = vadd.f32 0.0, %v8196
        %v8198 = vpop.f32.mrb[0].mxu0
        %8199 = vmatprep.mubr.bf16.mxu0 0
        %8200 = vmatmul.mubr.bf16.gmra.mrb[0].mxu0 %v3216
        %v8201 = vpop.f32.mrb[0].mxu0
        %v8202 = vadd.f32 0.0, %v8201
        %v8203 = vpop.f32.mrb[0].mxu0
        %v8204 = vpop.f32.mrb[0].mxu0
        %v8205 = vadd.f32 0.0, %v8204
        %v8206 = vpop.f32.mrb[0].mxu0
        %8207 = vmatprep.mubr.bf16.mxu0 0
        %8208 = vmatmul.mubr.bf16.gmra.mrb[0].mxu0 %v3219
        %v8209 = vpop.f32.mrb[0].mxu0
        %v8210 = vadd.f32 0.0, %v8209
        %v8211 = vpop.f32.mrb[0].mxu0
        %v8212 = vpop.f32.mrb[0].mxu0
        %v8213 = vadd.f32 0.0, %v8212
        %v8214 = vpop.f32.mrb[0].mxu0
        %8215 = vmatprep.mubr.bf16.mxu0 0
        %8216 = vmatmul.mubr.bf16.gmra.mrb[0].mxu0 %v3221
        %v8217 = vpop.f32.mrb[0].mxu0
        %v8218 = vadd.f32 0.0, %v8217
        %v8219 = vpop.f32.mrb[0].mxu0
        %v8220 = vpop.f32.mrb[0].mxu0
        %v8221 = vadd.f32 0.0, %v8220
        %v8222 = vpop.f32.mrb[0].mxu0
        %8223 = vmatprep.mubr.bf16.mxu0 0
        %8224 = vmatmul.mubr.bf16.gmra.mrb[0].mxu0 %v3224
        %v8225 = vpop.f32.mrb[0].mxu0
        %v8226 = vadd.f32 0.0, %v8225
        %v8227 = vpop.f32.mrb[0].mxu0
        %v8228 = vpop.f32.mrb[0].mxu0
        %v8229 = vadd.f32 0.0, %v8228
        %v8230 = vpop.f32.mrb[0].mxu0
        %8231 = vmatprep.mubr.bf16.mxu0 0
        %8232 = vmatmul.mubr.bf16.gmra.mrb[0].mxu0 %v3226
        %v8233 = vpop.f32.mrb[0].mxu0
        %v8234 = vadd.f32 0.0, %v8233
        %v8235 = vpop.f32.mrb[0].mxu0
        %v8236 = vpop.f32.mrb[0].mxu0
        %v8237 = vadd.f32 0.0, %v8236
        %v8238 = vpop.f32.mrb[0].mxu0
        %8239 = vmatprep.mubr.bf16.mxu0 0
        %8240 = vmatmul.mubr.bf16.gmra.mrb[0].mxu0 %v3229
        %v8241 = vpop.f32.mrb[0].mxu0
        %v8242 = vadd.f32 0.0, %v8241
        %v8243 = vpop.f32.mrb[0].mxu0
        %v8244 = vpop.f32.mrb[0].mxu0
        %v8245 = vadd.f32 0.0, %v8244
        %v8246 = vpop.f32.mrb[0].mxu0
        %8247 = vmatprep.mubr.bf16.mxu0 0
        %8248 = vmatmul.mubr.bf16.gmra.mrb[0].mxu0 %v3231
        %v8249 = vpop.f32.mrb[0].mxu0
        %v8250 = vadd.f32 0.0, %v8249
        %v8251 = vpop.f32.mrb[0].mxu0
        %v8252 = vpop.f32.mrb[0].mxu0
        %v8253 = vadd.f32 0.0, %v8252
        %v8254 = vpop.f32.mrb[0].mxu0
        %8255 = vmatprep.mubr.bf16.mxu0 0
        %8256 = vmatmul.mubr.bf16.gmra.mrb[0].mxu0 %v3234
        %v8257 = vpop.f32.mrb[0].mxu0
        %v8258 = vadd.f32 0.0, %v8257
        %v8259 = vpop.f32.mrb[0].mxu0
        %v8260 = vpop.f32.mrb[0].mxu0
        %v8261 = vadd.f32 0.0, %v8260
        %v8262 = vpop.f32.mrb[0].mxu0
        %8263 = vmatprep.mubr.bf16.mxu0 0
        %8264 = vmatmul.mubr.bf16.gmra.mrb[0].mxu0 %v3236
        %v8265 = vpop.f32.mrb[0].mxu0
        %v8266 = vadd.f32 0.0, %v8265
        %v8267 = vpop.f32.mrb[0].mxu0
        %v8268 = vpop.f32.mrb[0].mxu0
        %v8269 = vadd.f32 0.0, %v8268
        %v8270 = vpop.f32.mrb[0].mxu0
        %8271 = vmatprep.mubr.bf16.mxu0 0
        %8272 = vmatmul.mubr.bf16.gmra.mrb[0].mxu0 %v3239
        %v8273 = vpop.f32.mrb[0].mxu0
        %v8274 = vadd.f32 0.0, %v8273
        %v8275 = vpop.f32.mrb[0].mxu0
        %v8276 = vpop.f32.mrb[0].mxu0
        %v8277 = vadd.f32 0.0, %v8276
        %v8278 = vpop.f32.mrb[0].mxu0
        %8279 = vmatprep.mubr.bf16.mxu0 0
        %8280 = vmatmul.mubr.bf16.gmra.mrb[0].mxu0 %v3241
        %v8281 = vpop.f32.mrb[0].mxu0
        %v8282 = vadd.f32 0.0, %v8281
        %v8283 = vpop.f32.mrb[0].mxu0
        %v8284 = vpop.f32.mrb[0].mxu0
        %v8285 = vadd.f32 0.0, %v8284
        %v8286 = vpop.f32.mrb[0].mxu0
        %8287 = vmatprep.mubr.bf16.mxu0 0
        %8288 = vmatmul.mubr.bf16.gmra.mrb[0].mxu0 %v3244
        %v8289 = vpop.f32.mrb[0].mxu0
        %v8290 = vadd.f32 0.0, %v8289
        %v8291 = vpop.f32.mrb[0].mxu0
        %v8292 = vpop.f32.mrb[0].mxu0
        %v8293 = vadd.f32 0.0, %v8292
        %v8294 = vpop.f32.mrb[0].mxu0
        %8295 = vmatprep.mubr.bf16.mxu0 0
        %8296 = vmatmul.mubr.bf16.gmra.mrb[0].mxu0 %v3246
        %v8297 = vpop.f32.mrb[0].mxu0
        %v8298 = vadd.f32 0.0, %v8297
        %v8299 = vpop.f32.mrb[0].mxu0
        %v8300 = vpop.f32.mrb[0].mxu0
        %v8301 = vadd.f32 0.0, %v8300
        %v8302 = vpop.f32.mrb[0].mxu0
        %8303 = vmatprep.mubr.bf16.mxu0 0
        %8304 = vmatmul.mubr.bf16.gmra.mrb[0].mxu0 %v3249
        %v8305 = vpop.f32.mrb[0].mxu0
        %v8306 = vadd.f32 0.0, %v8305
        %v8307 = vpop.f32.mrb[0].mxu0
        %v8308 = vpop.f32.mrb[0].mxu0
        %v8309 = vadd.f32 0.0, %v8308
        %v8310 = vpop.f32.mrb[0].mxu0
        %8311 = vmatprep.mubr.bf16.mxu0 0
        %8312 = vmatmul.mubr.bf16.gmra.mrb[0].mxu0 %v3251
        %v8313 = vpop.f32.mrb[0].mxu0
        %v8314 = vadd.f32 0.0, %v8313
        %v8315 = vpop.f32.mrb[0].mxu0
        %v8316 = vpop.f32.mrb[0].mxu0
        %v8317 = vadd.f32 0.0, %v8316
        %v8318 = vpop.f32.mrb[0].mxu0
        %8319 = vmatprep.mubr.bf16.mxu0 0
        %8320 = vmatmul.mubr.bf16.gmra.mrb[0].mxu0 %v3254
        %v8321 = vpop.f32.mrb[0].mxu0
        %v8322 = vadd.f32 0.0, %v8321
        %v8323 = vpop.f32.mrb[0].mxu0
        %v8324 = vpop.f32.mrb[0].mxu0
        %v8325 = vadd.f32 0.0, %v8324
        %v8326 = vpop.f32.mrb[0].mxu0
        %8327 = vmatprep.mubr.bf16.mxu0 0
        %8328 = vmatmul.mubr.bf16.gmra.mrb[0].mxu0 %v3256
        %v8329 = vpop.f32.mrb[0].mxu0
        %v8330 = vadd.f32 0.0, %v8329
        %v8331 = vpop.f32.mrb[0].mxu0
        %v8332 = vpop.f32.mrb[0].mxu0
        %v8333 = vadd.f32 0.0, %v8332
        %v8334 = vpop.f32.mrb[0].mxu0
        %8335 = vmatprep.mubr.bf16.mxu0 0
        %8336 = vmatmul.mubr.bf16.gmra.mrb[0].mxu0 %v3259
        %v8337 = vpop.f32.mrb[0].mxu0
        %v8338 = vadd.f32 0.0, %v8337
        %v8339 = vpop.f32.mrb[0].mxu0
        %v8340 = vpop.f32.mrb[0].mxu0
        %v8341 = vadd.f32 0.0, %v8340
        %v8342 = vpop.f32.mrb[0].mxu0
        %8343 = vmatprep.mubr.bf16.mxu0 0
        %8344 = vmatmul.mubr.bf16.gmra.mrb[0].mxu0 %v3261
        %v8345 = vpop.f32.mrb[0].mxu0
        %v8346 = vadd.f32 0.0, %v8345
        %v8347 = vpop.f32.mrb[0].mxu0
        %v8348 = vpop.f32.mrb[0].mxu0
        %v8349 = vadd.f32 0.0, %v8348
        %v8350 = vpop.f32.mrb[0].mxu0
        %8351 = vmatprep.mubr.bf16.mxu0 0
        %8352 = vmatmul.mubr.bf16.gmra.mrb[0].mxu0 %v3264
        %v8353 = vpop.f32.mrb[0].mxu0
        %v8354 = vadd.f32 0.0, %v8353
        %v8355 = vpop.f32.mrb[0].mxu0
        %v8356 = vpop.f32.mrb[0].mxu0
        %v8357 = vadd.f32 0.0, %v8356
        %v8358 = vpop.f32.mrb[0].mxu0
        %8359 = vmatprep.mubr.bf16.mxu0 0
        %8360 = vmatmul.mubr.bf16.gmra.mrb[0].mxu0 %v3266
        %v8361 = vpop.f32.mrb[0].mxu0
        %v8362 = vadd.f32 0.0, %v8361
        %v8363 = vpop.f32.mrb[0].mxu0
        %v8364 = vpop.f32.mrb[0].mxu0
        %v8365 = vadd.f32 0.0, %v8364
        %v8366 = vpop.f32.mrb[0].mxu0
        %8367 = vmatprep.mubr.bf16.mxu0 0
        %8368 = vmatmul.mubr.bf16.gmra.mrb[0].mxu0 %v5571
        %v8369 = vpop.f32.mrb[0].mxu0
        %v8370 = vadd.f32 0.0, %v8369
        %v8371 = vpop.f32.mrb[0].mxu0
        %v8372 = vpop.f32.mrb[0].mxu0
        %v8373 = vadd.f32 0.0, %v8372
        %v8374 = vpop.f32.mrb[0].mxu0
        %8375 = vmatprep.mubr.bf16.mxu0 0
        %8376 = vmatmul.mubr.bf16.gmra.mrb[0].mxu0 %v5573
        %v8377 = vpop.f32.mrb[0].mxu0
        %v8378 = vadd.f32 0.0, %v8377
        %v8379 = vpop.f32.mrb[0].mxu0
        %v8380 = vpop.f32.mrb[0].mxu0
        %v8381 = vadd.f32 0.0, %v8380
        %v8382 = vpop.f32.mrb[0].mxu0
        %8383 = vmatprep.mubr.bf16.mxu0 0
        %8384 = vmatmul.mubr.bf16.gmra.mrb[0].mxu0 %v3109
        %v8385 = vpop.f32.mrb[0].mxu0
        %v8386 = vadd.f32 0.0, %v8385
        %v8387 = vpop.f32.mrb[0].mxu0
        %v8388 = vpop.f32.mrb[0].mxu0
        %v8389 = vadd.f32 0.0, %v8388
        %v8390 = vpop.f32.mrb[0].mxu0
        %8391 = vmatprep.mubr.bf16.mxu0 0
        %8392 = vmatmul.mubr.bf16.gmra.mrb[0].mxu0 %v3111
        %v8393 = vpop.f32.mrb[0].mxu0
        %v8394 = vadd.f32 0.0, %v8393
        %v8395 = vpop.f32.mrb[0].mxu0
        %v8396 = vpop.f32.mrb[0].mxu0
        %v8397 = vadd.f32 0.0, %v8396
        %v8398 = vpop.f32.mrb[0].mxu0
        %8399 = vdwg.mxu0
        %v8400 = vadd.f32 %v7662, %v7890
        %v8401 = vadd.f32 %v7663, %v7893
        %v8402 = vadd.f32 %v7664, %v7898
        %v8403 = vadd.f32 %v7665, %v7901
        %v8404 = vadd.f32 %v7666, %v7906
        %v8405 = vadd.f32 %v7667, %v7909
        %v8406 = vadd.f32 %v7668, %v7914
        %v8407 = vadd.f32 %v7669, %v7917
        %v8408 = vadd.f32 %v7670, %v7922
        %v8409 = vadd.f32 %v7671, %v7925
        %v8410 = vadd.f32 %v7672, %v7930
        %v8411 = vadd.f32 %v7673, %v7933
        %v8412 = vadd.f32 %v7674, %v7938
        %v8413 = vadd.f32 %v7675, %v7941
        %v8414 = vadd.f32 %v7676, %v7946
        %v8415 = vadd.f32 %v7677, %v7949
        %v8416 = vadd.f32 %v7678, %v7954
        %v8417 = vadd.f32 %v7679, %v7957
        %v8418 = vadd.f32 %v7680, %v7962
        %v8419 = vadd.f32 %v7681, %v7965
        %v8420 = vadd.f32 %v7682, %v7970
        %v8421 = vadd.f32 %v7683, %v7973
        %v8422 = vadd.f32 %v7684, %v7978
        %v8423 = vadd.f32 %v7685, %v7981
        %v8424 = vadd.f32 %v7686, %v7986
        %v8425 = vadd.f32 %v7687, %v7989
        %v8426 = vadd.f32 %v7688, %v7994
        %v8427 = vadd.f32 %v7689, %v7997
        %v8428 = vadd.f32 %v7690, %v8002
        %v8429 = vadd.f32 %v7691, %v8005
        %v8430 = vadd.f32 %v7692, %v8010
        %v8431 = vadd.f32 %v7693, %v8013
        %v8432 = vadd.f32 %v7694, %v8018
        %v8433 = vadd.f32 %v7695, %v8021
        %v8434 = vadd.f32 %v7696, %v8026
        %v8435 = vadd.f32 %v7697, %v8029
        %v8436 = vadd.f32 %v7698, %v8034
        %v8437 = vadd.f32 %v7699, %v8037
        %v8438 = vadd.f32 %v7700, %v8042
        %v8439 = vadd.f32 %v7701, %v8045
        %v8440 = vadd.f32 %v7702, %v8050
        %v8441 = vadd.f32 %v7703, %v8053
        %v8442 = vadd.f32 %v7704, %v8058
        %v8443 = vadd.f32 %v7705, %v8061
        %v8444 = vadd.f32 %v7706, %v8066
        %v8445 = vadd.f32 %v7707, %v8069
        %v8446 = vadd.f32 %v7708, %v8074
        %v8447 = vadd.f32 %v7709, %v8077
        %v8448 = vadd.f32 %v7710, %v8082
        %v8449 = vadd.f32 %v7711, %v8085
        %v8450 = vadd.f32 %v7712, %v8090
        %v8451 = vadd.f32 %v7713, %v8093
        %v8452 = vadd.f32 %v7714, %v8098
        %v8453 = vadd.f32 %v7715, %v8101
        %v8454 = vadd.f32 %v7716, %v8106
        %v8455 = vadd.f32 %v7717, %v8109
        %v8456 = vadd.f32 %v7718, %v8114
        %v8457 = vadd.f32 %v7719, %v8117
        %v8458 = vadd.f32 %v7720, %v8122
        %v8459 = vadd.f32 %v7721, %v8125
        %v8460 = vadd.f32 %v7722, %v8130
        %v8461 = vadd.f32 %v7723, %v8133
        %v8462 = vadd.f32 %v7724, %v8138
        %v8463 = vadd.f32 %v7725, %v8141
        %v8464 = vadd.f32 %v7726, %v8146
        %v8465 = vadd.f32 %v7727, %v8149
        %v8466 = vadd.f32 %v7728, %v8154
        %v8467 = vadd.f32 %v7729, %v8157
        %v8468 = vadd.f32 %v7730, %v8162
        %v8469 = vadd.f32 %v7731, %v8165
        %v8470 = vadd.f32 %v7732, %v8170
        %v8471 = vadd.f32 %v7733, %v8173
        %v8472 = vadd.f32 %v7734, %v8178
        %v8473 = vadd.f32 %v7735, %v8181
        %v8474 = vadd.f32 %v7736, %v8186
        %v8475 = vadd.f32 %v7737, %v8189
        %v8476 = vadd.f32 %v7738, %v8194
        %v8477 = vadd.f32 %v7739, %v8197
        %v8478 = vadd.f32 %v7740, %v8202
        %v8479 = vadd.f32 %v7741, %v8205
        %v8480 = vadd.f32 %v7742, %v8210
        %v8481 = vadd.f32 %v7743, %v8213
        %v8482 = vadd.f32 %v7744, %v8218
        %v8483 = vadd.f32 %v7745, %v8221
        %v8484 = vadd.f32 %v7746, %v8226
        %v8485 = vadd.f32 %v7747, %v8229
        %v8486 = vadd.f32 %v7748, %v8234
        %v8487 = vadd.f32 %v7749, %v8237
        %v8488 = vadd.f32 %v7750, %v8242
        %v8489 = vadd.f32 %v7751, %v8245
        %v8490 = vadd.f32 %v7752, %v8250
        %v8491 = vadd.f32 %v7753, %v8253
        %v8492 = vadd.f32 %v7754, %v8258
        %v8493 = vadd.f32 %v7755, %v8261
        %v8494 = vadd.f32 %v7756, %v8266
        %v8495 = vadd.f32 %v7757, %v8269
        %v8496 = vadd.f32 %v7758, %v8274
        %v8497 = vadd.f32 %v7759, %v8277
        %v8498 = vadd.f32 %v7760, %v8282
        %v8499 = vadd.f32 %v7761, %v8285
        %v8500 = vadd.f32 %v7762, %v8290
        %v8501 = vadd.f32 %v7763, %v8293
        %v8502 = vadd.f32 %v7764, %v8298
        %v8503 = vadd.f32 %v7765, %v8301
        %v8504 = vadd.f32 %v7766, %v8306
        %v8505 = vadd.f32 %v7767, %v8309
        %v8506 = vadd.f32 %v7768, %v8314
        %v8507 = vadd.f32 %v7769, %v8317
        %v8508 = vadd.f32 %v7770, %v8322
        %v8509 = vadd.f32 %v7771, %v8325
        %v8510 = vadd.f32 %v7772, %v8330
        %v8511 = vadd.f32 %v7773, %v8333
        %v8512 = vadd.f32 %v7774, %v8338
        %v8513 = vadd.f32 %v7775, %v8341
        %v8514 = vadd.f32 %v7776, %v8346
        %v8515 = vadd.f32 %v7777, %v8349
        %v8516 = vadd.f32 %v7778, %v8354
        %v8517 = vadd.f32 %v7779, %v8357
        %v8518 = vadd.f32 %v7780, %v8362
        %v8519 = vadd.f32 %v7781, %v8365
        %v8520 = vadd.f32 %v7782, %v8370
        %v8521 = vadd.f32 %v7783, %v8373
        %v8522 = vadd.f32 %v7784, %v8378
        %v8523 = vadd.f32 %v7785, %v8381
        %v8524 = vadd.f32 %v7786, %v8386
        %v8525 = vadd.f32 %v7787, %v8389
        %v8526 = vadd.f32 %v7788, %v8394
        %v8527 = vadd.f32 %v7789, %v8397
        %8528 = vst [vmem:[%s261] sm:$0xff] %v8400
        %8529 = vst [vmem:[%s261 + $0x8] sm:$0xff] %v8401
        %8530 = vst [vmem:[%s261 + $0x10] sm:$0xff] %v8402
        %8531 = vst [vmem:[%s261 + $0x18] sm:$0xff] %v8403
        %8532 = vst [vmem:[%s261 + $0x20] sm:$0xff] %v8404
        %8533 = vst [vmem:[%s261 + $0x28] sm:$0xff] %v8405
        %8534 = vst [vmem:[%s261 + $0x30] sm:$0xff] %v8406
        %8535 = vst [vmem:[%s261 + $0x38] sm:$0xff] %v8407
        %8536 = vst [vmem:[%s261 + $0x40] sm:$0xff] %v8408
        %8537 = vst [vmem:[%s261 + $0x48] sm:$0xff] %v8409
        %8538 = vst [vmem:[%s261 + $0x50] sm:$0xff] %v8410
        %8539 = vst [vmem:[%s261 + $0x58] sm:$0xff] %v8411
        %8540 = vst [vmem:[%s261 + $0x60] sm:$0xff] %v8412
        %8541 = vst [vmem:[%s261 + $0x68] sm:$0xff] %v8413
        %8542 = vst [vmem:[%s261 + $0x70] sm:$0xff] %v8414
        %8543 = vst [vmem:[%s261 + $0x78] sm:$0xff] %v8415
        %8544 = vst [vmem:[%s261 + $0x80] sm:$0xff] %v8416
        %8545 = vst [vmem:[%s261 + $0x88] sm:$0xff] %v8417
        %8546 = vst [vmem:[%s261 + $0x90] sm:$0xff] %v8418
        %8547 = vst [vmem:[%s261 + $0x98] sm:$0xff] %v8419
        %8548 = vst [vmem:[%s261 + $0xa0] sm:$0xff] %v8420
        %8549 = vst [vmem:[%s261 + $0xa8] sm:$0xff] %v8421
        %8550 = vst [vmem:[%s261 + $0xb0] sm:$0xff] %v8422
        %8551 = vst [vmem:[%s261 + $0xb8] sm:$0xff] %v8423
        %8552 = vst [vmem:[%s261 + $0xc0] sm:$0xff] %v8424
        %8553 = vst [vmem:[%s261 + $0xc8] sm:$0xff] %v8425
        %8554 = vst [vmem:[%s261 + $0xd0] sm:$0xff] %v8426
        %8555 = vst [vmem:[%s261 + $0xd8] sm:$0xff] %v8427
        %8556 = vst [vmem:[%s261 + $0xe0] sm:$0xff] %v8428
        %8557 = vst [vmem:[%s261 + $0xe8] sm:$0xff] %v8429
        %8558 = vst [vmem:[%s261 + $0xf0] sm:$0xff] %v8430
        %8559 = vst [vmem:[%s261 + $0xf8] sm:$0xff] %v8431
        %8560 = vst [vmem:[%s261 + $0x100] sm:$0xff] %v8432
        %8561 = vst [vmem:[%s261 + $0x108] sm:$0xff] %v8433
        %8562 = vst [vmem:[%s261 + $0x110] sm:$0xff] %v8434
        %8563 = vst [vmem:[%s261 + $0x118] sm:$0xff] %v8435
        %8564 = vst [vmem:[%s261 + $0x120] sm:$0xff] %v8436
        %8565 = vst [vmem:[%s261 + $0x128] sm:$0xff] %v8437
        %8566 = vst [vmem:[%s261 + $0x130] sm:$0xff] %v8438
        %8567 = vst [vmem:[%s261 + $0x138] sm:$0xff] %v8439
        %8568 = vst [vmem:[%s261 + $0x140] sm:$0xff] %v8440
        %8569 = vst [vmem:[%s261 + $0x148] sm:$0xff] %v8441
        %8570 = vst [vmem:[%s261 + $0x150] sm:$0xff] %v8442
        %8571 = vst [vmem:[%s261 + $0x158] sm:$0xff] %v8443
        %8572 = vst [vmem:[%s261 + $0x160] sm:$0xff] %v8444
        %8573 = vst [vmem:[%s261 + $0x168] sm:$0xff] %v8445
        %8574 = vst [vmem:[%s261 + $0x170] sm:$0xff] %v8446
        %8575 = vst [vmem:[%s261 + $0x178] sm:$0xff] %v8447
        %8576 = vst [vmem:[%s261 + $0x180] sm:$0xff] %v8448
        %8577 = vst [vmem:[%s261 + $0x188] sm:$0xff] %v8449
        %8578 = vst [vmem:[%s261 + $0x190] sm:$0xff] %v8450
        %8579 = vst [vmem:[%s261 + $0x198] sm:$0xff] %v8451
        %8580 = vst [vmem:[%s261 + $0x1a0] sm:$0xff] %v8452
        %8581 = vst [vmem:[%s261 + $0x1a8] sm:$0xff] %v8453
        %8582 = vst [vmem:[%s261 + $0x1b0] sm:$0xff] %v8454
        %8583 = vst [vmem:[%s261 + $0x1b8] sm:$0xff] %v8455
        %8584 = vst [vmem:[%s261 + $0x1c0] sm:$0xff] %v8456
        %8585 = vst [vmem:[%s261 + $0x1c8] sm:$0xff] %v8457
        %8586 = vst [vmem:[%s261 + $0x1d0] sm:$0xff] %v8458
        %8587 = vst [vmem:[%s261 + $0x1d8] sm:$0xff] %v8459
        %8588 = vst [vmem:[%s261 + $0x1e0] sm:$0xff] %v8460
        %8589 = vst [vmem:[%s261 + $0x1e8] sm:$0xff] %v8461
        %8590 = vst [vmem:[%s261 + $0x1f0] sm:$0xff] %v8462
        %8591 = vst [vmem:[%s261 + $0x1f8] sm:$0xff] %v8463
        %8592 = vst [vmem:[%s261 + $0x200] sm:$0xff] %v8464
        %8593 = vst [vmem:[%s261 + $0x208] sm:$0xff] %v8465
        %8594 = vst [vmem:[%s261 + $0x210] sm:$0xff] %v8466
        %8595 = vst [vmem:[%s261 + $0x218] sm:$0xff] %v8467
        %8596 = vst [vmem:[%s261 + $0x220] sm:$0xff] %v8468
        %8597 = vst [vmem:[%s261 + $0x228] sm:$0xff] %v8469
        %8598 = vst [vmem:[%s261 + $0x230] sm:$0xff] %v8470
        %8599 = vst [vmem:[%s261 + $0x238] sm:$0xff] %v8471
        %8600 = vst [vmem:[%s261 + $0x240] sm:$0xff] %v8472
        %8601 = vst [vmem:[%s261 + $0x248] sm:$0xff] %v8473
        %8602 = vst [vmem:[%s261 + $0x250] sm:$0xff] %v8474
        %8603 = vst [vmem:[%s261 + $0x258] sm:$0xff] %v8475
        %8604 = vst [vmem:[%s261 + $0x260] sm:$0xff] %v8476
        %8605 = vst [vmem:[%s261 + $0x268] sm:$0xff] %v8477
        %8606 = vst [vmem:[%s261 + $0x270] sm:$0xff] %v8478
        %8607 = vst [vmem:[%s261 + $0x278] sm:$0xff] %v8479
        %8608 = vst [vmem:[%s261 + $0x280] sm:$0xff] %v8480
        %8609 = vst [vmem:[%s261 + $0x288] sm:$0xff] %v8481
        %8610 = vst [vmem:[%s261 + $0x290] sm:$0xff] %v8482
        %8611 = vst [vmem:[%s261 + $0x298] sm:$0xff] %v8483
        %8612 = vst [vmem:[%s261 + $0x2a0] sm:$0xff] %v8484
        %8613 = vst [vmem:[%s261 + $0x2a8] sm:$0xff] %v8485
        %8614 = vst [vmem:[%s261 + $0x2b0] sm:$0xff] %v8486
        %8615 = vst [vmem:[%s261 + $0x2b8] sm:$0xff] %v8487
        %8616 = vst [vmem:[%s261 + $0x2c0] sm:$0xff] %v8488
        %8617 = vst [vmem:[%s261 + $0x2c8] sm:$0xff] %v8489
        %8618 = vst [vmem:[%s261 + $0x2d0] sm:$0xff] %v8490
        %8619 = vst [vmem:[%s261 + $0x2d8] sm:$0xff] %v8491
        %8620 = vst [vmem:[%s261 + $0x2e0] sm:$0xff] %v8492
        %8621 = vst [vmem:[%s261 + $0x2e8] sm:$0xff] %v8493
        %8622 = vst [vmem:[%s261 + $0x2f0] sm:$0xff] %v8494
        %8623 = vst [vmem:[%s261 + $0x2f8] sm:$0xff] %v8495
        %8624 = vst [vmem:[%s261 + $0x300] sm:$0xff] %v8496
        %8625 = vst [vmem:[%s261 + $0x308] sm:$0xff] %v8497
        %8626 = vst [vmem:[%s261 + $0x310] sm:$0xff] %v8498
        %8627 = vst [vmem:[%s261 + $0x318] sm:$0xff] %v8499
        %8628 = vst [vmem:[%s261 + $0x320] sm:$0xff] %v8500
        %8629 = vst [vmem:[%s261 + $0x328] sm:$0xff] %v8501
        %8630 = vst [vmem:[%s261 + $0x330] sm:$0xff] %v8502
        %8631 = vst [vmem:[%s261 + $0x338] sm:$0xff] %v8503
        %8632 = vst [vmem:[%s261 + $0x340] sm:$0xff] %v8504
        %8633 = vst [vmem:[%s261 + $0x348] sm:$0xff] %v8505
        %8634 = vst [vmem:[%s261 + $0x350] sm:$0xff] %v8506
        %8635 = vst [vmem:[%s261 + $0x358] sm:$0xff] %v8507
        %8636 = vst [vmem:[%s261 + $0x360] sm:$0xff] %v8508
        %8637 = vst [vmem:[%s261 + $0x368] sm:$0xff] %v8509
        %8638 = vst [vmem:[%s261 + $0x370] sm:$0xff] %v8510
        %8639 = vst [vmem:[%s261 + $0x378] sm:$0xff] %v8511
        %8640 = vst [vmem:[%s261 + $0x380] sm:$0xff] %v8512
        %8641 = vst [vmem:[%s261 + $0x388] sm:$0xff] %v8513
        %8642 = vst [vmem:[%s261 + $0x390] sm:$0xff] %v8514
        %8643 = vst [vmem:[%s261 + $0x398] sm:$0xff] %v8515
        %8644 = vst [vmem:[%s261 + $0x3a0] sm:$0xff] %v8516
        %8645 = vst [vmem:[%s261 + $0x3a8] sm:$0xff] %v8517
        %8646 = vst [vmem:[%s261 + $0x3b0] sm:$0xff] %v8518
        %8647 = vst [vmem:[%s261 + $0x3b8] sm:$0xff] %v8519
        %8648 = vst [vmem:[%s261 + $0x3c0] sm:$0xff] %v8520
        %8649 = vst [vmem:[%s261 + $0x3c8] sm:$0xff] %v8521
        %8650 = vst [vmem:[%s261 + $0x3d0] sm:$0xff] %v8522
        %8651 = vst [vmem:[%s261 + $0x3d8] sm:$0xff] %v8523
        %8652 = vst [vmem:[%s261 + $0x3e0] sm:$0xff] %v8524
        %8653 = vst [vmem:[%s261 + $0x3e8] sm:$0xff] %v8525
        %8654 = vst [vmem:[%s261 + $0x3f0] sm:$0xff] %v8526
        %8655 = vst [vmem:[%s261 + $0x3f8] sm:$0xff] %v8527
        %v8656 = vadd.f32 %v8400, %v8401
        %v8657 = vadd.f32 %v8656, %v8402
        %v8658 = vadd.f32 %v8657, %v8403
        %v8659 = vadd.f32 %v8658, %v8404
        %v8660 = vadd.f32 %v8659, %v8405
        %v8661 = vadd.f32 %v8660, %v8406
        %v8662 = vadd.f32 %v8661, %v8407
        %v8663 = vadd.f32 %v8662, %v8408
        %v8664 = vadd.f32 %v8663, %v8409
        %v8665 = vadd.f32 %v8664, %v8410
        %v8666 = vadd.f32 %v8665, %v8411
        %v8667 = vadd.f32 %v8666, %v8412
        %v8668 = vadd.f32 %v8667, %v8413
        %v8669 = vadd.f32 %v8668, %v8414
        %v8670 = vadd.f32 %v8669, %v8415
        %v8671 = vadd.f32 %v8670, %v8416
        %v8672 = vadd.f32 %v8671, %v8417
        %v8673 = vadd.f32 %v8672, %v8418
        %v8674 = vadd.f32 %v8673, %v8419
        %v8675 = vadd.f32 %v8674, %v8420
        %v8676 = vadd.f32 %v8675, %v8421
        %v8677 = vadd.f32 %v8676, %v8422
        %v8678 = vadd.f32 %v8677, %v8423
        %v8679 = vadd.f32 %v8678, %v8424
        %v8680 = vadd.f32 %v8679, %v8425
        %v8681 = vadd.f32 %v8680, %v8426
        %v8682 = vadd.f32 %v8681, %v8427
        %v8683 = vadd.f32 %v8682, %v8428
        %v8684 = vadd.f32 %v8683, %v8429
        %v8685 = vadd.f32 %v8684, %v8430
        %v8686 = vadd.f32 %v8685, %v8431
        %v8687 = vadd.f32 %v8686, %v8432
        %v8688 = vadd.f32 %v8687, %v8433
        %v8689 = vadd.f32 %v8688, %v8434
        %v8690 = vadd.f32 %v8689, %v8435
        %v8691 = vadd.f32 %v8690, %v8436
        %v8692 = vadd.f32 %v8691, %v8437
        %v8693 = vadd.f32 %v8692, %v8438
        %v8694 = vadd.f32 %v8693, %v8439
        %v8695 = vadd.f32 %v8694, %v8440
        %v8696 = vadd.f32 %v8695, %v8441
        %v8697 = vadd.f32 %v8696, %v8442
        %v8698 = vadd.f32 %v8697, %v8443
        %v8699 = vadd.f32 %v8698, %v8444
        %v8700 = vadd.f32 %v8699, %v8445
        %v8701 = vadd.f32 %v8700, %v8446
        %v8702 = vadd.f32 %v8701, %v8447
        %v8703 = vadd.f32 %v8702, %v8448
        %v8704 = vadd.f32 %v8703, %v8449
        %v8705 = vadd.f32 %v8704, %v8450
        %v8706 = vadd.f32 %v8705, %v8451
        %v8707 = vadd.f32 %v8706, %v8452
        %v8708 = vadd.f32 %v8707, %v8453
        %v8709 = vadd.f32 %v8708, %v8454
        %v8710 = vadd.f32 %v8709, %v8455
        %v8711 = vadd.f32 %v8710, %v8456
        %v8712 = vadd.f32 %v8711, %v8457
        %v8713 = vadd.f32 %v8712, %v8458
        %v8714 = vadd.f32 %v8713, %v8459
        %v8715 = vadd.f32 %v8714, %v8460
        %v8716 = vadd.f32 %v8715, %v8461
        %v8717 = vadd.f32 %v8716, %v8462
        %v8718 = vadd.f32 %v8717, %v8463
        %v8719 = vadd.f32 %v8718, %v8464
        %v8720 = vadd.f32 %v8719, %v8465
        %v8721 = vadd.f32 %v8720, %v8466
        %v8722 = vadd.f32 %v8721, %v8467
        %v8723 = vadd.f32 %v8722, %v8468
        %v8724 = vadd.f32 %v8723, %v8469
        %v8725 = vadd.f32 %v8724, %v8470
        %v8726 = vadd.f32 %v8725, %v8471
        %v8727 = vadd.f32 %v8726, %v8472
        %v8728 = vadd.f32 %v8727, %v8473
        %v8729 = vadd.f32 %v8728, %v8474
        %v8730 = vadd.f32 %v8729, %v8475
        %v8731 = vadd.f32 %v8730, %v8476
        %v8732 = vadd.f32 %v8731, %v8477
        %v8733 = vadd.f32 %v8732, %v8478
        %v8734 = vadd.f32 %v8733, %v8479
        %v8735 = vadd.f32 %v8734, %v8480
        %v8736 = vadd.f32 %v8735, %v8481
        %v8737 = vadd.f32 %v8736, %v8482
        %v8738 = vadd.f32 %v8737, %v8483
        %v8739 = vadd.f32 %v8738, %v8484
        %v8740 = vadd.f32 %v8739, %v8485
        %v8741 = vadd.f32 %v8740, %v8486
        %v8742 = vadd.f32 %v8741, %v8487
        %v8743 = vadd.f32 %v8742, %v8488
        %v8744 = vadd.f32 %v8743, %v8489
        %v8745 = vadd.f32 %v8744, %v8490
        %v8746 = vadd.f32 %v8745, %v8491
        %v8747 = vadd.f32 %v8746, %v8492
        %v8748 = vadd.f32 %v8747, %v8493
        %v8749 = vadd.f32 %v8748, %v8494
        %v8750 = vadd.f32 %v8749, %v8495
        %v8751 = vadd.f32 %v8750, %v8496
        %v8752 = vadd.f32 %v8751, %v8497
        %v8753 = vadd.f32 %v8752, %v8498
        %v8754 = vadd.f32 %v8753, %v8499
        %v8755 = vadd.f32 %v8754, %v8500
        %v8756 = vadd.f32 %v8755, %v8501
        %v8757 = vadd.f32 %v8756, %v8502
        %v8758 = vadd.f32 %v8757, %v8503
        %v8759 = vadd.f32 %v8758, %v8504
        %v8760 = vadd.f32 %v8759, %v8505
        %v8761 = vadd.f32 %v8760, %v8506
        %v8762 = vadd.f32 %v8761, %v8507
        %v8763 = vadd.f32 %v8762, %v8508
        %v8764 = vadd.f32 %v8763, %v8509
        %v8765 = vadd.f32 %v8764, %v8510
        %v8766 = vadd.f32 %v8765, %v8511
        %v8767 = vadd.f32 %v8766, %v8512
        %v8768 = vadd.f32 %v8767, %v8513
        %v8769 = vadd.f32 %v8768, %v8514
        %v8770 = vadd.f32 %v8769, %v8515
        %v8771 = vadd.f32 %v8770, %v8516
        %v8772 = vadd.f32 %v8771, %v8517
        %v8773 = vadd.f32 %v8772, %v8518
        %v8774 = vadd.f32 %v8773, %v8519
        %v8775 = vadd.f32 %v8774, %v8520
        %v8776 = vadd.f32 %v8775, %v8521
        %v8777 = vadd.f32 %v8776, %v8522
        %v8778 = vadd.f32 %v8777, %v8523
        %v8779 = vadd.f32 %v8778, %v8524
        %v8780 = vadd.f32 %v8779, %v8525
        %v8781 = vadd.f32 %v8780, %v8526
        %v8782 = vadd.f32 %v8781, %v8527
        %v8783 = vrot.slane %v8782, 4
        %v8784 = vadd.f32 %v8782, %v8783
        %v8785 = vrot.slane %v8784, 2
        %v8786 = vadd.f32 %v8784, %v8785
        %v8787 = vrot.slane %v8786, 1
        %v8788 = vadd.f32 %v8786, %v8787
        %v8789 = vmul.f32 %v8400, %v8400
        %v8790 = vmul.f32 %v8401, %v8401
        %v8791 = vmul.f32 %v8402, %v8402
        %v8792 = vmul.f32 %v8403, %v8403
        %v8793 = vmul.f32 %v8404, %v8404
        %v8794 = vmul.f32 %v8405, %v8405
        %v8795 = vmul.f32 %v8406, %v8406
        %v8796 = vmul.f32 %v8407, %v8407
        %v8797 = vmul.f32 %v8408, %v8408
        %v8798 = vmul.f32 %v8409, %v8409
        %v8799 = vmul.f32 %v8410, %v8410
        %v8800 = vmul.f32 %v8411, %v8411
        %v8801 = vmul.f32 %v8412, %v8412
        %v8802 = vmul.f32 %v8413, %v8413
        %v8803 = vmul.f32 %v8414, %v8414
        %v8804 = vmul.f32 %v8415, %v8415
        %v8805 = vmul.f32 %v8416, %v8416
        %v8806 = vmul.f32 %v8417, %v8417
        %v8807 = vmul.f32 %v8418, %v8418
        %v8808 = vmul.f32 %v8419, %v8419
        %v8809 = vmul.f32 %v8420, %v8420
        %v8810 = vmul.f32 %v8421, %v8421
        %v8811 = vmul.f32 %v8422, %v8422
        %v8812 = vmul.f32 %v8423, %v8423
        %v8813 = vmul.f32 %v8424, %v8424
        %v8814 = vmul.f32 %v8425, %v8425
        %v8815 = vmul.f32 %v8426, %v8426
        %v8816 = vmul.f32 %v8427, %v8427
        %v8817 = vmul.f32 %v8428, %v8428
        %v8818 = vmul.f32 %v8429, %v8429
        %v8819 = vmul.f32 %v8430, %v8430
        %v8820 = vmul.f32 %v8431, %v8431
        %v8821 = vmul.f32 %v8432, %v8432
        %v8822 = vmul.f32 %v8433, %v8433
        %v8823 = vmul.f32 %v8434, %v8434
        %v8824 = vmul.f32 %v8435, %v8435
        %v8825 = vmul.f32 %v8436, %v8436
        %v8826 = vmul.f32 %v8437, %v8437
        %v8827 = vmul.f32 %v8438, %v8438
        %v8828 = vmul.f32 %v8439, %v8439
        %v8829 = vmul.f32 %v8440, %v8440
        %v8830 = vmul.f32 %v8441, %v8441
        %v8831 = vmul.f32 %v8442, %v8442
        %v8832 = vmul.f32 %v8443, %v8443
        %v8833 = vmul.f32 %v8444, %v8444
        %v8834 = vmul.f32 %v8445, %v8445
        %v8835 = vmul.f32 %v8446, %v8446
        %v8836 = vmul.f32 %v8447, %v8447
        %v8837 = vmul.f32 %v8448, %v8448
        %v8838 = vmul.f32 %v8449, %v8449
        %v8839 = vmul.f32 %v8450, %v8450
        %v8840 = vmul.f32 %v8451, %v8451
        %v8841 = vmul.f32 %v8452, %v8452
        %v8842 = vmul.f32 %v8453, %v8453
        %v8843 = vmul.f32 %v8454, %v8454
        %v8844 = vmul.f32 %v8455, %v8455
        %v8845 = vmul.f32 %v8456, %v8456
        %v8846 = vmul.f32 %v8457, %v8457
        %v8847 = vmul.f32 %v8458, %v8458
        %v8848 = vmul.f32 %v8459, %v8459
        %v8849 = vmul.f32 %v8460, %v8460
        %v8850 = vmul.f32 %v8461, %v8461
        %v8851 = vmul.f32 %v8462, %v8462
        %v8852 = vmul.f32 %v8463, %v8463
        %v8853 = vmul.f32 %v8464, %v8464
        %v8854 = vmul.f32 %v8465, %v8465
        %v8855 = vmul.f32 %v8466, %v8466
        %v8856 = vmul.f32 %v8467, %v8467
        %v8857 = vmul.f32 %v8468, %v8468
        %v8858 = vmul.f32 %v8469, %v8469
        %v8859 = vmul.f32 %v8470, %v8470
        %v8860 = vmul.f32 %v8471, %v8471
        %v8861 = vmul.f32 %v8472, %v8472
        %v8862 = vmul.f32 %v8473, %v8473
        %v8863 = vmul.f32 %v8474, %v8474
        %v8864 = vmul.f32 %v8475, %v8475
        %v8865 = vmul.f32 %v8476, %v8476
        %v8866 = vmul.f32 %v8477, %v8477
        %v8867 = vmul.f32 %v8478, %v8478
        %v8868 = vmul.f32 %v8479, %v8479
        %v8869 = vmul.f32 %v8480, %v8480
        %v8870 = vmul.f32 %v8481, %v8481
        %v8871 = vmul.f32 %v8482, %v8482
        %v8872 = vmul.f32 %v8483, %v8483
        %v8873 = vmul.f32 %v8484, %v8484
        %v8874 = vmul.f32 %v8485, %v8485
        %v8875 = vmul.f32 %v8486, %v8486
        %v8876 = vmul.f32 %v8487, %v8487
        %v8877 = vmul.f32 %v8488, %v8488
        %v8878 = vmul.f32 %v8489, %v8489
        %v8879 = vmul.f32 %v8490, %v8490
        %v8880 = vmul.f32 %v8491, %v8491
        %v8881 = vmul.f32 %v8492, %v8492
        %v8882 = vmul.f32 %v8493, %v8493
        %v8883 = vmul.f32 %v8494, %v8494
        %v8884 = vmul.f32 %v8495, %v8495
        %v8885 = vmul.f32 %v8496, %v8496
        %v8886 = vmul.f32 %v8497, %v8497
        %v8887 = vmul.f32 %v8498, %v8498
        %v8888 = vmul.f32 %v8499, %v8499
        %v8889 = vmul.f32 %v8500, %v8500
        %v8890 = vmul.f32 %v8501, %v8501
        %v8891 = vmul.f32 %v8502, %v8502
        %v8892 = vmul.f32 %v8503, %v8503
        %v8893 = vmul.f32 %v8504, %v8504
        %v8894 = vmul.f32 %v8505, %v8505
        %v8895 = vmul.f32 %v8506, %v8506
        %v8896 = vmul.f32 %v8507, %v8507
        %v8897 = vmul.f32 %v8508, %v8508
        %v8898 = vmul.f32 %v8509, %v8509
        %v8899 = vmul.f32 %v8510, %v8510
        %v8900 = vmul.f32 %v8511, %v8511
        %v8901 = vmul.f32 %v8512, %v8512
        %v8902 = vmul.f32 %v8513, %v8513
        %v8903 = vmul.f32 %v8514, %v8514
        %v8904 = vmul.f32 %v8515, %v8515
        %v8905 = vmul.f32 %v8516, %v8516
        %v8906 = vmul.f32 %v8517, %v8517
        %v8907 = vmul.f32 %v8518, %v8518
        %v8908 = vmul.f32 %v8519, %v8519
        %v8909 = vmul.f32 %v8520, %v8520
        %v8910 = vmul.f32 %v8521, %v8521
        %v8911 = vmul.f32 %v8522, %v8522
        %v8912 = vmul.f32 %v8523, %v8523
        %v8913 = vmul.f32 %v8524, %v8524
        %v8914 = vmul.f32 %v8525, %v8525
        %v8915 = vmul.f32 %v8526, %v8526
        %v8916 = vmul.f32 %v8527, %v8527
        %v8917 = vadd.f32 %v8789, %v8790
        %v8918 = vadd.f32 %v8917, %v8791
        %v8919 = vadd.f32 %v8918, %v8792
        %v8920 = vadd.f32 %v8919, %v8793
        %v8921 = vadd.f32 %v8920, %v8794
        %v8922 = vadd.f32 %v8921, %v8795
        %v8923 = vadd.f32 %v8922, %v8796
        %v8924 = vadd.f32 %v8923, %v8797
        %v8925 = vadd.f32 %v8924, %v8798
        %v8926 = vadd.f32 %v8925, %v8799
        %v8927 = vadd.f32 %v8926, %v8800
        %v8928 = vadd.f32 %v8927, %v8801
        %v8929 = vadd.f32 %v8928, %v8802
        %v8930 = vadd.f32 %v8929, %v8803
        %v8931 = vadd.f32 %v8930, %v8804
        %v8932 = vadd.f32 %v8931, %v8805
        %v8933 = vadd.f32 %v8932, %v8806
        %v8934 = vadd.f32 %v8933, %v8807
        %v8935 = vadd.f32 %v8934, %v8808
        %v8936 = vadd.f32 %v8935, %v8809
        %v8937 = vadd.f32 %v8936, %v8810
        %v8938 = vadd.f32 %v8937, %v8811
        %v8939 = vadd.f32 %v8938, %v8812
        %v8940 = vadd.f32 %v8939, %v8813
        %v8941 = vadd.f32 %v8940, %v8814
        %v8942 = vadd.f32 %v8941, %v8815
        %v8943 = vadd.f32 %v8942, %v8816
        %v8944 = vadd.f32 %v8943, %v8817
        %v8945 = vadd.f32 %v8944, %v8818
        %v8946 = vadd.f32 %v8945, %v8819
        %v8947 = vadd.f32 %v8946, %v8820
        %v8948 = vadd.f32 %v8947, %v8821
        %v8949 = vadd.f32 %v8948, %v8822
        %v8950 = vadd.f32 %v8949, %v8823
        %v8951 = vadd.f32 %v8950, %v8824
        %v8952 = vadd.f32 %v8951, %v8825
        %v8953 = vadd.f32 %v8952, %v8826
        %v8954 = vadd.f32 %v8953, %v8827
        %v8955 = vadd.f32 %v8954, %v8828
        %v8956 = vadd.f32 %v8955, %v8829
        %v8957 = vadd.f32 %v8956, %v8830
        %v8958 = vadd.f32 %v8957, %v8831
        %v8959 = vadd.f32 %v8958, %v8832
        %v8960 = vadd.f32 %v8959, %v8833
        %v8961 = vadd.f32 %v8960, %v8834
        %v8962 = vadd.f32 %v8961, %v8835
        %v8963 = vadd.f32 %v8962, %v8836
        %v8964 = vadd.f32 %v8963, %v8837
        %v8965 = vadd.f32 %v8964, %v8838
        %v8966 = vadd.f32 %v8965, %v8839
        %v8967 = vadd.f32 %v8966, %v8840
        %v8968 = vadd.f32 %v8967, %v8841
        %v8969 = vadd.f32 %v8968, %v8842
        %v8970 = vadd.f32 %v8969, %v8843
        %v8971 = vadd.f32 %v8970, %v8844
        %v8972 = vadd.f32 %v8971, %v8845
        %v8973 = vadd.f32 %v8972, %v8846
        %v8974 = vadd.f32 %v8973, %v8847
        %v8975 = vadd.f32 %v8974, %v8848
        %v8976 = vadd.f32 %v8975, %v8849
        %v8977 = vadd.f32 %v8976, %v8850
        %v8978 = vadd.f32 %v8977, %v8851
        %v8979 = vadd.f32 %v8978, %v8852
        %v8980 = vadd.f32 %v8979, %v8853
        %v8981 = vadd.f32 %v8980, %v8854
        %v8982 = vadd.f32 %v8981, %v8855
        %v8983 = vadd.f32 %v8982, %v8856
        %v8984 = vadd.f32 %v8983, %v8857
        %v8985 = vadd.f32 %v8984, %v8858
        %v8986 = vadd.f32 %v8985, %v8859
        %v8987 = vadd.f32 %v8986, %v8860
        %v8988 = vadd.f32 %v8987, %v8861
        %v8989 = vadd.f32 %v8988, %v8862
        %v8990 = vadd.f32 %v8989, %v8863
        %v8991 = vadd.f32 %v8990, %v8864
        %v8992 = vadd.f32 %v8991, %v8865
        %v8993 = vadd.f32 %v8992, %v8866
        %v8994 = vadd.f32 %v8993, %v8867
        %v8995 = vadd.f32 %v8994, %v8868
        %v8996 = vadd.f32 %v8995, %v8869
        %v8997 = vadd.f32 %v8996, %v8870
        %v8998 = vadd.f32 %v8997, %v8871
        %v8999 = vadd.f32 %v8998, %v8872
        %v9000 = vadd.f32 %v8999, %v8873
        %v9001 = vadd.f32 %v9000, %v8874
        %v9002 = vadd.f32 %v9001, %v8875
        %v9003 = vadd.f32 %v9002, %v8876
        %v9004 = vadd.f32 %v9003, %v8877
        %v9005 = vadd.f32 %v9004, %v8878
        %v9006 = vadd.f32 %v9005, %v8879
        %v9007 = vadd.f32 %v9006, %v8880
        %v9008 = vadd.f32 %v9007, %v8881
        %v9009 = vadd.f32 %v9008, %v8882
        %v9010 = vadd.f32 %v9009, %v8883
        %v9011 = vadd.f32 %v9010, %v8884
        %v9012 = vadd.f32 %v9011, %v8885
        %v9013 = vadd.f32 %v9012, %v8886
        %v9014 = vadd.f32 %v9013, %v8887
        %v9015 = vadd.f32 %v9014, %v8888
        %v9016 = vadd.f32 %v9015, %v8889
        %v9017 = vadd.f32 %v9016, %v8890
        %v9018 = vadd.f32 %v9017, %v8891
        %v9019 = vadd.f32 %v9018, %v8892
        %v9020 = vadd.f32 %v9019, %v8893
        %v9021 = vadd.f32 %v9020, %v8894
        %v9022 = vadd.f32 %v9021, %v8895
        %v9023 = vadd.f32 %v9022, %v8896
        %v9024 = vadd.f32 %v9023, %v8897
        %v9025 = vadd.f32 %v9024, %v8898
        %v9026 = vadd.f32 %v9025, %v8899
        %v9027 = vadd.f32 %v9026, %v8900
        %v9028 = vadd.f32 %v9027, %v8901
        %v9029 = vadd.f32 %v9028, %v8902
        %v9030 = vadd.f32 %v9029, %v8903
        %v9031 = vadd.f32 %v9030, %v8904
        %v9032 = vadd.f32 %v9031, %v8905
        %v9033 = vadd.f32 %v9032, %v8906
        %v9034 = vadd.f32 %v9033, %v8907
        %v9035 = vadd.f32 %v9034, %v8908
        %v9036 = vadd.f32 %v9035, %v8909
        %v9037 = vadd.f32 %v9036, %v8910
        %v9038 = vadd.f32 %v9037, %v8911
        %v9039 = vadd.f32 %v9038, %v8912
        %v9040 = vadd.f32 %v9039, %v8913
        %v9041 = vadd.f32 %v9040, %v8914
        %v9042 = vadd.f32 %v9041, %v8915
        %v9043 = vadd.f32 %v9042, %v8916
        %v9044 = vrot.slane %v9043, 4
        %v9045 = vadd.f32 %v9043, %v9044
        %v9046 = vrot.slane %v9045, 2
        %v9047 = vadd.f32 %v9045, %v9046
        %v9048 = vrot.slane %v9047, 1
        %v9049 = vadd.f32 %v9047, %v9048
        %vm9050 = vcmask 1040384
        %v9051 = vsel %vm9050, %v8788, %v9049
        %9052 = vst [vmem:[%s268] sm:$0x3] %v9051
        %s9053 = sand.u32 %s124, 1
        %s9054 = scalar_lea.sflag [#allocation4], %s9053
        %s9055 = sand.u32 %s124, 1
        %s9056 = smul.addr %s9055, 1024
        %s9057 = scalar_lea.vmem [#allocation7], %s9056
        %s9058 = sand.u32 %s150, 1
        %s9059 = scalar_lea.sflag [#allocation9], %s9058
        %s9060 = sand.u32 %s150, 1
        %s9061 = smul.addr %s9060, 2
        %s9062 = scalar_lea.vmem [#allocation8], %s9061
        // Predicated region
        $region45: #{tpu_custom_call.1} parent=35 // pred_check
          %p9063 = pneg %p134
        $region46: #{tpu_custom_call.1} parent=35 // pred_check_branch
          %9065 = sbr.rel (%p9063) target = $region48
        $region47: #{tpu_custom_call.1} parent=35 // pred_region
          %s9067 = ssub.s32 16384, 16384
          %9068 = vsyncadd %s9054, %s9067
          %s9069 = smul.addr %s27, 128
          %s9070 = smul.addr %s9069, 128
          %s9071 = scalar_lea.hbm %s4, %s9070
          %s9072 = sshll.u32 %s9057, 4
          %s9073 = int_to_ptr.vmem [resolvable:$true] %s9072
          %9078 = dma.vmem_to_hbm [thread:$0]  %s9073, 16384, %s9071, %s9054, 128, 128, 8
        $region48: #{tpu_custom_call.1} parent=35 // pred_fallthru
          _
        // Predicated region
        $region49: #{tpu_custom_call.1} parent=35 // pred_check
          %p9079 = pneg %p160
        $region50: #{tpu_custom_call.1} parent=35 // pred_check_branch
          %9081 = sbr.rel (%p9079) target = $region52
        $region51: #{tpu_custom_call.1} parent=35 // pred_region
          %s9083 = ssub.s32 32, 32
          %9084 = vsyncadd %s9059, %s9083
          %s9085 = smul.addr %s27, 32
          %s9086 = scalar_lea.hbm %s5, %s9085
          %s9088 = sshll.u32 %s9062, 4
          %s9089 = int_to_ptr.vmem [resolvable:$true] %s9088
          %9091 = dma.vmem_to_hbm [thread:$0]  %s9089, 32, %s9086, %s9059
        $region52: #{tpu_custom_call.1} parent=35 // pred_fallthru
          _
      $region36: #{tpu_custom_call.1} parent=5 // pred_fallthru
        _
      %p9092 = scmp.le.s32.totalorder 2, %s22
      // Predicated region
      $region53: #{tpu_custom_call.1} parent=5 // pred_check
        %p9093 = pneg %p9092
      $region54: #{tpu_custom_call.1} parent=5 // pred_check_branch
        %9095 = sbr.rel (%p9093) target = $region56
      $region55: #{tpu_custom_call.1} parent=5 // pred_region
        %s9096 = ssub.s32 %s22, 2
        // Predicated region
        $region57: #{tpu_custom_call.1} parent=55 // pred_check
          %p9097 = pneg %p140
        $region58: #{tpu_custom_call.1} parent=55 // pred_check_branch
          %9099 = sbr.rel (%p9097) target = $region60
        $region59: #{tpu_custom_call.1} parent=55 // pred_region
          %s9100 = sand.u32 %s125, 1
          %s9101 = scalar_lea.sflag [#allocation4], %s9100
          %s9102 = sand.u32 %s125, 1
          %s9103 = smul.addr %s9102, 1024
          %s9104 = scalar_lea.vmem [#allocation7], %s9103
          %9105 = dma.done %s9101, 16384
        $region60: #{tpu_custom_call.1} parent=55 // pred_fallthru
          _
        // Predicated region
        $region61: #{tpu_custom_call.1} parent=55 // pred_check
          %p9106 = pneg %p166
        $region62: #{tpu_custom_call.1} parent=55 // pred_check_branch
          %9108 = sbr.rel (%p9106) target = $region64
        $region63: #{tpu_custom_call.1} parent=55 // pred_region
          %s9109 = sand.u32 %s151, 1
          %s9110 = scalar_lea.sflag [#allocation9], %s9109
          %s9111 = sand.u32 %s151, 1
          %s9112 = smul.addr %s9111, 2
          %s9113 = scalar_lea.vmem [#allocation8], %s9112
          %9114 = dma.done %s9110, 32
        $region64: #{tpu_custom_call.1} parent=55 // pred_fallthru
          _
      $region56: #{tpu_custom_call.1} parent=5 // pred_fallthru
        _
    $region6: #{tpu_custom_call.1} parent=1 // loop_footer
      %s26 = sadd.s32 1, %s22
    $region7: #{tpu_custom_call.1} parent=1 // loop_footer_branch
      %21 = sbr.rel target = $region3
    $region8: #{tpu_custom_call.1} parent=1 // loop_exit
      _
    %9115 = vsyncpa [#allocation3], 1
    %s9116 = scalar_lea.sflag [#allocation3], 1
    %9117 = vsyncpa %s9116, 1
    %9118 = vsyncpa [#allocation6], 1
    %9119 = vsyncpa [#allocation4], 1
    %s9120 = scalar_lea.sflag [#allocation4], 1
    %9121 = vsyncpa %s9120, 1
    %9122 = vsyncpa [#allocation9], 1
    %s9123 = scalar_lea.sflag [#allocation9], 1
    %9124 = vsyncpa %s9123, 1

</llo_original>
